<compile_context>
chip_gen: v7x
topology: tpu7x:2x2x1
jax: 0.10.0
libtpu: 0.0.40
codegen_flags: <defaults>
</compile_context>

<pallas_src>
import math

import jax
import jax.numpy as jnp
from jax import lax
from jax.experimental import pallas as pl
from jax.experimental.pallas import tpu as pltpu


# -----------------------------------------------------------------------------
# Pallas kernels — all FLOPs of the forward pass live here.
# -----------------------------------------------------------------------------

def _conv_relu_pool_kernel(p_ref, w_ref, b_ref, o_ref):
    """maxpool2x2(relu(conv(x))) with im2col patches pre-grouped by pool pos.

    p_ref: (4, N, K)  im2col patches, axis 0 = pool position (py, px)
    w_ref: (K, C)     flattened conv weight, feature order (ky, kx, cin)
    b_ref: (1, C)     bias
    o_ref: (N, C)     pooled output, rows ordered (b, yo, xo), channels last
    """
    w = w_ref[...]
    b = b_ref[...]
    acc = jnp.maximum(
        jnp.dot(p_ref[0], w, preferred_element_type=jnp.float32) + b, 0.0)
    for p in range(1, p_ref.shape[0]):          # unrolled (4 pool positions)
        y = jnp.maximum(
            jnp.dot(p_ref[p], w, preferred_element_type=jnp.float32) + b, 0.0)
        acc = jnp.maximum(acc, y)
    o_ref[...] = acc


def _latent_decoderfc_bn_kernel(x_ref, wmu_ref, bmu_ref, wd_ref, bd_ref,
                                gamma_ref, beta_ref, rmean_ref, rvar_ref,
                                o_ref):
    """z = x @ Wmu + bmu ; h = z @ Wd + bd ; o = BatchNorm1d(h) (inference)."""
    z = jnp.dot(x_ref[...], wmu_ref[...],
                preferred_element_type=jnp.float32) + bmu_ref[...]
    h = jnp.dot(z, wd_ref[...],
                preferred_element_type=jnp.float32) + bd_ref[...]
    inv_std = lax.rsqrt(rvar_ref[...] + 1e-5)
    o_ref[...] = (h - rmean_ref[...]) * inv_std * gamma_ref[...] + beta_ref[...]


def _matmul_bias_relu_kernel(a_ref, b_ref, bias_ref, o_ref):
    y = jnp.dot(a_ref[...], b_ref[...],
                preferred_element_type=jnp.float32) + bias_ref[...]
    o_ref[...] = jnp.maximum(y, 0.0)


def _matmul_bias_sigmoid_kernel(a_ref, b_ref, bias_ref, o_ref):
    y = jnp.dot(a_ref[...], b_ref[...],
                preferred_element_type=jnp.float32) + bias_ref[...]
    o_ref[...] = jax.nn.sigmoid(y)


def _vmem_call(kernel, out_shape, *args):
    """Gridless pallas_call with all operands resident in VMEM."""
    vmem = pl.BlockSpec(memory_space=pltpu.MemorySpace.VMEM)
    return pl.pallas_call(
        kernel,
        out_shape=out_shape,
        in_specs=[vmem] * len(args),
        out_specs=vmem,
    )(*args)


# -----------------------------------------------------------------------------
# Wrapper-side layout helpers — pure data movement / parameter repacking.
# -----------------------------------------------------------------------------

def _im2col(xcl, K):
    """xcl: (B, H, W, C) channel-last.  -> (B, Ho, Wo, K*K*C), features (ky,kx,c)."""
    B, H, W, C = xcl.shape
    Ho, Wo = H - K + 1, W - K + 1
    cols = [xcl[:, ky:ky + Ho, kx:kx + Wo, :]
            for ky in range(K) for kx in range(K)]
    p = jnp.stack(cols, axis=3)                    # (B, Ho, Wo, K*K, C)
    return p.reshape(B, Ho, Wo, K * K * C)


def _pool_group(p, pool=2):
    """Group per-conv-pixel features by 2x2 pool position.

    p: (B, Ho, Wo, F) -> (pool*pool, B*Hp*Wp, F), rows ordered (b, yo, xo)."""
    B, Ho, Wo, F = p.shape
    Hp, Wp = Ho // pool, Wo // pool                # floor, like F.max_pool2d
    groups = [p[:, py:py + pool * Hp:pool, px:px + pool * Wp:pool, :]
              for py in range(pool) for px in range(pool)]
    g = jnp.stack(groups, axis=0)                  # (4, B, Hp, Wp, F)
    return g.reshape(pool * pool, B * Hp * Wp, F)


def _dilate_pad(xcl, stride, K):
    """Zero-insert (stride-1) between pixels and pad by K-1 on each side so a
    transposed conv becomes a plain valid conv with a flipped kernel."""
    B, H, W, C = xcl.shape
    Hd, Wd = (H - 1) * stride + 1, (W - 1) * stride + 1
    xd = jnp.zeros((B, Hd, Wd, C), xcl.dtype)
    xd = xd.at[:, ::stride, ::stride, :].set(xcl)
    pad = K - 1
    return jnp.pad(xd, ((0, 0), (pad, pad), (pad, pad), (0, 0)))


def _conv_w(w):
    """torch Conv2d weight (Cout, Cin, KH, KW) -> (KH*KW*Cin, Cout)."""
    Cout, Cin, KH, KW = w.shape
    return jnp.transpose(w, (2, 3, 1, 0)).reshape(KH * KW * Cin, Cout)


def _convT_w(w):
    """torch ConvTranspose2d weight (Cin, Cout, KH, KW) -> flipped (KH*KW*Cin, Cout)."""
    Cin, Cout, KH, KW = w.shape
    wf = w[:, :, ::-1, ::-1]                       # spatial flip
    return jnp.transpose(wf, (2, 3, 0, 1)).reshape(KH * KW * Cin, Cout)


# -----------------------------------------------------------------------------
# Forward pass
# -----------------------------------------------------------------------------

def cnn_ae_mnist_forward(x, params):
    """x: (B, 1, 28, 28) float32 -> reconstruction (B, 1, 28, 28)."""
    B = x.shape[0]
    f32 = jnp.float32

    # ---------------- encoder ----------------
    xcl = jnp.transpose(x, (0, 2, 3, 1))                     # (B,28,28,1)

    # conv1 (1->32, 3x3) + relu + maxpool2  ->  (B*13*13, 32)
    p1 = _pool_group(_im2col(xcl, 3))                        # (4, B*169, 9)
    y1 = _vmem_call(_conv_relu_pool_kernel,
                    jax.ShapeDtypeStruct((p1.shape[1], 32), f32),
                    p1, _conv_w(params["conv1_w"]),
                    params["conv1_b"].reshape(1, -1))

    # conv2 (32->32, 3x3) + relu + maxpool2  ->  (B*5*5, 32)
    y1cl = y1.reshape(B, 13, 13, 32)
    p2 = _pool_group(_im2col(y1cl, 3))                       # (4, B*25, 288)
    y2 = _vmem_call(_conv_relu_pool_kernel,
                    jax.ShapeDtypeStruct((p2.shape[1], 32), f32),
                    p2, _conv_w(params["conv2_w"]),
                    params["conv2_b"].reshape(1, -1))

    # flatten exactly like torch .view on a (B, 32, 5, 5) tensor
    flat = jnp.transpose(y2.reshape(B, 5, 5, 32), (0, 3, 1, 2)).reshape(B, 800)

    # ---------------- latent + decoder fc + BatchNorm1d (fused) -------------
    hdec = _vmem_call(
        _latent_decoderfc_bn_kernel,
        jax.ShapeDtypeStruct((B, 36), f32),
        flat,
        jnp.transpose(params["fc_mu_w"]), params["fc_mu_b"].reshape(1, -1),
        jnp.transpose(params["fc_dec_w"]), params["fc_dec_b"].reshape(1, -1),
        params["bn_dec_gamma"].reshape(1, -1),
        params["bn_dec_beta"].reshape(1, -1),
        params["bn_dec_rm"].reshape(1, -1),
        params["bn_dec_rv"].reshape(1, -1))                  # (B, 36)

    # ---------------- decoder convT1 (1->32, 3x3, stride 2) + relu ----------
    d0 = hdec.reshape(B, 6, 6, 1)
    d0p = _dilate_pad(d0, 2, 3)                              # (B,15,15,1)
    pt1 = _im2col(d0p, 3).reshape(B * 13 * 13, 9)            # (B*169, 9)
    d1 = _vmem_call(_matmul_bias_relu_kernel,
                    jax.ShapeDtypeStruct((B * 13 * 13, 32), f32),
                    pt1, _convT_w(params["deconv1_w"]),
                    params["deconv1_b"].reshape(1, -1))      # (B*169, 32)

    # ---------------- decoder convT2 (32->1, 4x4, stride 2) + sigmoid -------
    d1cl = d1.reshape(B, 13, 13, 32)
    d1p = _dilate_pad(d1cl, 2, 4)                            # (B,31,31,32)
    pt2 = _im2col(d1p, 4).reshape(B * 28 * 28, 512)          # (B*784, 512)
    pt2_t = jnp.transpose(pt2)                               # (512, B*784)
    wt2 = jnp.transpose(_convT_w(params["deconv2_w"]))       # (1, 512)
    recon = _vmem_call(_matmul_bias_sigmoid_kernel,
                       jax.ShapeDtypeStruct((1, B * 28 * 28), f32),
                       wt2, pt2_t,
                       params["deconv2_b"].reshape(1, 1))    # (1, B*784)

    return recon.reshape(B, 1, 28, 28)


# -----------------------------------------------------------------------------
# Parameter init (PyTorch-default-like shapes / uniform bounds)
# -----------------------------------------------------------------------------

def init_params(key, n_hidden):
    ks = jax.random.split(key, 12)

    def u(k, shape, fan_in):
        a = 1.0 / math.sqrt(fan_in)
        return jax.random.uniform(k, shape, jnp.float32, -a, a)

    return {
        "conv1_w": u(ks[0], (32, 1, 3, 3), 1 * 9),
        "conv1_b": u(ks[1], (32,), 1 * 9),
        "conv2_w": u(ks[2], (32, 32, 3, 3), 32 * 9),
        "conv2_b": u(ks[3], (32,), 32 * 9),
        "fc_mu_w": u(ks[4], (n_hidden, 800), 800),
        "fc_mu_b": u(ks[5], (n_hidden,), 800),
        "fc_dec_w": u(ks[6], (36, n_hidden), n_hidden),
        "fc_dec_b": u(ks[7], (36,), n_hidden),
        "bn_dec_gamma": jnp.ones((36,), jnp.float32),
        "bn_dec_beta": jnp.zeros((36,), jnp.float32),
        "bn_dec_rm": jnp.zeros((36,), jnp.float32),
        "bn_dec_rv": jnp.ones((36,), jnp.float32),
        "deconv1_w": u(ks[8], (1, 32, 3, 3), 32 * 9),
        "deconv1_b": u(ks[9], (32,), 32 * 9),
        "deconv2_w": u(ks[10], (32, 1, 4, 4), 1 * 16),
        "deconv2_b": u(ks[11], (1,), 1 * 16),
    }


if __name__ == "__main__":
    key = jax.random.PRNGKey(0)
    k_x, k_p = jax.random.split(key)

    B, n_hidden = 2, 32
    x = jax.random.uniform(k_x, (B, 1, 28, 28), jnp.float32)   # MNIST-like input
    params = init_params(k_p, n_hidden)

    forward = jax.jit(cnn_ae_mnist_forward)
    out = forward(x, params)
    jax.block_until_ready(out)

    assert out.shape == (B, 1, 28, 28), out.shape
    assert bool(jnp.all(jnp.isfinite(out))), "non-finite output"
    assert bool(jnp.all((out >= 0.0) & (out <= 1.0))), "sigmoid range violated"
    print("KERNEL_OK")
</pallas_src>

<mosaic_0001>
module attributes {stable_mosaic.version = 11 : i64} {
  func.func @_conv_relu_pool_kernel(%arg0: memref<4x338x9xf32, #tpu.memory_space<vmem>>, %arg1: memref<9x32xf32, #tpu.memory_space<vmem>>, %arg2: memref<1x32xf32, #tpu.memory_space<vmem>>, %arg3: memref<338x32xf32, #tpu.memory_space<vmem>>) attributes {dimension_semantics = [], scalar_prefetch = 0 : i64, scratch_operands = 0 : i64, tpu.core_type = #tpu.core_type<tc>} {
    %c0 = arith.constant 0 : index
    %c0_0 = arith.constant 0 : index
    %0 = vector.load %arg1[%c0, %c0_0] : memref<9x32xf32, #tpu.memory_space<vmem>>, vector<9x32xf32>
    %c0_1 = arith.constant 0 : index
    %c0_2 = arith.constant 0 : index
    %1 = vector.load %arg2[%c0_1, %c0_2] : memref<1x32xf32, #tpu.memory_space<vmem>>, vector<1x32xf32>
    %c0_3 = arith.constant 0 : index
    %c0_4 = arith.constant 0 : index
    %c0_5 = arith.constant 0 : index
    %2 = vector.load %arg0[%c0_3, %c0_4, %c0_5] : memref<4x338x9xf32, #tpu.memory_space<vmem>>, vector<1x338x9xf32>
    %3 = vector.shape_cast %2 : vector<1x338x9xf32> to vector<338x9xf32>
    %cst = arith.constant dense<0.000000e+00> : vector<338x32xf32>
    %4 = tpu.matmul %3, %0, %cst {dimension_numbers = #tpu.dot_dimension_numbers<[1], [0], [0], [1], [0, 0, 1, 1], [], []>} : vector<338x9xf32>, vector<9x32xf32>, vector<338x32xf32> -> vector<338x32xf32>
    %5 = vector.broadcast %1 : vector<1x32xf32> to vector<338x32xf32>
    %6 = arith.addf %4, %5 : vector<338x32xf32>
    %cst_6 = arith.constant 0.000000e+00 : f32
    %7 = vector.broadcast %cst_6 : f32 to vector<338x32xf32>
    %8 = arith.maximumf %6, %7 : vector<338x32xf32>
    %c1 = arith.constant 1 : index
    %c0_7 = arith.constant 0 : index
    %c0_8 = arith.constant 0 : index
    %9 = vector.load %arg0[%c1, %c0_7, %c0_8] : memref<4x338x9xf32, #tpu.memory_space<vmem>>, vector<1x338x9xf32>
    %10 = vector.shape_cast %9 : vector<1x338x9xf32> to vector<338x9xf32>
    %cst_9 = arith.constant dense<0.000000e+00> : vector<338x32xf32>
    %11 = tpu.matmul %10, %0, %cst_9 {dimension_numbers = #tpu.dot_dimension_numbers<[1], [0], [0], [1], [0, 0, 1, 1], [], []>} : vector<338x9xf32>, vector<9x32xf32>, vector<338x32xf32> -> vector<338x32xf32>
    %12 = vector.broadcast %1 : vector<1x32xf32> to vector<338x32xf32>
    %13 = arith.addf %11, %12 : vector<338x32xf32>
    %cst_10 = arith.constant 0.000000e+00 : f32
    %14 = vector.broadcast %cst_10 : f32 to vector<338x32xf32>
    %15 = arith.maximumf %13, %14 : vector<338x32xf32>
    %16 = arith.maximumf %8, %15 : vector<338x32xf32>
    %c2 = arith.constant 2 : index
    %c0_11 = arith.constant 0 : index
    %c0_12 = arith.constant 0 : index
    %17 = vector.load %arg0[%c2, %c0_11, %c0_12] : memref<4x338x9xf32, #tpu.memory_space<vmem>>, vector<1x338x9xf32>
    %18 = vector.shape_cast %17 : vector<1x338x9xf32> to vector<338x9xf32>
    %cst_13 = arith.constant dense<0.000000e+00> : vector<338x32xf32>
    %19 = tpu.matmul %18, %0, %cst_13 {dimension_numbers = #tpu.dot_dimension_numbers<[1], [0], [0], [1], [0, 0, 1, 1], [], []>} : vector<338x9xf32>, vector<9x32xf32>, vector<338x32xf32> -> vector<338x32xf32>
    %20 = vector.broadcast %1 : vector<1x32xf32> to vector<338x32xf32>
    %21 = arith.addf %19, %20 : vector<338x32xf32>
    %cst_14 = arith.constant 0.000000e+00 : f32
    %22 = vector.broadcast %cst_14 : f32 to vector<338x32xf32>
    %23 = arith.maximumf %21, %22 : vector<338x32xf32>
    %24 = arith.maximumf %16, %23 : vector<338x32xf32>
    %c3 = arith.constant 3 : index
    %c0_15 = arith.constant 0 : index
    %c0_16 = arith.constant 0 : index
    %25 = vector.load %arg0[%c3, %c0_15, %c0_16] : memref<4x338x9xf32, #tpu.memory_space<vmem>>, vector<1x338x9xf32>
    %26 = vector.shape_cast %25 : vector<1x338x9xf32> to vector<338x9xf32>
    %cst_17 = arith.constant dense<0.000000e+00> : vector<338x32xf32>
    %27 = tpu.matmul %26, %0, %cst_17 {dimension_numbers = #tpu.dot_dimension_numbers<[1], [0], [0], [1], [0, 0, 1, 1], [], []>} : vector<338x9xf32>, vector<9x32xf32>, vector<338x32xf32> -> vector<338x32xf32>
    %28 = vector.broadcast %1 : vector<1x32xf32> to vector<338x32xf32>
    %29 = arith.addf %27, %28 : vector<338x32xf32>
    %cst_18 = arith.constant 0.000000e+00 : f32
    %30 = vector.broadcast %cst_18 : f32 to vector<338x32xf32>
    %31 = arith.maximumf %29, %30 : vector<338x32xf32>
    %32 = arith.maximumf %24, %31 : vector<338x32xf32>
    %c0_19 = arith.constant 0 : index
    %c0_20 = arith.constant 0 : index
    %33 = vector.load %arg3[%c0_19, %c0_20] : memref<338x32xf32, #tpu.memory_space<vmem>>, vector<338x32xf32>
    tpu.vector_store %arg3[%c0_19, %c0_20], %32 {strides = array<i32>} : memref<338x32xf32, #tpu.memory_space<vmem>>, vector<338x32xf32>,
    return
  }
}

module attributes {stable_mosaic.version = 11 : i64} {
  func.func @_conv_relu_pool_kernel(%arg0: memref<4x50x288xf32, #tpu.memory_space<vmem>>, %arg1: memref<288x32xf32, #tpu.memory_space<vmem>>, %arg2: memref<1x32xf32, #tpu.memory_space<vmem>>, %arg3: memref<50x32xf32, #tpu.memory_space<vmem>>) attributes {dimension_semantics = [], scalar_prefetch = 0 : i64, scratch_operands = 0 : i64, tpu.core_type = #tpu.core_type<tc>} {
    %c0 = arith.constant 0 : index
    %c0_0 = arith.constant 0 : index
    %0 = vector.load %arg1[%c0, %c0_0] : memref<288x32xf32, #tpu.memory_space<vmem>>, vector<288x32xf32>
    %c0_1 = arith.constant 0 : index
    %c0_2 = arith.constant 0 : index
    %1 = vector.load %arg2[%c0_1, %c0_2] : memref<1x32xf32, #tpu.memory_space<vmem>>, vector<1x32xf32>
    %c0_3 = arith.constant 0 : index
    %c0_4 = arith.constant 0 : index
    %c0_5 = arith.constant 0 : index
    %2 = vector.load %arg0[%c0_3, %c0_4, %c0_5] : memref<4x50x288xf32, #tpu.memory_space<vmem>>, vector<1x50x288xf32>
    %3 = vector.shape_cast %2 : vector<1x50x288xf32> to vector<50x288xf32>
    %cst = arith.constant dense<0.000000e+00> : vector<50x32xf32>
    %4 = tpu.matmul %3, %0, %cst {dimension_numbers = #tpu.dot_dimension_numbers<[1], [0], [0], [1], [0, 0, 1, 1], [], []>} : vector<50x288xf32>, vector<288x32xf32>, vector<50x32xf32> -> vector<50x32xf32>
    %5 = vector.broadcast %1 : vector<1x32xf32> to vector<50x32xf32>
    %6 = arith.addf %4, %5 : vector<50x32xf32>
    %cst_6 = arith.constant 0.000000e+00 : f32
    %7 = vector.broadcast %cst_6 : f32 to vector<50x32xf32>
    %8 = arith.maximumf %6, %7 : vector<50x32xf32>
    %c1 = arith.constant 1 : index
    %c0_7 = arith.constant 0 : index
    %c0_8 = arith.constant 0 : index
    %9 = vector.load %arg0[%c1, %c0_7, %c0_8] : memref<4x50x288xf32, #tpu.memory_space<vmem>>, vector<1x50x288xf32>
    %10 = vector.shape_cast %9 : vector<1x50x288xf32> to vector<50x288xf32>
    %cst_9 = arith.constant dense<0.000000e+00> : vector<50x32xf32>
    %11 = tpu.matmul %10, %0, %cst_9 {dimension_numbers = #tpu.dot_dimension_numbers<[1], [0], [0], [1], [0, 0, 1, 1], [], []>} : vector<50x288xf32>, vector<288x32xf32>, vector<50x32xf32> -> vector<50x32xf32>
    %12 = vector.broadcast %1 : vector<1x32xf32> to vector<50x32xf32>
    %13 = arith.addf %11, %12 : vector<50x32xf32>
    %cst_10 = arith.constant 0.000000e+00 : f32
    %14 = vector.broadcast %cst_10 : f32 to vector<50x32xf32>
    %15 = arith.maximumf %13, %14 : vector<50x32xf32>
    %16 = arith.maximumf %8, %15 : vector<50x32xf32>
    %c2 = arith.constant 2 : index
    %c0_11 = arith.constant 0 : index
    %c0_12 = arith.constant 0 : index
    %17 = vector.load %arg0[%c2, %c0_11, %c0_12] : memref<4x50x288xf32, #tpu.memory_space<vmem>>, vector<1x50x288xf32>
    %18 = vector.shape_cast %17 : vector<1x50x288xf32> to vector<50x288xf32>
    %cst_13 = arith.constant dense<0.000000e+00> : vector<50x32xf32>
    %19 = tpu.matmul %18, %0, %cst_13 {dimension_numbers = #tpu.dot_dimension_numbers<[1], [0], [0], [1], [0, 0, 1, 1], [], []>} : vector<50x288xf32>, vector<288x32xf32>, vector<50x32xf32> -> vector<50x32xf32>
    %20 = vector.broadcast %1 : vector<1x32xf32> to vector<50x32xf32>
    %21 = arith.addf %19, %20 : vector<50x32xf32>
    %cst_14 = arith.constant 0.000000e+00 : f32
    %22 = vector.broadcast %cst_14 : f32 to vector<50x32xf32>
    %23 = arith.maximumf %21, %22 : vector<50x32xf32>
    %24 = arith.maximumf %16, %23 : vector<50x32xf32>
    %c3 = arith.constant 3 : index
    %c0_15 = arith.constant 0 : index
    %c0_16 = arith.constant 0 : index
    %25 = vector.load %arg0[%c3, %c0_15, %c0_16] : memref<4x50x288xf32, #tpu.memory_space<vmem>>, vector<1x50x288xf32>
    %26 = vector.shape_cast %25 : vector<1x50x288xf32> to vector<50x288xf32>
    %cst_17 = arith.constant dense<0.000000e+00> : vector<50x32xf32>
    %27 = tpu.matmul %26, %0, %cst_17 {dimension_numbers = #tpu.dot_dimension_numbers<[1], [0], [0], [1], [0, 0, 1, 1], [], []>} : vector<50x288xf32>, vector<288x32xf32>, vector<50x32xf32> -> vector<50x32xf32>
    %28 = vector.broadcast %1 : vector<1x32xf32> to vector<50x32xf32>
    %29 = arith.addf %27, %28 : vector<50x32xf32>
    %cst_18 = arith.constant 0.000000e+00 : f32
    %30 = vector.broadcast %cst_18 : f32 to vector<50x32xf32>
    %31 = arith.maximumf %29, %30 : vector<50x32xf32>
    %32 = arith.maximumf %24, %31 : vector<50x32xf32>
    %c0_19 = arith.constant 0 : index
    %c0_20 = arith.constant 0 : index
    %33 = vector.load %arg3[%c0_19, %c0_20] : memref<50x32xf32, #tpu.memory_space<vmem>>, vector<50x32xf32>
    tpu.vector_store %arg3[%c0_19, %c0_20], %32 {strides = array<i32>} : memref<50x32xf32, #tpu.memory_space<vmem>>, vector<50x32xf32>,
    return
  }
}

module attributes {stable_mosaic.version = 11 : i64} {
  func.func @_latent_decoderfc_bn_kernel(%arg0: memref<2x800xf32, #tpu.memory_space<vmem>>, %arg1: memref<800x32xf32, #tpu.memory_space<vmem>>, %arg2: memref<1x32xf32, #tpu.memory_space<vmem>>, %arg3: memref<32x36xf32, #tpu.memory_space<vmem>>, %arg4: memref<1x36xf32, #tpu.memory_space<vmem>>, %arg5: memref<1x36xf32, #tpu.memory_space<vmem>>, %arg6: memref<1x36xf32, #tpu.memory_space<vmem>>, %arg7: memref<1x36xf32, #tpu.memory_space<vmem>>, %arg8: memref<1x36xf32, #tpu.memory_space<vmem>>, %arg9: memref<2x36xf32, #tpu.memory_space<vmem>>) attributes {dimension_semantics = [], scalar_prefetch = 0 : i64, scratch_operands = 0 : i64, tpu.core_type = #tpu.core_type<tc>} {
    %c0 = arith.constant 0 : index
    %c0_0 = arith.constant 0 : index
    %0 = vector.load %arg0[%c0, %c0_0] : memref<2x800xf32, #tpu.memory_space<vmem>>, vector<2x800xf32>
    %c0_1 = arith.constant 0 : index
    %c0_2 = arith.constant 0 : index
    %1 = vector.load %arg1[%c0_1, %c0_2] : memref<800x32xf32, #tpu.memory_space<vmem>>, vector<800x32xf32>
    %cst = arith.constant dense<0.000000e+00> : vector<2x32xf32>
    %2 = tpu.matmul %0, %1, %cst {dimension_numbers = #tpu.dot_dimension_numbers<[1], [0], [0], [1], [0, 0, 1, 1], [], []>} : vector<2x800xf32>, vector<800x32xf32>, vector<2x32xf32> -> vector<2x32xf32>
    %c0_3 = arith.constant 0 : index
    %c0_4 = arith.constant 0 : index
    %3 = vector.load %arg2[%c0_3, %c0_4] : memref<1x32xf32, #tpu.memory_space<vmem>>, vector<1x32xf32>
    %4 = vector.broadcast %3 : vector<1x32xf32> to vector<2x32xf32>
    %5 = arith.addf %2, %4 : vector<2x32xf32>
    %c0_5 = arith.constant 0 : index
    %c0_6 = arith.constant 0 : index
    %6 = vector.load %arg3[%c0_5, %c0_6] : memref<32x36xf32, #tpu.memory_space<vmem>>, vector<32x36xf32>
    %cst_7 = arith.constant dense<0.000000e+00> : vector<2x36xf32>
    %7 = tpu.matmul %5, %6, %cst_7 {dimension_numbers = #tpu.dot_dimension_numbers<[1], [0], [0], [1], [0, 0, 1, 1], [], []>} : vector<2x32xf32>, vector<32x36xf32>, vector<2x36xf32> -> vector<2x36xf32>
    %c0_8 = arith.constant 0 : index
    %c0_9 = arith.constant 0 : index
    %8 = vector.load %arg4[%c0_8, %c0_9] : memref<1x36xf32, #tpu.memory_space<vmem>>, vector<1x36xf32>
    %9 = vector.broadcast %8 : vector<1x36xf32> to vector<2x36xf32>
    %10 = arith.addf %7, %9 : vector<2x36xf32>
    %c0_10 = arith.constant 0 : index
    %c0_11 = arith.constant 0 : index
    %11 = vector.load %arg8[%c0_10, %c0_11] : memref<1x36xf32, #tpu.memory_space<vmem>>, vector<1x36xf32>
    %cst_12 = arith.constant 9.99999974E-6 : f32
    %12 = vector.broadcast %cst_12 : f32 to vector<1x36xf32>
    %13 = arith.addf %11, %12 : vector<1x36xf32>
    %14 = math.rsqrt %13 : vector<1x36xf32>
    %c0_13 = arith.constant 0 : index
    %c0_14 = arith.constant 0 : index
    %15 = vector.load %arg7[%c0_13, %c0_14] : memref<1x36xf32, #tpu.memory_space<vmem>>, vector<1x36xf32>
    %16 = vector.broadcast %15 : vector<1x36xf32> to vector<2x36xf32>
    %17 = arith.subf %10, %16 : vector<2x36xf32>
    %18 = vector.broadcast %14 : vector<1x36xf32> to vector<2x36xf32>
    %19 = arith.mulf %17, %18 : vector<2x36xf32>
    %c0_15 = arith.constant 0 : index
    %c0_16 = arith.constant 0 : index
    %20 = vector.load %arg5[%c0_15, %c0_16] : memref<1x36xf32, #tpu.memory_space<vmem>>, vector<1x36xf32>
    %21 = vector.broadcast %20 : vector<1x36xf32> to vector<2x36xf32>
    %22 = arith.mulf %19, %21 : vector<2x36xf32>
    %c0_17 = arith.constant 0 : index
    %c0_18 = arith.constant 0 : index
    %23 = vector.load %arg6[%c0_17, %c0_18] : memref<1x36xf32, #tpu.memory_space<vmem>>, vector<1x36xf32>
    %24 = vector.broadcast %23 : vector<1x36xf32> to vector<2x36xf32>
    %25 = arith.addf %22, %24 : vector<2x36xf32>
    %c0_19 = arith.constant 0 : index
    %c0_20 = arith.constant 0 : index
    %26 = vector.load %arg9[%c0_19, %c0_20] : memref<2x36xf32, #tpu.memory_space<vmem>>, vector<2x36xf32>
    tpu.vector_store %arg9[%c0_19, %c0_20], %25 {strides = array<i32>} : memref<2x36xf32, #tpu.memory_space<vmem>>, vector<2x36xf32>,
    return
  }
}

module attributes {stable_mosaic.version = 11 : i64} {
  func.func @_matmul_bias_relu_kernel(%arg0: memref<338x9xf32, #tpu.memory_space<vmem>>, %arg1: memref<9x32xf32, #tpu.memory_space<vmem>>, %arg2: memref<1x32xf32, #tpu.memory_space<vmem>>, %arg3: memref<338x32xf32, #tpu.memory_space<vmem>>) attributes {dimension_semantics = [], scalar_prefetch = 0 : i64, scratch_operands = 0 : i64, tpu.core_type = #tpu.core_type<tc>} {
    %c0 = arith.constant 0 : index
    %c0_0 = arith.constant 0 : index
    %0 = vector.load %arg0[%c0, %c0_0] : memref<338x9xf32, #tpu.memory_space<vmem>>, vector<338x9xf32>
    %c0_1 = arith.constant 0 : index
    %c0_2 = arith.constant 0 : index
    %1 = vector.load %arg1[%c0_1, %c0_2] : memref<9x32xf32, #tpu.memory_space<vmem>>, vector<9x32xf32>
    %cst = arith.constant dense<0.000000e+00> : vector<338x32xf32>
    %2 = tpu.matmul %0, %1, %cst {dimension_numbers = #tpu.dot_dimension_numbers<[1], [0], [0], [1], [0, 0, 1, 1], [], []>} : vector<338x9xf32>, vector<9x32xf32>, vector<338x32xf32> -> vector<338x32xf32>
    %c0_3 = arith.constant 0 : index
    %c0_4 = arith.constant 0 : index
    %3 = vector.load %arg2[%c0_3, %c0_4] : memref<1x32xf32, #tpu.memory_space<vmem>>, vector<1x32xf32>
    %4 = vector.broadcast %3 : vector<1x32xf32> to vector<338x32xf32>
    %5 = arith.addf %2, %4 : vector<338x32xf32>
    %cst_5 = arith.constant 0.000000e+00 : f32
    %6 = vector.broadcast %cst_5 : f32 to vector<338x32xf32>
    %7 = arith.maximumf %5, %6 : vector<338x32xf32>
    %c0_6 = arith.constant 0 : index
    %c0_7 = arith.constant 0 : index
    %8 = vector.load %arg3[%c0_6, %c0_7] : memref<338x32xf32, #tpu.memory_space<vmem>>, vector<338x32xf32>
    tpu.vector_store %arg3[%c0_6, %c0_7], %7 {strides = array<i32>} : memref<338x32xf32, #tpu.memory_space<vmem>>, vector<338x32xf32>,
    return
  }
}

module attributes {stable_mosaic.version = 11 : i64} {
  func.func @_matmul_bias_sigmoid_kernel(%arg0: memref<1x512xf32, #tpu.memory_space<vmem>>, %arg1: memref<512x1568xf32, #tpu.memory_space<vmem>>, %arg2: memref<1x1xf32, #tpu.memory_space<vmem>>, %arg3: memref<1x1568xf32, #tpu.memory_space<vmem>>) attributes {dimension_semantics = [], scalar_prefetch = 0 : i64, scratch_operands = 0 : i64, tpu.core_type = #tpu.core_type<tc>} {
    %c0 = arith.constant 0 : index
    %c0_0 = arith.constant 0 : index
    %0 = vector.load %arg0[%c0, %c0_0] : memref<1x512xf32, #tpu.memory_space<vmem>>, vector<1x512xf32>
    %c0_1 = arith.constant 0 : index
    %c0_2 = arith.constant 0 : index
    %1 = vector.load %arg1[%c0_1, %c0_2] : memref<512x1568xf32, #tpu.memory_space<vmem>>, vector<512x1568xf32>
    %cst = arith.constant dense<0.000000e+00> : vector<1x1568xf32>
    %2 = tpu.matmul %0, %1, %cst {dimension_numbers = #tpu.dot_dimension_numbers<[1], [0], [0], [1], [0, 0, 1, 1], [], []>} : vector<1x512xf32>, vector<512x1568xf32>, vector<1x1568xf32> -> vector<1x1568xf32>
    %c0_3 = arith.constant 0 : index
    %c0_4 = arith.constant 0 : index
    %3 = vector.load %arg2[%c0_3, %c0_4] : memref<1x1xf32, #tpu.memory_space<vmem>>, vector<1x1xf32>
    %4 = vector.broadcast %3 : vector<1x1xf32> to vector<1x1568xf32>
    %5 = arith.addf %2, %4 : vector<1x1568xf32>
    %6 = arith.negf %5 : vector<1x1568xf32>
    %7 = math.exp %6 : vector<1x1568xf32>
    %cst_5 = arith.constant 1.000000e+00 : f32
    %8 = vector.broadcast %cst_5 : f32 to vector<1x1568xf32>
    %9 = arith.addf %8, %7 : vector<1x1568xf32>
    %10 = arith.divf %8, %9 : vector<1x1568xf32>
    %c0_6 = arith.constant 0 : index
    %c0_7 = arith.constant 0 : index
    %11 = vector.load %arg3[%c0_6, %c0_7] : memref<1x1568xf32, #tpu.memory_space<vmem>>, vector<1x1568xf32>
    tpu.vector_store %arg3[%c0_6, %c0_7], %10 {strides = array<i32>} : memref<1x1568xf32, #tpu.memory_space<vmem>>, vector<1x1568xf32>,
    return
  }
}

</mosaic_0001>

<llo_original>
// kernel: cnn_ae_mnist_forward.5
$region0: #{cnn_ae_mnist_forward.5}
  #allocation0 [shape = 'u32[]', space=smem, size = 0x4, offset = 0x4, fixed_abs, tag = 'smem constant byte address 0x4 - core index']
  #allocation1 [shape = 'u32[144,128]{1,0:T(1,128)}', space=vmem, size = 0x12000, scoped, tag = 'internal scratch']
  %s0 = inlined_call_operand.vmem [shape: f32[4,338,9], index: 0, kind: input, shape index: {}]
  %s1 = inlined_call_operand.vmem [shape: f32[9,32], index: 1, kind: input, shape index: {}]
  %s2 = inlined_call_operand.hbm [shape: f32[1,32], index: 2, kind: input, shape index: {}]
  %s3 = inlined_call_operand.vmem [shape: f32[338,32], index: 3, kind: output, shape index: {}]
  %s4 = sld [smem:[#allocation0]]
  $region26: #{cnn_ae_mnist_forward.5} parent=0
    _
  %s6 = ssub.s32 1, %s4
  %s7 = scalar_select 0, %s6, %s4
  $region1: #{cnn_ae_mnist_forward.5} parent=0
    #allocation2 [shape = 'u8[512]{0}', space=vmem, size = 0x400, scoped, tag = 'input window, operand 2, single buffered']
    #allocation3 [shape = 's32[1]{0}', space=sflag, size = 0x4, scoped, tag = 'scoped memory for cnn_ae_mnist_forward.5']
    %8 = vsyncpa [#allocation3], 0
    // Predicated region
    $region2: #{cnn_ae_mnist_forward.5} parent=1 // pred_check
      _
    $region3: #{cnn_ae_mnist_forward.5} parent=1 // pred_check_branch
      %10 = sbr.rel (0) target = $region5
    $region4: #{cnn_ae_mnist_forward.5} parent=1 // pred_region
      _
    $region5: #{cnn_ae_mnist_forward.5} parent=1 // pred_fallthru
      _
    // Predicated region
    $region6: #{cnn_ae_mnist_forward.5} parent=1 // pred_check
      _
    $region7: #{cnn_ae_mnist_forward.5} parent=1 // pred_check_branch
      %12 = sbr.rel (0) target = $region9
    $region8: #{cnn_ae_mnist_forward.5} parent=1 // pred_region
      _
    $region9: #{cnn_ae_mnist_forward.5} parent=1 // pred_fallthru
      _
    // Predicated region
    $region10: #{cnn_ae_mnist_forward.5} parent=1 // pred_check
      _
    $region11: #{cnn_ae_mnist_forward.5} parent=1 // pred_check_branch
      %14 = sbr.rel (0) target = $region13
    $region12: #{cnn_ae_mnist_forward.5} parent=1 // pred_region
      %s16 = ssub.s32 16, 16
      %17 = vsyncadd [#allocation3], %s16
      %s19 = sshll.u32 [#allocation2], 4
      %s20 = int_to_ptr.vmem [resolvable:$true] %s19
      %22 = dma.hbm_to_vmem [thread:$0]  %s2, 16, %s20, [#allocation3]
    $region13: #{cnn_ae_mnist_forward.5} parent=1 // pred_fallthru
      _
    // Predicated region
    $region14: #{cnn_ae_mnist_forward.5} parent=1 // pred_check
      _
    $region15: #{cnn_ae_mnist_forward.5} parent=1 // pred_check_branch
      %24 = sbr.rel (0) target = $region17
    $region16: #{cnn_ae_mnist_forward.5} parent=1 // pred_region
      %25 = dma.done [#allocation3], 16
    $region17: #{cnn_ae_mnist_forward.5} parent=1 // pred_fallthru
      _
    %v26 = vld [vmem:[%s1] sm:$0xff]
    %v27 = vld [vmem:[%s1 + $0x8] sm:$0x1]
    %v28 = vld [vmem:[#allocation2] sm:$0x1]
    %v29 = vld [vmem:[%s0] sm:$0xff]
    %v30 = vld [vmem:[%s0 + $0x8] sm:$0xff]
    %v31 = vld [vmem:[%s0 + $0x10] sm:$0xff]
    %v32 = vld [vmem:[%s0 + $0x18] sm:$0xff]
    %v33 = vld [vmem:[%s0 + $0x20] sm:$0xff]
    %v34 = vld [vmem:[%s0 + $0x28] sm:$0xff]
    %v35 = vld [vmem:[%s0 + $0x30] sm:$0xff]
    %v36 = vld [vmem:[%s0 + $0x38] sm:$0xff]
    %v37 = vld [vmem:[%s0 + $0x40] sm:$0xff]
    %v38 = vld [vmem:[%s0 + $0x48] sm:$0xff]
    %v39 = vld [vmem:[%s0 + $0x50] sm:$0xff]
    %v40 = vld [vmem:[%s0 + $0x58] sm:$0xff]
    %v41 = vld [vmem:[%s0 + $0x60] sm:$0xff]
    %v42 = vld [vmem:[%s0 + $0x68] sm:$0xff]
    %v43 = vld [vmem:[%s0 + $0x70] sm:$0xff]
    %v44 = vld [vmem:[%s0 + $0x78] sm:$0xff]
    %v45 = vld [vmem:[%s0 + $0x80] sm:$0xff]
    %v46 = vld [vmem:[%s0 + $0x88] sm:$0xff]
    %v47 = vld [vmem:[%s0 + $0x90] sm:$0xff]
    %v48 = vld [vmem:[%s0 + $0x98] sm:$0xff]
    %v49 = vld [vmem:[%s0 + $0xa0] sm:$0xff]
    %v50 = vld [vmem:[%s0 + $0xa8] sm:$0xff]
    %v51 = vld [vmem:[%s0 + $0xb0] sm:$0xff]
    %v52 = vld [vmem:[%s0 + $0xb8] sm:$0xff]
    %v53 = vld [vmem:[%s0 + $0xc0] sm:$0xff]
    %v54 = vld [vmem:[%s0 + $0xc8] sm:$0xff]
    %v55 = vld [vmem:[%s0 + $0xd0] sm:$0xff]
    %v56 = vld [vmem:[%s0 + $0xd8] sm:$0xff]
    %v57 = vld [vmem:[%s0 + $0xe0] sm:$0xff]
    %v58 = vld [vmem:[%s0 + $0xe8] sm:$0xff]
    %v59 = vld [vmem:[%s0 + $0xf0] sm:$0xff]
    %v60 = vld [vmem:[%s0 + $0xf8] sm:$0xff]
    %v61 = vld [vmem:[%s0 + $0x100] sm:$0xff]
    %v62 = vld [vmem:[%s0 + $0x108] sm:$0xff]
    %v63 = vld [vmem:[%s0 + $0x110] sm:$0xff]
    %v64 = vld [vmem:[%s0 + $0x118] sm:$0xff]
    %v65 = vld [vmem:[%s0 + $0x120] sm:$0xff]
    %v66 = vld [vmem:[%s0 + $0x128] sm:$0xff]
    %v67 = vld [vmem:[%s0 + $0x130] sm:$0xff]
    %v68 = vld [vmem:[%s0 + $0x138] sm:$0xff]
    %v69 = vld [vmem:[%s0 + $0x140] sm:$0xff]
    %v70 = vld [vmem:[%s0 + $0x148] sm:$0xff]
    %v71 = vld [vmem:[%s0 + $0x150] sm:$0x3]
    %v73 = vlaneseq
    %v74 = vshrl.u32 %v73, 7
    %v75 = vsub.s32 0, %v74
    %v76 = vrot.slane %v28, %v75
    %vm78 = vcmask 72704
    %v80 = vsel %vm78, %v29, 0
    %v83 = vsel %vm78, %v30, 0
    %v86 = vsel %vm78, %v31, 0
    %v89 = vsel %vm78, %v32, 0
    %v92 = vsel %vm78, %v33, 0
    %v95 = vsel %vm78, %v34, 0
    %v98 = vsel %vm78, %v35, 0
    %v101 = vsel %vm78, %v36, 0
    %v104 = vsel %vm78, %v37, 0
    %v107 = vsel %vm78, %v38, 0
    %v110 = vsel %vm78, %v39, 0
    %v113 = vsel %vm78, %v40, 0
    %v116 = vsel %vm78, %v41, 0
    %v119 = vsel %vm78, %v42, 0
    %v122 = vsel %vm78, %v43, 0
    %v125 = vsel %vm78, %v44, 0
    %v128 = vsel %vm78, %v45, 0
    %v131 = vsel %vm78, %v46, 0
    %v134 = vsel %vm78, %v47, 0
    %v137 = vsel %vm78, %v48, 0
    %v140 = vsel %vm78, %v49, 0
    %v143 = vsel %vm78, %v50, 0
    %v146 = vsel %vm78, %v51, 0
    %v149 = vsel %vm78, %v52, 0
    %v152 = vsel %vm78, %v53, 0
    %v155 = vsel %vm78, %v54, 0
    %v158 = vsel %vm78, %v55, 0
    %v161 = vsel %vm78, %v56, 0
    %v164 = vsel %vm78, %v57, 0
    %v167 = vsel %vm78, %v58, 0
    %v170 = vsel %vm78, %v59, 0
    %v173 = vsel %vm78, %v60, 0
    %v176 = vsel %vm78, %v61, 0
    %v179 = vsel %vm78, %v62, 0
    %v182 = vsel %vm78, %v63, 0
    %v185 = vsel %vm78, %v64, 0
    %v188 = vsel %vm78, %v65, 0
    %v191 = vsel %vm78, %v66, 0
    %v194 = vsel %vm78, %v67, 0
    %v197 = vsel %vm78, %v68, 0
    %v200 = vsel %vm78, %v69, 0
    %v203 = vsel %vm78, %v70, 0
    %v206 = vsel %vm78, %v71, 0
    %vm208 = vcmask 1040384
    %v210 = vsel %vm208, %v27, 0
    %212 = vmatprep.subr.mxu0 0.0
    %213 = vmatpush1.msra.mxu0 %v26
    %214 = vmatprep.subr.mxu0 0.0
    %215 = vmatpush1.msra.mxu0 %v210
    %216 = vmatprep.subr.mxu0 0.0
    %217 = vmatpush1.msra.mxu0 0.0
    %218 = vmatprep.subr.mxu0 0.0
    %219 = vmatpush1.msra.mxu0 0.0
    %220 = vmatprep.subr.mxu0 0.0
    %221 = vmatpush1.msra.mxu0 0.0
    %222 = vmatprep.subr.mxu0 0.0
    %223 = vmatpush1.msra.mxu0 0.0
    %224 = vmatprep.subr.mxu0 0.0
    %225 = vmatpush1.msra.mxu0 0.0
    %226 = vmatprep.subr.mxu0 0.0
    %227 = vmatpush1.msra.mxu0 0.0
    %228 = vmatprep.subr.mxu0 0.0
    %229 = vmatpush1.msra.mxu0 0.0
    %230 = vmatprep.subr.mxu0 0.0
    %231 = vmatpush1.msra.mxu0 0.0
    %232 = vmatprep.subr.mxu0 0.0
    %233 = vmatpush1.msra.mxu0 0.0
    %234 = vmatprep.subr.mxu0 0.0
    %235 = vmatpush1.msra.mxu0 0.0
    %236 = vmatprep.subr.mxu0 0.0
    %237 = vmatpush1.msra.mxu0 0.0
    %238 = vmatprep.subr.mxu0 0.0
    %239 = vmatpush1.msra.mxu0 0.0
    %240 = vmatprep.subr.mxu0 0.0
    %241 = vmatpush1.msra.mxu0 0.0
    %242 = vmatprep.subr.mxu0 0.0
    %243 = vmatpush1.msra.mxu0 0.0
    %244 = vmatprep.subr.mxu0 0.0
    %245 = vmatpush1.msra.mxu0 0.0
    %246 = vmatprep.subr.mxu0 0.0
    %247 = vmatpush1.msra.mxu0 0.0
    %248 = vmatprep.subr.mxu0 0.0
    %249 = vmatpush1.msra.mxu0 0.0
    %250 = vmatprep.subr.mxu0 0.0
    %251 = vmatpush1.msra.mxu0 0.0
    %252 = vmatprep.subr.mxu0 0.0
    %253 = vmatpush1.msra.mxu0 0.0
    %254 = vmatprep.subr.mxu0 0.0
    %255 = vmatpush1.msra.mxu0 0.0
    %256 = vmatprep.subr.mxu0 0.0
    %257 = vmatpush1.msra.mxu0 0.0
    %258 = vmatprep.subr.mxu0 0.0
    %259 = vmatpush1.msra.mxu0 0.0
    %260 = vmatprep.subr.mxu0 0.0
    %261 = vmatpush1.msra.mxu0 0.0
    %262 = vmatprep.subr.mxu0 0.0
    %263 = vmatpush1.msra.mxu0 0.0
    %264 = vmatprep.subr.mxu0 0.0
    %265 = vmatpush1.msra.mxu0 0.0
    %266 = vmatprep.subr.mxu0 0.0
    %267 = vmatpush1.msra.mxu0 0.0
    %268 = vmatprep.subr.mxu0 0.0
    %269 = vmatpush1.msra.mxu0 0.0
    %270 = vmatprep.subr.mxu0 0.0
    %271 = vmatpush1.msra.mxu0 0.0
    %272 = vmatprep.subr.mxu0 0.0
    %273 = vmatpush1.msra.mxu0 0.0
    %274 = vmatprep.subr.mxu0 0.0
    %275 = vmatpush1.msra.mxu0 0.0
    %276 = vmatprep.mubr.f32.mxu0 0.0
    %277 = vmatmul.mubr.f32.gmra.mrb[0].mxu0 %v80
    %v278 = vpop.f32.mrb[0].mxu0
    %v279 = vadd.f32 %v76, %v278
    %v280 = vpop.f32.mrb[0].mxu0
    %281 = vmatprep.mubr.f32.mxu0 0.0
    %282 = vmatmul.mubr.f32.gmra.mrb[0].mxu0 %v83
    %v283 = vpop.f32.mrb[0].mxu0
    %v284 = vadd.f32 %v76, %v283
    %v285 = vpop.f32.mrb[0].mxu0
    %286 = vmatprep.mubr.f32.mxu0 0.0
    %287 = vmatmul.mubr.f32.gmra.mrb[0].mxu0 %v86
    %v288 = vpop.f32.mrb[0].mxu0
    %v289 = vadd.f32 %v76, %v288
    %v290 = vpop.f32.mrb[0].mxu0
    %291 = vmatprep.mubr.f32.mxu0 0.0
    %292 = vmatmul.mubr.f32.gmra.mrb[0].mxu0 %v89
    %v293 = vpop.f32.mrb[0].mxu0
    %v294 = vadd.f32 %v76, %v293
    %v295 = vpop.f32.mrb[0].mxu0
    %296 = vmatprep.mubr.f32.mxu0 0.0
    %297 = vmatmul.mubr.f32.gmra.mrb[0].mxu0 %v92
    %v298 = vpop.f32.mrb[0].mxu0
    %v299 = vadd.f32 %v76, %v298
    %v300 = vpop.f32.mrb[0].mxu0
    %301 = vmatprep.mubr.f32.mxu0 0.0
    %302 = vmatmul.mubr.f32.gmra.mrb[0].mxu0 %v95
    %v303 = vpop.f32.mrb[0].mxu0
    %v304 = vadd.f32 %v76, %v303
    %v305 = vpop.f32.mrb[0].mxu0
    %306 = vmatprep.mubr.f32.mxu0 0.0
    %307 = vmatmul.mubr.f32.gmra.mrb[0].mxu0 %v98
    %v308 = vpop.f32.mrb[0].mxu0
    %v309 = vadd.f32 %v76, %v308
    %v310 = vpop.f32.mrb[0].mxu0
    %311 = vmatprep.mubr.f32.mxu0 0.0
    %312 = vmatmul.mubr.f32.gmra.mrb[0].mxu0 %v101
    %v313 = vpop.f32.mrb[0].mxu0
    %v314 = vadd.f32 %v76, %v313
    %v315 = vpop.f32.mrb[0].mxu0
    %316 = vmatprep.mubr.f32.mxu0 0.0
    %317 = vmatmul.mubr.f32.gmra.mrb[0].mxu0 %v104
    %v318 = vpop.f32.mrb[0].mxu0
    %v319 = vadd.f32 %v76, %v318
    %v320 = vpop.f32.mrb[0].mxu0
    %321 = vmatprep.mubr.f32.mxu0 0.0
    %322 = vmatmul.mubr.f32.gmra.mrb[0].mxu0 %v107
    %v323 = vpop.f32.mrb[0].mxu0
    %v324 = vadd.f32 %v76, %v323
    %v325 = vpop.f32.mrb[0].mxu0
    %326 = vmatprep.mubr.f32.mxu0 0.0
    %327 = vmatmul.mubr.f32.gmra.mrb[0].mxu0 %v110
    %v328 = vpop.f32.mrb[0].mxu0
    %v329 = vadd.f32 %v76, %v328
    %v330 = vpop.f32.mrb[0].mxu0
    %331 = vmatprep.mubr.f32.mxu0 0.0
    %332 = vmatmul.mubr.f32.gmra.mrb[0].mxu0 %v113
    %v333 = vpop.f32.mrb[0].mxu0
    %v334 = vadd.f32 %v76, %v333
    %v335 = vpop.f32.mrb[0].mxu0
    %336 = vmatprep.mubr.f32.mxu0 0.0
    %337 = vmatmul.mubr.f32.gmra.mrb[0].mxu0 %v116
    %v338 = vpop.f32.mrb[0].mxu0
    %v339 = vadd.f32 %v76, %v338
    %v340 = vpop.f32.mrb[0].mxu0
    %341 = vmatprep.mubr.f32.mxu0 0.0
    %342 = vmatmul.mubr.f32.gmra.mrb[0].mxu0 %v119
    %v343 = vpop.f32.mrb[0].mxu0
    %v344 = vadd.f32 %v76, %v343
    %v345 = vpop.f32.mrb[0].mxu0
    %346 = vmatprep.mubr.f32.mxu0 0.0
    %347 = vmatmul.mubr.f32.gmra.mrb[0].mxu0 %v122
    %v348 = vpop.f32.mrb[0].mxu0
    %v349 = vadd.f32 %v76, %v348
    %v350 = vpop.f32.mrb[0].mxu0
    %351 = vmatprep.mubr.f32.mxu0 0.0
    %352 = vmatmul.mubr.f32.gmra.mrb[0].mxu0 %v125
    %v353 = vpop.f32.mrb[0].mxu0
    %v354 = vadd.f32 %v76, %v353
    %v355 = vpop.f32.mrb[0].mxu0
    %356 = vmatprep.mubr.f32.mxu0 0.0
    %357 = vmatmul.mubr.f32.gmra.mrb[0].mxu0 %v128
    %v358 = vpop.f32.mrb[0].mxu0
    %v359 = vadd.f32 %v76, %v358
    %v360 = vpop.f32.mrb[0].mxu0
    %361 = vmatprep.mubr.f32.mxu0 0.0
    %362 = vmatmul.mubr.f32.gmra.mrb[0].mxu0 %v131
    %v363 = vpop.f32.mrb[0].mxu0
    %v364 = vadd.f32 %v76, %v363
    %v365 = vpop.f32.mrb[0].mxu0
    %366 = vmatprep.mubr.f32.mxu0 0.0
    %367 = vmatmul.mubr.f32.gmra.mrb[0].mxu0 %v134
    %v368 = vpop.f32.mrb[0].mxu0
    %v369 = vadd.f32 %v76, %v368
    %v370 = vpop.f32.mrb[0].mxu0
    %371 = vmatprep.mubr.f32.mxu0 0.0
    %372 = vmatmul.mubr.f32.gmra.mrb[0].mxu0 %v137
    %v373 = vpop.f32.mrb[0].mxu0
    %v374 = vadd.f32 %v76, %v373
    %v375 = vpop.f32.mrb[0].mxu0
    %376 = vmatprep.mubr.f32.mxu0 0.0
    %377 = vmatmul.mubr.f32.gmra.mrb[0].mxu0 %v140
    %v378 = vpop.f32.mrb[0].mxu0
    %v379 = vadd.f32 %v76, %v378
    %v380 = vpop.f32.mrb[0].mxu0
    %381 = vmatprep.mubr.f32.mxu0 0.0
    %382 = vmatmul.mubr.f32.gmra.mrb[0].mxu0 %v143
    %v383 = vpop.f32.mrb[0].mxu0
    %v384 = vadd.f32 %v76, %v383
    %v385 = vpop.f32.mrb[0].mxu0
    %386 = vmatprep.mubr.f32.mxu0 0.0
    %387 = vmatmul.mubr.f32.gmra.mrb[0].mxu0 %v146
    %v388 = vpop.f32.mrb[0].mxu0
    %v389 = vadd.f32 %v76, %v388
    %v390 = vpop.f32.mrb[0].mxu0
    %391 = vmatprep.mubr.f32.mxu0 0.0
    %392 = vmatmul.mubr.f32.gmra.mrb[0].mxu0 %v149
    %v393 = vpop.f32.mrb[0].mxu0
    %v394 = vadd.f32 %v76, %v393
    %v395 = vpop.f32.mrb[0].mxu0
    %396 = vmatprep.mubr.f32.mxu0 0.0
    %397 = vmatmul.mubr.f32.gmra.mrb[0].mxu0 %v152
    %v398 = vpop.f32.mrb[0].mxu0
    %v399 = vadd.f32 %v76, %v398
    %v400 = vpop.f32.mrb[0].mxu0
    %401 = vmatprep.mubr.f32.mxu0 0.0
    %402 = vmatmul.mubr.f32.gmra.mrb[0].mxu0 %v155
    %v403 = vpop.f32.mrb[0].mxu0
    %v404 = vadd.f32 %v76, %v403
    %v405 = vpop.f32.mrb[0].mxu0
    %406 = vmatprep.mubr.f32.mxu0 0.0
    %407 = vmatmul.mubr.f32.gmra.mrb[0].mxu0 %v158
    %v408 = vpop.f32.mrb[0].mxu0
    %v409 = vadd.f32 %v76, %v408
    %v410 = vpop.f32.mrb[0].mxu0
    %411 = vmatprep.mubr.f32.mxu0 0.0
    %412 = vmatmul.mubr.f32.gmra.mrb[0].mxu0 %v161
    %v413 = vpop.f32.mrb[0].mxu0
    %v414 = vadd.f32 %v76, %v413
    %v415 = vpop.f32.mrb[0].mxu0
    %416 = vmatprep.mubr.f32.mxu0 0.0
    %417 = vmatmul.mubr.f32.gmra.mrb[0].mxu0 %v164
    %v418 = vpop.f32.mrb[0].mxu0
    %v419 = vadd.f32 %v76, %v418
    %v420 = vpop.f32.mrb[0].mxu0
    %421 = vmatprep.mubr.f32.mxu0 0.0
    %422 = vmatmul.mubr.f32.gmra.mrb[0].mxu0 %v167
    %v423 = vpop.f32.mrb[0].mxu0
    %v424 = vadd.f32 %v76, %v423
    %v425 = vpop.f32.mrb[0].mxu0
    %426 = vmatprep.mubr.f32.mxu0 0.0
    %427 = vmatmul.mubr.f32.gmra.mrb[0].mxu0 %v170
    %v428 = vpop.f32.mrb[0].mxu0
    %v429 = vadd.f32 %v76, %v428
    %v430 = vpop.f32.mrb[0].mxu0
    %431 = vmatprep.mubr.f32.mxu0 0.0
    %432 = vmatmul.mubr.f32.gmra.mrb[0].mxu0 %v173
    %v433 = vpop.f32.mrb[0].mxu0
    %v434 = vadd.f32 %v76, %v433
    %v435 = vpop.f32.mrb[0].mxu0
    %436 = vmatprep.mubr.f32.mxu0 0.0
    %437 = vmatmul.mubr.f32.gmra.mrb[0].mxu0 %v176
    %v438 = vpop.f32.mrb[0].mxu0
    %v439 = vadd.f32 %v76, %v438
    %v440 = vpop.f32.mrb[0].mxu0
    %441 = vmatprep.mubr.f32.mxu0 0.0
    %442 = vmatmul.mubr.f32.gmra.mrb[0].mxu0 %v179
    %v443 = vpop.f32.mrb[0].mxu0
    %v444 = vadd.f32 %v76, %v443
    %v445 = vpop.f32.mrb[0].mxu0
    %446 = vmatprep.mubr.f32.mxu0 0.0
    %447 = vmatmul.mubr.f32.gmra.mrb[0].mxu0 %v182
    %v448 = vpop.f32.mrb[0].mxu0
    %v449 = vadd.f32 %v76, %v448
    %v450 = vpop.f32.mrb[0].mxu0
    %451 = vmatprep.mubr.f32.mxu0 0.0
    %452 = vmatmul.mubr.f32.gmra.mrb[0].mxu0 %v185
    %v453 = vpop.f32.mrb[0].mxu0
    %v454 = vadd.f32 %v76, %v453
    %v455 = vpop.f32.mrb[0].mxu0
    %456 = vmatprep.mubr.f32.mxu0 0.0
    %457 = vmatmul.mubr.f32.gmra.mrb[0].mxu0 %v188
    %v458 = vpop.f32.mrb[0].mxu0
    %v459 = vadd.f32 %v76, %v458
    %v460 = vpop.f32.mrb[0].mxu0
    %461 = vmatprep.mubr.f32.mxu0 0.0
    %462 = vmatmul.mubr.f32.gmra.mrb[0].mxu0 %v191
    %v463 = vpop.f32.mrb[0].mxu0
    %v464 = vadd.f32 %v76, %v463
    %v465 = vpop.f32.mrb[0].mxu0
    %466 = vmatprep.mubr.f32.mxu0 0.0
    %467 = vmatmul.mubr.f32.gmra.mrb[0].mxu0 %v194
    %v468 = vpop.f32.mrb[0].mxu0
    %v469 = vadd.f32 %v76, %v468
    %v470 = vpop.f32.mrb[0].mxu0
    %471 = vmatprep.mubr.f32.mxu0 0.0
    %472 = vmatmul.mubr.f32.gmra.mrb[0].mxu0 %v197
    %v473 = vpop.f32.mrb[0].mxu0
    %v474 = vadd.f32 %v76, %v473
    %v475 = vpop.f32.mrb[0].mxu0
    %476 = vmatprep.mubr.f32.mxu0 0.0
    %477 = vmatmul.mubr.f32.gmra.mrb[0].mxu0 %v200
    %v478 = vpop.f32.mrb[0].mxu0
    %v479 = vadd.f32 %v76, %v478
    %v480 = vpop.f32.mrb[0].mxu0
    %481 = vmatprep.mubr.f32.mxu0 0.0
    %482 = vmatmul.mubr.f32.gmra.mrb[0].mxu0 %v203
    %v483 = vpop.f32.mrb[0].mxu0
    %v484 = vadd.f32 %v76, %v483
    %v485 = vpop.f32.mrb[0].mxu0
    %486 = vmatprep.mubr.f32.mxu0 0.0
    %487 = vmatmul.mubr.f32.gmra.mrb[0].mxu0 %v206
    %v488 = vpop.f32.mrb[0].mxu0
    %v489 = vadd.f32 %v76, %v488
    %v490 = vpop.f32.mrb[0].mxu0
    %491 = vdwg.mxu0
    %v492 = vmax.f32 %v279, 0.0
    %v493 = vmax.f32 %v284, 0.0
    %v494 = vmax.f32 %v289, 0.0
    %v495 = vmax.f32 %v294, 0.0
    %v496 = vmax.f32 %v299, 0.0
    %v497 = vmax.f32 %v304, 0.0
    %v498 = vmax.f32 %v309, 0.0
    %v499 = vmax.f32 %v314, 0.0
    %v500 = vmax.f32 %v319, 0.0
    %v501 = vmax.f32 %v324, 0.0
    %v502 = vmax.f32 %v329, 0.0
    %v503 = vmax.f32 %v334, 0.0
    %v504 = vmax.f32 %v339, 0.0
    %v505 = vmax.f32 %v344, 0.0
    %v506 = vmax.f32 %v349, 0.0
    %v507 = vmax.f32 %v354, 0.0
    %v508 = vmax.f32 %v359, 0.0
    %v509 = vmax.f32 %v364, 0.0
    %v510 = vmax.f32 %v369, 0.0
    %v511 = vmax.f32 %v374, 0.0
    %v512 = vmax.f32 %v379, 0.0
    %v513 = vmax.f32 %v384, 0.0
    %v514 = vmax.f32 %v389, 0.0
    %v515 = vmax.f32 %v394, 0.0
    %v516 = vmax.f32 %v399, 0.0
    %v517 = vmax.f32 %v404, 0.0
    %v518 = vmax.f32 %v409, 0.0
    %v519 = vmax.f32 %v414, 0.0
    %v520 = vmax.f32 %v419, 0.0
    %v521 = vmax.f32 %v424, 0.0
    %v522 = vmax.f32 %v429, 0.0
    %v523 = vmax.f32 %v434, 0.0
    %v524 = vmax.f32 %v439, 0.0
    %v525 = vmax.f32 %v444, 0.0
    %v526 = vmax.f32 %v449, 0.0
    %v527 = vmax.f32 %v454, 0.0
    %v528 = vmax.f32 %v459, 0.0
    %v529 = vmax.f32 %v464, 0.0
    %v530 = vmax.f32 %v469, 0.0
    %v531 = vmax.f32 %v474, 0.0
    %v532 = vmax.f32 %v479, 0.0
    %v533 = vmax.f32 %v484, 0.0
    %v534 = vmax.f32 %v489, 0.0
    %s535 = scalar_lea.vmem %s0, 344
    %v536 = vld [vmem:[%s535] sm:$0xff]
    %v537 = vld [vmem:[%s535 + $0x8] sm:$0xff]
    %v538 = vld [vmem:[%s535 + $0x10] sm:$0xff]
    %v539 = vld [vmem:[%s535 + $0x18] sm:$0xff]
    %v540 = vld [vmem:[%s535 + $0x20] sm:$0xff]
    %v541 = vld [vmem:[%s535 + $0x28] sm:$0xff]
    %v542 = vld [vmem:[%s535 + $0x30] sm:$0xff]
    %v543 = vld [vmem:[%s535 + $0x38] sm:$0xff]
    %v544 = vld [vmem:[%s535 + $0x40] sm:$0xff]
    %v545 = vld [vmem:[%s535 + $0x48] sm:$0xff]
    %v546 = vld [vmem:[%s535 + $0x50] sm:$0xff]
    %v547 = vld [vmem:[%s535 + $0x58] sm:$0xff]
    %v548 = vld [vmem:[%s535 + $0x60] sm:$0xff]
    %v549 = vld [vmem:[%s535 + $0x68] sm:$0xff]
    %v550 = vld [vmem:[%s535 + $0x70] sm:$0xff]
    %v551 = vld [vmem:[%s535 + $0x78] sm:$0xff]
    %v552 = vld [vmem:[%s535 + $0x80] sm:$0xff]
    %v553 = vld [vmem:[%s535 + $0x88] sm:$0xff]
    %v554 = vld [vmem:[%s535 + $0x90] sm:$0xff]
    %v555 = vld [vmem:[%s535 + $0x98] sm:$0xff]
    %v556 = vld [vmem:[%s535 + $0xa0] sm:$0xff]
    %v557 = vld [vmem:[%s535 + $0xa8] sm:$0xff]
    %v558 = vld [vmem:[%s535 + $0xb0] sm:$0xff]
    %v559 = vld [vmem:[%s535 + $0xb8] sm:$0xff]
    %v560 = vld [vmem:[%s535 + $0xc0] sm:$0xff]
    %v561 = vld [vmem:[%s535 + $0xc8] sm:$0xff]
    %v562 = vld [vmem:[%s535 + $0xd0] sm:$0xff]
    %v563 = vld [vmem:[%s535 + $0xd8] sm:$0xff]
    %v564 = vld [vmem:[%s535 + $0xe0] sm:$0xff]
    %v565 = vld [vmem:[%s535 + $0xe8] sm:$0xff]
    %v566 = vld [vmem:[%s535 + $0xf0] sm:$0xff]
    %v567 = vld [vmem:[%s535 + $0xf8] sm:$0xff]
    %v568 = vld [vmem:[%s535 + $0x100] sm:$0xff]
    %v569 = vld [vmem:[%s535 + $0x108] sm:$0xff]
    %v570 = vld [vmem:[%s535 + $0x110] sm:$0xff]
    %v571 = vld [vmem:[%s535 + $0x118] sm:$0xff]
    %v572 = vld [vmem:[%s535 + $0x120] sm:$0xff]
    %v573 = vld [vmem:[%s535 + $0x128] sm:$0xff]
    %v574 = vld [vmem:[%s535 + $0x130] sm:$0xff]
    %v575 = vld [vmem:[%s535 + $0x138] sm:$0xff]
    %v576 = vld [vmem:[%s535 + $0x140] sm:$0xff]
    %v577 = vld [vmem:[%s535 + $0x148] sm:$0xff]
    %v578 = vld [vmem:[%s535 + $0x150] sm:$0x3]
    %v580 = vsel %vm78, %v536, 0
    %v583 = vsel %vm78, %v537, 0
    %v586 = vsel %vm78, %v538, 0
    %v589 = vsel %vm78, %v539, 0
    %v592 = vsel %vm78, %v540, 0
    %v595 = vsel %vm78, %v541, 0
    %v598 = vsel %vm78, %v542, 0
    %v601 = vsel %vm78, %v543, 0
    %v604 = vsel %vm78, %v544, 0
    %v607 = vsel %vm78, %v545, 0
    %v610 = vsel %vm78, %v546, 0
    %v613 = vsel %vm78, %v547, 0
    %v616 = vsel %vm78, %v548, 0
    %v619 = vsel %vm78, %v549, 0
    %v622 = vsel %vm78, %v550, 0
    %v625 = vsel %vm78, %v551, 0
    %v628 = vsel %vm78, %v552, 0
    %v631 = vsel %vm78, %v553, 0
    %v634 = vsel %vm78, %v554, 0
    %v637 = vsel %vm78, %v555, 0
    %v640 = vsel %vm78, %v556, 0
    %v643 = vsel %vm78, %v557, 0
    %v646 = vsel %vm78, %v558, 0
    %v649 = vsel %vm78, %v559, 0
    %v652 = vsel %vm78, %v560, 0
    %v655 = vsel %vm78, %v561, 0
    %v658 = vsel %vm78, %v562, 0
    %v661 = vsel %vm78, %v563, 0
    %v664 = vsel %vm78, %v564, 0
    %v667 = vsel %vm78, %v565, 0
    %v670 = vsel %vm78, %v566, 0
    %v673 = vsel %vm78, %v567, 0
    %v676 = vsel %vm78, %v568, 0
    %v679 = vsel %vm78, %v569, 0
    %v682 = vsel %vm78, %v570, 0
    %v685 = vsel %vm78, %v571, 0
    %v688 = vsel %vm78, %v572, 0
    %v691 = vsel %vm78, %v573, 0
    %v694 = vsel %vm78, %v574, 0
    %v697 = vsel %vm78, %v575, 0
    %v700 = vsel %vm78, %v576, 0
    %v703 = vsel %vm78, %v577, 0
    %v706 = vsel %vm78, %v578, 0
    %708 = vmatprep.subr.mxu0 0.0
    %709 = vmatpush1.msra.mxu0 %v26
    %710 = vmatprep.subr.mxu0 0.0
    %711 = vmatpush1.msra.mxu0 %v210
    %712 = vmatprep.subr.mxu0 0.0
    %713 = vmatpush1.msra.mxu0 0.0
    %714 = vmatprep.subr.mxu0 0.0
    %715 = vmatpush1.msra.mxu0 0.0
    %716 = vmatprep.subr.mxu0 0.0
    %717 = vmatpush1.msra.mxu0 0.0
    %718 = vmatprep.subr.mxu0 0.0
    %719 = vmatpush1.msra.mxu0 0.0
    %720 = vmatprep.subr.mxu0 0.0
    %721 = vmatpush1.msra.mxu0 0.0
    %722 = vmatprep.subr.mxu0 0.0
    %723 = vmatpush1.msra.mxu0 0.0
    %724 = vmatprep.subr.mxu0 0.0
    %725 = vmatpush1.msra.mxu0 0.0
    %726 = vmatprep.subr.mxu0 0.0
    %727 = vmatpush1.msra.mxu0 0.0
    %728 = vmatprep.subr.mxu0 0.0
    %729 = vmatpush1.msra.mxu0 0.0
    %730 = vmatprep.subr.mxu0 0.0
    %731 = vmatpush1.msra.mxu0 0.0
    %732 = vmatprep.subr.mxu0 0.0
    %733 = vmatpush1.msra.mxu0 0.0
    %734 = vmatprep.subr.mxu0 0.0
    %735 = vmatpush1.msra.mxu0 0.0
    %736 = vmatprep.subr.mxu0 0.0
    %737 = vmatpush1.msra.mxu0 0.0
    %738 = vmatprep.subr.mxu0 0.0
    %739 = vmatpush1.msra.mxu0 0.0
    %740 = vmatprep.subr.mxu0 0.0
    %741 = vmatpush1.msra.mxu0 0.0
    %742 = vmatprep.subr.mxu0 0.0
    %743 = vmatpush1.msra.mxu0 0.0
    %744 = vmatprep.subr.mxu0 0.0
    %745 = vmatpush1.msra.mxu0 0.0
    %746 = vmatprep.subr.mxu0 0.0
    %747 = vmatpush1.msra.mxu0 0.0
    %748 = vmatprep.subr.mxu0 0.0
    %749 = vmatpush1.msra.mxu0 0.0
    %750 = vmatprep.subr.mxu0 0.0
    %751 = vmatpush1.msra.mxu0 0.0
    %752 = vmatprep.subr.mxu0 0.0
    %753 = vmatpush1.msra.mxu0 0.0
    %754 = vmatprep.subr.mxu0 0.0
    %755 = vmatpush1.msra.mxu0 0.0
    %756 = vmatprep.subr.mxu0 0.0
    %757 = vmatpush1.msra.mxu0 0.0
    %758 = vmatprep.subr.mxu0 0.0
    %759 = vmatpush1.msra.mxu0 0.0
    %760 = vmatprep.subr.mxu0 0.0
    %761 = vmatpush1.msra.mxu0 0.0
    %762 = vmatprep.subr.mxu0 0.0
    %763 = vmatpush1.msra.mxu0 0.0
    %764 = vmatprep.subr.mxu0 0.0
    %765 = vmatpush1.msra.mxu0 0.0
    %766 = vmatprep.subr.mxu0 0.0
    %767 = vmatpush1.msra.mxu0 0.0
    %768 = vmatprep.subr.mxu0 0.0
    %769 = vmatpush1.msra.mxu0 0.0
    %770 = vmatprep.subr.mxu0 0.0
    %771 = vmatpush1.msra.mxu0 0.0
    %772 = vmatprep.mubr.f32.mxu0 0.0
    %773 = vmatmul.mubr.f32.gmra.mrb[0].mxu0 %v580
    %v774 = vpop.f32.mrb[0].mxu0
    %v775 = vadd.f32 %v76, %v774
    %v776 = vpop.f32.mrb[0].mxu0
    %777 = vmatprep.mubr.f32.mxu0 0.0
    %778 = vmatmul.mubr.f32.gmra.mrb[0].mxu0 %v583
    %v779 = vpop.f32.mrb[0].mxu0
    %v780 = vadd.f32 %v76, %v779
    %v781 = vpop.f32.mrb[0].mxu0
    %782 = vmatprep.mubr.f32.mxu0 0.0
    %783 = vmatmul.mubr.f32.gmra.mrb[0].mxu0 %v586
    %v784 = vpop.f32.mrb[0].mxu0
    %v785 = vadd.f32 %v76, %v784
    %v786 = vpop.f32.mrb[0].mxu0
    %787 = vmatprep.mubr.f32.mxu0 0.0
    %788 = vmatmul.mubr.f32.gmra.mrb[0].mxu0 %v589
    %v789 = vpop.f32.mrb[0].mxu0
    %v790 = vadd.f32 %v76, %v789
    %v791 = vpop.f32.mrb[0].mxu0
    %792 = vmatprep.mubr.f32.mxu0 0.0
    %793 = vmatmul.mubr.f32.gmra.mrb[0].mxu0 %v592
    %v794 = vpop.f32.mrb[0].mxu0
    %v795 = vadd.f32 %v76, %v794
    %v796 = vpop.f32.mrb[0].mxu0
    %797 = vmatprep.mubr.f32.mxu0 0.0
    %798 = vmatmul.mubr.f32.gmra.mrb[0].mxu0 %v595
    %v799 = vpop.f32.mrb[0].mxu0
    %v800 = vadd.f32 %v76, %v799
    %v801 = vpop.f32.mrb[0].mxu0
    %802 = vmatprep.mubr.f32.mxu0 0.0
    %803 = vmatmul.mubr.f32.gmra.mrb[0].mxu0 %v598
    %v804 = vpop.f32.mrb[0].mxu0
    %v805 = vadd.f32 %v76, %v804
    %v806 = vpop.f32.mrb[0].mxu0
    %807 = vmatprep.mubr.f32.mxu0 0.0
    %808 = vmatmul.mubr.f32.gmra.mrb[0].mxu0 %v601
    %v809 = vpop.f32.mrb[0].mxu0
    %v810 = vadd.f32 %v76, %v809
    %v811 = vpop.f32.mrb[0].mxu0
    %812 = vmatprep.mubr.f32.mxu0 0.0
    %813 = vmatmul.mubr.f32.gmra.mrb[0].mxu0 %v604
    %v814 = vpop.f32.mrb[0].mxu0
    %v815 = vadd.f32 %v76, %v814
    %v816 = vpop.f32.mrb[0].mxu0
    %817 = vmatprep.mubr.f32.mxu0 0.0
    %818 = vmatmul.mubr.f32.gmra.mrb[0].mxu0 %v607
    %v819 = vpop.f32.mrb[0].mxu0
    %v820 = vadd.f32 %v76, %v819
    %v821 = vpop.f32.mrb[0].mxu0
    %822 = vmatprep.mubr.f32.mxu0 0.0
    %823 = vmatmul.mubr.f32.gmra.mrb[0].mxu0 %v610
    %v824 = vpop.f32.mrb[0].mxu0
    %v825 = vadd.f32 %v76, %v824
    %v826 = vpop.f32.mrb[0].mxu0
    %827 = vmatprep.mubr.f32.mxu0 0.0
    %828 = vmatmul.mubr.f32.gmra.mrb[0].mxu0 %v613
    %v829 = vpop.f32.mrb[0].mxu0
    %v830 = vadd.f32 %v76, %v829
    %v831 = vpop.f32.mrb[0].mxu0
    %832 = vmatprep.mubr.f32.mxu0 0.0
    %833 = vmatmul.mubr.f32.gmra.mrb[0].mxu0 %v616
    %v834 = vpop.f32.mrb[0].mxu0
    %v835 = vadd.f32 %v76, %v834
    %v836 = vpop.f32.mrb[0].mxu0
    %837 = vmatprep.mubr.f32.mxu0 0.0
    %838 = vmatmul.mubr.f32.gmra.mrb[0].mxu0 %v619
    %v839 = vpop.f32.mrb[0].mxu0
    %v840 = vadd.f32 %v76, %v839
    %v841 = vpop.f32.mrb[0].mxu0
    %842 = vmatprep.mubr.f32.mxu0 0.0
    %843 = vmatmul.mubr.f32.gmra.mrb[0].mxu0 %v622
    %v844 = vpop.f32.mrb[0].mxu0
    %v845 = vadd.f32 %v76, %v844
    %v846 = vpop.f32.mrb[0].mxu0
    %847 = vmatprep.mubr.f32.mxu0 0.0
    %848 = vmatmul.mubr.f32.gmra.mrb[0].mxu0 %v625
    %v849 = vpop.f32.mrb[0].mxu0
    %v850 = vadd.f32 %v76, %v849
    %v851 = vpop.f32.mrb[0].mxu0
    %852 = vmatprep.mubr.f32.mxu0 0.0
    %853 = vmatmul.mubr.f32.gmra.mrb[0].mxu0 %v628
    %v854 = vpop.f32.mrb[0].mxu0
    %v855 = vadd.f32 %v76, %v854
    %v856 = vpop.f32.mrb[0].mxu0
    %857 = vmatprep.mubr.f32.mxu0 0.0
    %858 = vmatmul.mubr.f32.gmra.mrb[0].mxu0 %v631
    %v859 = vpop.f32.mrb[0].mxu0
    %v860 = vadd.f32 %v76, %v859
    %v861 = vpop.f32.mrb[0].mxu0
    %862 = vmatprep.mubr.f32.mxu0 0.0
    %863 = vmatmul.mubr.f32.gmra.mrb[0].mxu0 %v634
    %v864 = vpop.f32.mrb[0].mxu0
    %v865 = vadd.f32 %v76, %v864
    %v866 = vpop.f32.mrb[0].mxu0
    %867 = vmatprep.mubr.f32.mxu0 0.0
    %868 = vmatmul.mubr.f32.gmra.mrb[0].mxu0 %v637
    %v869 = vpop.f32.mrb[0].mxu0
    %v870 = vadd.f32 %v76, %v869
    %v871 = vpop.f32.mrb[0].mxu0
    %872 = vmatprep.mubr.f32.mxu0 0.0
    %873 = vmatmul.mubr.f32.gmra.mrb[0].mxu0 %v640
    %v874 = vpop.f32.mrb[0].mxu0
    %v875 = vadd.f32 %v76, %v874
    %v876 = vpop.f32.mrb[0].mxu0
    %877 = vmatprep.mubr.f32.mxu0 0.0
    %878 = vmatmul.mubr.f32.gmra.mrb[0].mxu0 %v643
    %v879 = vpop.f32.mrb[0].mxu0
    %v880 = vadd.f32 %v76, %v879
    %v881 = vpop.f32.mrb[0].mxu0
    %882 = vmatprep.mubr.f32.mxu0 0.0
    %883 = vmatmul.mubr.f32.gmra.mrb[0].mxu0 %v646
    %v884 = vpop.f32.mrb[0].mxu0
    %v885 = vadd.f32 %v76, %v884
    %v886 = vpop.f32.mrb[0].mxu0
    %887 = vmatprep.mubr.f32.mxu0 0.0
    %888 = vmatmul.mubr.f32.gmra.mrb[0].mxu0 %v649
    %v889 = vpop.f32.mrb[0].mxu0
    %v890 = vadd.f32 %v76, %v889
    %v891 = vpop.f32.mrb[0].mxu0
    %892 = vmatprep.mubr.f32.mxu0 0.0
    %893 = vmatmul.mubr.f32.gmra.mrb[0].mxu0 %v652
    %v894 = vpop.f32.mrb[0].mxu0
    %v895 = vadd.f32 %v76, %v894
    %v896 = vpop.f32.mrb[0].mxu0
    %897 = vmatprep.mubr.f32.mxu0 0.0
    %898 = vmatmul.mubr.f32.gmra.mrb[0].mxu0 %v655
    %v899 = vpop.f32.mrb[0].mxu0
    %v900 = vadd.f32 %v76, %v899
    %v901 = vpop.f32.mrb[0].mxu0
    %902 = vmatprep.mubr.f32.mxu0 0.0
    %903 = vmatmul.mubr.f32.gmra.mrb[0].mxu0 %v658
    %v904 = vpop.f32.mrb[0].mxu0
    %v905 = vadd.f32 %v76, %v904
    %v906 = vpop.f32.mrb[0].mxu0
    %907 = vmatprep.mubr.f32.mxu0 0.0
    %908 = vmatmul.mubr.f32.gmra.mrb[0].mxu0 %v661
    %v909 = vpop.f32.mrb[0].mxu0
    %v910 = vadd.f32 %v76, %v909
    %v911 = vpop.f32.mrb[0].mxu0
    %912 = vmatprep.mubr.f32.mxu0 0.0
    %913 = vmatmul.mubr.f32.gmra.mrb[0].mxu0 %v664
    %v914 = vpop.f32.mrb[0].mxu0
    %v915 = vadd.f32 %v76, %v914
    %v916 = vpop.f32.mrb[0].mxu0
    %917 = vmatprep.mubr.f32.mxu0 0.0
    %918 = vmatmul.mubr.f32.gmra.mrb[0].mxu0 %v667
    %v919 = vpop.f32.mrb[0].mxu0
    %v920 = vadd.f32 %v76, %v919
    %v921 = vpop.f32.mrb[0].mxu0
    %922 = vmatprep.mubr.f32.mxu0 0.0
    %923 = vmatmul.mubr.f32.gmra.mrb[0].mxu0 %v670
    %v924 = vpop.f32.mrb[0].mxu0
    %v925 = vadd.f32 %v76, %v924
    %v926 = vpop.f32.mrb[0].mxu0
    %927 = vmatprep.mubr.f32.mxu0 0.0
    %928 = vmatmul.mubr.f32.gmra.mrb[0].mxu0 %v673
    %v929 = vpop.f32.mrb[0].mxu0
    %v930 = vadd.f32 %v76, %v929
    %v931 = vpop.f32.mrb[0].mxu0
    %932 = vmatprep.mubr.f32.mxu0 0.0
    %933 = vmatmul.mubr.f32.gmra.mrb[0].mxu0 %v676
    %v934 = vpop.f32.mrb[0].mxu0
    %v935 = vadd.f32 %v76, %v934
    %v936 = vpop.f32.mrb[0].mxu0
    %937 = vmatprep.mubr.f32.mxu0 0.0
    %938 = vmatmul.mubr.f32.gmra.mrb[0].mxu0 %v679
    %v939 = vpop.f32.mrb[0].mxu0
    %v940 = vadd.f32 %v76, %v939
    %v941 = vpop.f32.mrb[0].mxu0
    %942 = vmatprep.mubr.f32.mxu0 0.0
    %943 = vmatmul.mubr.f32.gmra.mrb[0].mxu0 %v682
    %v944 = vpop.f32.mrb[0].mxu0
    %v945 = vadd.f32 %v76, %v944
    %v946 = vpop.f32.mrb[0].mxu0
    %947 = vmatprep.mubr.f32.mxu0 0.0
    %948 = vmatmul.mubr.f32.gmra.mrb[0].mxu0 %v685
    %v949 = vpop.f32.mrb[0].mxu0
    %v950 = vadd.f32 %v76, %v949
    %v951 = vpop.f32.mrb[0].mxu0
    %952 = vmatprep.mubr.f32.mxu0 0.0
    %953 = vmatmul.mubr.f32.gmra.mrb[0].mxu0 %v688
    %v954 = vpop.f32.mrb[0].mxu0
    %v955 = vadd.f32 %v76, %v954
    %v956 = vpop.f32.mrb[0].mxu0
    %957 = vmatprep.mubr.f32.mxu0 0.0
    %958 = vmatmul.mubr.f32.gmra.mrb[0].mxu0 %v691
    %v959 = vpop.f32.mrb[0].mxu0
    %v960 = vadd.f32 %v76, %v959
    %v961 = vpop.f32.mrb[0].mxu0
    %962 = vmatprep.mubr.f32.mxu0 0.0
    %963 = vmatmul.mubr.f32.gmra.mrb[0].mxu0 %v694
    %v964 = vpop.f32.mrb[0].mxu0
    %v965 = vadd.f32 %v76, %v964
    %v966 = vpop.f32.mrb[0].mxu0
    %967 = vmatprep.mubr.f32.mxu0 0.0
    %968 = vmatmul.mubr.f32.gmra.mrb[0].mxu0 %v697
    %v969 = vpop.f32.mrb[0].mxu0
    %v970 = vadd.f32 %v76, %v969
    %v971 = vpop.f32.mrb[0].mxu0
    %972 = vmatprep.mubr.f32.mxu0 0.0
    %973 = vmatmul.mubr.f32.gmra.mrb[0].mxu0 %v700
    %v974 = vpop.f32.mrb[0].mxu0
    %v975 = vadd.f32 %v76, %v974
    %v976 = vpop.f32.mrb[0].mxu0
    %977 = vmatprep.mubr.f32.mxu0 0.0
    %978 = vmatmul.mubr.f32.gmra.mrb[0].mxu0 %v703
    %v979 = vpop.f32.mrb[0].mxu0
    %v980 = vadd.f32 %v76, %v979
    %v981 = vpop.f32.mrb[0].mxu0
    %982 = vmatprep.mubr.f32.mxu0 0.0
    %983 = vmatmul.mubr.f32.gmra.mrb[0].mxu0 %v706
    %v984 = vpop.f32.mrb[0].mxu0
    %v985 = vadd.f32 %v76, %v984
    %v986 = vpop.f32.mrb[0].mxu0
    %987 = vdwg.mxu0
    %v988 = vmax.f32 %v775, 0.0
    %v989 = vmax.f32 %v780, 0.0
    %v990 = vmax.f32 %v785, 0.0
    %v991 = vmax.f32 %v790, 0.0
    %v992 = vmax.f32 %v795, 0.0
    %v993 = vmax.f32 %v800, 0.0
    %v994 = vmax.f32 %v805, 0.0
    %v995 = vmax.f32 %v810, 0.0
    %v996 = vmax.f32 %v815, 0.0
    %v997 = vmax.f32 %v820, 0.0
    %v998 = vmax.f32 %v825, 0.0
    %v999 = vmax.f32 %v830, 0.0
    %v1000 = vmax.f32 %v835, 0.0
    %v1001 = vmax.f32 %v840, 0.0
    %v1002 = vmax.f32 %v845, 0.0
    %v1003 = vmax.f32 %v850, 0.0
    %v1004 = vmax.f32 %v855, 0.0
    %v1005 = vmax.f32 %v860, 0.0
    %v1006 = vmax.f32 %v865, 0.0
    %v1007 = vmax.f32 %v870, 0.0
    %v1008 = vmax.f32 %v875, 0.0
    %v1009 = vmax.f32 %v880, 0.0
    %v1010 = vmax.f32 %v885, 0.0
    %v1011 = vmax.f32 %v890, 0.0
    %v1012 = vmax.f32 %v895, 0.0
    %v1013 = vmax.f32 %v900, 0.0
    %v1014 = vmax.f32 %v905, 0.0
    %v1015 = vmax.f32 %v910, 0.0
    %v1016 = vmax.f32 %v915, 0.0
    %v1017 = vmax.f32 %v920, 0.0
    %v1018 = vmax.f32 %v925, 0.0
    %v1019 = vmax.f32 %v930, 0.0
    %v1020 = vmax.f32 %v935, 0.0
    %v1021 = vmax.f32 %v940, 0.0
    %v1022 = vmax.f32 %v945, 0.0
    %v1023 = vmax.f32 %v950, 0.0
    %v1024 = vmax.f32 %v955, 0.0
    %v1025 = vmax.f32 %v960, 0.0
    %v1026 = vmax.f32 %v965, 0.0
    %v1027 = vmax.f32 %v970, 0.0
    %v1028 = vmax.f32 %v975, 0.0
    %v1029 = vmax.f32 %v980, 0.0
    %v1030 = vmax.f32 %v985, 0.0
    %v1031 = vmax.f32 %v492, %v988
    %v1032 = vmax.f32 %v493, %v989
    %v1033 = vmax.f32 %v494, %v990
    %v1034 = vmax.f32 %v495, %v991
    %v1035 = vmax.f32 %v496, %v992
    %v1036 = vmax.f32 %v497, %v993
    %v1037 = vmax.f32 %v498, %v994
    %v1038 = vmax.f32 %v499, %v995
    %v1039 = vmax.f32 %v500, %v996
    %v1040 = vmax.f32 %v501, %v997
    %v1041 = vmax.f32 %v502, %v998
    %v1042 = vmax.f32 %v503, %v999
    %v1043 = vmax.f32 %v504, %v1000
    %v1044 = vmax.f32 %v505, %v1001
    %v1045 = vmax.f32 %v506, %v1002
    %v1046 = vmax.f32 %v507, %v1003
    %v1047 = vmax.f32 %v508, %v1004
    %v1048 = vmax.f32 %v509, %v1005
    %v1049 = vmax.f32 %v510, %v1006
    %v1050 = vmax.f32 %v511, %v1007
    %v1051 = vmax.f32 %v512, %v1008
    %v1052 = vmax.f32 %v513, %v1009
    %v1053 = vmax.f32 %v514, %v1010
    %v1054 = vmax.f32 %v515, %v1011
    %v1055 = vmax.f32 %v516, %v1012
    %v1056 = vmax.f32 %v517, %v1013
    %v1057 = vmax.f32 %v518, %v1014
    %v1058 = vmax.f32 %v519, %v1015
    %v1059 = vmax.f32 %v520, %v1016
    %v1060 = vmax.f32 %v521, %v1017
    %v1061 = vmax.f32 %v522, %v1018
    %v1062 = vmax.f32 %v523, %v1019
    %v1063 = vmax.f32 %v524, %v1020
    %v1064 = vmax.f32 %v525, %v1021
    %v1065 = vmax.f32 %v526, %v1022
    %v1066 = vmax.f32 %v527, %v1023
    %v1067 = vmax.f32 %v528, %v1024
    %v1068 = vmax.f32 %v529, %v1025
    %v1069 = vmax.f32 %v530, %v1026
    %v1070 = vmax.f32 %v531, %v1027
    %v1071 = vmax.f32 %v532, %v1028
    %v1072 = vmax.f32 %v533, %v1029
    %v1073 = vmax.f32 %v534, %v1030
    %s1074 = scalar_lea.vmem %s0, 688
    %v1075 = vld [vmem:[%s1074] sm:$0xff]
    %v1076 = vld [vmem:[%s1074 + $0x8] sm:$0xff]
    %v1077 = vld [vmem:[%s1074 + $0x10] sm:$0xff]
    %v1078 = vld [vmem:[%s1074 + $0x18] sm:$0xff]
    %v1079 = vld [vmem:[%s1074 + $0x20] sm:$0xff]
    %v1080 = vld [vmem:[%s1074 + $0x28] sm:$0xff]
    %v1081 = vld [vmem:[%s1074 + $0x30] sm:$0xff]
    %v1082 = vld [vmem:[%s1074 + $0x38] sm:$0xff]
    %v1083 = vld [vmem:[%s1074 + $0x40] sm:$0xff]
    %v1084 = vld [vmem:[%s1074 + $0x48] sm:$0xff]
    %v1085 = vld [vmem:[%s1074 + $0x50] sm:$0xff]
    %v1086 = vld [vmem:[%s1074 + $0x58] sm:$0xff]
    %v1087 = vld [vmem:[%s1074 + $0x60] sm:$0xff]
    %v1088 = vld [vmem:[%s1074 + $0x68] sm:$0xff]
    %v1089 = vld [vmem:[%s1074 + $0x70] sm:$0xff]
    %v1090 = vld [vmem:[%s1074 + $0x78] sm:$0xff]
    %v1091 = vld [vmem:[%s1074 + $0x80] sm:$0xff]
    %v1092 = vld [vmem:[%s1074 + $0x88] sm:$0xff]
    %v1093 = vld [vmem:[%s1074 + $0x90] sm:$0xff]
    %v1094 = vld [vmem:[%s1074 + $0x98] sm:$0xff]
    %v1095 = vld [vmem:[%s1074 + $0xa0] sm:$0xff]
    %v1096 = vld [vmem:[%s1074 + $0xa8] sm:$0xff]
    %v1097 = vld [vmem:[%s1074 + $0xb0] sm:$0xff]
    %v1098 = vld [vmem:[%s1074 + $0xb8] sm:$0xff]
    %v1099 = vld [vmem:[%s1074 + $0xc0] sm:$0xff]
    %v1100 = vld [vmem:[%s1074 + $0xc8] sm:$0xff]
    %v1101 = vld [vmem:[%s1074 + $0xd0] sm:$0xff]
    %v1102 = vld [vmem:[%s1074 + $0xd8] sm:$0xff]
    %v1103 = vld [vmem:[%s1074 + $0xe0] sm:$0xff]
    %v1104 = vld [vmem:[%s1074 + $0xe8] sm:$0xff]
    %v1105 = vld [vmem:[%s1074 + $0xf0] sm:$0xff]
    %v1106 = vld [vmem:[%s1074 + $0xf8] sm:$0xff]
    %v1107 = vld [vmem:[%s1074 + $0x100] sm:$0xff]
    %v1108 = vld [vmem:[%s1074 + $0x108] sm:$0xff]
    %v1109 = vld [vmem:[%s1074 + $0x110] sm:$0xff]
    %v1110 = vld [vmem:[%s1074 + $0x118] sm:$0xff]
    %v1111 = vld [vmem:[%s1074 + $0x120] sm:$0xff]
    %v1112 = vld [vmem:[%s1074 + $0x128] sm:$0xff]
    %v1113 = vld [vmem:[%s1074 + $0x130] sm:$0xff]
    %v1114 = vld [vmem:[%s1074 + $0x138] sm:$0xff]
    %v1115 = vld [vmem:[%s1074 + $0x140] sm:$0xff]
    %v1116 = vld [vmem:[%s1074 + $0x148] sm:$0xff]
    %v1117 = vld [vmem:[%s1074 + $0x150] sm:$0x3]
    %v1119 = vsel %vm78, %v1075, 0
    %v1122 = vsel %vm78, %v1076, 0
    %v1125 = vsel %vm78, %v1077, 0
    %v1128 = vsel %vm78, %v1078, 0
    %v1131 = vsel %vm78, %v1079, 0
    %v1134 = vsel %vm78, %v1080, 0
    %v1137 = vsel %vm78, %v1081, 0
    %v1140 = vsel %vm78, %v1082, 0
    %v1143 = vsel %vm78, %v1083, 0
    %v1146 = vsel %vm78, %v1084, 0
    %v1149 = vsel %vm78, %v1085, 0
    %v1152 = vsel %vm78, %v1086, 0
    %v1155 = vsel %vm78, %v1087, 0
    %v1158 = vsel %vm78, %v1088, 0
    %v1161 = vsel %vm78, %v1089, 0
    %v1164 = vsel %vm78, %v1090, 0
    %v1167 = vsel %vm78, %v1091, 0
    %v1170 = vsel %vm78, %v1092, 0
    %v1173 = vsel %vm78, %v1093, 0
    %v1176 = vsel %vm78, %v1094, 0
    %v1179 = vsel %vm78, %v1095, 0
    %v1182 = vsel %vm78, %v1096, 0
    %v1185 = vsel %vm78, %v1097, 0
    %v1188 = vsel %vm78, %v1098, 0
    %v1191 = vsel %vm78, %v1099, 0
    %v1194 = vsel %vm78, %v1100, 0
    %v1197 = vsel %vm78, %v1101, 0
    %v1200 = vsel %vm78, %v1102, 0
    %v1203 = vsel %vm78, %v1103, 0
    %v1206 = vsel %vm78, %v1104, 0
    %v1209 = vsel %vm78, %v1105, 0
    %v1212 = vsel %vm78, %v1106, 0
    %v1215 = vsel %vm78, %v1107, 0
    %v1218 = vsel %vm78, %v1108, 0
    %v1221 = vsel %vm78, %v1109, 0
    %v1224 = vsel %vm78, %v1110, 0
    %v1227 = vsel %vm78, %v1111, 0
    %v1230 = vsel %vm78, %v1112, 0
    %v1233 = vsel %vm78, %v1113, 0
    %v1236 = vsel %vm78, %v1114, 0
    %v1239 = vsel %vm78, %v1115, 0
    %v1242 = vsel %vm78, %v1116, 0
    %v1245 = vsel %vm78, %v1117, 0
    %1247 = vmatprep.subr.mxu0 0.0
    %1248 = vmatpush1.msra.mxu0 %v26
    %1249 = vmatprep.subr.mxu0 0.0
    %1250 = vmatpush1.msra.mxu0 %v210
    %1251 = vmatprep.subr.mxu0 0.0
    %1252 = vmatpush1.msra.mxu0 0.0
    %1253 = vmatprep.subr.mxu0 0.0
    %1254 = vmatpush1.msra.mxu0 0.0
    %1255 = vmatprep.subr.mxu0 0.0
    %1256 = vmatpush1.msra.mxu0 0.0
    %1257 = vmatprep.subr.mxu0 0.0
    %1258 = vmatpush1.msra.mxu0 0.0
    %1259 = vmatprep.subr.mxu0 0.0
    %1260 = vmatpush1.msra.mxu0 0.0
    %1261 = vmatprep.subr.mxu0 0.0
    %1262 = vmatpush1.msra.mxu0 0.0
    %1263 = vmatprep.subr.mxu0 0.0
    %1264 = vmatpush1.msra.mxu0 0.0
    %1265 = vmatprep.subr.mxu0 0.0
    %1266 = vmatpush1.msra.mxu0 0.0
    %1267 = vmatprep.subr.mxu0 0.0
    %1268 = vmatpush1.msra.mxu0 0.0
    %1269 = vmatprep.subr.mxu0 0.0
    %1270 = vmatpush1.msra.mxu0 0.0
    %1271 = vmatprep.subr.mxu0 0.0
    %1272 = vmatpush1.msra.mxu0 0.0
    %1273 = vmatprep.subr.mxu0 0.0
    %1274 = vmatpush1.msra.mxu0 0.0
    %1275 = vmatprep.subr.mxu0 0.0
    %1276 = vmatpush1.msra.mxu0 0.0
    %1277 = vmatprep.subr.mxu0 0.0
    %1278 = vmatpush1.msra.mxu0 0.0
    %1279 = vmatprep.subr.mxu0 0.0
    %1280 = vmatpush1.msra.mxu0 0.0
    %1281 = vmatprep.subr.mxu0 0.0
    %1282 = vmatpush1.msra.mxu0 0.0
    %1283 = vmatprep.subr.mxu0 0.0
    %1284 = vmatpush1.msra.mxu0 0.0
    %1285 = vmatprep.subr.mxu0 0.0
    %1286 = vmatpush1.msra.mxu0 0.0
    %1287 = vmatprep.subr.mxu0 0.0
    %1288 = vmatpush1.msra.mxu0 0.0
    %1289 = vmatprep.subr.mxu0 0.0
    %1290 = vmatpush1.msra.mxu0 0.0
    %1291 = vmatprep.subr.mxu0 0.0
    %1292 = vmatpush1.msra.mxu0 0.0
    %1293 = vmatprep.subr.mxu0 0.0
    %1294 = vmatpush1.msra.mxu0 0.0
    %1295 = vmatprep.subr.mxu0 0.0
    %1296 = vmatpush1.msra.mxu0 0.0
    %1297 = vmatprep.subr.mxu0 0.0
    %1298 = vmatpush1.msra.mxu0 0.0
    %1299 = vmatprep.subr.mxu0 0.0
    %1300 = vmatpush1.msra.mxu0 0.0
    %1301 = vmatprep.subr.mxu0 0.0
    %1302 = vmatpush1.msra.mxu0 0.0
    %1303 = vmatprep.subr.mxu0 0.0
    %1304 = vmatpush1.msra.mxu0 0.0
    %1305 = vmatprep.subr.mxu0 0.0
    %1306 = vmatpush1.msra.mxu0 0.0
    %1307 = vmatprep.subr.mxu0 0.0
    %1308 = vmatpush1.msra.mxu0 0.0
    %1309 = vmatprep.subr.mxu0 0.0
    %1310 = vmatpush1.msra.mxu0 0.0
    %1311 = vmatprep.mubr.f32.mxu0 0.0
    %1312 = vmatmul.mubr.f32.gmra.mrb[0].mxu0 %v1119
    %v1313 = vpop.f32.mrb[0].mxu0
    %v1314 = vadd.f32 %v76, %v1313
    %v1315 = vpop.f32.mrb[0].mxu0
    %1316 = vmatprep.mubr.f32.mxu0 0.0
    %1317 = vmatmul.mubr.f32.gmra.mrb[0].mxu0 %v1122
    %v1318 = vpop.f32.mrb[0].mxu0
    %v1319 = vadd.f32 %v76, %v1318
    %v1320 = vpop.f32.mrb[0].mxu0
    %1321 = vmatprep.mubr.f32.mxu0 0.0
    %1322 = vmatmul.mubr.f32.gmra.mrb[0].mxu0 %v1125
    %v1323 = vpop.f32.mrb[0].mxu0
    %v1324 = vadd.f32 %v76, %v1323
    %v1325 = vpop.f32.mrb[0].mxu0
    %1326 = vmatprep.mubr.f32.mxu0 0.0
    %1327 = vmatmul.mubr.f32.gmra.mrb[0].mxu0 %v1128
    %v1328 = vpop.f32.mrb[0].mxu0
    %v1329 = vadd.f32 %v76, %v1328
    %v1330 = vpop.f32.mrb[0].mxu0
    %1331 = vmatprep.mubr.f32.mxu0 0.0
    %1332 = vmatmul.mubr.f32.gmra.mrb[0].mxu0 %v1131
    %v1333 = vpop.f32.mrb[0].mxu0
    %v1334 = vadd.f32 %v76, %v1333
    %v1335 = vpop.f32.mrb[0].mxu0
    %1336 = vmatprep.mubr.f32.mxu0 0.0
    %1337 = vmatmul.mubr.f32.gmra.mrb[0].mxu0 %v1134
    %v1338 = vpop.f32.mrb[0].mxu0
    %v1339 = vadd.f32 %v76, %v1338
    %v1340 = vpop.f32.mrb[0].mxu0
    %1341 = vmatprep.mubr.f32.mxu0 0.0
    %1342 = vmatmul.mubr.f32.gmra.mrb[0].mxu0 %v1137
    %v1343 = vpop.f32.mrb[0].mxu0
    %v1344 = vadd.f32 %v76, %v1343
    %v1345 = vpop.f32.mrb[0].mxu0
    %1346 = vmatprep.mubr.f32.mxu0 0.0
    %1347 = vmatmul.mubr.f32.gmra.mrb[0].mxu0 %v1140
    %v1348 = vpop.f32.mrb[0].mxu0
    %v1349 = vadd.f32 %v76, %v1348
    %v1350 = vpop.f32.mrb[0].mxu0
    %1351 = vmatprep.mubr.f32.mxu0 0.0
    %1352 = vmatmul.mubr.f32.gmra.mrb[0].mxu0 %v1143
    %v1353 = vpop.f32.mrb[0].mxu0
    %v1354 = vadd.f32 %v76, %v1353
    %v1355 = vpop.f32.mrb[0].mxu0
    %1356 = vmatprep.mubr.f32.mxu0 0.0
    %1357 = vmatmul.mubr.f32.gmra.mrb[0].mxu0 %v1146
    %v1358 = vpop.f32.mrb[0].mxu0
    %v1359 = vadd.f32 %v76, %v1358
    %v1360 = vpop.f32.mrb[0].mxu0
    %1361 = vmatprep.mubr.f32.mxu0 0.0
    %1362 = vmatmul.mubr.f32.gmra.mrb[0].mxu0 %v1149
    %v1363 = vpop.f32.mrb[0].mxu0
    %v1364 = vadd.f32 %v76, %v1363
    %v1365 = vpop.f32.mrb[0].mxu0
    %1366 = vmatprep.mubr.f32.mxu0 0.0
    %1367 = vmatmul.mubr.f32.gmra.mrb[0].mxu0 %v1152
    %v1368 = vpop.f32.mrb[0].mxu0
    %v1369 = vadd.f32 %v76, %v1368
    %v1370 = vpop.f32.mrb[0].mxu0
    %1371 = vmatprep.mubr.f32.mxu0 0.0
    %1372 = vmatmul.mubr.f32.gmra.mrb[0].mxu0 %v1155
    %v1373 = vpop.f32.mrb[0].mxu0
    %v1374 = vadd.f32 %v76, %v1373
    %v1375 = vpop.f32.mrb[0].mxu0
    %1376 = vmatprep.mubr.f32.mxu0 0.0
    %1377 = vmatmul.mubr.f32.gmra.mrb[0].mxu0 %v1158
    %v1378 = vpop.f32.mrb[0].mxu0
    %v1379 = vadd.f32 %v76, %v1378
    %v1380 = vpop.f32.mrb[0].mxu0
    %1381 = vmatprep.mubr.f32.mxu0 0.0
    %1382 = vmatmul.mubr.f32.gmra.mrb[0].mxu0 %v1161
    %v1383 = vpop.f32.mrb[0].mxu0
    %v1384 = vadd.f32 %v76, %v1383
    %v1385 = vpop.f32.mrb[0].mxu0
    %1386 = vmatprep.mubr.f32.mxu0 0.0
    %1387 = vmatmul.mubr.f32.gmra.mrb[0].mxu0 %v1164
    %v1388 = vpop.f32.mrb[0].mxu0
    %v1389 = vadd.f32 %v76, %v1388
    %v1390 = vpop.f32.mrb[0].mxu0
    %1391 = vmatprep.mubr.f32.mxu0 0.0
    %1392 = vmatmul.mubr.f32.gmra.mrb[0].mxu0 %v1167
    %v1393 = vpop.f32.mrb[0].mxu0
    %v1394 = vadd.f32 %v76, %v1393
    %v1395 = vpop.f32.mrb[0].mxu0
    %1396 = vmatprep.mubr.f32.mxu0 0.0
    %1397 = vmatmul.mubr.f32.gmra.mrb[0].mxu0 %v1170
    %v1398 = vpop.f32.mrb[0].mxu0
    %v1399 = vadd.f32 %v76, %v1398
    %v1400 = vpop.f32.mrb[0].mxu0
    %1401 = vmatprep.mubr.f32.mxu0 0.0
    %1402 = vmatmul.mubr.f32.gmra.mrb[0].mxu0 %v1173
    %v1403 = vpop.f32.mrb[0].mxu0
    %v1404 = vadd.f32 %v76, %v1403
    %v1405 = vpop.f32.mrb[0].mxu0
    %1406 = vmatprep.mubr.f32.mxu0 0.0
    %1407 = vmatmul.mubr.f32.gmra.mrb[0].mxu0 %v1176
    %v1408 = vpop.f32.mrb[0].mxu0
    %v1409 = vadd.f32 %v76, %v1408
    %v1410 = vpop.f32.mrb[0].mxu0
    %1411 = vmatprep.mubr.f32.mxu0 0.0
    %1412 = vmatmul.mubr.f32.gmra.mrb[0].mxu0 %v1179
    %v1413 = vpop.f32.mrb[0].mxu0
    %v1414 = vadd.f32 %v76, %v1413
    %v1415 = vpop.f32.mrb[0].mxu0
    %1416 = vmatprep.mubr.f32.mxu0 0.0
    %1417 = vmatmul.mubr.f32.gmra.mrb[0].mxu0 %v1182
    %v1418 = vpop.f32.mrb[0].mxu0
    %v1419 = vadd.f32 %v76, %v1418
    %v1420 = vpop.f32.mrb[0].mxu0
    %1421 = vmatprep.mubr.f32.mxu0 0.0
    %1422 = vmatmul.mubr.f32.gmra.mrb[0].mxu0 %v1185
    %v1423 = vpop.f32.mrb[0].mxu0
    %v1424 = vadd.f32 %v76, %v1423
    %v1425 = vpop.f32.mrb[0].mxu0
    %1426 = vmatprep.mubr.f32.mxu0 0.0
    %1427 = vmatmul.mubr.f32.gmra.mrb[0].mxu0 %v1188
    %v1428 = vpop.f32.mrb[0].mxu0
    %v1429 = vadd.f32 %v76, %v1428
    %v1430 = vpop.f32.mrb[0].mxu0
    %1431 = vmatprep.mubr.f32.mxu0 0.0
    %1432 = vmatmul.mubr.f32.gmra.mrb[0].mxu0 %v1191
    %v1433 = vpop.f32.mrb[0].mxu0
    %v1434 = vadd.f32 %v76, %v1433
    %v1435 = vpop.f32.mrb[0].mxu0
    %1436 = vmatprep.mubr.f32.mxu0 0.0
    %1437 = vmatmul.mubr.f32.gmra.mrb[0].mxu0 %v1194
    %v1438 = vpop.f32.mrb[0].mxu0
    %v1439 = vadd.f32 %v76, %v1438
    %v1440 = vpop.f32.mrb[0].mxu0
    %1441 = vmatprep.mubr.f32.mxu0 0.0
    %1442 = vmatmul.mubr.f32.gmra.mrb[0].mxu0 %v1197
    %v1443 = vpop.f32.mrb[0].mxu0
    %v1444 = vadd.f32 %v76, %v1443
    %v1445 = vpop.f32.mrb[0].mxu0
    %1446 = vmatprep.mubr.f32.mxu0 0.0
    %1447 = vmatmul.mubr.f32.gmra.mrb[0].mxu0 %v1200
    %v1448 = vpop.f32.mrb[0].mxu0
    %v1449 = vadd.f32 %v76, %v1448
    %v1450 = vpop.f32.mrb[0].mxu0
    %1451 = vmatprep.mubr.f32.mxu0 0.0
    %1452 = vmatmul.mubr.f32.gmra.mrb[0].mxu0 %v1203
    %v1453 = vpop.f32.mrb[0].mxu0
    %v1454 = vadd.f32 %v76, %v1453
    %v1455 = vpop.f32.mrb[0].mxu0
    %1456 = vmatprep.mubr.f32.mxu0 0.0
    %1457 = vmatmul.mubr.f32.gmra.mrb[0].mxu0 %v1206
    %v1458 = vpop.f32.mrb[0].mxu0
    %v1459 = vadd.f32 %v76, %v1458
    %v1460 = vpop.f32.mrb[0].mxu0
    %1461 = vmatprep.mubr.f32.mxu0 0.0
    %1462 = vmatmul.mubr.f32.gmra.mrb[0].mxu0 %v1209
    %v1463 = vpop.f32.mrb[0].mxu0
    %v1464 = vadd.f32 %v76, %v1463
    %v1465 = vpop.f32.mrb[0].mxu0
    %1466 = vmatprep.mubr.f32.mxu0 0.0
    %1467 = vmatmul.mubr.f32.gmra.mrb[0].mxu0 %v1212
    %v1468 = vpop.f32.mrb[0].mxu0
    %v1469 = vadd.f32 %v76, %v1468
    %v1470 = vpop.f32.mrb[0].mxu0
    %1471 = vmatprep.mubr.f32.mxu0 0.0
    %1472 = vmatmul.mubr.f32.gmra.mrb[0].mxu0 %v1215
    %v1473 = vpop.f32.mrb[0].mxu0
    %v1474 = vadd.f32 %v76, %v1473
    %v1475 = vpop.f32.mrb[0].mxu0
    %1476 = vmatprep.mubr.f32.mxu0 0.0
    %1477 = vmatmul.mubr.f32.gmra.mrb[0].mxu0 %v1218
    %v1478 = vpop.f32.mrb[0].mxu0
    %v1479 = vadd.f32 %v76, %v1478
    %v1480 = vpop.f32.mrb[0].mxu0
    %1481 = vmatprep.mubr.f32.mxu0 0.0
    %1482 = vmatmul.mubr.f32.gmra.mrb[0].mxu0 %v1221
    %v1483 = vpop.f32.mrb[0].mxu0
    %v1484 = vadd.f32 %v76, %v1483
    %v1485 = vpop.f32.mrb[0].mxu0
    %1486 = vmatprep.mubr.f32.mxu0 0.0
    %1487 = vmatmul.mubr.f32.gmra.mrb[0].mxu0 %v1224
    %v1488 = vpop.f32.mrb[0].mxu0
    %v1489 = vadd.f32 %v76, %v1488
    %v1490 = vpop.f32.mrb[0].mxu0
    %1491 = vmatprep.mubr.f32.mxu0 0.0
    %1492 = vmatmul.mubr.f32.gmra.mrb[0].mxu0 %v1227
    %v1493 = vpop.f32.mrb[0].mxu0
    %v1494 = vadd.f32 %v76, %v1493
    %v1495 = vpop.f32.mrb[0].mxu0
    %1496 = vmatprep.mubr.f32.mxu0 0.0
    %1497 = vmatmul.mubr.f32.gmra.mrb[0].mxu0 %v1230
    %v1498 = vpop.f32.mrb[0].mxu0
    %v1499 = vadd.f32 %v76, %v1498
    %v1500 = vpop.f32.mrb[0].mxu0
    %1501 = vmatprep.mubr.f32.mxu0 0.0
    %1502 = vmatmul.mubr.f32.gmra.mrb[0].mxu0 %v1233
    %v1503 = vpop.f32.mrb[0].mxu0
    %v1504 = vadd.f32 %v76, %v1503
    %v1505 = vpop.f32.mrb[0].mxu0
    %1506 = vmatprep.mubr.f32.mxu0 0.0
    %1507 = vmatmul.mubr.f32.gmra.mrb[0].mxu0 %v1236
    %v1508 = vpop.f32.mrb[0].mxu0
    %v1509 = vadd.f32 %v76, %v1508
    %v1510 = vpop.f32.mrb[0].mxu0
    %1511 = vmatprep.mubr.f32.mxu0 0.0
    %1512 = vmatmul.mubr.f32.gmra.mrb[0].mxu0 %v1239
    %v1513 = vpop.f32.mrb[0].mxu0
    %v1514 = vadd.f32 %v76, %v1513
    %v1515 = vpop.f32.mrb[0].mxu0
    %1516 = vmatprep.mubr.f32.mxu0 0.0
    %1517 = vmatmul.mubr.f32.gmra.mrb[0].mxu0 %v1242
    %v1518 = vpop.f32.mrb[0].mxu0
    %v1519 = vadd.f32 %v76, %v1518
    %v1520 = vpop.f32.mrb[0].mxu0
    %1521 = vmatprep.mubr.f32.mxu0 0.0
    %1522 = vmatmul.mubr.f32.gmra.mrb[0].mxu0 %v1245
    %v1523 = vpop.f32.mrb[0].mxu0
    %v1524 = vadd.f32 %v76, %v1523
    %v1525 = vpop.f32.mrb[0].mxu0
    %1526 = vdwg.mxu0
    %v1527 = vmax.f32 %v1314, 0.0
    %v1528 = vmax.f32 %v1319, 0.0
    %v1529 = vmax.f32 %v1324, 0.0
    %v1530 = vmax.f32 %v1329, 0.0
    %v1531 = vmax.f32 %v1334, 0.0
    %v1532 = vmax.f32 %v1339, 0.0
    %v1533 = vmax.f32 %v1344, 0.0
    %v1534 = vmax.f32 %v1349, 0.0
    %v1535 = vmax.f32 %v1354, 0.0
    %v1536 = vmax.f32 %v1359, 0.0
    %v1537 = vmax.f32 %v1364, 0.0
    %v1538 = vmax.f32 %v1369, 0.0
    %v1539 = vmax.f32 %v1374, 0.0
    %v1540 = vmax.f32 %v1379, 0.0
    %v1541 = vmax.f32 %v1384, 0.0
    %v1542 = vmax.f32 %v1389, 0.0
    %v1543 = vmax.f32 %v1394, 0.0
    %v1544 = vmax.f32 %v1399, 0.0
    %v1545 = vmax.f32 %v1404, 0.0
    %v1546 = vmax.f32 %v1409, 0.0
    %v1547 = vmax.f32 %v1414, 0.0
    %v1548 = vmax.f32 %v1419, 0.0
    %v1549 = vmax.f32 %v1424, 0.0
    %v1550 = vmax.f32 %v1429, 0.0
    %v1551 = vmax.f32 %v1434, 0.0
    %v1552 = vmax.f32 %v1439, 0.0
    %v1553 = vmax.f32 %v1444, 0.0
    %v1554 = vmax.f32 %v1449, 0.0
    %v1555 = vmax.f32 %v1454, 0.0
    %v1556 = vmax.f32 %v1459, 0.0
    %v1557 = vmax.f32 %v1464, 0.0
    %v1558 = vmax.f32 %v1469, 0.0
    %v1559 = vmax.f32 %v1474, 0.0
    %v1560 = vmax.f32 %v1479, 0.0
    %v1561 = vmax.f32 %v1484, 0.0
    %v1562 = vmax.f32 %v1489, 0.0
    %v1563 = vmax.f32 %v1494, 0.0
    %v1564 = vmax.f32 %v1499, 0.0
    %v1565 = vmax.f32 %v1504, 0.0
    %v1566 = vmax.f32 %v1509, 0.0
    %v1567 = vmax.f32 %v1514, 0.0
    %v1568 = vmax.f32 %v1519, 0.0
    %v1569 = vmax.f32 %v1524, 0.0
    %v1570 = vmax.f32 %v1031, %v1527
    %v1571 = vmax.f32 %v1032, %v1528
    %v1572 = vmax.f32 %v1033, %v1529
    %v1573 = vmax.f32 %v1034, %v1530
    %v1574 = vmax.f32 %v1035, %v1531
    %v1575 = vmax.f32 %v1036, %v1532
    %v1576 = vmax.f32 %v1037, %v1533
    %v1577 = vmax.f32 %v1038, %v1534
    %v1578 = vmax.f32 %v1039, %v1535
    %v1579 = vmax.f32 %v1040, %v1536
    %v1580 = vmax.f32 %v1041, %v1537
    %v1581 = vmax.f32 %v1042, %v1538
    %v1582 = vmax.f32 %v1043, %v1539
    %v1583 = vmax.f32 %v1044, %v1540
    %v1584 = vmax.f32 %v1045, %v1541
    %v1585 = vmax.f32 %v1046, %v1542
    %v1586 = vmax.f32 %v1047, %v1543
    %v1587 = vmax.f32 %v1048, %v1544
    %v1588 = vmax.f32 %v1049, %v1545
    %v1589 = vmax.f32 %v1050, %v1546
    %v1590 = vmax.f32 %v1051, %v1547
    %v1591 = vmax.f32 %v1052, %v1548
    %v1592 = vmax.f32 %v1053, %v1549
    %v1593 = vmax.f32 %v1054, %v1550
    %v1594 = vmax.f32 %v1055, %v1551
    %v1595 = vmax.f32 %v1056, %v1552
    %v1596 = vmax.f32 %v1057, %v1553
    %v1597 = vmax.f32 %v1058, %v1554
    %v1598 = vmax.f32 %v1059, %v1555
    %v1599 = vmax.f32 %v1060, %v1556
    %v1600 = vmax.f32 %v1061, %v1557
    %v1601 = vmax.f32 %v1062, %v1558
    %v1602 = vmax.f32 %v1063, %v1559
    %v1603 = vmax.f32 %v1064, %v1560
    %v1604 = vmax.f32 %v1065, %v1561
    %v1605 = vmax.f32 %v1066, %v1562
    %v1606 = vmax.f32 %v1067, %v1563
    %v1607 = vmax.f32 %v1068, %v1564
    %v1608 = vmax.f32 %v1069, %v1565
    %v1609 = vmax.f32 %v1070, %v1566
    %v1610 = vmax.f32 %v1071, %v1567
    %v1611 = vmax.f32 %v1072, %v1568
    %v1612 = vmax.f32 %v1073, %v1569
    %s1613 = scalar_lea.vmem %s0, 1032
    %v1614 = vld [vmem:[%s1613] sm:$0xff]
    %v1615 = vld [vmem:[%s1613 + $0x8] sm:$0xff]
    %v1616 = vld [vmem:[%s1613 + $0x10] sm:$0xff]
    %v1617 = vld [vmem:[%s1613 + $0x18] sm:$0xff]
    %v1618 = vld [vmem:[%s1613 + $0x20] sm:$0xff]
    %v1619 = vld [vmem:[%s1613 + $0x28] sm:$0xff]
    %v1620 = vld [vmem:[%s1613 + $0x30] sm:$0xff]
    %v1621 = vld [vmem:[%s1613 + $0x38] sm:$0xff]
    %v1622 = vld [vmem:[%s1613 + $0x40] sm:$0xff]
    %v1623 = vld [vmem:[%s1613 + $0x48] sm:$0xff]
    %v1624 = vld [vmem:[%s1613 + $0x50] sm:$0xff]
    %v1625 = vld [vmem:[%s1613 + $0x58] sm:$0xff]
    %v1626 = vld [vmem:[%s1613 + $0x60] sm:$0xff]
    %v1627 = vld [vmem:[%s1613 + $0x68] sm:$0xff]
    %v1628 = vld [vmem:[%s1613 + $0x70] sm:$0xff]
    %v1629 = vld [vmem:[%s1613 + $0x78] sm:$0xff]
    %v1630 = vld [vmem:[%s1613 + $0x80] sm:$0xff]
    %v1631 = vld [vmem:[%s1613 + $0x88] sm:$0xff]
    %v1632 = vld [vmem:[%s1613 + $0x90] sm:$0xff]
    %v1633 = vld [vmem:[%s1613 + $0x98] sm:$0xff]
    %v1634 = vld [vmem:[%s1613 + $0xa0] sm:$0xff]
    %v1635 = vld [vmem:[%s1613 + $0xa8] sm:$0xff]
    %v1636 = vld [vmem:[%s1613 + $0xb0] sm:$0xff]
    %v1637 = vld [vmem:[%s1613 + $0xb8] sm:$0xff]
    %v1638 = vld [vmem:[%s1613 + $0xc0] sm:$0xff]
    %v1639 = vld [vmem:[%s1613 + $0xc8] sm:$0xff]
    %v1640 = vld [vmem:[%s1613 + $0xd0] sm:$0xff]
    %v1641 = vld [vmem:[%s1613 + $0xd8] sm:$0xff]
    %v1642 = vld [vmem:[%s1613 + $0xe0] sm:$0xff]
    %v1643 = vld [vmem:[%s1613 + $0xe8] sm:$0xff]
    %v1644 = vld [vmem:[%s1613 + $0xf0] sm:$0xff]
    %v1645 = vld [vmem:[%s1613 + $0xf8] sm:$0xff]
    %v1646 = vld [vmem:[%s1613 + $0x100] sm:$0xff]
    %v1647 = vld [vmem:[%s1613 + $0x108] sm:$0xff]
    %v1648 = vld [vmem:[%s1613 + $0x110] sm:$0xff]
    %v1649 = vld [vmem:[%s1613 + $0x118] sm:$0xff]
    %v1650 = vld [vmem:[%s1613 + $0x120] sm:$0xff]
    %v1651 = vld [vmem:[%s1613 + $0x128] sm:$0xff]
    %v1652 = vld [vmem:[%s1613 + $0x130] sm:$0xff]
    %v1653 = vld [vmem:[%s1613 + $0x138] sm:$0xff]
    %v1654 = vld [vmem:[%s1613 + $0x140] sm:$0xff]
    %v1655 = vld [vmem:[%s1613 + $0x148] sm:$0xff]
    %v1656 = vld [vmem:[%s1613 + $0x150] sm:$0x3]
    %v1658 = vsel %vm78, %v1614, 0
    %v1661 = vsel %vm78, %v1615, 0
    %v1664 = vsel %vm78, %v1616, 0
    %v1667 = vsel %vm78, %v1617, 0
    %v1670 = vsel %vm78, %v1618, 0
    %v1673 = vsel %vm78, %v1619, 0
    %v1676 = vsel %vm78, %v1620, 0
    %v1679 = vsel %vm78, %v1621, 0
    %v1682 = vsel %vm78, %v1622, 0
    %v1685 = vsel %vm78, %v1623, 0
    %v1688 = vsel %vm78, %v1624, 0
    %v1691 = vsel %vm78, %v1625, 0
    %v1694 = vsel %vm78, %v1626, 0
    %v1697 = vsel %vm78, %v1627, 0
    %v1700 = vsel %vm78, %v1628, 0
    %v1703 = vsel %vm78, %v1629, 0
    %v1706 = vsel %vm78, %v1630, 0
    %v1709 = vsel %vm78, %v1631, 0
    %v1712 = vsel %vm78, %v1632, 0
    %v1715 = vsel %vm78, %v1633, 0
    %v1718 = vsel %vm78, %v1634, 0
    %v1721 = vsel %vm78, %v1635, 0
    %v1724 = vsel %vm78, %v1636, 0
    %v1727 = vsel %vm78, %v1637, 0
    %v1730 = vsel %vm78, %v1638, 0
    %v1733 = vsel %vm78, %v1639, 0
    %v1736 = vsel %vm78, %v1640, 0
    %v1739 = vsel %vm78, %v1641, 0
    %v1742 = vsel %vm78, %v1642, 0
    %v1745 = vsel %vm78, %v1643, 0
    %v1748 = vsel %vm78, %v1644, 0
    %v1751 = vsel %vm78, %v1645, 0
    %v1754 = vsel %vm78, %v1646, 0
    %v1757 = vsel %vm78, %v1647, 0
    %v1760 = vsel %vm78, %v1648, 0
    %v1763 = vsel %vm78, %v1649, 0
    %v1766 = vsel %vm78, %v1650, 0
    %v1769 = vsel %vm78, %v1651, 0
    %v1772 = vsel %vm78, %v1652, 0
    %v1775 = vsel %vm78, %v1653, 0
    %v1778 = vsel %vm78, %v1654, 0
    %v1781 = vsel %vm78, %v1655, 0
    %v1784 = vsel %vm78, %v1656, 0
    %1786 = vmatprep.subr.mxu0 0.0
    %1787 = vmatpush1.msra.mxu0 %v26
    %1788 = vmatprep.subr.mxu0 0.0
    %1789 = vmatpush1.msra.mxu0 %v210
    %1790 = vmatprep.subr.mxu0 0.0
    %1791 = vmatpush1.msra.mxu0 0.0
    %1792 = vmatprep.subr.mxu0 0.0
    %1793 = vmatpush1.msra.mxu0 0.0
    %1794 = vmatprep.subr.mxu0 0.0
    %1795 = vmatpush1.msra.mxu0 0.0
    %1796 = vmatprep.subr.mxu0 0.0
    %1797 = vmatpush1.msra.mxu0 0.0
    %1798 = vmatprep.subr.mxu0 0.0
    %1799 = vmatpush1.msra.mxu0 0.0
    %1800 = vmatprep.subr.mxu0 0.0
    %1801 = vmatpush1.msra.mxu0 0.0
    %1802 = vmatprep.subr.mxu0 0.0
    %1803 = vmatpush1.msra.mxu0 0.0
    %1804 = vmatprep.subr.mxu0 0.0
    %1805 = vmatpush1.msra.mxu0 0.0
    %1806 = vmatprep.subr.mxu0 0.0
    %1807 = vmatpush1.msra.mxu0 0.0
    %1808 = vmatprep.subr.mxu0 0.0
    %1809 = vmatpush1.msra.mxu0 0.0
    %1810 = vmatprep.subr.mxu0 0.0
    %1811 = vmatpush1.msra.mxu0 0.0
    %1812 = vmatprep.subr.mxu0 0.0
    %1813 = vmatpush1.msra.mxu0 0.0
    %1814 = vmatprep.subr.mxu0 0.0
    %1815 = vmatpush1.msra.mxu0 0.0
    %1816 = vmatprep.subr.mxu0 0.0
    %1817 = vmatpush1.msra.mxu0 0.0
    %1818 = vmatprep.subr.mxu0 0.0
    %1819 = vmatpush1.msra.mxu0 0.0
    %1820 = vmatprep.subr.mxu0 0.0
    %1821 = vmatpush1.msra.mxu0 0.0
    %1822 = vmatprep.subr.mxu0 0.0
    %1823 = vmatpush1.msra.mxu0 0.0
    %1824 = vmatprep.subr.mxu0 0.0
    %1825 = vmatpush1.msra.mxu0 0.0
    %1826 = vmatprep.subr.mxu0 0.0
    %1827 = vmatpush1.msra.mxu0 0.0
    %1828 = vmatprep.subr.mxu0 0.0
    %1829 = vmatpush1.msra.mxu0 0.0
    %1830 = vmatprep.subr.mxu0 0.0
    %1831 = vmatpush1.msra.mxu0 0.0
    %1832 = vmatprep.subr.mxu0 0.0
    %1833 = vmatpush1.msra.mxu0 0.0
    %1834 = vmatprep.subr.mxu0 0.0
    %1835 = vmatpush1.msra.mxu0 0.0
    %1836 = vmatprep.subr.mxu0 0.0
    %1837 = vmatpush1.msra.mxu0 0.0
    %1838 = vmatprep.subr.mxu0 0.0
    %1839 = vmatpush1.msra.mxu0 0.0
    %1840 = vmatprep.subr.mxu0 0.0
    %1841 = vmatpush1.msra.mxu0 0.0
    %1842 = vmatprep.subr.mxu0 0.0
    %1843 = vmatpush1.msra.mxu0 0.0
    %1844 = vmatprep.subr.mxu0 0.0
    %1845 = vmatpush1.msra.mxu0 0.0
    %1846 = vmatprep.subr.mxu0 0.0
    %1847 = vmatpush1.msra.mxu0 0.0
    %1848 = vmatprep.subr.mxu0 0.0
    %1849 = vmatpush1.msra.mxu0 0.0
    %1850 = vmatprep.mubr.f32.mxu0 0.0
    %1851 = vmatmul.mubr.f32.gmra.mrb[0].mxu0 %v1658
    %v1852 = vpop.f32.mrb[0].mxu0
    %v1853 = vadd.f32 %v76, %v1852
    %v1854 = vpop.f32.mrb[0].mxu0
    %1855 = vmatprep.mubr.f32.mxu0 0.0
    %1856 = vmatmul.mubr.f32.gmra.mrb[0].mxu0 %v1661
    %v1857 = vpop.f32.mrb[0].mxu0
    %v1858 = vadd.f32 %v76, %v1857
    %v1859 = vpop.f32.mrb[0].mxu0
    %1860 = vmatprep.mubr.f32.mxu0 0.0
    %1861 = vmatmul.mubr.f32.gmra.mrb[0].mxu0 %v1664
    %v1862 = vpop.f32.mrb[0].mxu0
    %v1863 = vadd.f32 %v76, %v1862
    %v1864 = vpop.f32.mrb[0].mxu0
    %1865 = vmatprep.mubr.f32.mxu0 0.0
    %1866 = vmatmul.mubr.f32.gmra.mrb[0].mxu0 %v1667
    %v1867 = vpop.f32.mrb[0].mxu0
    %v1868 = vadd.f32 %v76, %v1867
    %v1869 = vpop.f32.mrb[0].mxu0
    %1870 = vmatprep.mubr.f32.mxu0 0.0
    %1871 = vmatmul.mubr.f32.gmra.mrb[0].mxu0 %v1670
    %v1872 = vpop.f32.mrb[0].mxu0
    %v1873 = vadd.f32 %v76, %v1872
    %v1874 = vpop.f32.mrb[0].mxu0
    %1875 = vmatprep.mubr.f32.mxu0 0.0
    %1876 = vmatmul.mubr.f32.gmra.mrb[0].mxu0 %v1673
    %v1877 = vpop.f32.mrb[0].mxu0
    %v1878 = vadd.f32 %v76, %v1877
    %v1879 = vpop.f32.mrb[0].mxu0
    %1880 = vmatprep.mubr.f32.mxu0 0.0
    %1881 = vmatmul.mubr.f32.gmra.mrb[0].mxu0 %v1676
    %v1882 = vpop.f32.mrb[0].mxu0
    %v1883 = vadd.f32 %v76, %v1882
    %v1884 = vpop.f32.mrb[0].mxu0
    %1885 = vmatprep.mubr.f32.mxu0 0.0
    %1886 = vmatmul.mubr.f32.gmra.mrb[0].mxu0 %v1679
    %v1887 = vpop.f32.mrb[0].mxu0
    %v1888 = vadd.f32 %v76, %v1887
    %v1889 = vpop.f32.mrb[0].mxu0
    %1890 = vmatprep.mubr.f32.mxu0 0.0
    %1891 = vmatmul.mubr.f32.gmra.mrb[0].mxu0 %v1682
    %v1892 = vpop.f32.mrb[0].mxu0
    %v1893 = vadd.f32 %v76, %v1892
    %v1894 = vpop.f32.mrb[0].mxu0
    %1895 = vmatprep.mubr.f32.mxu0 0.0
    %1896 = vmatmul.mubr.f32.gmra.mrb[0].mxu0 %v1685
    %v1897 = vpop.f32.mrb[0].mxu0
    %v1898 = vadd.f32 %v76, %v1897
    %v1899 = vpop.f32.mrb[0].mxu0
    %1900 = vmatprep.mubr.f32.mxu0 0.0
    %1901 = vmatmul.mubr.f32.gmra.mrb[0].mxu0 %v1688
    %v1902 = vpop.f32.mrb[0].mxu0
    %v1903 = vadd.f32 %v76, %v1902
    %v1904 = vpop.f32.mrb[0].mxu0
    %1905 = vmatprep.mubr.f32.mxu0 0.0
    %1906 = vmatmul.mubr.f32.gmra.mrb[0].mxu0 %v1691
    %v1907 = vpop.f32.mrb[0].mxu0
    %v1908 = vadd.f32 %v76, %v1907
    %v1909 = vpop.f32.mrb[0].mxu0
    %1910 = vmatprep.mubr.f32.mxu0 0.0
    %1911 = vmatmul.mubr.f32.gmra.mrb[0].mxu0 %v1694
    %v1912 = vpop.f32.mrb[0].mxu0
    %v1913 = vadd.f32 %v76, %v1912
    %v1914 = vpop.f32.mrb[0].mxu0
    %1915 = vmatprep.mubr.f32.mxu0 0.0
    %1916 = vmatmul.mubr.f32.gmra.mrb[0].mxu0 %v1697
    %v1917 = vpop.f32.mrb[0].mxu0
    %v1918 = vadd.f32 %v76, %v1917
    %v1919 = vpop.f32.mrb[0].mxu0
    %1920 = vmatprep.mubr.f32.mxu0 0.0
    %1921 = vmatmul.mubr.f32.gmra.mrb[0].mxu0 %v1700
    %v1922 = vpop.f32.mrb[0].mxu0
    %v1923 = vadd.f32 %v76, %v1922
    %v1924 = vpop.f32.mrb[0].mxu0
    %1925 = vmatprep.mubr.f32.mxu0 0.0
    %1926 = vmatmul.mubr.f32.gmra.mrb[0].mxu0 %v1703
    %v1927 = vpop.f32.mrb[0].mxu0
    %v1928 = vadd.f32 %v76, %v1927
    %v1929 = vpop.f32.mrb[0].mxu0
    %1930 = vmatprep.mubr.f32.mxu0 0.0
    %1931 = vmatmul.mubr.f32.gmra.mrb[0].mxu0 %v1706
    %v1932 = vpop.f32.mrb[0].mxu0
    %v1933 = vadd.f32 %v76, %v1932
    %v1934 = vpop.f32.mrb[0].mxu0
    %1935 = vmatprep.mubr.f32.mxu0 0.0
    %1936 = vmatmul.mubr.f32.gmra.mrb[0].mxu0 %v1709
    %v1937 = vpop.f32.mrb[0].mxu0
    %v1938 = vadd.f32 %v76, %v1937
    %v1939 = vpop.f32.mrb[0].mxu0
    %1940 = vmatprep.mubr.f32.mxu0 0.0
    %1941 = vmatmul.mubr.f32.gmra.mrb[0].mxu0 %v1712
    %v1942 = vpop.f32.mrb[0].mxu0
    %v1943 = vadd.f32 %v76, %v1942
    %v1944 = vpop.f32.mrb[0].mxu0
    %1945 = vmatprep.mubr.f32.mxu0 0.0
    %1946 = vmatmul.mubr.f32.gmra.mrb[0].mxu0 %v1715
    %v1947 = vpop.f32.mrb[0].mxu0
    %v1948 = vadd.f32 %v76, %v1947
    %v1949 = vpop.f32.mrb[0].mxu0
    %1950 = vmatprep.mubr.f32.mxu0 0.0
    %1951 = vmatmul.mubr.f32.gmra.mrb[0].mxu0 %v1718
    %v1952 = vpop.f32.mrb[0].mxu0
    %v1953 = vadd.f32 %v76, %v1952
    %v1954 = vpop.f32.mrb[0].mxu0
    %1955 = vmatprep.mubr.f32.mxu0 0.0
    %1956 = vmatmul.mubr.f32.gmra.mrb[0].mxu0 %v1721
    %v1957 = vpop.f32.mrb[0].mxu0
    %v1958 = vadd.f32 %v76, %v1957
    %v1959 = vpop.f32.mrb[0].mxu0
    %1960 = vmatprep.mubr.f32.mxu0 0.0
    %1961 = vmatmul.mubr.f32.gmra.mrb[0].mxu0 %v1724
    %v1962 = vpop.f32.mrb[0].mxu0
    %v1963 = vadd.f32 %v76, %v1962
    %v1964 = vpop.f32.mrb[0].mxu0
    %1965 = vmatprep.mubr.f32.mxu0 0.0
    %1966 = vmatmul.mubr.f32.gmra.mrb[0].mxu0 %v1727
    %v1967 = vpop.f32.mrb[0].mxu0
    %v1968 = vadd.f32 %v76, %v1967
    %v1969 = vpop.f32.mrb[0].mxu0
    %1970 = vmatprep.mubr.f32.mxu0 0.0
    %1971 = vmatmul.mubr.f32.gmra.mrb[0].mxu0 %v1730
    %v1972 = vpop.f32.mrb[0].mxu0
    %v1973 = vadd.f32 %v76, %v1972
    %v1974 = vpop.f32.mrb[0].mxu0
    %1975 = vmatprep.mubr.f32.mxu0 0.0
    %1976 = vmatmul.mubr.f32.gmra.mrb[0].mxu0 %v1733
    %v1977 = vpop.f32.mrb[0].mxu0
    %v1978 = vadd.f32 %v76, %v1977
    %v1979 = vpop.f32.mrb[0].mxu0
    %1980 = vmatprep.mubr.f32.mxu0 0.0
    %1981 = vmatmul.mubr.f32.gmra.mrb[0].mxu0 %v1736
    %v1982 = vpop.f32.mrb[0].mxu0
    %v1983 = vadd.f32 %v76, %v1982
    %v1984 = vpop.f32.mrb[0].mxu0
    %1985 = vmatprep.mubr.f32.mxu0 0.0
    %1986 = vmatmul.mubr.f32.gmra.mrb[0].mxu0 %v1739
    %v1987 = vpop.f32.mrb[0].mxu0
    %v1988 = vadd.f32 %v76, %v1987
    %v1989 = vpop.f32.mrb[0].mxu0
    %1990 = vmatprep.mubr.f32.mxu0 0.0
    %1991 = vmatmul.mubr.f32.gmra.mrb[0].mxu0 %v1742
    %v1992 = vpop.f32.mrb[0].mxu0
    %v1993 = vadd.f32 %v76, %v1992
    %v1994 = vpop.f32.mrb[0].mxu0
    %1995 = vmatprep.mubr.f32.mxu0 0.0
    %1996 = vmatmul.mubr.f32.gmra.mrb[0].mxu0 %v1745
    %v1997 = vpop.f32.mrb[0].mxu0
    %v1998 = vadd.f32 %v76, %v1997
    %v1999 = vpop.f32.mrb[0].mxu0
    %2000 = vmatprep.mubr.f32.mxu0 0.0
    %2001 = vmatmul.mubr.f32.gmra.mrb[0].mxu0 %v1748
    %v2002 = vpop.f32.mrb[0].mxu0
    %v2003 = vadd.f32 %v76, %v2002
    %v2004 = vpop.f32.mrb[0].mxu0
    %2005 = vmatprep.mubr.f32.mxu0 0.0
    %2006 = vmatmul.mubr.f32.gmra.mrb[0].mxu0 %v1751
    %v2007 = vpop.f32.mrb[0].mxu0
    %v2008 = vadd.f32 %v76, %v2007
    %v2009 = vpop.f32.mrb[0].mxu0
    %2010 = vmatprep.mubr.f32.mxu0 0.0
    %2011 = vmatmul.mubr.f32.gmra.mrb[0].mxu0 %v1754
    %v2012 = vpop.f32.mrb[0].mxu0
    %v2013 = vadd.f32 %v76, %v2012
    %v2014 = vpop.f32.mrb[0].mxu0
    %2015 = vmatprep.mubr.f32.mxu0 0.0
    %2016 = vmatmul.mubr.f32.gmra.mrb[0].mxu0 %v1757
    %v2017 = vpop.f32.mrb[0].mxu0
    %v2018 = vadd.f32 %v76, %v2017
    %v2019 = vpop.f32.mrb[0].mxu0
    %2020 = vmatprep.mubr.f32.mxu0 0.0
    %2021 = vmatmul.mubr.f32.gmra.mrb[0].mxu0 %v1760
    %v2022 = vpop.f32.mrb[0].mxu0
    %v2023 = vadd.f32 %v76, %v2022
    %v2024 = vpop.f32.mrb[0].mxu0
    %2025 = vmatprep.mubr.f32.mxu0 0.0
    %2026 = vmatmul.mubr.f32.gmra.mrb[0].mxu0 %v1763
    %v2027 = vpop.f32.mrb[0].mxu0
    %v2028 = vadd.f32 %v76, %v2027
    %v2029 = vpop.f32.mrb[0].mxu0
    %2030 = vmatprep.mubr.f32.mxu0 0.0
    %2031 = vmatmul.mubr.f32.gmra.mrb[0].mxu0 %v1766
    %v2032 = vpop.f32.mrb[0].mxu0
    %v2033 = vadd.f32 %v76, %v2032
    %v2034 = vpop.f32.mrb[0].mxu0
    %2035 = vmatprep.mubr.f32.mxu0 0.0
    %2036 = vmatmul.mubr.f32.gmra.mrb[0].mxu0 %v1769
    %v2037 = vpop.f32.mrb[0].mxu0
    %v2038 = vadd.f32 %v76, %v2037
    %v2039 = vpop.f32.mrb[0].mxu0
    %2040 = vmatprep.mubr.f32.mxu0 0.0
    %2041 = vmatmul.mubr.f32.gmra.mrb[0].mxu0 %v1772
    %v2042 = vpop.f32.mrb[0].mxu0
    %v2043 = vadd.f32 %v76, %v2042
    %v2044 = vpop.f32.mrb[0].mxu0
    %2045 = vmatprep.mubr.f32.mxu0 0.0
    %2046 = vmatmul.mubr.f32.gmra.mrb[0].mxu0 %v1775
    %v2047 = vpop.f32.mrb[0].mxu0
    %v2048 = vadd.f32 %v76, %v2047
    %v2049 = vpop.f32.mrb[0].mxu0
    %2050 = vmatprep.mubr.f32.mxu0 0.0
    %2051 = vmatmul.mubr.f32.gmra.mrb[0].mxu0 %v1778
    %v2052 = vpop.f32.mrb[0].mxu0
    %v2053 = vadd.f32 %v76, %v2052
    %v2054 = vpop.f32.mrb[0].mxu0
    %2055 = vmatprep.mubr.f32.mxu0 0.0
    %2056 = vmatmul.mubr.f32.gmra.mrb[0].mxu0 %v1781
    %v2057 = vpop.f32.mrb[0].mxu0
    %v2058 = vadd.f32 %v76, %v2057
    %v2059 = vpop.f32.mrb[0].mxu0
    %2060 = vmatprep.mubr.f32.mxu0 0.0
    %2061 = vmatmul.mubr.f32.gmra.mrb[0].mxu0 %v1784
    %v2062 = vpop.f32.mrb[0].mxu0
    %v2063 = vadd.f32 %v76, %v2062
    %v2064 = vpop.f32.mrb[0].mxu0
    %2065 = vdwg.mxu0
    %v2066 = vmax.f32 %v1853, 0.0
    %v2067 = vmax.f32 %v1858, 0.0
    %v2068 = vmax.f32 %v1863, 0.0
    %v2069 = vmax.f32 %v1868, 0.0
    %v2070 = vmax.f32 %v1873, 0.0
    %v2071 = vmax.f32 %v1878, 0.0
    %v2072 = vmax.f32 %v1883, 0.0
    %v2073 = vmax.f32 %v1888, 0.0
    %v2074 = vmax.f32 %v1893, 0.0
    %v2075 = vmax.f32 %v1898, 0.0
    %v2076 = vmax.f32 %v1903, 0.0
    %v2077 = vmax.f32 %v1908, 0.0
    %v2078 = vmax.f32 %v1913, 0.0
    %v2079 = vmax.f32 %v1918, 0.0
    %v2080 = vmax.f32 %v1923, 0.0
    %v2081 = vmax.f32 %v1928, 0.0
    %v2082 = vmax.f32 %v1933, 0.0
    %v2083 = vmax.f32 %v1938, 0.0
    %v2084 = vmax.f32 %v1943, 0.0
    %v2085 = vmax.f32 %v1948, 0.0
    %v2086 = vmax.f32 %v1953, 0.0
    %v2087 = vmax.f32 %v1958, 0.0
    %v2088 = vmax.f32 %v1963, 0.0
    %v2089 = vmax.f32 %v1968, 0.0
    %v2090 = vmax.f32 %v1973, 0.0
    %v2091 = vmax.f32 %v1978, 0.0
    %v2092 = vmax.f32 %v1983, 0.0
    %v2093 = vmax.f32 %v1988, 0.0
    %v2094 = vmax.f32 %v1993, 0.0
    %v2095 = vmax.f32 %v1998, 0.0
    %v2096 = vmax.f32 %v2003, 0.0
    %v2097 = vmax.f32 %v2008, 0.0
    %v2098 = vmax.f32 %v2013, 0.0
    %v2099 = vmax.f32 %v2018, 0.0
    %v2100 = vmax.f32 %v2023, 0.0
    %v2101 = vmax.f32 %v2028, 0.0
    %v2102 = vmax.f32 %v2033, 0.0
    %v2103 = vmax.f32 %v2038, 0.0
    %v2104 = vmax.f32 %v2043, 0.0
    %v2105 = vmax.f32 %v2048, 0.0
    %v2106 = vmax.f32 %v2053, 0.0
    %v2107 = vmax.f32 %v2058, 0.0
    %v2108 = vmax.f32 %v2063, 0.0
    %v2109 = vmax.f32 %v1570, %v2066
    %v2110 = vmax.f32 %v1571, %v2067
    %v2111 = vmax.f32 %v1572, %v2068
    %v2112 = vmax.f32 %v1573, %v2069
    %v2113 = vmax.f32 %v1574, %v2070
    %v2114 = vmax.f32 %v1575, %v2071
    %v2115 = vmax.f32 %v1576, %v2072
    %v2116 = vmax.f32 %v1577, %v2073
    %v2117 = vmax.f32 %v1578, %v2074
    %v2118 = vmax.f32 %v1579, %v2075
    %v2119 = vmax.f32 %v1580, %v2076
    %v2120 = vmax.f32 %v1581, %v2077
    %v2121 = vmax.f32 %v1582, %v2078
    %v2122 = vmax.f32 %v1583, %v2079
    %v2123 = vmax.f32 %v1584, %v2080
    %v2124 = vmax.f32 %v1585, %v2081
    %v2125 = vmax.f32 %v1586, %v2082
    %v2126 = vmax.f32 %v1587, %v2083
    %v2127 = vmax.f32 %v1588, %v2084
    %v2128 = vmax.f32 %v1589, %v2085
    %v2129 = vmax.f32 %v1590, %v2086
    %v2130 = vmax.f32 %v1591, %v2087
    %v2131 = vmax.f32 %v1592, %v2088
    %v2132 = vmax.f32 %v1593, %v2089
    %v2133 = vmax.f32 %v1594, %v2090
    %v2134 = vmax.f32 %v1595, %v2091
    %v2135 = vmax.f32 %v1596, %v2092
    %v2136 = vmax.f32 %v1597, %v2093
    %v2137 = vmax.f32 %v1598, %v2094
    %v2138 = vmax.f32 %v1599, %v2095
    %v2139 = vmax.f32 %v1600, %v2096
    %v2140 = vmax.f32 %v1601, %v2097
    %v2141 = vmax.f32 %v1602, %v2098
    %v2142 = vmax.f32 %v1603, %v2099
    %v2143 = vmax.f32 %v1604, %v2100
    %v2144 = vmax.f32 %v1605, %v2101
    %v2145 = vmax.f32 %v1606, %v2102
    %v2146 = vmax.f32 %v1607, %v2103
    %v2147 = vmax.f32 %v1608, %v2104
    %v2148 = vmax.f32 %v1609, %v2105
    %v2149 = vmax.f32 %v1610, %v2106
    %v2150 = vmax.f32 %v1611, %v2107
    %v2151 = vmax.f32 %v1612, %v2108
    %vm2152 = vcmask 261120
    %2153 = vst.msk [vmem:[%s3] sm:$0xff] %vm2152, %v2109
    %2154 = vst.msk [vmem:[%s3 + $0x8] sm:$0xff] %vm2152, %v2110
    %2155 = vst.msk [vmem:[%s3 + $0x10] sm:$0xff] %vm2152, %v2111
    %2156 = vst.msk [vmem:[%s3 + $0x18] sm:$0xff] %vm2152, %v2112
    %2157 = vst.msk [vmem:[%s3 + $0x20] sm:$0xff] %vm2152, %v2113
    %2158 = vst.msk [vmem:[%s3 + $0x28] sm:$0xff] %vm2152, %v2114
    %2159 = vst.msk [vmem:[%s3 + $0x30] sm:$0xff] %vm2152, %v2115
    %2160 = vst.msk [vmem:[%s3 + $0x38] sm:$0xff] %vm2152, %v2116
    %2161 = vst.msk [vmem:[%s3 + $0x40] sm:$0xff] %vm2152, %v2117
    %2162 = vst.msk [vmem:[%s3 + $0x48] sm:$0xff] %vm2152, %v2118
    %2163 = vst.msk [vmem:[%s3 + $0x50] sm:$0xff] %vm2152, %v2119
    %2164 = vst.msk [vmem:[%s3 + $0x58] sm:$0xff] %vm2152, %v2120
    %2165 = vst.msk [vmem:[%s3 + $0x60] sm:$0xff] %vm2152, %v2121
    %2166 = vst.msk [vmem:[%s3 + $0x68] sm:$0xff] %vm2152, %v2122
    %2167 = vst.msk [vmem:[%s3 + $0x70] sm:$0xff] %vm2152, %v2123
    %2168 = vst.msk [vmem:[%s3 + $0x78] sm:$0xff] %vm2152, %v2124
    %2169 = vst.msk [vmem:[%s3 + $0x80] sm:$0xff] %vm2152, %v2125
    %2170 = vst.msk [vmem:[%s3 + $0x88] sm:$0xff] %vm2152, %v2126
    %2171 = vst.msk [vmem:[%s3 + $0x90] sm:$0xff] %vm2152, %v2127
    %2172 = vst.msk [vmem:[%s3 + $0x98] sm:$0xff] %vm2152, %v2128
    %2173 = vst.msk [vmem:[%s3 + $0xa0] sm:$0xff] %vm2152, %v2129
    %2174 = vst.msk [vmem:[%s3 + $0xa8] sm:$0xff] %vm2152, %v2130
    %2175 = vst.msk [vmem:[%s3 + $0xb0] sm:$0xff] %vm2152, %v2131
    %2176 = vst.msk [vmem:[%s3 + $0xb8] sm:$0xff] %vm2152, %v2132
    %2177 = vst.msk [vmem:[%s3 + $0xc0] sm:$0xff] %vm2152, %v2133
    %2178 = vst.msk [vmem:[%s3 + $0xc8] sm:$0xff] %vm2152, %v2134
    %2179 = vst.msk [vmem:[%s3 + $0xd0] sm:$0xff] %vm2152, %v2135
    %2180 = vst.msk [vmem:[%s3 + $0xd8] sm:$0xff] %vm2152, %v2136
    %2181 = vst.msk [vmem:[%s3 + $0xe0] sm:$0xff] %vm2152, %v2137
    %2182 = vst.msk [vmem:[%s3 + $0xe8] sm:$0xff] %vm2152, %v2138
    %2183 = vst.msk [vmem:[%s3 + $0xf0] sm:$0xff] %vm2152, %v2139
    %2184 = vst.msk [vmem:[%s3 + $0xf8] sm:$0xff] %vm2152, %v2140
    %2185 = vst.msk [vmem:[%s3 + $0x100] sm:$0xff] %vm2152, %v2141
    %2186 = vst.msk [vmem:[%s3 + $0x108] sm:$0xff] %vm2152, %v2142
    %2187 = vst.msk [vmem:[%s3 + $0x110] sm:$0xff] %vm2152, %v2143
    %2188 = vst.msk [vmem:[%s3 + $0x118] sm:$0xff] %vm2152, %v2144
    %2189 = vst.msk [vmem:[%s3 + $0x120] sm:$0xff] %vm2152, %v2145
    %2190 = vst.msk [vmem:[%s3 + $0x128] sm:$0xff] %vm2152, %v2146
    %2191 = vst.msk [vmem:[%s3 + $0x130] sm:$0xff] %vm2152, %v2147
    %2192 = vst.msk [vmem:[%s3 + $0x138] sm:$0xff] %vm2152, %v2148
    %2193 = vst.msk [vmem:[%s3 + $0x140] sm:$0xff] %vm2152, %v2149
    %2194 = vst.msk [vmem:[%s3 + $0x148] sm:$0xff] %vm2152, %v2150
    %vm2195 = vcmask 254976
    %2196 = vst.msk [vmem:[%s3 + $0x150] sm:$0x3] %vm2195, %v2151
    // Predicated region
    $region18: #{cnn_ae_mnist_forward.5} parent=1 // pred_check
      _
    $region19: #{cnn_ae_mnist_forward.5} parent=1 // pred_check_branch
      %2198 = sbr.rel (0) target = $region21
    $region20: #{cnn_ae_mnist_forward.5} parent=1 // pred_region
      _
    $region21: #{cnn_ae_mnist_forward.5} parent=1 // pred_fallthru
      _
    // Predicated region
    $region22: #{cnn_ae_mnist_forward.5} parent=1 // pred_check
      _
    $region23: #{cnn_ae_mnist_forward.5} parent=1 // pred_check_branch
      %2200 = sbr.rel (0) target = $region25
    $region24: #{cnn_ae_mnist_forward.5} parent=1 // pred_region
      _
    $region25: #{cnn_ae_mnist_forward.5} parent=1 // pred_fallthru
      _
    %2201 = vsyncpa [#allocation3], 1

// kernel: cnn_ae_mnist_forward.6
$region0: #{cnn_ae_mnist_forward.6}
  #allocation0 [shape = 'u32[]', space=smem, size = 0x4, offset = 0x4, fixed_abs, tag = 'smem constant byte address 0x4 - core index']
  #allocation1 [shape = 'u32[144,128]{1,0:T(1,128)}', space=vmem, size = 0x12000, scoped, tag = 'internal scratch']
  %s0 = inlined_call_operand.vmem [shape: f32[4,50,288], index: 0, kind: input, shape index: {}]
  %s1 = inlined_call_operand.vmem [shape: f32[288,32], index: 1, kind: input, shape index: {}]
  %s2 = inlined_call_operand.vmem [shape: f32[1,32], index: 2, kind: input, shape index: {}]
  %s3 = inlined_call_operand.vmem [shape: f32[50,32], index: 3, kind: output, shape index: {}]
  %s4 = sld [smem:[#allocation0]]
  $region22: #{cnn_ae_mnist_forward.6} parent=0
    _
  %s6 = ssub.s32 1, %s4
  %s7 = scalar_select 0, %s6, %s4
  // Predicated region
  $region2: #{cnn_ae_mnist_forward.6} parent=0 // pred_check
    _
  $region3: #{cnn_ae_mnist_forward.6} parent=0 // pred_check_branch
    %9 = sbr.rel (0) target = $region5
  $region4: #{cnn_ae_mnist_forward.6} parent=0 // pred_region
    _
  $region5: #{cnn_ae_mnist_forward.6} parent=0 // pred_fallthru
    _
  // Predicated region
  $region6: #{cnn_ae_mnist_forward.6} parent=0 // pred_check
    _
  $region7: #{cnn_ae_mnist_forward.6} parent=0 // pred_check_branch
    %11 = sbr.rel (0) target = $region9
  $region8: #{cnn_ae_mnist_forward.6} parent=0 // pred_region
    _
  $region9: #{cnn_ae_mnist_forward.6} parent=0 // pred_fallthru
    _
  // Predicated region
  $region10: #{cnn_ae_mnist_forward.6} parent=0 // pred_check
    _
  $region11: #{cnn_ae_mnist_forward.6} parent=0 // pred_check_branch
    %13 = sbr.rel (0) target = $region13
  $region12: #{cnn_ae_mnist_forward.6} parent=0 // pred_region
    _
  $region13: #{cnn_ae_mnist_forward.6} parent=0 // pred_fallthru
    _
  %v14 = vld [vmem:[%s1] sm:$0xff]
  %v15 = vld [vmem:[%s1 + $0x8] sm:$0xff]
  %v16 = vld [vmem:[%s1 + $0x10] sm:$0xff]
  %v17 = vld [vmem:[%s1 + $0x18] sm:$0xff]
  %v18 = vld [vmem:[%s1 + $0x20] sm:$0xff]
  %v19 = vld [vmem:[%s1 + $0x28] sm:$0xff]
  %v20 = vld [vmem:[%s1 + $0x30] sm:$0xff]
  %v21 = vld [vmem:[%s1 + $0x38] sm:$0xff]
  %v22 = vld [vmem:[%s1 + $0x40] sm:$0xff]
  %v23 = vld [vmem:[%s1 + $0x48] sm:$0xff]
  %v24 = vld [vmem:[%s1 + $0x50] sm:$0xff]
  %v25 = vld [vmem:[%s1 + $0x58] sm:$0xff]
  %v26 = vld [vmem:[%s1 + $0x60] sm:$0xff]
  %v27 = vld [vmem:[%s1 + $0x68] sm:$0xff]
  %v28 = vld [vmem:[%s1 + $0x70] sm:$0xff]
  %v29 = vld [vmem:[%s1 + $0x78] sm:$0xff]
  %v30 = vld [vmem:[%s1 + $0x80] sm:$0xff]
  %v31 = vld [vmem:[%s1 + $0x88] sm:$0xff]
  %v32 = vld [vmem:[%s1 + $0x90] sm:$0xff]
  %v33 = vld [vmem:[%s1 + $0x98] sm:$0xff]
  %v34 = vld [vmem:[%s1 + $0xa0] sm:$0xff]
  %v35 = vld [vmem:[%s1 + $0xa8] sm:$0xff]
  %v36 = vld [vmem:[%s1 + $0xb0] sm:$0xff]
  %v37 = vld [vmem:[%s1 + $0xb8] sm:$0xff]
  %v38 = vld [vmem:[%s1 + $0xc0] sm:$0xff]
  %v39 = vld [vmem:[%s1 + $0xc8] sm:$0xff]
  %v40 = vld [vmem:[%s1 + $0xd0] sm:$0xff]
  %v41 = vld [vmem:[%s1 + $0xd8] sm:$0xff]
  %v42 = vld [vmem:[%s1 + $0xe0] sm:$0xff]
  %v43 = vld [vmem:[%s1 + $0xe8] sm:$0xff]
  %v44 = vld [vmem:[%s1 + $0xf0] sm:$0xff]
  %v45 = vld [vmem:[%s1 + $0xf8] sm:$0xff]
  %v46 = vld [vmem:[%s1 + $0x100] sm:$0xff]
  %v47 = vld [vmem:[%s1 + $0x108] sm:$0xff]
  %v48 = vld [vmem:[%s1 + $0x110] sm:$0xff]
  %v49 = vld [vmem:[%s1 + $0x118] sm:$0xff]
  %v50 = vld [vmem:[%s2] sm:$0x1]
  %v51 = vld [vmem:[%s0] sm:$0xff]
  %v52 = vld [vmem:[%s0 + $0x8] sm:$0xff]
  %v53 = vld [vmem:[%s0 + $0x10] sm:$0xff]
  %v54 = vld [vmem:[%s0 + $0x18] sm:$0xff]
  %v55 = vld [vmem:[%s0 + $0x20] sm:$0xff]
  %v56 = vld [vmem:[%s0 + $0x28] sm:$0xff]
  %v57 = vld [vmem:[%s0 + $0x30] sm:$0xff]
  %v58 = vld [vmem:[%s0 + $0x38] sm:$0xff]
  %v59 = vld [vmem:[%s0 + $0x40] sm:$0xff]
  %v60 = vld [vmem:[%s0 + $0x48] sm:$0xff]
  %v61 = vld [vmem:[%s0 + $0x50] sm:$0xff]
  %v62 = vld [vmem:[%s0 + $0x58] sm:$0xff]
  %v63 = vld [vmem:[%s0 + $0x60] sm:$0xff]
  %v64 = vld [vmem:[%s0 + $0x68] sm:$0xff]
  %v65 = vld [vmem:[%s0 + $0x70] sm:$0xff]
  %v66 = vld [vmem:[%s0 + $0x78] sm:$0xff]
  %v67 = vld [vmem:[%s0 + $0x80] sm:$0xff]
  %v68 = vld [vmem:[%s0 + $0x88] sm:$0xff]
  %v69 = vld [vmem:[%s0 + $0x90] sm:$0x3]
  %v70 = vld [vmem:[%s0 + $0x98] sm:$0x3]
  %v71 = vld [vmem:[%s0 + $0xa0] sm:$0x3]
  %v73 = vlaneseq
  %v74 = vshrl.u32 %v73, 7
  %v75 = vsub.s32 0, %v74
  %v76 = vrot.slane %v50, %v75
  %vm78 = vcmask 261120
  %v80 = vsel %vm78, %v53, 0
  %v83 = vsel %vm78, %v56, 0
  %v86 = vsel %vm78, %v59, 0
  %v89 = vsel %vm78, %v62, 0
  %v92 = vsel %vm78, %v65, 0
  %v95 = vsel %vm78, %v68, 0
  %v98 = vsel %vm78, %v71, 0
  %100 = vmatprep.subr.mxu0 0.0
  %101 = vmatpush1.msra.mxu0 %v14
  %102 = vmatprep.subr.mxu0 0.0
  %103 = vmatpush1.msra.mxu0 %v15
  %104 = vmatprep.subr.mxu0 0.0
  %105 = vmatpush1.msra.mxu0 %v16
  %106 = vmatprep.subr.mxu0 0.0
  %107 = vmatpush1.msra.mxu0 %v17
  %108 = vmatprep.subr.mxu0 0.0
  %109 = vmatpush1.msra.mxu0 %v18
  %110 = vmatprep.subr.mxu0 0.0
  %111 = vmatpush1.msra.mxu0 %v19
  %112 = vmatprep.subr.mxu0 0.0
  %113 = vmatpush1.msra.mxu0 %v20
  %114 = vmatprep.subr.mxu0 0.0
  %115 = vmatpush1.msra.mxu0 %v21
  %116 = vmatprep.subr.mxu0 0.0
  %117 = vmatpush1.msra.mxu0 %v22
  %118 = vmatprep.subr.mxu0 0.0
  %119 = vmatpush1.msra.mxu0 %v23
  %120 = vmatprep.subr.mxu0 0.0
  %121 = vmatpush1.msra.mxu0 %v24
  %122 = vmatprep.subr.mxu0 0.0
  %123 = vmatpush1.msra.mxu0 %v25
  %124 = vmatprep.subr.mxu0 0.0
  %125 = vmatpush1.msra.mxu0 %v26
  %126 = vmatprep.subr.mxu0 0.0
  %127 = vmatpush1.msra.mxu0 %v27
  %128 = vmatprep.subr.mxu0 0.0
  %129 = vmatpush1.msra.mxu0 %v28
  %130 = vmatprep.subr.mxu0 0.0
  %131 = vmatpush1.msra.mxu0 %v29
  %132 = vmatprep.subr.mxu0 0.0
  %133 = vmatpush1.msra.mxu0 %v30
  %134 = vmatprep.subr.mxu0 0.0
  %135 = vmatpush1.msra.mxu0 %v31
  %136 = vmatprep.subr.mxu0 0.0
  %137 = vmatpush1.msra.mxu0 %v32
  %138 = vmatprep.subr.mxu0 0.0
  %139 = vmatpush1.msra.mxu0 %v33
  %140 = vmatprep.subr.mxu0 0.0
  %141 = vmatpush1.msra.mxu0 %v34
  %142 = vmatprep.subr.mxu0 0.0
  %143 = vmatpush1.msra.mxu0 %v35
  %144 = vmatprep.subr.mxu0 0.0
  %145 = vmatpush1.msra.mxu0 %v36
  %146 = vmatprep.subr.mxu0 0.0
  %147 = vmatpush1.msra.mxu0 %v37
  %148 = vmatprep.subr.mxu0 0.0
  %149 = vmatpush1.msra.mxu0 %v38
  %150 = vmatprep.subr.mxu0 0.0
  %151 = vmatpush1.msra.mxu0 %v39
  %152 = vmatprep.subr.mxu0 0.0
  %153 = vmatpush1.msra.mxu0 %v40
  %154 = vmatprep.subr.mxu0 0.0
  %155 = vmatpush1.msra.mxu0 %v41
  %156 = vmatprep.subr.mxu0 0.0
  %157 = vmatpush1.msra.mxu0 %v42
  %158 = vmatprep.subr.mxu0 0.0
  %159 = vmatpush1.msra.mxu0 %v43
  %160 = vmatprep.subr.mxu0 0.0
  %161 = vmatpush1.msra.mxu0 %v44
  %162 = vmatprep.subr.mxu0 0.0
  %163 = vmatpush1.msra.mxu0 %v45
  %164 = vmatprep.mubr.f32.mxu0 %v52
  %165 = vmatmul.mubr.f32.gmra.mrb[0].mxu0 %v51
  %v166 = vpop.f32.mrb[0].mxu0
  %v167 = vadd.f32 %v76, %v166
  %v168 = vpop.f32.mrb[0].mxu0
  %169 = vmatprep.mubr.f32.mxu0 %v55
  %170 = vmatmul.mubr.f32.gmra.mrb[0].mxu0 %v54
  %v171 = vpop.f32.mrb[0].mxu0
  %v172 = vadd.f32 %v76, %v171
  %v173 = vpop.f32.mrb[0].mxu0
  %174 = vmatprep.mubr.f32.mxu0 %v58
  %175 = vmatmul.mubr.f32.gmra.mrb[0].mxu0 %v57
  %v176 = vpop.f32.mrb[0].mxu0
  %v177 = vadd.f32 %v76, %v176
  %v178 = vpop.f32.mrb[0].mxu0
  %179 = vmatprep.mubr.f32.mxu0 %v61
  %180 = vmatmul.mubr.f32.gmra.mrb[0].mxu0 %v60
  %v181 = vpop.f32.mrb[0].mxu0
  %v182 = vadd.f32 %v76, %v181
  %v183 = vpop.f32.mrb[0].mxu0
  %184 = vmatprep.mubr.f32.mxu0 %v64
  %185 = vmatmul.mubr.f32.gmra.mrb[0].mxu0 %v63
  %v186 = vpop.f32.mrb[0].mxu0
  %v187 = vadd.f32 %v76, %v186
  %v188 = vpop.f32.mrb[0].mxu0
  %189 = vmatprep.mubr.f32.mxu0 %v67
  %190 = vmatmul.mubr.f32.gmra.mrb[0].mxu0 %v66
  %v191 = vpop.f32.mrb[0].mxu0
  %v192 = vadd.f32 %v76, %v191
  %v193 = vpop.f32.mrb[0].mxu0
  %194 = vmatprep.mubr.f32.mxu0 %v70
  %195 = vmatmul.mubr.f32.gmra.mrb[0].mxu0 %v69
  %v196 = vpop.f32.mrb[0].mxu0
  %v197 = vadd.f32 %v76, %v196
  %v198 = vpop.f32.mrb[0].mxu0
  %199 = vdwg.mxu0
  %200 = vmatprep.subr.mxu0 0.0
  %201 = vmatpush1.msra.mxu0 %v46
  %202 = vmatprep.subr.mxu0 0.0
  %203 = vmatpush1.msra.mxu0 %v47
  %204 = vmatprep.subr.mxu0 0.0
  %205 = vmatpush1.msra.mxu0 %v48
  %206 = vmatprep.subr.mxu0 0.0
  %207 = vmatpush1.msra.mxu0 %v49
  %208 = vmatprep.subr.mxu0 0.0
  %209 = vmatpush1.msra.mxu0 0.0
  %210 = vmatprep.subr.mxu0 0.0
  %211 = vmatpush1.msra.mxu0 0.0
  %212 = vmatprep.subr.mxu0 0.0
  %213 = vmatpush1.msra.mxu0 0.0
  %214 = vmatprep.subr.mxu0 0.0
  %215 = vmatpush1.msra.mxu0 0.0
  %216 = vmatprep.subr.mxu0 0.0
  %217 = vmatpush1.msra.mxu0 0.0
  %218 = vmatprep.subr.mxu0 0.0
  %219 = vmatpush1.msra.mxu0 0.0
  %220 = vmatprep.subr.mxu0 0.0
  %221 = vmatpush1.msra.mxu0 0.0
  %222 = vmatprep.subr.mxu0 0.0
  %223 = vmatpush1.msra.mxu0 0.0
  %224 = vmatprep.subr.mxu0 0.0
  %225 = vmatpush1.msra.mxu0 0.0
  %226 = vmatprep.subr.mxu0 0.0
  %227 = vmatpush1.msra.mxu0 0.0
  %228 = vmatprep.subr.mxu0 0.0
  %229 = vmatpush1.msra.mxu0 0.0
  %230 = vmatprep.subr.mxu0 0.0
  %231 = vmatpush1.msra.mxu0 0.0
  %232 = vmatprep.subr.mxu0 0.0
  %233 = vmatpush1.msra.mxu0 0.0
  %234 = vmatprep.subr.mxu0 0.0
  %235 = vmatpush1.msra.mxu0 0.0
  %236 = vmatprep.subr.mxu0 0.0
  %237 = vmatpush1.msra.mxu0 0.0
  %238 = vmatprep.subr.mxu0 0.0
  %239 = vmatpush1.msra.mxu0 0.0
  %240 = vmatprep.subr.mxu0 0.0
  %241 = vmatpush1.msra.mxu0 0.0
  %242 = vmatprep.subr.mxu0 0.0
  %243 = vmatpush1.msra.mxu0 0.0
  %244 = vmatprep.subr.mxu0 0.0
  %245 = vmatpush1.msra.mxu0 0.0
  %246 = vmatprep.subr.mxu0 0.0
  %247 = vmatpush1.msra.mxu0 0.0
  %248 = vmatprep.subr.mxu0 0.0
  %249 = vmatpush1.msra.mxu0 0.0
  %250 = vmatprep.subr.mxu0 0.0
  %251 = vmatpush1.msra.mxu0 0.0
  %252 = vmatprep.subr.mxu0 0.0
  %253 = vmatpush1.msra.mxu0 0.0
  %254 = vmatprep.subr.mxu0 0.0
  %255 = vmatpush1.msra.mxu0 0.0
  %256 = vmatprep.subr.mxu0 0.0
  %257 = vmatpush1.msra.mxu0 0.0
  %258 = vmatprep.subr.mxu0 0.0
  %259 = vmatpush1.msra.mxu0 0.0
  %260 = vmatprep.subr.mxu0 0.0
  %261 = vmatpush1.msra.mxu0 0.0
  %262 = vmatprep.subr.mxu0 0.0
  %263 = vmatpush1.msra.mxu0 0.0
  %264 = vmatprep.mubr.f32.mxu0 0.0
  %265 = vmatmul.mubr.f32.gmra.mrb[0].mxu0 %v80
  %v266 = vpop.f32.mrb[0].mxu0
  %v267 = vadd.f32 %v167, %v266
  %v268 = vpop.f32.mrb[0].mxu0
  %269 = vmatprep.mubr.f32.mxu0 0.0
  %270 = vmatmul.mubr.f32.gmra.mrb[0].mxu0 %v83
  %v271 = vpop.f32.mrb[0].mxu0
  %v272 = vadd.f32 %v172, %v271
  %v273 = vpop.f32.mrb[0].mxu0
  %274 = vmatprep.mubr.f32.mxu0 0.0
  %275 = vmatmul.mubr.f32.gmra.mrb[0].mxu0 %v86
  %v276 = vpop.f32.mrb[0].mxu0
  %v277 = vadd.f32 %v177, %v276
  %v278 = vpop.f32.mrb[0].mxu0
  %279 = vmatprep.mubr.f32.mxu0 0.0
  %280 = vmatmul.mubr.f32.gmra.mrb[0].mxu0 %v89
  %v281 = vpop.f32.mrb[0].mxu0
  %v282 = vadd.f32 %v182, %v281
  %v283 = vpop.f32.mrb[0].mxu0
  %284 = vmatprep.mubr.f32.mxu0 0.0
  %285 = vmatmul.mubr.f32.gmra.mrb[0].mxu0 %v92
  %v286 = vpop.f32.mrb[0].mxu0
  %v287 = vadd.f32 %v187, %v286
  %v288 = vpop.f32.mrb[0].mxu0
  %289 = vmatprep.mubr.f32.mxu0 0.0
  %290 = vmatmul.mubr.f32.gmra.mrb[0].mxu0 %v95
  %v291 = vpop.f32.mrb[0].mxu0
  %v292 = vadd.f32 %v192, %v291
  %v293 = vpop.f32.mrb[0].mxu0
  %294 = vmatprep.mubr.f32.mxu0 0.0
  %295 = vmatmul.mubr.f32.gmra.mrb[0].mxu0 %v98
  %v296 = vpop.f32.mrb[0].mxu0
  %v297 = vadd.f32 %v197, %v296
  %v298 = vpop.f32.mrb[0].mxu0
  %299 = vdwg.mxu0
  %v300 = vmax.f32 %v267, 0.0
  %v301 = vmax.f32 %v272, 0.0
  %v302 = vmax.f32 %v277, 0.0
  %v303 = vmax.f32 %v282, 0.0
  %v304 = vmax.f32 %v287, 0.0
  %v305 = vmax.f32 %v292, 0.0
  %v306 = vmax.f32 %v297, 0.0
  %s307 = scalar_lea.vmem %s0, 168
  %v308 = vld [vmem:[%s307] sm:$0xff]
  %v309 = vld [vmem:[%s307 + $0x8] sm:$0xff]
  %v310 = vld [vmem:[%s307 + $0x10] sm:$0xff]
  %v311 = vld [vmem:[%s307 + $0x18] sm:$0xff]
  %v312 = vld [vmem:[%s307 + $0x20] sm:$0xff]
  %v313 = vld [vmem:[%s307 + $0x28] sm:$0xff]
  %v314 = vld [vmem:[%s307 + $0x30] sm:$0xff]
  %v315 = vld [vmem:[%s307 + $0x38] sm:$0xff]
  %v316 = vld [vmem:[%s307 + $0x40] sm:$0xff]
  %v317 = vld [vmem:[%s307 + $0x48] sm:$0xff]
  %v318 = vld [vmem:[%s307 + $0x50] sm:$0xff]
  %v319 = vld [vmem:[%s307 + $0x58] sm:$0xff]
  %v320 = vld [vmem:[%s307 + $0x60] sm:$0xff]
  %v321 = vld [vmem:[%s307 + $0x68] sm:$0xff]
  %v322 = vld [vmem:[%s307 + $0x70] sm:$0xff]
  %v323 = vld [vmem:[%s307 + $0x78] sm:$0xff]
  %v324 = vld [vmem:[%s307 + $0x80] sm:$0xff]
  %v325 = vld [vmem:[%s307 + $0x88] sm:$0xff]
  %v326 = vld [vmem:[%s307 + $0x90] sm:$0x3]
  %v327 = vld [vmem:[%s307 + $0x98] sm:$0x3]
  %v328 = vld [vmem:[%s307 + $0xa0] sm:$0x3]
  %v330 = vsel %vm78, %v310, 0
  %v333 = vsel %vm78, %v313, 0
  %v336 = vsel %vm78, %v316, 0
  %v339 = vsel %vm78, %v319, 0
  %v342 = vsel %vm78, %v322, 0
  %v345 = vsel %vm78, %v325, 0
  %v348 = vsel %vm78, %v328, 0
  %350 = vmatprep.subr.mxu0 0.0
  %351 = vmatpush1.msra.mxu0 %v14
  %352 = vmatprep.subr.mxu0 0.0
  %353 = vmatpush1.msra.mxu0 %v15
  %354 = vmatprep.subr.mxu0 0.0
  %355 = vmatpush1.msra.mxu0 %v16
  %356 = vmatprep.subr.mxu0 0.0
  %357 = vmatpush1.msra.mxu0 %v17
  %358 = vmatprep.subr.mxu0 0.0
  %359 = vmatpush1.msra.mxu0 %v18
  %360 = vmatprep.subr.mxu0 0.0
  %361 = vmatpush1.msra.mxu0 %v19
  %362 = vmatprep.subr.mxu0 0.0
  %363 = vmatpush1.msra.mxu0 %v20
  %364 = vmatprep.subr.mxu0 0.0
  %365 = vmatpush1.msra.mxu0 %v21
  %366 = vmatprep.subr.mxu0 0.0
  %367 = vmatpush1.msra.mxu0 %v22
  %368 = vmatprep.subr.mxu0 0.0
  %369 = vmatpush1.msra.mxu0 %v23
  %370 = vmatprep.subr.mxu0 0.0
  %371 = vmatpush1.msra.mxu0 %v24
  %372 = vmatprep.subr.mxu0 0.0
  %373 = vmatpush1.msra.mxu0 %v25
  %374 = vmatprep.subr.mxu0 0.0
  %375 = vmatpush1.msra.mxu0 %v26
  %376 = vmatprep.subr.mxu0 0.0
  %377 = vmatpush1.msra.mxu0 %v27
  %378 = vmatprep.subr.mxu0 0.0
  %379 = vmatpush1.msra.mxu0 %v28
  %380 = vmatprep.subr.mxu0 0.0
  %381 = vmatpush1.msra.mxu0 %v29
  %382 = vmatprep.subr.mxu0 0.0
  %383 = vmatpush1.msra.mxu0 %v30
  %384 = vmatprep.subr.mxu0 0.0
  %385 = vmatpush1.msra.mxu0 %v31
  %386 = vmatprep.subr.mxu0 0.0
  %387 = vmatpush1.msra.mxu0 %v32
  %388 = vmatprep.subr.mxu0 0.0
  %389 = vmatpush1.msra.mxu0 %v33
  %390 = vmatprep.subr.mxu0 0.0
  %391 = vmatpush1.msra.mxu0 %v34
  %392 = vmatprep.subr.mxu0 0.0
  %393 = vmatpush1.msra.mxu0 %v35
  %394 = vmatprep.subr.mxu0 0.0
  %395 = vmatpush1.msra.mxu0 %v36
  %396 = vmatprep.subr.mxu0 0.0
  %397 = vmatpush1.msra.mxu0 %v37
  %398 = vmatprep.subr.mxu0 0.0
  %399 = vmatpush1.msra.mxu0 %v38
  %400 = vmatprep.subr.mxu0 0.0
  %401 = vmatpush1.msra.mxu0 %v39
  %402 = vmatprep.subr.mxu0 0.0
  %403 = vmatpush1.msra.mxu0 %v40
  %404 = vmatprep.subr.mxu0 0.0
  %405 = vmatpush1.msra.mxu0 %v41
  %406 = vmatprep.subr.mxu0 0.0
  %407 = vmatpush1.msra.mxu0 %v42
  %408 = vmatprep.subr.mxu0 0.0
  %409 = vmatpush1.msra.mxu0 %v43
  %410 = vmatprep.subr.mxu0 0.0
  %411 = vmatpush1.msra.mxu0 %v44
  %412 = vmatprep.subr.mxu0 0.0
  %413 = vmatpush1.msra.mxu0 %v45
  %414 = vmatprep.mubr.f32.mxu0 %v309
  %415 = vmatmul.mubr.f32.gmra.mrb[0].mxu0 %v308
  %v416 = vpop.f32.mrb[0].mxu0
  %v417 = vadd.f32 %v76, %v416
  %v418 = vpop.f32.mrb[0].mxu0
  %419 = vmatprep.mubr.f32.mxu0 %v312
  %420 = vmatmul.mubr.f32.gmra.mrb[0].mxu0 %v311
  %v421 = vpop.f32.mrb[0].mxu0
  %v422 = vadd.f32 %v76, %v421
  %v423 = vpop.f32.mrb[0].mxu0
  %424 = vmatprep.mubr.f32.mxu0 %v315
  %425 = vmatmul.mubr.f32.gmra.mrb[0].mxu0 %v314
  %v426 = vpop.f32.mrb[0].mxu0
  %v427 = vadd.f32 %v76, %v426
  %v428 = vpop.f32.mrb[0].mxu0
  %429 = vmatprep.mubr.f32.mxu0 %v318
  %430 = vmatmul.mubr.f32.gmra.mrb[0].mxu0 %v317
  %v431 = vpop.f32.mrb[0].mxu0
  %v432 = vadd.f32 %v76, %v431
  %v433 = vpop.f32.mrb[0].mxu0
  %434 = vmatprep.mubr.f32.mxu0 %v321
  %435 = vmatmul.mubr.f32.gmra.mrb[0].mxu0 %v320
  %v436 = vpop.f32.mrb[0].mxu0
  %v437 = vadd.f32 %v76, %v436
  %v438 = vpop.f32.mrb[0].mxu0
  %439 = vmatprep.mubr.f32.mxu0 %v324
  %440 = vmatmul.mubr.f32.gmra.mrb[0].mxu0 %v323
  %v441 = vpop.f32.mrb[0].mxu0
  %v442 = vadd.f32 %v76, %v441
  %v443 = vpop.f32.mrb[0].mxu0
  %444 = vmatprep.mubr.f32.mxu0 %v327
  %445 = vmatmul.mubr.f32.gmra.mrb[0].mxu0 %v326
  %v446 = vpop.f32.mrb[0].mxu0
  %v447 = vadd.f32 %v76, %v446
  %v448 = vpop.f32.mrb[0].mxu0
  %449 = vdwg.mxu0
  %450 = vmatprep.subr.mxu0 0.0
  %451 = vmatpush1.msra.mxu0 %v46
  %452 = vmatprep.subr.mxu0 0.0
  %453 = vmatpush1.msra.mxu0 %v47
  %454 = vmatprep.subr.mxu0 0.0
  %455 = vmatpush1.msra.mxu0 %v48
  %456 = vmatprep.subr.mxu0 0.0
  %457 = vmatpush1.msra.mxu0 %v49
  %458 = vmatprep.subr.mxu0 0.0
  %459 = vmatpush1.msra.mxu0 0.0
  %460 = vmatprep.subr.mxu0 0.0
  %461 = vmatpush1.msra.mxu0 0.0
  %462 = vmatprep.subr.mxu0 0.0
  %463 = vmatpush1.msra.mxu0 0.0
  %464 = vmatprep.subr.mxu0 0.0
  %465 = vmatpush1.msra.mxu0 0.0
  %466 = vmatprep.subr.mxu0 0.0
  %467 = vmatpush1.msra.mxu0 0.0
  %468 = vmatprep.subr.mxu0 0.0
  %469 = vmatpush1.msra.mxu0 0.0
  %470 = vmatprep.subr.mxu0 0.0
  %471 = vmatpush1.msra.mxu0 0.0
  %472 = vmatprep.subr.mxu0 0.0
  %473 = vmatpush1.msra.mxu0 0.0
  %474 = vmatprep.subr.mxu0 0.0
  %475 = vmatpush1.msra.mxu0 0.0
  %476 = vmatprep.subr.mxu0 0.0
  %477 = vmatpush1.msra.mxu0 0.0
  %478 = vmatprep.subr.mxu0 0.0
  %479 = vmatpush1.msra.mxu0 0.0
  %480 = vmatprep.subr.mxu0 0.0
  %481 = vmatpush1.msra.mxu0 0.0
  %482 = vmatprep.subr.mxu0 0.0
  %483 = vmatpush1.msra.mxu0 0.0
  %484 = vmatprep.subr.mxu0 0.0
  %485 = vmatpush1.msra.mxu0 0.0
  %486 = vmatprep.subr.mxu0 0.0
  %487 = vmatpush1.msra.mxu0 0.0
  %488 = vmatprep.subr.mxu0 0.0
  %489 = vmatpush1.msra.mxu0 0.0
  %490 = vmatprep.subr.mxu0 0.0
  %491 = vmatpush1.msra.mxu0 0.0
  %492 = vmatprep.subr.mxu0 0.0
  %493 = vmatpush1.msra.mxu0 0.0
  %494 = vmatprep.subr.mxu0 0.0
  %495 = vmatpush1.msra.mxu0 0.0
  %496 = vmatprep.subr.mxu0 0.0
  %497 = vmatpush1.msra.mxu0 0.0
  %498 = vmatprep.subr.mxu0 0.0
  %499 = vmatpush1.msra.mxu0 0.0
  %500 = vmatprep.subr.mxu0 0.0
  %501 = vmatpush1.msra.mxu0 0.0
  %502 = vmatprep.subr.mxu0 0.0
  %503 = vmatpush1.msra.mxu0 0.0
  %504 = vmatprep.subr.mxu0 0.0
  %505 = vmatpush1.msra.mxu0 0.0
  %506 = vmatprep.subr.mxu0 0.0
  %507 = vmatpush1.msra.mxu0 0.0
  %508 = vmatprep.subr.mxu0 0.0
  %509 = vmatpush1.msra.mxu0 0.0
  %510 = vmatprep.subr.mxu0 0.0
  %511 = vmatpush1.msra.mxu0 0.0
  %512 = vmatprep.subr.mxu0 0.0
  %513 = vmatpush1.msra.mxu0 0.0
  %514 = vmatprep.mubr.f32.mxu0 0.0
  %515 = vmatmul.mubr.f32.gmra.mrb[0].mxu0 %v330
  %v516 = vpop.f32.mrb[0].mxu0
  %v517 = vadd.f32 %v417, %v516
  %v518 = vpop.f32.mrb[0].mxu0
  %519 = vmatprep.mubr.f32.mxu0 0.0
  %520 = vmatmul.mubr.f32.gmra.mrb[0].mxu0 %v333
  %v521 = vpop.f32.mrb[0].mxu0
  %v522 = vadd.f32 %v422, %v521
  %v523 = vpop.f32.mrb[0].mxu0
  %524 = vmatprep.mubr.f32.mxu0 0.0
  %525 = vmatmul.mubr.f32.gmra.mrb[0].mxu0 %v336
  %v526 = vpop.f32.mrb[0].mxu0
  %v527 = vadd.f32 %v427, %v526
  %v528 = vpop.f32.mrb[0].mxu0
  %529 = vmatprep.mubr.f32.mxu0 0.0
  %530 = vmatmul.mubr.f32.gmra.mrb[0].mxu0 %v339
  %v531 = vpop.f32.mrb[0].mxu0
  %v532 = vadd.f32 %v432, %v531
  %v533 = vpop.f32.mrb[0].mxu0
  %534 = vmatprep.mubr.f32.mxu0 0.0
  %535 = vmatmul.mubr.f32.gmra.mrb[0].mxu0 %v342
  %v536 = vpop.f32.mrb[0].mxu0
  %v537 = vadd.f32 %v437, %v536
  %v538 = vpop.f32.mrb[0].mxu0
  %539 = vmatprep.mubr.f32.mxu0 0.0
  %540 = vmatmul.mubr.f32.gmra.mrb[0].mxu0 %v345
  %v541 = vpop.f32.mrb[0].mxu0
  %v542 = vadd.f32 %v442, %v541
  %v543 = vpop.f32.mrb[0].mxu0
  %544 = vmatprep.mubr.f32.mxu0 0.0
  %545 = vmatmul.mubr.f32.gmra.mrb[0].mxu0 %v348
  %v546 = vpop.f32.mrb[0].mxu0
  %v547 = vadd.f32 %v447, %v546
  %v548 = vpop.f32.mrb[0].mxu0
  %549 = vdwg.mxu0
  %v550 = vmax.f32 %v517, 0.0
  %v551 = vmax.f32 %v522, 0.0
  %v552 = vmax.f32 %v527, 0.0
  %v553 = vmax.f32 %v532, 0.0
  %v554 = vmax.f32 %v537, 0.0
  %v555 = vmax.f32 %v542, 0.0
  %v556 = vmax.f32 %v547, 0.0
  %v557 = vmax.f32 %v300, %v550
  %v558 = vmax.f32 %v301, %v551
  %v559 = vmax.f32 %v302, %v552
  %v560 = vmax.f32 %v303, %v553
  %v561 = vmax.f32 %v304, %v554
  %v562 = vmax.f32 %v305, %v555
  %v563 = vmax.f32 %v306, %v556
  %s564 = scalar_lea.vmem %s0, 336
  %v565 = vld [vmem:[%s564] sm:$0xff]
  %v566 = vld [vmem:[%s564 + $0x8] sm:$0xff]
  %v567 = vld [vmem:[%s564 + $0x10] sm:$0xff]
  %v568 = vld [vmem:[%s564 + $0x18] sm:$0xff]
  %v569 = vld [vmem:[%s564 + $0x20] sm:$0xff]
  %v570 = vld [vmem:[%s564 + $0x28] sm:$0xff]
  %v571 = vld [vmem:[%s564 + $0x30] sm:$0xff]
  %v572 = vld [vmem:[%s564 + $0x38] sm:$0xff]
  %v573 = vld [vmem:[%s564 + $0x40] sm:$0xff]
  %v574 = vld [vmem:[%s564 + $0x48] sm:$0xff]
  %v575 = vld [vmem:[%s564 + $0x50] sm:$0xff]
  %v576 = vld [vmem:[%s564 + $0x58] sm:$0xff]
  %v577 = vld [vmem:[%s564 + $0x60] sm:$0xff]
  %v578 = vld [vmem:[%s564 + $0x68] sm:$0xff]
  %v579 = vld [vmem:[%s564 + $0x70] sm:$0xff]
  %v580 = vld [vmem:[%s564 + $0x78] sm:$0xff]
  %v581 = vld [vmem:[%s564 + $0x80] sm:$0xff]
  %v582 = vld [vmem:[%s564 + $0x88] sm:$0xff]
  %v583 = vld [vmem:[%s564 + $0x90] sm:$0x3]
  %v584 = vld [vmem:[%s564 + $0x98] sm:$0x3]
  %v585 = vld [vmem:[%s564 + $0xa0] sm:$0x3]
  %v587 = vsel %vm78, %v567, 0
  %v590 = vsel %vm78, %v570, 0
  %v593 = vsel %vm78, %v573, 0
  %v596 = vsel %vm78, %v576, 0
  %v599 = vsel %vm78, %v579, 0
  %v602 = vsel %vm78, %v582, 0
  %v605 = vsel %vm78, %v585, 0
  %607 = vmatprep.subr.mxu0 0.0
  %608 = vmatpush1.msra.mxu0 %v14
  %609 = vmatprep.subr.mxu0 0.0
  %610 = vmatpush1.msra.mxu0 %v15
  %611 = vmatprep.subr.mxu0 0.0
  %612 = vmatpush1.msra.mxu0 %v16
  %613 = vmatprep.subr.mxu0 0.0
  %614 = vmatpush1.msra.mxu0 %v17
  %615 = vmatprep.subr.mxu0 0.0
  %616 = vmatpush1.msra.mxu0 %v18
  %617 = vmatprep.subr.mxu0 0.0
  %618 = vmatpush1.msra.mxu0 %v19
  %619 = vmatprep.subr.mxu0 0.0
  %620 = vmatpush1.msra.mxu0 %v20
  %621 = vmatprep.subr.mxu0 0.0
  %622 = vmatpush1.msra.mxu0 %v21
  %623 = vmatprep.subr.mxu0 0.0
  %624 = vmatpush1.msra.mxu0 %v22
  %625 = vmatprep.subr.mxu0 0.0
  %626 = vmatpush1.msra.mxu0 %v23
  %627 = vmatprep.subr.mxu0 0.0
  %628 = vmatpush1.msra.mxu0 %v24
  %629 = vmatprep.subr.mxu0 0.0
  %630 = vmatpush1.msra.mxu0 %v25
  %631 = vmatprep.subr.mxu0 0.0
  %632 = vmatpush1.msra.mxu0 %v26
  %633 = vmatprep.subr.mxu0 0.0
  %634 = vmatpush1.msra.mxu0 %v27
  %635 = vmatprep.subr.mxu0 0.0
  %636 = vmatpush1.msra.mxu0 %v28
  %637 = vmatprep.subr.mxu0 0.0
  %638 = vmatpush1.msra.mxu0 %v29
  %639 = vmatprep.subr.mxu0 0.0
  %640 = vmatpush1.msra.mxu0 %v30
  %641 = vmatprep.subr.mxu0 0.0
  %642 = vmatpush1.msra.mxu0 %v31
  %643 = vmatprep.subr.mxu0 0.0
  %644 = vmatpush1.msra.mxu0 %v32
  %645 = vmatprep.subr.mxu0 0.0
  %646 = vmatpush1.msra.mxu0 %v33
  %647 = vmatprep.subr.mxu0 0.0
  %648 = vmatpush1.msra.mxu0 %v34
  %649 = vmatprep.subr.mxu0 0.0
  %650 = vmatpush1.msra.mxu0 %v35
  %651 = vmatprep.subr.mxu0 0.0
  %652 = vmatpush1.msra.mxu0 %v36
  %653 = vmatprep.subr.mxu0 0.0
  %654 = vmatpush1.msra.mxu0 %v37
  %655 = vmatprep.subr.mxu0 0.0
  %656 = vmatpush1.msra.mxu0 %v38
  %657 = vmatprep.subr.mxu0 0.0
  %658 = vmatpush1.msra.mxu0 %v39
  %659 = vmatprep.subr.mxu0 0.0
  %660 = vmatpush1.msra.mxu0 %v40
  %661 = vmatprep.subr.mxu0 0.0
  %662 = vmatpush1.msra.mxu0 %v41
  %663 = vmatprep.subr.mxu0 0.0
  %664 = vmatpush1.msra.mxu0 %v42
  %665 = vmatprep.subr.mxu0 0.0
  %666 = vmatpush1.msra.mxu0 %v43
  %667 = vmatprep.subr.mxu0 0.0
  %668 = vmatpush1.msra.mxu0 %v44
  %669 = vmatprep.subr.mxu0 0.0
  %670 = vmatpush1.msra.mxu0 %v45
  %671 = vmatprep.mubr.f32.mxu0 %v566
  %672 = vmatmul.mubr.f32.gmra.mrb[0].mxu0 %v565
  %v673 = vpop.f32.mrb[0].mxu0
  %v674 = vadd.f32 %v76, %v673
  %v675 = vpop.f32.mrb[0].mxu0
  %676 = vmatprep.mubr.f32.mxu0 %v569
  %677 = vmatmul.mubr.f32.gmra.mrb[0].mxu0 %v568
  %v678 = vpop.f32.mrb[0].mxu0
  %v679 = vadd.f32 %v76, %v678
  %v680 = vpop.f32.mrb[0].mxu0
  %681 = vmatprep.mubr.f32.mxu0 %v572
  %682 = vmatmul.mubr.f32.gmra.mrb[0].mxu0 %v571
  %v683 = vpop.f32.mrb[0].mxu0
  %v684 = vadd.f32 %v76, %v683
  %v685 = vpop.f32.mrb[0].mxu0
  %686 = vmatprep.mubr.f32.mxu0 %v575
  %687 = vmatmul.mubr.f32.gmra.mrb[0].mxu0 %v574
  %v688 = vpop.f32.mrb[0].mxu0
  %v689 = vadd.f32 %v76, %v688
  %v690 = vpop.f32.mrb[0].mxu0
  %691 = vmatprep.mubr.f32.mxu0 %v578
  %692 = vmatmul.mubr.f32.gmra.mrb[0].mxu0 %v577
  %v693 = vpop.f32.mrb[0].mxu0
  %v694 = vadd.f32 %v76, %v693
  %v695 = vpop.f32.mrb[0].mxu0
  %696 = vmatprep.mubr.f32.mxu0 %v581
  %697 = vmatmul.mubr.f32.gmra.mrb[0].mxu0 %v580
  %v698 = vpop.f32.mrb[0].mxu0
  %v699 = vadd.f32 %v76, %v698
  %v700 = vpop.f32.mrb[0].mxu0
  %701 = vmatprep.mubr.f32.mxu0 %v584
  %702 = vmatmul.mubr.f32.gmra.mrb[0].mxu0 %v583
  %v703 = vpop.f32.mrb[0].mxu0
  %v704 = vadd.f32 %v76, %v703
  %v705 = vpop.f32.mrb[0].mxu0
  %706 = vdwg.mxu0
  %707 = vmatprep.subr.mxu0 0.0
  %708 = vmatpush1.msra.mxu0 %v46
  %709 = vmatprep.subr.mxu0 0.0
  %710 = vmatpush1.msra.mxu0 %v47
  %711 = vmatprep.subr.mxu0 0.0
  %712 = vmatpush1.msra.mxu0 %v48
  %713 = vmatprep.subr.mxu0 0.0
  %714 = vmatpush1.msra.mxu0 %v49
  %715 = vmatprep.subr.mxu0 0.0
  %716 = vmatpush1.msra.mxu0 0.0
  %717 = vmatprep.subr.mxu0 0.0
  %718 = vmatpush1.msra.mxu0 0.0
  %719 = vmatprep.subr.mxu0 0.0
  %720 = vmatpush1.msra.mxu0 0.0
  %721 = vmatprep.subr.mxu0 0.0
  %722 = vmatpush1.msra.mxu0 0.0
  %723 = vmatprep.subr.mxu0 0.0
  %724 = vmatpush1.msra.mxu0 0.0
  %725 = vmatprep.subr.mxu0 0.0
  %726 = vmatpush1.msra.mxu0 0.0
  %727 = vmatprep.subr.mxu0 0.0
  %728 = vmatpush1.msra.mxu0 0.0
  %729 = vmatprep.subr.mxu0 0.0
  %730 = vmatpush1.msra.mxu0 0.0
  %731 = vmatprep.subr.mxu0 0.0
  %732 = vmatpush1.msra.mxu0 0.0
  %733 = vmatprep.subr.mxu0 0.0
  %734 = vmatpush1.msra.mxu0 0.0
  %735 = vmatprep.subr.mxu0 0.0
  %736 = vmatpush1.msra.mxu0 0.0
  %737 = vmatprep.subr.mxu0 0.0
  %738 = vmatpush1.msra.mxu0 0.0
  %739 = vmatprep.subr.mxu0 0.0
  %740 = vmatpush1.msra.mxu0 0.0
  %741 = vmatprep.subr.mxu0 0.0
  %742 = vmatpush1.msra.mxu0 0.0
  %743 = vmatprep.subr.mxu0 0.0
  %744 = vmatpush1.msra.mxu0 0.0
  %745 = vmatprep.subr.mxu0 0.0
  %746 = vmatpush1.msra.mxu0 0.0
  %747 = vmatprep.subr.mxu0 0.0
  %748 = vmatpush1.msra.mxu0 0.0
  %749 = vmatprep.subr.mxu0 0.0
  %750 = vmatpush1.msra.mxu0 0.0
  %751 = vmatprep.subr.mxu0 0.0
  %752 = vmatpush1.msra.mxu0 0.0
  %753 = vmatprep.subr.mxu0 0.0
  %754 = vmatpush1.msra.mxu0 0.0
  %755 = vmatprep.subr.mxu0 0.0
  %756 = vmatpush1.msra.mxu0 0.0
  %757 = vmatprep.subr.mxu0 0.0
  %758 = vmatpush1.msra.mxu0 0.0
  %759 = vmatprep.subr.mxu0 0.0
  %760 = vmatpush1.msra.mxu0 0.0
  %761 = vmatprep.subr.mxu0 0.0
  %762 = vmatpush1.msra.mxu0 0.0
  %763 = vmatprep.subr.mxu0 0.0
  %764 = vmatpush1.msra.mxu0 0.0
  %765 = vmatprep.subr.mxu0 0.0
  %766 = vmatpush1.msra.mxu0 0.0
  %767 = vmatprep.subr.mxu0 0.0
  %768 = vmatpush1.msra.mxu0 0.0
  %769 = vmatprep.subr.mxu0 0.0
  %770 = vmatpush1.msra.mxu0 0.0
  %771 = vmatprep.mubr.f32.mxu0 0.0
  %772 = vmatmul.mubr.f32.gmra.mrb[0].mxu0 %v587
  %v773 = vpop.f32.mrb[0].mxu0
  %v774 = vadd.f32 %v674, %v773
  %v775 = vpop.f32.mrb[0].mxu0
  %776 = vmatprep.mubr.f32.mxu0 0.0
  %777 = vmatmul.mubr.f32.gmra.mrb[0].mxu0 %v590
  %v778 = vpop.f32.mrb[0].mxu0
  %v779 = vadd.f32 %v679, %v778
  %v780 = vpop.f32.mrb[0].mxu0
  %781 = vmatprep.mubr.f32.mxu0 0.0
  %782 = vmatmul.mubr.f32.gmra.mrb[0].mxu0 %v593
  %v783 = vpop.f32.mrb[0].mxu0
  %v784 = vadd.f32 %v684, %v783
  %v785 = vpop.f32.mrb[0].mxu0
  %786 = vmatprep.mubr.f32.mxu0 0.0
  %787 = vmatmul.mubr.f32.gmra.mrb[0].mxu0 %v596
  %v788 = vpop.f32.mrb[0].mxu0
  %v789 = vadd.f32 %v689, %v788
  %v790 = vpop.f32.mrb[0].mxu0
  %791 = vmatprep.mubr.f32.mxu0 0.0
  %792 = vmatmul.mubr.f32.gmra.mrb[0].mxu0 %v599
  %v793 = vpop.f32.mrb[0].mxu0
  %v794 = vadd.f32 %v694, %v793
  %v795 = vpop.f32.mrb[0].mxu0
  %796 = vmatprep.mubr.f32.mxu0 0.0
  %797 = vmatmul.mubr.f32.gmra.mrb[0].mxu0 %v602
  %v798 = vpop.f32.mrb[0].mxu0
  %v799 = vadd.f32 %v699, %v798
  %v800 = vpop.f32.mrb[0].mxu0
  %801 = vmatprep.mubr.f32.mxu0 0.0
  %802 = vmatmul.mubr.f32.gmra.mrb[0].mxu0 %v605
  %v803 = vpop.f32.mrb[0].mxu0
  %v804 = vadd.f32 %v704, %v803
  %v805 = vpop.f32.mrb[0].mxu0
  %806 = vdwg.mxu0
  %v807 = vmax.f32 %v774, 0.0
  %v808 = vmax.f32 %v779, 0.0
  %v809 = vmax.f32 %v784, 0.0
  %v810 = vmax.f32 %v789, 0.0
  %v811 = vmax.f32 %v794, 0.0
  %v812 = vmax.f32 %v799, 0.0
  %v813 = vmax.f32 %v804, 0.0
  %v814 = vmax.f32 %v557, %v807
  %v815 = vmax.f32 %v558, %v808
  %v816 = vmax.f32 %v559, %v809
  %v817 = vmax.f32 %v560, %v810
  %v818 = vmax.f32 %v561, %v811
  %v819 = vmax.f32 %v562, %v812
  %v820 = vmax.f32 %v563, %v813
  %s821 = scalar_lea.vmem %s0, 504
  %v822 = vld [vmem:[%s821] sm:$0xff]
  %v823 = vld [vmem:[%s821 + $0x8] sm:$0xff]
  %v824 = vld [vmem:[%s821 + $0x10] sm:$0xff]
  %v825 = vld [vmem:[%s821 + $0x18] sm:$0xff]
  %v826 = vld [vmem:[%s821 + $0x20] sm:$0xff]
  %v827 = vld [vmem:[%s821 + $0x28] sm:$0xff]
  %v828 = vld [vmem:[%s821 + $0x30] sm:$0xff]
  %v829 = vld [vmem:[%s821 + $0x38] sm:$0xff]
  %v830 = vld [vmem:[%s821 + $0x40] sm:$0xff]
  %v831 = vld [vmem:[%s821 + $0x48] sm:$0xff]
  %v832 = vld [vmem:[%s821 + $0x50] sm:$0xff]
  %v833 = vld [vmem:[%s821 + $0x58] sm:$0xff]
  %v834 = vld [vmem:[%s821 + $0x60] sm:$0xff]
  %v835 = vld [vmem:[%s821 + $0x68] sm:$0xff]
  %v836 = vld [vmem:[%s821 + $0x70] sm:$0xff]
  %v837 = vld [vmem:[%s821 + $0x78] sm:$0xff]
  %v838 = vld [vmem:[%s821 + $0x80] sm:$0xff]
  %v839 = vld [vmem:[%s821 + $0x88] sm:$0xff]
  %v840 = vld [vmem:[%s821 + $0x90] sm:$0x3]
  %v841 = vld [vmem:[%s821 + $0x98] sm:$0x3]
  %v842 = vld [vmem:[%s821 + $0xa0] sm:$0x3]
  %v844 = vsel %vm78, %v824, 0
  %v847 = vsel %vm78, %v827, 0
  %v850 = vsel %vm78, %v830, 0
  %v853 = vsel %vm78, %v833, 0
  %v856 = vsel %vm78, %v836, 0
  %v859 = vsel %vm78, %v839, 0
  %v862 = vsel %vm78, %v842, 0
  %864 = vmatprep.subr.mxu0 0.0
  %865 = vmatpush1.msra.mxu0 %v14
  %866 = vmatprep.subr.mxu0 0.0
  %867 = vmatpush1.msra.mxu0 %v15
  %868 = vmatprep.subr.mxu0 0.0
  %869 = vmatpush1.msra.mxu0 %v16
  %870 = vmatprep.subr.mxu0 0.0
  %871 = vmatpush1.msra.mxu0 %v17
  %872 = vmatprep.subr.mxu0 0.0
  %873 = vmatpush1.msra.mxu0 %v18
  %874 = vmatprep.subr.mxu0 0.0
  %875 = vmatpush1.msra.mxu0 %v19
  %876 = vmatprep.subr.mxu0 0.0
  %877 = vmatpush1.msra.mxu0 %v20
  %878 = vmatprep.subr.mxu0 0.0
  %879 = vmatpush1.msra.mxu0 %v21
  %880 = vmatprep.subr.mxu0 0.0
  %881 = vmatpush1.msra.mxu0 %v22
  %882 = vmatprep.subr.mxu0 0.0
  %883 = vmatpush1.msra.mxu0 %v23
  %884 = vmatprep.subr.mxu0 0.0
  %885 = vmatpush1.msra.mxu0 %v24
  %886 = vmatprep.subr.mxu0 0.0
  %887 = vmatpush1.msra.mxu0 %v25
  %888 = vmatprep.subr.mxu0 0.0
  %889 = vmatpush1.msra.mxu0 %v26
  %890 = vmatprep.subr.mxu0 0.0
  %891 = vmatpush1.msra.mxu0 %v27
  %892 = vmatprep.subr.mxu0 0.0
  %893 = vmatpush1.msra.mxu0 %v28
  %894 = vmatprep.subr.mxu0 0.0
  %895 = vmatpush1.msra.mxu0 %v29
  %896 = vmatprep.subr.mxu0 0.0
  %897 = vmatpush1.msra.mxu0 %v30
  %898 = vmatprep.subr.mxu0 0.0
  %899 = vmatpush1.msra.mxu0 %v31
  %900 = vmatprep.subr.mxu0 0.0
  %901 = vmatpush1.msra.mxu0 %v32
  %902 = vmatprep.subr.mxu0 0.0
  %903 = vmatpush1.msra.mxu0 %v33
  %904 = vmatprep.subr.mxu0 0.0
  %905 = vmatpush1.msra.mxu0 %v34
  %906 = vmatprep.subr.mxu0 0.0
  %907 = vmatpush1.msra.mxu0 %v35
  %908 = vmatprep.subr.mxu0 0.0
  %909 = vmatpush1.msra.mxu0 %v36
  %910 = vmatprep.subr.mxu0 0.0
  %911 = vmatpush1.msra.mxu0 %v37
  %912 = vmatprep.subr.mxu0 0.0
  %913 = vmatpush1.msra.mxu0 %v38
  %914 = vmatprep.subr.mxu0 0.0
  %915 = vmatpush1.msra.mxu0 %v39
  %916 = vmatprep.subr.mxu0 0.0
  %917 = vmatpush1.msra.mxu0 %v40
  %918 = vmatprep.subr.mxu0 0.0
  %919 = vmatpush1.msra.mxu0 %v41
  %920 = vmatprep.subr.mxu0 0.0
  %921 = vmatpush1.msra.mxu0 %v42
  %922 = vmatprep.subr.mxu0 0.0
  %923 = vmatpush1.msra.mxu0 %v43
  %924 = vmatprep.subr.mxu0 0.0
  %925 = vmatpush1.msra.mxu0 %v44
  %926 = vmatprep.subr.mxu0 0.0
  %927 = vmatpush1.msra.mxu0 %v45
  %928 = vmatprep.mubr.f32.mxu0 %v823
  %929 = vmatmul.mubr.f32.gmra.mrb[0].mxu0 %v822
  %v930 = vpop.f32.mrb[0].mxu0
  %v931 = vadd.f32 %v76, %v930
  %v932 = vpop.f32.mrb[0].mxu0
  %933 = vmatprep.mubr.f32.mxu0 %v826
  %934 = vmatmul.mubr.f32.gmra.mrb[0].mxu0 %v825
  %v935 = vpop.f32.mrb[0].mxu0
  %v936 = vadd.f32 %v76, %v935
  %v937 = vpop.f32.mrb[0].mxu0
  %938 = vmatprep.mubr.f32.mxu0 %v829
  %939 = vmatmul.mubr.f32.gmra.mrb[0].mxu0 %v828
  %v940 = vpop.f32.mrb[0].mxu0
  %v941 = vadd.f32 %v76, %v940
  %v942 = vpop.f32.mrb[0].mxu0
  %943 = vmatprep.mubr.f32.mxu0 %v832
  %944 = vmatmul.mubr.f32.gmra.mrb[0].mxu0 %v831
  %v945 = vpop.f32.mrb[0].mxu0
  %v946 = vadd.f32 %v76, %v945
  %v947 = vpop.f32.mrb[0].mxu0
  %948 = vmatprep.mubr.f32.mxu0 %v835
  %949 = vmatmul.mubr.f32.gmra.mrb[0].mxu0 %v834
  %v950 = vpop.f32.mrb[0].mxu0
  %v951 = vadd.f32 %v76, %v950
  %v952 = vpop.f32.mrb[0].mxu0
  %953 = vmatprep.mubr.f32.mxu0 %v838
  %954 = vmatmul.mubr.f32.gmra.mrb[0].mxu0 %v837
  %v955 = vpop.f32.mrb[0].mxu0
  %v956 = vadd.f32 %v76, %v955
  %v957 = vpop.f32.mrb[0].mxu0
  %958 = vmatprep.mubr.f32.mxu0 %v841
  %959 = vmatmul.mubr.f32.gmra.mrb[0].mxu0 %v840
  %v960 = vpop.f32.mrb[0].mxu0
  %v961 = vadd.f32 %v76, %v960
  %v962 = vpop.f32.mrb[0].mxu0
  %963 = vdwg.mxu0
  %964 = vmatprep.subr.mxu0 0.0
  %965 = vmatpush1.msra.mxu0 %v46
  %966 = vmatprep.subr.mxu0 0.0
  %967 = vmatpush1.msra.mxu0 %v47
  %968 = vmatprep.subr.mxu0 0.0
  %969 = vmatpush1.msra.mxu0 %v48
  %970 = vmatprep.subr.mxu0 0.0
  %971 = vmatpush1.msra.mxu0 %v49
  %972 = vmatprep.subr.mxu0 0.0
  %973 = vmatpush1.msra.mxu0 0.0
  %974 = vmatprep.subr.mxu0 0.0
  %975 = vmatpush1.msra.mxu0 0.0
  %976 = vmatprep.subr.mxu0 0.0
  %977 = vmatpush1.msra.mxu0 0.0
  %978 = vmatprep.subr.mxu0 0.0
  %979 = vmatpush1.msra.mxu0 0.0
  %980 = vmatprep.subr.mxu0 0.0
  %981 = vmatpush1.msra.mxu0 0.0
  %982 = vmatprep.subr.mxu0 0.0
  %983 = vmatpush1.msra.mxu0 0.0
  %984 = vmatprep.subr.mxu0 0.0
  %985 = vmatpush1.msra.mxu0 0.0
  %986 = vmatprep.subr.mxu0 0.0
  %987 = vmatpush1.msra.mxu0 0.0
  %988 = vmatprep.subr.mxu0 0.0
  %989 = vmatpush1.msra.mxu0 0.0
  %990 = vmatprep.subr.mxu0 0.0
  %991 = vmatpush1.msra.mxu0 0.0
  %992 = vmatprep.subr.mxu0 0.0
  %993 = vmatpush1.msra.mxu0 0.0
  %994 = vmatprep.subr.mxu0 0.0
  %995 = vmatpush1.msra.mxu0 0.0
  %996 = vmatprep.subr.mxu0 0.0
  %997 = vmatpush1.msra.mxu0 0.0
  %998 = vmatprep.subr.mxu0 0.0
  %999 = vmatpush1.msra.mxu0 0.0
  %1000 = vmatprep.subr.mxu0 0.0
  %1001 = vmatpush1.msra.mxu0 0.0
  %1002 = vmatprep.subr.mxu0 0.0
  %1003 = vmatpush1.msra.mxu0 0.0
  %1004 = vmatprep.subr.mxu0 0.0
  %1005 = vmatpush1.msra.mxu0 0.0
  %1006 = vmatprep.subr.mxu0 0.0
  %1007 = vmatpush1.msra.mxu0 0.0
  %1008 = vmatprep.subr.mxu0 0.0
  %1009 = vmatpush1.msra.mxu0 0.0
  %1010 = vmatprep.subr.mxu0 0.0
  %1011 = vmatpush1.msra.mxu0 0.0
  %1012 = vmatprep.subr.mxu0 0.0
  %1013 = vmatpush1.msra.mxu0 0.0
  %1014 = vmatprep.subr.mxu0 0.0
  %1015 = vmatpush1.msra.mxu0 0.0
  %1016 = vmatprep.subr.mxu0 0.0
  %1017 = vmatpush1.msra.mxu0 0.0
  %1018 = vmatprep.subr.mxu0 0.0
  %1019 = vmatpush1.msra.mxu0 0.0
  %1020 = vmatprep.subr.mxu0 0.0
  %1021 = vmatpush1.msra.mxu0 0.0
  %1022 = vmatprep.subr.mxu0 0.0
  %1023 = vmatpush1.msra.mxu0 0.0
  %1024 = vmatprep.subr.mxu0 0.0
  %1025 = vmatpush1.msra.mxu0 0.0
  %1026 = vmatprep.subr.mxu0 0.0
  %1027 = vmatpush1.msra.mxu0 0.0
  %1028 = vmatprep.mubr.f32.mxu0 0.0
  %1029 = vmatmul.mubr.f32.gmra.mrb[0].mxu0 %v844
  %v1030 = vpop.f32.mrb[0].mxu0
  %v1031 = vadd.f32 %v931, %v1030
  %v1032 = vpop.f32.mrb[0].mxu0
  %1033 = vmatprep.mubr.f32.mxu0 0.0
  %1034 = vmatmul.mubr.f32.gmra.mrb[0].mxu0 %v847
  %v1035 = vpop.f32.mrb[0].mxu0
  %v1036 = vadd.f32 %v936, %v1035
  %v1037 = vpop.f32.mrb[0].mxu0
  %1038 = vmatprep.mubr.f32.mxu0 0.0
  %1039 = vmatmul.mubr.f32.gmra.mrb[0].mxu0 %v850
  %v1040 = vpop.f32.mrb[0].mxu0
  %v1041 = vadd.f32 %v941, %v1040
  %v1042 = vpop.f32.mrb[0].mxu0
  %1043 = vmatprep.mubr.f32.mxu0 0.0
  %1044 = vmatmul.mubr.f32.gmra.mrb[0].mxu0 %v853
  %v1045 = vpop.f32.mrb[0].mxu0
  %v1046 = vadd.f32 %v946, %v1045
  %v1047 = vpop.f32.mrb[0].mxu0
  %1048 = vmatprep.mubr.f32.mxu0 0.0
  %1049 = vmatmul.mubr.f32.gmra.mrb[0].mxu0 %v856
  %v1050 = vpop.f32.mrb[0].mxu0
  %v1051 = vadd.f32 %v951, %v1050
  %v1052 = vpop.f32.mrb[0].mxu0
  %1053 = vmatprep.mubr.f32.mxu0 0.0
  %1054 = vmatmul.mubr.f32.gmra.mrb[0].mxu0 %v859
  %v1055 = vpop.f32.mrb[0].mxu0
  %v1056 = vadd.f32 %v956, %v1055
  %v1057 = vpop.f32.mrb[0].mxu0
  %1058 = vmatprep.mubr.f32.mxu0 0.0
  %1059 = vmatmul.mubr.f32.gmra.mrb[0].mxu0 %v862
  %v1060 = vpop.f32.mrb[0].mxu0
  %v1061 = vadd.f32 %v961, %v1060
  %v1062 = vpop.f32.mrb[0].mxu0
  %1063 = vdwg.mxu0
  %v1064 = vmax.f32 %v1031, 0.0
  %v1065 = vmax.f32 %v1036, 0.0
  %v1066 = vmax.f32 %v1041, 0.0
  %v1067 = vmax.f32 %v1046, 0.0
  %v1068 = vmax.f32 %v1051, 0.0
  %v1069 = vmax.f32 %v1056, 0.0
  %v1070 = vmax.f32 %v1061, 0.0
  %v1071 = vmax.f32 %v814, %v1064
  %v1072 = vmax.f32 %v815, %v1065
  %v1073 = vmax.f32 %v816, %v1066
  %v1074 = vmax.f32 %v817, %v1067
  %v1075 = vmax.f32 %v818, %v1068
  %v1076 = vmax.f32 %v819, %v1069
  %v1077 = vmax.f32 %v820, %v1070
  %1078 = vst.msk [vmem:[%s3] sm:$0xff] %vm78, %v1071
  %1079 = vst.msk [vmem:[%s3 + $0x8] sm:$0xff] %vm78, %v1072
  %1080 = vst.msk [vmem:[%s3 + $0x10] sm:$0xff] %vm78, %v1073
  %1081 = vst.msk [vmem:[%s3 + $0x18] sm:$0xff] %vm78, %v1074
  %1082 = vst.msk [vmem:[%s3 + $0x20] sm:$0xff] %vm78, %v1075
  %1083 = vst.msk [vmem:[%s3 + $0x28] sm:$0xff] %vm78, %v1076
  %vm1084 = vcmask 254976
  %1085 = vst.msk [vmem:[%s3 + $0x30] sm:$0x3] %vm1084, %v1077
  // Predicated region
  $region14: #{cnn_ae_mnist_forward.6} parent=0 // pred_check
    _
  $region15: #{cnn_ae_mnist_forward.6} parent=0 // pred_check_branch
    %1087 = sbr.rel (0) target = $region17
  $region16: #{cnn_ae_mnist_forward.6} parent=0 // pred_region
    _
  $region17: #{cnn_ae_mnist_forward.6} parent=0 // pred_fallthru
    _
  // Predicated region
  $region18: #{cnn_ae_mnist_forward.6} parent=0 // pred_check
    _
  $region19: #{cnn_ae_mnist_forward.6} parent=0 // pred_check_branch
    %1089 = sbr.rel (0) target = $region21
  $region20: #{cnn_ae_mnist_forward.6} parent=0 // pred_region
    _
  $region21: #{cnn_ae_mnist_forward.6} parent=0 // pred_fallthru
    _

// kernel: cnn_ae_mnist_forward.7
$region0: #{cnn_ae_mnist_forward.7}
  #allocation0 [shape = 'u32[]', space=smem, size = 0x4, offset = 0x4, fixed_abs, tag = 'smem constant byte address 0x4 - core index']
  #allocation1 [shape = 'u32[144,128]{1,0:T(1,128)}', space=vmem, size = 0x12000, scoped, tag = 'internal scratch']
  %s0 = inlined_call_operand.vmem [shape: f32[2,800], index: 0, kind: input, shape index: {}]
  %s1 = inlined_call_operand.vmem [shape: f32[800,32], index: 1, kind: input, shape index: {}]
  %s2 = inlined_call_operand.vmem [shape: f32[1,32], index: 2, kind: input, shape index: {}]
  %s3 = inlined_call_operand.vmem [shape: f32[32,36], index: 3, kind: input, shape index: {}]
  %s4 = inlined_call_operand.vmem [shape: f32[1,36], index: 4, kind: input, shape index: {}]
  %s5 = inlined_call_operand.vmem [shape: f32[1,36], index: 5, kind: input, shape index: {}]
  %s6 = inlined_call_operand.vmem [shape: f32[1,36], index: 6, kind: input, shape index: {}]
  %s7 = inlined_call_operand.vmem [shape: f32[1,36], index: 7, kind: input, shape index: {}]
  %s8 = inlined_call_operand.vmem [shape: f32[1,36], index: 8, kind: input, shape index: {}]
  %s9 = inlined_call_operand.vmem [shape: f32[2,36], index: 9, kind: output, shape index: {}]
  %s10 = sld [smem:[#allocation0]]
  $region46: #{cnn_ae_mnist_forward.7} parent=0
    _
  %s12 = ssub.s32 1, %s10
  %s13 = scalar_select 0, %s12, %s10
  // Predicated region
  $region2: #{cnn_ae_mnist_forward.7} parent=0 // pred_check
    _
  $region3: #{cnn_ae_mnist_forward.7} parent=0 // pred_check_branch
    %15 = sbr.rel (0) target = $region5
  $region4: #{cnn_ae_mnist_forward.7} parent=0 // pred_region
    _
  $region5: #{cnn_ae_mnist_forward.7} parent=0 // pred_fallthru
    _
  // Predicated region
  $region6: #{cnn_ae_mnist_forward.7} parent=0 // pred_check
    _
  $region7: #{cnn_ae_mnist_forward.7} parent=0 // pred_check_branch
    %17 = sbr.rel (0) target = $region9
  $region8: #{cnn_ae_mnist_forward.7} parent=0 // pred_region
    _
  $region9: #{cnn_ae_mnist_forward.7} parent=0 // pred_fallthru
    _
  // Predicated region
  $region10: #{cnn_ae_mnist_forward.7} parent=0 // pred_check
    _
  $region11: #{cnn_ae_mnist_forward.7} parent=0 // pred_check_branch
    %19 = sbr.rel (0) target = $region13
  $region12: #{cnn_ae_mnist_forward.7} parent=0 // pred_region
    _
  $region13: #{cnn_ae_mnist_forward.7} parent=0 // pred_fallthru
    _
  // Predicated region
  $region14: #{cnn_ae_mnist_forward.7} parent=0 // pred_check
    _
  $region15: #{cnn_ae_mnist_forward.7} parent=0 // pred_check_branch
    %21 = sbr.rel (0) target = $region17
  $region16: #{cnn_ae_mnist_forward.7} parent=0 // pred_region
    _
  $region17: #{cnn_ae_mnist_forward.7} parent=0 // pred_fallthru
    _
  // Predicated region
  $region18: #{cnn_ae_mnist_forward.7} parent=0 // pred_check
    _
  $region19: #{cnn_ae_mnist_forward.7} parent=0 // pred_check_branch
    %23 = sbr.rel (0) target = $region21
  $region20: #{cnn_ae_mnist_forward.7} parent=0 // pred_region
    _
  $region21: #{cnn_ae_mnist_forward.7} parent=0 // pred_fallthru
    _
  // Predicated region
  $region22: #{cnn_ae_mnist_forward.7} parent=0 // pred_check
    _
  $region23: #{cnn_ae_mnist_forward.7} parent=0 // pred_check_branch
    %25 = sbr.rel (0) target = $region25
  $region24: #{cnn_ae_mnist_forward.7} parent=0 // pred_region
    _
  $region25: #{cnn_ae_mnist_forward.7} parent=0 // pred_fallthru
    _
  // Predicated region
  $region26: #{cnn_ae_mnist_forward.7} parent=0 // pred_check
    _
  $region27: #{cnn_ae_mnist_forward.7} parent=0 // pred_check_branch
    %27 = sbr.rel (0) target = $region29
  $region28: #{cnn_ae_mnist_forward.7} parent=0 // pred_region
    _
  $region29: #{cnn_ae_mnist_forward.7} parent=0 // pred_fallthru
    _
  // Predicated region
  $region30: #{cnn_ae_mnist_forward.7} parent=0 // pred_check
    _
  $region31: #{cnn_ae_mnist_forward.7} parent=0 // pred_check_branch
    %29 = sbr.rel (0) target = $region33
  $region32: #{cnn_ae_mnist_forward.7} parent=0 // pred_region
    _
  $region33: #{cnn_ae_mnist_forward.7} parent=0 // pred_fallthru
    _
  // Predicated region
  $region34: #{cnn_ae_mnist_forward.7} parent=0 // pred_check
    _
  $region35: #{cnn_ae_mnist_forward.7} parent=0 // pred_check_branch
    %31 = sbr.rel (0) target = $region37
  $region36: #{cnn_ae_mnist_forward.7} parent=0 // pred_region
    _
  $region37: #{cnn_ae_mnist_forward.7} parent=0 // pred_fallthru
    _
  %v32 = vld [vmem:[%s0] sm:$0xff]
  %v33 = vld [vmem:[%s0 + $0x8] sm:$0x3f]
  %v34 = vld [vmem:[%s1] sm:$0xff]
  %v35 = vld [vmem:[%s1 + $0x8] sm:$0xff]
  %v36 = vld [vmem:[%s1 + $0x10] sm:$0xff]
  %v37 = vld [vmem:[%s1 + $0x18] sm:$0xff]
  %v38 = vld [vmem:[%s1 + $0x20] sm:$0xff]
  %v39 = vld [vmem:[%s1 + $0x28] sm:$0xff]
  %v40 = vld [vmem:[%s1 + $0x30] sm:$0xff]
  %v41 = vld [vmem:[%s1 + $0x38] sm:$0xff]
  %v42 = vld [vmem:[%s1 + $0x40] sm:$0xff]
  %v43 = vld [vmem:[%s1 + $0x48] sm:$0xff]
  %v44 = vld [vmem:[%s1 + $0x50] sm:$0xff]
  %v45 = vld [vmem:[%s1 + $0x58] sm:$0xff]
  %v46 = vld [vmem:[%s1 + $0x60] sm:$0xff]
  %v47 = vld [vmem:[%s1 + $0x68] sm:$0xff]
  %v48 = vld [vmem:[%s1 + $0x70] sm:$0xff]
  %v49 = vld [vmem:[%s1 + $0x78] sm:$0xff]
  %v50 = vld [vmem:[%s1 + $0x80] sm:$0xff]
  %v51 = vld [vmem:[%s1 + $0x88] sm:$0xff]
  %v52 = vld [vmem:[%s1 + $0x90] sm:$0xff]
  %v53 = vld [vmem:[%s1 + $0x98] sm:$0xff]
  %v54 = vld [vmem:[%s1 + $0xa0] sm:$0xff]
  %v55 = vld [vmem:[%s1 + $0xa8] sm:$0xff]
  %v56 = vld [vmem:[%s1 + $0xb0] sm:$0xff]
  %v57 = vld [vmem:[%s1 + $0xb8] sm:$0xff]
  %v58 = vld [vmem:[%s1 + $0xc0] sm:$0xff]
  %v59 = vld [vmem:[%s1 + $0xc8] sm:$0xff]
  %v60 = vld [vmem:[%s1 + $0xd0] sm:$0xff]
  %v61 = vld [vmem:[%s1 + $0xd8] sm:$0xff]
  %v62 = vld [vmem:[%s1 + $0xe0] sm:$0xff]
  %v63 = vld [vmem:[%s1 + $0xe8] sm:$0xff]
  %v64 = vld [vmem:[%s1 + $0xf0] sm:$0xff]
  %v65 = vld [vmem:[%s1 + $0xf8] sm:$0xff]
  %v66 = vld [vmem:[%s1 + $0x100] sm:$0xff]
  %v67 = vld [vmem:[%s1 + $0x108] sm:$0xff]
  %v68 = vld [vmem:[%s1 + $0x110] sm:$0xff]
  %v69 = vld [vmem:[%s1 + $0x118] sm:$0xff]
  %v70 = vld [vmem:[%s1 + $0x120] sm:$0xff]
  %v71 = vld [vmem:[%s1 + $0x128] sm:$0xff]
  %v72 = vld [vmem:[%s1 + $0x130] sm:$0xff]
  %v73 = vld [vmem:[%s1 + $0x138] sm:$0xff]
  %v74 = vld [vmem:[%s1 + $0x140] sm:$0xff]
  %v75 = vld [vmem:[%s1 + $0x148] sm:$0xff]
  %v76 = vld [vmem:[%s1 + $0x150] sm:$0xff]
  %v77 = vld [vmem:[%s1 + $0x158] sm:$0xff]
  %v78 = vld [vmem:[%s1 + $0x160] sm:$0xff]
  %v79 = vld [vmem:[%s1 + $0x168] sm:$0xff]
  %v80 = vld [vmem:[%s1 + $0x170] sm:$0xff]
  %v81 = vld [vmem:[%s1 + $0x178] sm:$0xff]
  %v82 = vld [vmem:[%s1 + $0x180] sm:$0xff]
  %v83 = vld [vmem:[%s1 + $0x188] sm:$0xff]
  %v84 = vld [vmem:[%s1 + $0x190] sm:$0xff]
  %v85 = vld [vmem:[%s1 + $0x198] sm:$0xff]
  %v86 = vld [vmem:[%s1 + $0x1a0] sm:$0xff]
  %v87 = vld [vmem:[%s1 + $0x1a8] sm:$0xff]
  %v88 = vld [vmem:[%s1 + $0x1b0] sm:$0xff]
  %v89 = vld [vmem:[%s1 + $0x1b8] sm:$0xff]
  %v90 = vld [vmem:[%s1 + $0x1c0] sm:$0xff]
  %v91 = vld [vmem:[%s1 + $0x1c8] sm:$0xff]
  %v92 = vld [vmem:[%s1 + $0x1d0] sm:$0xff]
  %v93 = vld [vmem:[%s1 + $0x1d8] sm:$0xff]
  %v94 = vld [vmem:[%s1 + $0x1e0] sm:$0xff]
  %v95 = vld [vmem:[%s1 + $0x1e8] sm:$0xff]
  %v96 = vld [vmem:[%s1 + $0x1f0] sm:$0xff]
  %v97 = vld [vmem:[%s1 + $0x1f8] sm:$0xff]
  %v98 = vld [vmem:[%s1 + $0x200] sm:$0xff]
  %v99 = vld [vmem:[%s1 + $0x208] sm:$0xff]
  %v100 = vld [vmem:[%s1 + $0x210] sm:$0xff]
  %v101 = vld [vmem:[%s1 + $0x218] sm:$0xff]
  %v102 = vld [vmem:[%s1 + $0x220] sm:$0xff]
  %v103 = vld [vmem:[%s1 + $0x228] sm:$0xff]
  %v104 = vld [vmem:[%s1 + $0x230] sm:$0xff]
  %v105 = vld [vmem:[%s1 + $0x238] sm:$0xff]
  %v106 = vld [vmem:[%s1 + $0x240] sm:$0xff]
  %v107 = vld [vmem:[%s1 + $0x248] sm:$0xff]
  %v108 = vld [vmem:[%s1 + $0x250] sm:$0xff]
  %v109 = vld [vmem:[%s1 + $0x258] sm:$0xff]
  %v110 = vld [vmem:[%s1 + $0x260] sm:$0xff]
  %v111 = vld [vmem:[%s1 + $0x268] sm:$0xff]
  %v112 = vld [vmem:[%s1 + $0x270] sm:$0xff]
  %v113 = vld [vmem:[%s1 + $0x278] sm:$0xff]
  %v114 = vld [vmem:[%s1 + $0x280] sm:$0xff]
  %v115 = vld [vmem:[%s1 + $0x288] sm:$0xff]
  %v116 = vld [vmem:[%s1 + $0x290] sm:$0xff]
  %v117 = vld [vmem:[%s1 + $0x298] sm:$0xff]
  %v118 = vld [vmem:[%s1 + $0x2a0] sm:$0xff]
  %v119 = vld [vmem:[%s1 + $0x2a8] sm:$0xff]
  %v120 = vld [vmem:[%s1 + $0x2b0] sm:$0xff]
  %v121 = vld [vmem:[%s1 + $0x2b8] sm:$0xff]
  %v122 = vld [vmem:[%s1 + $0x2c0] sm:$0xff]
  %v123 = vld [vmem:[%s1 + $0x2c8] sm:$0xff]
  %v124 = vld [vmem:[%s1 + $0x2d0] sm:$0xff]
  %v125 = vld [vmem:[%s1 + $0x2d8] sm:$0xff]
  %v126 = vld [vmem:[%s1 + $0x2e0] sm:$0xff]
  %v127 = vld [vmem:[%s1 + $0x2e8] sm:$0xff]
  %v128 = vld [vmem:[%s1 + $0x2f0] sm:$0xff]
  %v129 = vld [vmem:[%s1 + $0x2f8] sm:$0xff]
  %v130 = vld [vmem:[%s1 + $0x300] sm:$0xff]
  %v131 = vld [vmem:[%s1 + $0x308] sm:$0xff]
  %v132 = vld [vmem:[%s1 + $0x310] sm:$0xff]
  %v133 = vld [vmem:[%s1 + $0x318] sm:$0xff]
  %v134 = vld [vmem:[%s2] sm:$0x1]
  %v136 = vlaneseq
  %v137 = vshrl.u32 %v136, 7
  %v138 = vsub.s32 0, %v137
  %v139 = vrot.slane %v134, %v138
  %v143 = vcombine.high %v32, %v32
  %v145 = vunpack.c.l.s4 1983009808
  %v146 = vunpack.c.0.s8 %v145
  %v147 = vlaneseq
  %v148 = vshrl.u32 %v147, 7
  %v149 = vsub.s32 %v146, %v148
  %v150 = vrot.slane %v32, %v149
  %v152 = vunpack.c.l.s4 1983009808
  %v153 = vunpack.c.0.s8 %v152
  %v154 = vlaneseq
  %v155 = vshrl.u32 %v154, 7
  %v156 = vsub.s32 %v153, %v155
  %v157 = vrot.slane %v143, %v156
  %v158 = vcombine.high %v150, %v150
  %v159 = vcombine.high %v157, %v157
  %v160 = vcombine.high %v33, %v33
  %v162 = vunpack.c.l.s4 1983009808
  %v163 = vunpack.c.0.s8 %v162
  %v164 = vlaneseq
  %v165 = vshrl.u32 %v164, 7
  %v166 = vsub.s32 %v163, %v165
  %v167 = vrot.slane %v33, %v166
  %v169 = vunpack.c.l.s4 1983009808
  %v170 = vunpack.c.0.s8 %v169
  %v171 = vlaneseq
  %v172 = vshrl.u32 %v171, 7
  %v173 = vsub.s32 %v170, %v172
  %v174 = vrot.slane %v160, %v173
  %v175 = vcombine.high %v167, %v167
  %vm182 = vcmask 261120
  %v183 = vsel %vm182, %v174, 0
  %185 = vmatprep.subr.mxu0 0.0
  %186 = vmatpush1.msra.mxu0 %v34
  %187 = vmatprep.subr.mxu0 0.0
  %188 = vmatpush1.msra.mxu0 %v35
  %189 = vmatprep.subr.mxu0 0.0
  %190 = vmatpush1.msra.mxu0 %v36
  %191 = vmatprep.subr.mxu0 0.0
  %192 = vmatpush1.msra.mxu0 %v37
  %193 = vmatprep.subr.mxu0 0.0
  %194 = vmatpush1.msra.mxu0 %v38
  %195 = vmatprep.subr.mxu0 0.0
  %196 = vmatpush1.msra.mxu0 %v39
  %197 = vmatprep.subr.mxu0 0.0
  %198 = vmatpush1.msra.mxu0 %v40
  %199 = vmatprep.subr.mxu0 0.0
  %200 = vmatpush1.msra.mxu0 %v41
  %201 = vmatprep.subr.mxu0 0.0
  %202 = vmatpush1.msra.mxu0 %v42
  %203 = vmatprep.subr.mxu0 0.0
  %204 = vmatpush1.msra.mxu0 %v43
  %205 = vmatprep.subr.mxu0 0.0
  %206 = vmatpush1.msra.mxu0 %v44
  %207 = vmatprep.subr.mxu0 0.0
  %208 = vmatpush1.msra.mxu0 %v45
  %209 = vmatprep.subr.mxu0 0.0
  %210 = vmatpush1.msra.mxu0 %v46
  %211 = vmatprep.subr.mxu0 0.0
  %212 = vmatpush1.msra.mxu0 %v47
  %213 = vmatprep.subr.mxu0 0.0
  %214 = vmatpush1.msra.mxu0 %v48
  %215 = vmatprep.subr.mxu0 0.0
  %216 = vmatpush1.msra.mxu0 %v49
  %217 = vmatprep.subr.mxu0 0.0
  %218 = vmatpush1.msra.mxu0 %v50
  %219 = vmatprep.subr.mxu0 0.0
  %220 = vmatpush1.msra.mxu0 %v51
  %221 = vmatprep.subr.mxu0 0.0
  %222 = vmatpush1.msra.mxu0 %v52
  %223 = vmatprep.subr.mxu0 0.0
  %224 = vmatpush1.msra.mxu0 %v53
  %225 = vmatprep.subr.mxu0 0.0
  %226 = vmatpush1.msra.mxu0 %v54
  %227 = vmatprep.subr.mxu0 0.0
  %228 = vmatpush1.msra.mxu0 %v55
  %229 = vmatprep.subr.mxu0 0.0
  %230 = vmatpush1.msra.mxu0 %v56
  %231 = vmatprep.subr.mxu0 0.0
  %232 = vmatpush1.msra.mxu0 %v57
  %233 = vmatprep.subr.mxu0 0.0
  %234 = vmatpush1.msra.mxu0 %v58
  %235 = vmatprep.subr.mxu0 0.0
  %236 = vmatpush1.msra.mxu0 %v59
  %237 = vmatprep.subr.mxu0 0.0
  %238 = vmatpush1.msra.mxu0 %v60
  %239 = vmatprep.subr.mxu0 0.0
  %240 = vmatpush1.msra.mxu0 %v61
  %241 = vmatprep.subr.mxu0 0.0
  %242 = vmatpush1.msra.mxu0 %v62
  %243 = vmatprep.subr.mxu0 0.0
  %244 = vmatpush1.msra.mxu0 %v63
  %245 = vmatprep.subr.mxu0 0.0
  %246 = vmatpush1.msra.mxu0 %v64
  %247 = vmatprep.subr.mxu0 0.0
  %248 = vmatpush1.msra.mxu0 %v65
  %249 = vmatprep.mubr.f32.mxu0 %v158
  %250 = vmatmul.mubr.f32.gmra.mrb[0].mxu0 %v150
  %v251 = vpop.f32.mrb[0].mxu0
  %v252 = vadd.f32 %v139, %v251
  %v253 = vpop.f32.mrb[0].mxu0
  %254 = vdwg.mxu0
  %255 = vmatprep.subr.mxu0 0.0
  %256 = vmatpush1.msra.mxu0 %v66
  %257 = vmatprep.subr.mxu0 0.0
  %258 = vmatpush1.msra.mxu0 %v67
  %259 = vmatprep.subr.mxu0 0.0
  %260 = vmatpush1.msra.mxu0 %v68
  %261 = vmatprep.subr.mxu0 0.0
  %262 = vmatpush1.msra.mxu0 %v69
  %263 = vmatprep.subr.mxu0 0.0
  %264 = vmatpush1.msra.mxu0 %v70
  %265 = vmatprep.subr.mxu0 0.0
  %266 = vmatpush1.msra.mxu0 %v71
  %267 = vmatprep.subr.mxu0 0.0
  %268 = vmatpush1.msra.mxu0 %v72
  %269 = vmatprep.subr.mxu0 0.0
  %270 = vmatpush1.msra.mxu0 %v73
  %271 = vmatprep.subr.mxu0 0.0
  %272 = vmatpush1.msra.mxu0 %v74
  %273 = vmatprep.subr.mxu0 0.0
  %274 = vmatpush1.msra.mxu0 %v75
  %275 = vmatprep.subr.mxu0 0.0
  %276 = vmatpush1.msra.mxu0 %v76
  %277 = vmatprep.subr.mxu0 0.0
  %278 = vmatpush1.msra.mxu0 %v77
  %279 = vmatprep.subr.mxu0 0.0
  %280 = vmatpush1.msra.mxu0 %v78
  %281 = vmatprep.subr.mxu0 0.0
  %282 = vmatpush1.msra.mxu0 %v79
  %283 = vmatprep.subr.mxu0 0.0
  %284 = vmatpush1.msra.mxu0 %v80
  %285 = vmatprep.subr.mxu0 0.0
  %286 = vmatpush1.msra.mxu0 %v81
  %287 = vmatprep.subr.mxu0 0.0
  %288 = vmatpush1.msra.mxu0 %v82
  %289 = vmatprep.subr.mxu0 0.0
  %290 = vmatpush1.msra.mxu0 %v83
  %291 = vmatprep.subr.mxu0 0.0
  %292 = vmatpush1.msra.mxu0 %v84
  %293 = vmatprep.subr.mxu0 0.0
  %294 = vmatpush1.msra.mxu0 %v85
  %295 = vmatprep.subr.mxu0 0.0
  %296 = vmatpush1.msra.mxu0 %v86
  %297 = vmatprep.subr.mxu0 0.0
  %298 = vmatpush1.msra.mxu0 %v87
  %299 = vmatprep.subr.mxu0 0.0
  %300 = vmatpush1.msra.mxu0 %v88
  %301 = vmatprep.subr.mxu0 0.0
  %302 = vmatpush1.msra.mxu0 %v89
  %303 = vmatprep.subr.mxu0 0.0
  %304 = vmatpush1.msra.mxu0 %v90
  %305 = vmatprep.subr.mxu0 0.0
  %306 = vmatpush1.msra.mxu0 %v91
  %307 = vmatprep.subr.mxu0 0.0
  %308 = vmatpush1.msra.mxu0 %v92
  %309 = vmatprep.subr.mxu0 0.0
  %310 = vmatpush1.msra.mxu0 %v93
  %311 = vmatprep.subr.mxu0 0.0
  %312 = vmatpush1.msra.mxu0 %v94
  %313 = vmatprep.subr.mxu0 0.0
  %314 = vmatpush1.msra.mxu0 %v95
  %315 = vmatprep.subr.mxu0 0.0
  %316 = vmatpush1.msra.mxu0 %v96
  %317 = vmatprep.subr.mxu0 0.0
  %318 = vmatpush1.msra.mxu0 %v97
  %319 = vmatprep.mubr.f32.mxu0 %v159
  %320 = vmatmul.mubr.f32.gmra.mrb[0].mxu0 %v157
  %v321 = vpop.f32.mrb[0].mxu0
  %v322 = vadd.f32 %v252, %v321
  %v323 = vpop.f32.mrb[0].mxu0
  %324 = vdwg.mxu0
  %325 = vmatprep.subr.mxu0 0.0
  %326 = vmatpush1.msra.mxu0 %v98
  %327 = vmatprep.subr.mxu0 0.0
  %328 = vmatpush1.msra.mxu0 %v99
  %329 = vmatprep.subr.mxu0 0.0
  %330 = vmatpush1.msra.mxu0 %v100
  %331 = vmatprep.subr.mxu0 0.0
  %332 = vmatpush1.msra.mxu0 %v101
  %333 = vmatprep.subr.mxu0 0.0
  %334 = vmatpush1.msra.mxu0 %v102
  %335 = vmatprep.subr.mxu0 0.0
  %336 = vmatpush1.msra.mxu0 %v103
  %337 = vmatprep.subr.mxu0 0.0
  %338 = vmatpush1.msra.mxu0 %v104
  %339 = vmatprep.subr.mxu0 0.0
  %340 = vmatpush1.msra.mxu0 %v105
  %341 = vmatprep.subr.mxu0 0.0
  %342 = vmatpush1.msra.mxu0 %v106
  %343 = vmatprep.subr.mxu0 0.0
  %344 = vmatpush1.msra.mxu0 %v107
  %345 = vmatprep.subr.mxu0 0.0
  %346 = vmatpush1.msra.mxu0 %v108
  %347 = vmatprep.subr.mxu0 0.0
  %348 = vmatpush1.msra.mxu0 %v109
  %349 = vmatprep.subr.mxu0 0.0
  %350 = vmatpush1.msra.mxu0 %v110
  %351 = vmatprep.subr.mxu0 0.0
  %352 = vmatpush1.msra.mxu0 %v111
  %353 = vmatprep.subr.mxu0 0.0
  %354 = vmatpush1.msra.mxu0 %v112
  %355 = vmatprep.subr.mxu0 0.0
  %356 = vmatpush1.msra.mxu0 %v113
  %357 = vmatprep.subr.mxu0 0.0
  %358 = vmatpush1.msra.mxu0 %v114
  %359 = vmatprep.subr.mxu0 0.0
  %360 = vmatpush1.msra.mxu0 %v115
  %361 = vmatprep.subr.mxu0 0.0
  %362 = vmatpush1.msra.mxu0 %v116
  %363 = vmatprep.subr.mxu0 0.0
  %364 = vmatpush1.msra.mxu0 %v117
  %365 = vmatprep.subr.mxu0 0.0
  %366 = vmatpush1.msra.mxu0 %v118
  %367 = vmatprep.subr.mxu0 0.0
  %368 = vmatpush1.msra.mxu0 %v119
  %369 = vmatprep.subr.mxu0 0.0
  %370 = vmatpush1.msra.mxu0 %v120
  %371 = vmatprep.subr.mxu0 0.0
  %372 = vmatpush1.msra.mxu0 %v121
  %373 = vmatprep.subr.mxu0 0.0
  %374 = vmatpush1.msra.mxu0 %v122
  %375 = vmatprep.subr.mxu0 0.0
  %376 = vmatpush1.msra.mxu0 %v123
  %377 = vmatprep.subr.mxu0 0.0
  %378 = vmatpush1.msra.mxu0 %v124
  %379 = vmatprep.subr.mxu0 0.0
  %380 = vmatpush1.msra.mxu0 %v125
  %381 = vmatprep.subr.mxu0 0.0
  %382 = vmatpush1.msra.mxu0 %v126
  %383 = vmatprep.subr.mxu0 0.0
  %384 = vmatpush1.msra.mxu0 %v127
  %385 = vmatprep.subr.mxu0 0.0
  %386 = vmatpush1.msra.mxu0 %v128
  %387 = vmatprep.subr.mxu0 0.0
  %388 = vmatpush1.msra.mxu0 %v129
  %389 = vmatprep.mubr.f32.mxu0 %v175
  %390 = vmatmul.mubr.f32.gmra.mrb[0].mxu0 %v167
  %v391 = vpop.f32.mrb[0].mxu0
  %v392 = vadd.f32 %v322, %v391
  %v393 = vpop.f32.mrb[0].mxu0
  %394 = vdwg.mxu0
  %395 = vmatprep.subr.mxu0 0.0
  %396 = vmatpush1.msra.mxu0 %v130
  %397 = vmatprep.subr.mxu0 0.0
  %398 = vmatpush1.msra.mxu0 %v131
  %399 = vmatprep.subr.mxu0 0.0
  %400 = vmatpush1.msra.mxu0 %v132
  %401 = vmatprep.subr.mxu0 0.0
  %402 = vmatpush1.msra.mxu0 %v133
  %403 = vmatprep.subr.mxu0 0.0
  %404 = vmatpush1.msra.mxu0 0.0
  %405 = vmatprep.subr.mxu0 0.0
  %406 = vmatpush1.msra.mxu0 0.0
  %407 = vmatprep.subr.mxu0 0.0
  %408 = vmatpush1.msra.mxu0 0.0
  %409 = vmatprep.subr.mxu0 0.0
  %410 = vmatpush1.msra.mxu0 0.0
  %411 = vmatprep.subr.mxu0 0.0
  %412 = vmatpush1.msra.mxu0 0.0
  %413 = vmatprep.subr.mxu0 0.0
  %414 = vmatpush1.msra.mxu0 0.0
  %415 = vmatprep.subr.mxu0 0.0
  %416 = vmatpush1.msra.mxu0 0.0
  %417 = vmatprep.subr.mxu0 0.0
  %418 = vmatpush1.msra.mxu0 0.0
  %419 = vmatprep.subr.mxu0 0.0
  %420 = vmatpush1.msra.mxu0 0.0
  %421 = vmatprep.subr.mxu0 0.0
  %422 = vmatpush1.msra.mxu0 0.0
  %423 = vmatprep.subr.mxu0 0.0
  %424 = vmatpush1.msra.mxu0 0.0
  %425 = vmatprep.subr.mxu0 0.0
  %426 = vmatpush1.msra.mxu0 0.0
  %427 = vmatprep.subr.mxu0 0.0
  %428 = vmatpush1.msra.mxu0 0.0
  %429 = vmatprep.subr.mxu0 0.0
  %430 = vmatpush1.msra.mxu0 0.0
  %431 = vmatprep.subr.mxu0 0.0
  %432 = vmatpush1.msra.mxu0 0.0
  %433 = vmatprep.subr.mxu0 0.0
  %434 = vmatpush1.msra.mxu0 0.0
  %435 = vmatprep.subr.mxu0 0.0
  %436 = vmatpush1.msra.mxu0 0.0
  %437 = vmatprep.subr.mxu0 0.0
  %438 = vmatpush1.msra.mxu0 0.0
  %439 = vmatprep.subr.mxu0 0.0
  %440 = vmatpush1.msra.mxu0 0.0
  %441 = vmatprep.subr.mxu0 0.0
  %442 = vmatpush1.msra.mxu0 0.0
  %443 = vmatprep.subr.mxu0 0.0
  %444 = vmatpush1.msra.mxu0 0.0
  %445 = vmatprep.subr.mxu0 0.0
  %446 = vmatpush1.msra.mxu0 0.0
  %447 = vmatprep.subr.mxu0 0.0
  %448 = vmatpush1.msra.mxu0 0.0
  %449 = vmatprep.subr.mxu0 0.0
  %450 = vmatpush1.msra.mxu0 0.0
  %451 = vmatprep.subr.mxu0 0.0
  %452 = vmatpush1.msra.mxu0 0.0
  %453 = vmatprep.subr.mxu0 0.0
  %454 = vmatpush1.msra.mxu0 0.0
  %455 = vmatprep.subr.mxu0 0.0
  %456 = vmatpush1.msra.mxu0 0.0
  %457 = vmatprep.subr.mxu0 0.0
  %458 = vmatpush1.msra.mxu0 0.0
  %459 = vmatprep.mubr.f32.mxu0 0.0
  %460 = vmatmul.mubr.f32.gmra.mrb[0].mxu0 %v183
  %v461 = vpop.f32.mrb[0].mxu0
  %v462 = vadd.f32 %v392, %v461
  %v463 = vpop.f32.mrb[0].mxu0
  %464 = vdwg.mxu0
  %v465 = vld [vmem:[%s3] sm:$0xff]
  %v466 = vld [vmem:[%s3 + $0x8] sm:$0xff]
  %v467 = vld [vmem:[%s3 + $0x10] sm:$0xff]
  %v468 = vld [vmem:[%s3 + $0x18] sm:$0xff]
  %v469 = vld [vmem:[%s4] sm:$0x1]
  %v471 = vlaneseq
  %v472 = vshrl.u32 %v471, 7
  %v473 = vsub.s32 0, %v472
  %v474 = vrot.slane %v469, %v473
  %v477 = vsel %vm182, %v462, 0
  %479 = vmatprep.subr.mxu0 0.0
  %480 = vmatpush1.msra.mxu0 %v465
  %481 = vmatprep.subr.mxu0 0.0
  %482 = vmatpush1.msra.mxu0 %v466
  %483 = vmatprep.subr.mxu0 0.0
  %484 = vmatpush1.msra.mxu0 %v467
  %485 = vmatprep.subr.mxu0 0.0
  %486 = vmatpush1.msra.mxu0 %v468
  %487 = vmatprep.subr.mxu0 0.0
  %488 = vmatpush1.msra.mxu0 0.0
  %489 = vmatprep.subr.mxu0 0.0
  %490 = vmatpush1.msra.mxu0 0.0
  %491 = vmatprep.subr.mxu0 0.0
  %492 = vmatpush1.msra.mxu0 0.0
  %493 = vmatprep.subr.mxu0 0.0
  %494 = vmatpush1.msra.mxu0 0.0
  %495 = vmatprep.subr.mxu0 0.0
  %496 = vmatpush1.msra.mxu0 0.0
  %497 = vmatprep.subr.mxu0 0.0
  %498 = vmatpush1.msra.mxu0 0.0
  %499 = vmatprep.subr.mxu0 0.0
  %500 = vmatpush1.msra.mxu0 0.0
  %501 = vmatprep.subr.mxu0 0.0
  %502 = vmatpush1.msra.mxu0 0.0
  %503 = vmatprep.subr.mxu0 0.0
  %504 = vmatpush1.msra.mxu0 0.0
  %505 = vmatprep.subr.mxu0 0.0
  %506 = vmatpush1.msra.mxu0 0.0
  %507 = vmatprep.subr.mxu0 0.0
  %508 = vmatpush1.msra.mxu0 0.0
  %509 = vmatprep.subr.mxu0 0.0
  %510 = vmatpush1.msra.mxu0 0.0
  %511 = vmatprep.subr.mxu0 0.0
  %512 = vmatpush1.msra.mxu0 0.0
  %513 = vmatprep.subr.mxu0 0.0
  %514 = vmatpush1.msra.mxu0 0.0
  %515 = vmatprep.subr.mxu0 0.0
  %516 = vmatpush1.msra.mxu0 0.0
  %517 = vmatprep.subr.mxu0 0.0
  %518 = vmatpush1.msra.mxu0 0.0
  %519 = vmatprep.subr.mxu0 0.0
  %520 = vmatpush1.msra.mxu0 0.0
  %521 = vmatprep.subr.mxu0 0.0
  %522 = vmatpush1.msra.mxu0 0.0
  %523 = vmatprep.subr.mxu0 0.0
  %524 = vmatpush1.msra.mxu0 0.0
  %525 = vmatprep.subr.mxu0 0.0
  %526 = vmatpush1.msra.mxu0 0.0
  %527 = vmatprep.subr.mxu0 0.0
  %528 = vmatpush1.msra.mxu0 0.0
  %529 = vmatprep.subr.mxu0 0.0
  %530 = vmatpush1.msra.mxu0 0.0
  %531 = vmatprep.subr.mxu0 0.0
  %532 = vmatpush1.msra.mxu0 0.0
  %533 = vmatprep.subr.mxu0 0.0
  %534 = vmatpush1.msra.mxu0 0.0
  %535 = vmatprep.subr.mxu0 0.0
  %536 = vmatpush1.msra.mxu0 0.0
  %537 = vmatprep.subr.mxu0 0.0
  %538 = vmatpush1.msra.mxu0 0.0
  %539 = vmatprep.subr.mxu0 0.0
  %540 = vmatpush1.msra.mxu0 0.0
  %541 = vmatprep.subr.mxu0 0.0
  %542 = vmatpush1.msra.mxu0 0.0
  %543 = vmatprep.mubr.f32.mxu0 0.0
  %544 = vmatmul.mubr.f32.gmra.mrb[0].mxu0 %v477
  %v545 = vpop.f32.mrb[0].mxu0
  %v546 = vadd.f32 %v474, %v545
  %v547 = vpop.f32.mrb[0].mxu0
  %548 = vdwg.mxu0
  %v549 = vld [vmem:[%s8] sm:$0x1]
  %v550 = vadd.f32 %v549, 1e-05
  %v551 = vrsqrt.pop %v550
  %v552 = vld [vmem:[%s7] sm:$0x1]
  %v554 = vlaneseq
  %v555 = vshrl.u32 %v554, 7
  %v556 = vsub.s32 0, %v555
  %v557 = vrot.slane %v552, %v556
  %v559 = vsub.f32 %v546, %v557
  %v561 = vlaneseq
  %v562 = vshrl.u32 %v561, 7
  %v563 = vsub.s32 0, %v562
  %v564 = vrot.slane %v551, %v563
  %v566 = vmul.f32 %v559, %v564
  %v567 = vld [vmem:[%s5] sm:$0x1]
  %v569 = vlaneseq
  %v570 = vshrl.u32 %v569, 7
  %v571 = vsub.s32 0, %v570
  %v572 = vrot.slane %v567, %v571
  %v574 = vmul.f32 %v566, %v572
  %v575 = vld [vmem:[%s6] sm:$0x1]
  %v577 = vlaneseq
  %v578 = vshrl.u32 %v577, 7
  %v579 = vsub.s32 0, %v578
  %v580 = vrot.slane %v575, %v579
  %v582 = vadd.f32 %v574, %v580
  %vm583 = vcmask 287744
  %584 = vst.msk [vmem:[%s9] sm:$0x3] %vm583, %v582
  // Predicated region
  $region38: #{cnn_ae_mnist_forward.7} parent=0 // pred_check
    _
  $region39: #{cnn_ae_mnist_forward.7} parent=0 // pred_check_branch
    %586 = sbr.rel (0) target = $region41
  $region40: #{cnn_ae_mnist_forward.7} parent=0 // pred_region
    _
  $region41: #{cnn_ae_mnist_forward.7} parent=0 // pred_fallthru
    _
  // Predicated region
  $region42: #{cnn_ae_mnist_forward.7} parent=0 // pred_check
    _
  $region43: #{cnn_ae_mnist_forward.7} parent=0 // pred_check_branch
    %588 = sbr.rel (0) target = $region45
  $region44: #{cnn_ae_mnist_forward.7} parent=0 // pred_region
    _
  $region45: #{cnn_ae_mnist_forward.7} parent=0 // pred_fallthru
    _

// kernel: cnn_ae_mnist_forward.8
$region0: #{cnn_ae_mnist_forward.8}
  #allocation0 [shape = 'u32[]', space=smem, size = 0x4, offset = 0x4, fixed_abs, tag = 'smem constant byte address 0x4 - core index']
  #allocation1 [shape = 'u32[144,128]{1,0:T(1,128)}', space=vmem, size = 0x12000, scoped, tag = 'internal scratch']
  %s0 = inlined_call_operand.vmem [shape: f32[338,9], index: 0, kind: input, shape index: {}]
  %s1 = inlined_call_operand.vmem [shape: f32[9,32], index: 1, kind: input, shape index: {}]
  %s2 = inlined_call_operand.vmem [shape: f32[1,32], index: 2, kind: input, shape index: {}]
  %s3 = inlined_call_operand.vmem [shape: f32[338,32], index: 3, kind: output, shape index: {}]
  %s4 = sld [smem:[#allocation0]]
  $region22: #{cnn_ae_mnist_forward.8} parent=0
    _
  %s6 = ssub.s32 1, %s4
  %s7 = scalar_select 0, %s6, %s4
  // Predicated region
  $region2: #{cnn_ae_mnist_forward.8} parent=0 // pred_check
    _
  $region3: #{cnn_ae_mnist_forward.8} parent=0 // pred_check_branch
    %9 = sbr.rel (0) target = $region5
  $region4: #{cnn_ae_mnist_forward.8} parent=0 // pred_region
    _
  $region5: #{cnn_ae_mnist_forward.8} parent=0 // pred_fallthru
    _
  // Predicated region
  $region6: #{cnn_ae_mnist_forward.8} parent=0 // pred_check
    _
  $region7: #{cnn_ae_mnist_forward.8} parent=0 // pred_check_branch
    %11 = sbr.rel (0) target = $region9
  $region8: #{cnn_ae_mnist_forward.8} parent=0 // pred_region
    _
  $region9: #{cnn_ae_mnist_forward.8} parent=0 // pred_fallthru
    _
  // Predicated region
  $region10: #{cnn_ae_mnist_forward.8} parent=0 // pred_check
    _
  $region11: #{cnn_ae_mnist_forward.8} parent=0 // pred_check_branch
    %13 = sbr.rel (0) target = $region13
  $region12: #{cnn_ae_mnist_forward.8} parent=0 // pred_region
    _
  $region13: #{cnn_ae_mnist_forward.8} parent=0 // pred_fallthru
    _
  %v14 = vld [vmem:[%s0] sm:$0xff]
  %v15 = vld [vmem:[%s0 + $0x8] sm:$0xff]
  %v16 = vld [vmem:[%s0 + $0x10] sm:$0xff]
  %v17 = vld [vmem:[%s0 + $0x18] sm:$0xff]
  %v18 = vld [vmem:[%s0 + $0x20] sm:$0xff]
  %v19 = vld [vmem:[%s0 + $0x28] sm:$0xff]
  %v20 = vld [vmem:[%s0 + $0x30] sm:$0xff]
  %v21 = vld [vmem:[%s0 + $0x38] sm:$0xff]
  %v22 = vld [vmem:[%s0 + $0x40] sm:$0xff]
  %v23 = vld [vmem:[%s0 + $0x48] sm:$0xff]
  %v24 = vld [vmem:[%s0 + $0x50] sm:$0xff]
  %v25 = vld [vmem:[%s0 + $0x58] sm:$0xff]
  %v26 = vld [vmem:[%s0 + $0x60] sm:$0xff]
  %v27 = vld [vmem:[%s0 + $0x68] sm:$0xff]
  %v28 = vld [vmem:[%s0 + $0x70] sm:$0xff]
  %v29 = vld [vmem:[%s0 + $0x78] sm:$0xff]
  %v30 = vld [vmem:[%s0 + $0x80] sm:$0xff]
  %v31 = vld [vmem:[%s0 + $0x88] sm:$0xff]
  %v32 = vld [vmem:[%s0 + $0x90] sm:$0xff]
  %v33 = vld [vmem:[%s0 + $0x98] sm:$0xff]
  %v34 = vld [vmem:[%s0 + $0xa0] sm:$0xff]
  %v35 = vld [vmem:[%s0 + $0xa8] sm:$0xff]
  %v36 = vld [vmem:[%s0 + $0xb0] sm:$0xff]
  %v37 = vld [vmem:[%s0 + $0xb8] sm:$0xff]
  %v38 = vld [vmem:[%s0 + $0xc0] sm:$0xff]
  %v39 = vld [vmem:[%s0 + $0xc8] sm:$0xff]
  %v40 = vld [vmem:[%s0 + $0xd0] sm:$0xff]
  %v41 = vld [vmem:[%s0 + $0xd8] sm:$0xff]
  %v42 = vld [vmem:[%s0 + $0xe0] sm:$0xff]
  %v43 = vld [vmem:[%s0 + $0xe8] sm:$0xff]
  %v44 = vld [vmem:[%s0 + $0xf0] sm:$0xff]
  %v45 = vld [vmem:[%s0 + $0xf8] sm:$0xff]
  %v46 = vld [vmem:[%s0 + $0x100] sm:$0xff]
  %v47 = vld [vmem:[%s0 + $0x108] sm:$0xff]
  %v48 = vld [vmem:[%s0 + $0x110] sm:$0xff]
  %v49 = vld [vmem:[%s0 + $0x118] sm:$0xff]
  %v50 = vld [vmem:[%s0 + $0x120] sm:$0xff]
  %v51 = vld [vmem:[%s0 + $0x128] sm:$0xff]
  %v52 = vld [vmem:[%s0 + $0x130] sm:$0xff]
  %v53 = vld [vmem:[%s0 + $0x138] sm:$0xff]
  %v54 = vld [vmem:[%s0 + $0x140] sm:$0xff]
  %v55 = vld [vmem:[%s0 + $0x148] sm:$0xff]
  %v56 = vld [vmem:[%s0 + $0x150] sm:$0x3]
  %v57 = vld [vmem:[%s1] sm:$0xff]
  %v58 = vld [vmem:[%s1 + $0x8] sm:$0x1]
  %v59 = vld [vmem:[%s2] sm:$0x1]
  %v61 = vlaneseq
  %v62 = vshrl.u32 %v61, 7
  %v63 = vsub.s32 0, %v62
  %v64 = vrot.slane %v59, %v63
  %vm66 = vcmask 72704
  %v68 = vsel %vm66, %v14, 0
  %v71 = vsel %vm66, %v15, 0
  %v74 = vsel %vm66, %v16, 0
  %v77 = vsel %vm66, %v17, 0
  %v80 = vsel %vm66, %v18, 0
  %v83 = vsel %vm66, %v19, 0
  %v86 = vsel %vm66, %v20, 0
  %v89 = vsel %vm66, %v21, 0
  %v92 = vsel %vm66, %v22, 0
  %v95 = vsel %vm66, %v23, 0
  %v98 = vsel %vm66, %v24, 0
  %v101 = vsel %vm66, %v25, 0
  %v104 = vsel %vm66, %v26, 0
  %v107 = vsel %vm66, %v27, 0
  %v110 = vsel %vm66, %v28, 0
  %v113 = vsel %vm66, %v29, 0
  %v116 = vsel %vm66, %v30, 0
  %v119 = vsel %vm66, %v31, 0
  %v122 = vsel %vm66, %v32, 0
  %v125 = vsel %vm66, %v33, 0
  %v128 = vsel %vm66, %v34, 0
  %v131 = vsel %vm66, %v35, 0
  %v134 = vsel %vm66, %v36, 0
  %v137 = vsel %vm66, %v37, 0
  %v140 = vsel %vm66, %v38, 0
  %v143 = vsel %vm66, %v39, 0
  %v146 = vsel %vm66, %v40, 0
  %v149 = vsel %vm66, %v41, 0
  %v152 = vsel %vm66, %v42, 0
  %v155 = vsel %vm66, %v43, 0
  %v158 = vsel %vm66, %v44, 0
  %v161 = vsel %vm66, %v45, 0
  %v164 = vsel %vm66, %v46, 0
  %v167 = vsel %vm66, %v47, 0
  %v170 = vsel %vm66, %v48, 0
  %v173 = vsel %vm66, %v49, 0
  %v176 = vsel %vm66, %v50, 0
  %v179 = vsel %vm66, %v51, 0
  %v182 = vsel %vm66, %v52, 0
  %v185 = vsel %vm66, %v53, 0
  %v188 = vsel %vm66, %v54, 0
  %v191 = vsel %vm66, %v55, 0
  %v194 = vsel %vm66, %v56, 0
  %vm196 = vcmask 1040384
  %v198 = vsel %vm196, %v58, 0
  %200 = vmatprep.subr.mxu0 0.0
  %201 = vmatpush1.msra.mxu0 %v57
  %202 = vmatprep.subr.mxu0 0.0
  %203 = vmatpush1.msra.mxu0 %v198
  %204 = vmatprep.subr.mxu0 0.0
  %205 = vmatpush1.msra.mxu0 0.0
  %206 = vmatprep.subr.mxu0 0.0
  %207 = vmatpush1.msra.mxu0 0.0
  %208 = vmatprep.subr.mxu0 0.0
  %209 = vmatpush1.msra.mxu0 0.0
  %210 = vmatprep.subr.mxu0 0.0
  %211 = vmatpush1.msra.mxu0 0.0
  %212 = vmatprep.subr.mxu0 0.0
  %213 = vmatpush1.msra.mxu0 0.0
  %214 = vmatprep.subr.mxu0 0.0
  %215 = vmatpush1.msra.mxu0 0.0
  %216 = vmatprep.subr.mxu0 0.0
  %217 = vmatpush1.msra.mxu0 0.0
  %218 = vmatprep.subr.mxu0 0.0
  %219 = vmatpush1.msra.mxu0 0.0
  %220 = vmatprep.subr.mxu0 0.0
  %221 = vmatpush1.msra.mxu0 0.0
  %222 = vmatprep.subr.mxu0 0.0
  %223 = vmatpush1.msra.mxu0 0.0
  %224 = vmatprep.subr.mxu0 0.0
  %225 = vmatpush1.msra.mxu0 0.0
  %226 = vmatprep.subr.mxu0 0.0
  %227 = vmatpush1.msra.mxu0 0.0
  %228 = vmatprep.subr.mxu0 0.0
  %229 = vmatpush1.msra.mxu0 0.0
  %230 = vmatprep.subr.mxu0 0.0
  %231 = vmatpush1.msra.mxu0 0.0
  %232 = vmatprep.subr.mxu0 0.0
  %233 = vmatpush1.msra.mxu0 0.0
  %234 = vmatprep.subr.mxu0 0.0
  %235 = vmatpush1.msra.mxu0 0.0
  %236 = vmatprep.subr.mxu0 0.0
  %237 = vmatpush1.msra.mxu0 0.0
  %238 = vmatprep.subr.mxu0 0.0
  %239 = vmatpush1.msra.mxu0 0.0
  %240 = vmatprep.subr.mxu0 0.0
  %241 = vmatpush1.msra.mxu0 0.0
  %242 = vmatprep.subr.mxu0 0.0
  %243 = vmatpush1.msra.mxu0 0.0
  %244 = vmatprep.subr.mxu0 0.0
  %245 = vmatpush1.msra.mxu0 0.0
  %246 = vmatprep.subr.mxu0 0.0
  %247 = vmatpush1.msra.mxu0 0.0
  %248 = vmatprep.subr.mxu0 0.0
  %249 = vmatpush1.msra.mxu0 0.0
  %250 = vmatprep.subr.mxu0 0.0
  %251 = vmatpush1.msra.mxu0 0.0
  %252 = vmatprep.subr.mxu0 0.0
  %253 = vmatpush1.msra.mxu0 0.0
  %254 = vmatprep.subr.mxu0 0.0
  %255 = vmatpush1.msra.mxu0 0.0
  %256 = vmatprep.subr.mxu0 0.0
  %257 = vmatpush1.msra.mxu0 0.0
  %258 = vmatprep.subr.mxu0 0.0
  %259 = vmatpush1.msra.mxu0 0.0
  %260 = vmatprep.subr.mxu0 0.0
  %261 = vmatpush1.msra.mxu0 0.0
  %262 = vmatprep.subr.mxu0 0.0
  %263 = vmatpush1.msra.mxu0 0.0
  %264 = vmatprep.mubr.f32.mxu0 0.0
  %265 = vmatmul.mubr.f32.gmra.mrb[0].mxu0 %v68
  %v266 = vpop.f32.mrb[0].mxu0
  %v267 = vadd.f32 %v64, %v266
  %v268 = vpop.f32.mrb[0].mxu0
  %269 = vmatprep.mubr.f32.mxu0 0.0
  %270 = vmatmul.mubr.f32.gmra.mrb[0].mxu0 %v71
  %v271 = vpop.f32.mrb[0].mxu0
  %v272 = vadd.f32 %v64, %v271
  %v273 = vpop.f32.mrb[0].mxu0
  %274 = vmatprep.mubr.f32.mxu0 0.0
  %275 = vmatmul.mubr.f32.gmra.mrb[0].mxu0 %v74
  %v276 = vpop.f32.mrb[0].mxu0
  %v277 = vadd.f32 %v64, %v276
  %v278 = vpop.f32.mrb[0].mxu0
  %279 = vmatprep.mubr.f32.mxu0 0.0
  %280 = vmatmul.mubr.f32.gmra.mrb[0].mxu0 %v77
  %v281 = vpop.f32.mrb[0].mxu0
  %v282 = vadd.f32 %v64, %v281
  %v283 = vpop.f32.mrb[0].mxu0
  %284 = vmatprep.mubr.f32.mxu0 0.0
  %285 = vmatmul.mubr.f32.gmra.mrb[0].mxu0 %v80
  %v286 = vpop.f32.mrb[0].mxu0
  %v287 = vadd.f32 %v64, %v286
  %v288 = vpop.f32.mrb[0].mxu0
  %289 = vmatprep.mubr.f32.mxu0 0.0
  %290 = vmatmul.mubr.f32.gmra.mrb[0].mxu0 %v83
  %v291 = vpop.f32.mrb[0].mxu0
  %v292 = vadd.f32 %v64, %v291
  %v293 = vpop.f32.mrb[0].mxu0
  %294 = vmatprep.mubr.f32.mxu0 0.0
  %295 = vmatmul.mubr.f32.gmra.mrb[0].mxu0 %v86
  %v296 = vpop.f32.mrb[0].mxu0
  %v297 = vadd.f32 %v64, %v296
  %v298 = vpop.f32.mrb[0].mxu0
  %299 = vmatprep.mubr.f32.mxu0 0.0
  %300 = vmatmul.mubr.f32.gmra.mrb[0].mxu0 %v89
  %v301 = vpop.f32.mrb[0].mxu0
  %v302 = vadd.f32 %v64, %v301
  %v303 = vpop.f32.mrb[0].mxu0
  %304 = vmatprep.mubr.f32.mxu0 0.0
  %305 = vmatmul.mubr.f32.gmra.mrb[0].mxu0 %v92
  %v306 = vpop.f32.mrb[0].mxu0
  %v307 = vadd.f32 %v64, %v306
  %v308 = vpop.f32.mrb[0].mxu0
  %309 = vmatprep.mubr.f32.mxu0 0.0
  %310 = vmatmul.mubr.f32.gmra.mrb[0].mxu0 %v95
  %v311 = vpop.f32.mrb[0].mxu0
  %v312 = vadd.f32 %v64, %v311
  %v313 = vpop.f32.mrb[0].mxu0
  %314 = vmatprep.mubr.f32.mxu0 0.0
  %315 = vmatmul.mubr.f32.gmra.mrb[0].mxu0 %v98
  %v316 = vpop.f32.mrb[0].mxu0
  %v317 = vadd.f32 %v64, %v316
  %v318 = vpop.f32.mrb[0].mxu0
  %319 = vmatprep.mubr.f32.mxu0 0.0
  %320 = vmatmul.mubr.f32.gmra.mrb[0].mxu0 %v101
  %v321 = vpop.f32.mrb[0].mxu0
  %v322 = vadd.f32 %v64, %v321
  %v323 = vpop.f32.mrb[0].mxu0
  %324 = vmatprep.mubr.f32.mxu0 0.0
  %325 = vmatmul.mubr.f32.gmra.mrb[0].mxu0 %v104
  %v326 = vpop.f32.mrb[0].mxu0
  %v327 = vadd.f32 %v64, %v326
  %v328 = vpop.f32.mrb[0].mxu0
  %329 = vmatprep.mubr.f32.mxu0 0.0
  %330 = vmatmul.mubr.f32.gmra.mrb[0].mxu0 %v107
  %v331 = vpop.f32.mrb[0].mxu0
  %v332 = vadd.f32 %v64, %v331
  %v333 = vpop.f32.mrb[0].mxu0
  %334 = vmatprep.mubr.f32.mxu0 0.0
  %335 = vmatmul.mubr.f32.gmra.mrb[0].mxu0 %v110
  %v336 = vpop.f32.mrb[0].mxu0
  %v337 = vadd.f32 %v64, %v336
  %v338 = vpop.f32.mrb[0].mxu0
  %339 = vmatprep.mubr.f32.mxu0 0.0
  %340 = vmatmul.mubr.f32.gmra.mrb[0].mxu0 %v113
  %v341 = vpop.f32.mrb[0].mxu0
  %v342 = vadd.f32 %v64, %v341
  %v343 = vpop.f32.mrb[0].mxu0
  %344 = vmatprep.mubr.f32.mxu0 0.0
  %345 = vmatmul.mubr.f32.gmra.mrb[0].mxu0 %v116
  %v346 = vpop.f32.mrb[0].mxu0
  %v347 = vadd.f32 %v64, %v346
  %v348 = vpop.f32.mrb[0].mxu0
  %349 = vmatprep.mubr.f32.mxu0 0.0
  %350 = vmatmul.mubr.f32.gmra.mrb[0].mxu0 %v119
  %v351 = vpop.f32.mrb[0].mxu0
  %v352 = vadd.f32 %v64, %v351
  %v353 = vpop.f32.mrb[0].mxu0
  %354 = vmatprep.mubr.f32.mxu0 0.0
  %355 = vmatmul.mubr.f32.gmra.mrb[0].mxu0 %v122
  %v356 = vpop.f32.mrb[0].mxu0
  %v357 = vadd.f32 %v64, %v356
  %v358 = vpop.f32.mrb[0].mxu0
  %359 = vmatprep.mubr.f32.mxu0 0.0
  %360 = vmatmul.mubr.f32.gmra.mrb[0].mxu0 %v125
  %v361 = vpop.f32.mrb[0].mxu0
  %v362 = vadd.f32 %v64, %v361
  %v363 = vpop.f32.mrb[0].mxu0
  %364 = vmatprep.mubr.f32.mxu0 0.0
  %365 = vmatmul.mubr.f32.gmra.mrb[0].mxu0 %v128
  %v366 = vpop.f32.mrb[0].mxu0
  %v367 = vadd.f32 %v64, %v366
  %v368 = vpop.f32.mrb[0].mxu0
  %369 = vmatprep.mubr.f32.mxu0 0.0
  %370 = vmatmul.mubr.f32.gmra.mrb[0].mxu0 %v131
  %v371 = vpop.f32.mrb[0].mxu0
  %v372 = vadd.f32 %v64, %v371
  %v373 = vpop.f32.mrb[0].mxu0
  %374 = vmatprep.mubr.f32.mxu0 0.0
  %375 = vmatmul.mubr.f32.gmra.mrb[0].mxu0 %v134
  %v376 = vpop.f32.mrb[0].mxu0
  %v377 = vadd.f32 %v64, %v376
  %v378 = vpop.f32.mrb[0].mxu0
  %379 = vmatprep.mubr.f32.mxu0 0.0
  %380 = vmatmul.mubr.f32.gmra.mrb[0].mxu0 %v137
  %v381 = vpop.f32.mrb[0].mxu0
  %v382 = vadd.f32 %v64, %v381
  %v383 = vpop.f32.mrb[0].mxu0
  %384 = vmatprep.mubr.f32.mxu0 0.0
  %385 = vmatmul.mubr.f32.gmra.mrb[0].mxu0 %v140
  %v386 = vpop.f32.mrb[0].mxu0
  %v387 = vadd.f32 %v64, %v386
  %v388 = vpop.f32.mrb[0].mxu0
  %389 = vmatprep.mubr.f32.mxu0 0.0
  %390 = vmatmul.mubr.f32.gmra.mrb[0].mxu0 %v143
  %v391 = vpop.f32.mrb[0].mxu0
  %v392 = vadd.f32 %v64, %v391
  %v393 = vpop.f32.mrb[0].mxu0
  %394 = vmatprep.mubr.f32.mxu0 0.0
  %395 = vmatmul.mubr.f32.gmra.mrb[0].mxu0 %v146
  %v396 = vpop.f32.mrb[0].mxu0
  %v397 = vadd.f32 %v64, %v396
  %v398 = vpop.f32.mrb[0].mxu0
  %399 = vmatprep.mubr.f32.mxu0 0.0
  %400 = vmatmul.mubr.f32.gmra.mrb[0].mxu0 %v149
  %v401 = vpop.f32.mrb[0].mxu0
  %v402 = vadd.f32 %v64, %v401
  %v403 = vpop.f32.mrb[0].mxu0
  %404 = vmatprep.mubr.f32.mxu0 0.0
  %405 = vmatmul.mubr.f32.gmra.mrb[0].mxu0 %v152
  %v406 = vpop.f32.mrb[0].mxu0
  %v407 = vadd.f32 %v64, %v406
  %v408 = vpop.f32.mrb[0].mxu0
  %409 = vmatprep.mubr.f32.mxu0 0.0
  %410 = vmatmul.mubr.f32.gmra.mrb[0].mxu0 %v155
  %v411 = vpop.f32.mrb[0].mxu0
  %v412 = vadd.f32 %v64, %v411
  %v413 = vpop.f32.mrb[0].mxu0
  %414 = vmatprep.mubr.f32.mxu0 0.0
  %415 = vmatmul.mubr.f32.gmra.mrb[0].mxu0 %v158
  %v416 = vpop.f32.mrb[0].mxu0
  %v417 = vadd.f32 %v64, %v416
  %v418 = vpop.f32.mrb[0].mxu0
  %419 = vmatprep.mubr.f32.mxu0 0.0
  %420 = vmatmul.mubr.f32.gmra.mrb[0].mxu0 %v161
  %v421 = vpop.f32.mrb[0].mxu0
  %v422 = vadd.f32 %v64, %v421
  %v423 = vpop.f32.mrb[0].mxu0
  %424 = vmatprep.mubr.f32.mxu0 0.0
  %425 = vmatmul.mubr.f32.gmra.mrb[0].mxu0 %v164
  %v426 = vpop.f32.mrb[0].mxu0
  %v427 = vadd.f32 %v64, %v426
  %v428 = vpop.f32.mrb[0].mxu0
  %429 = vmatprep.mubr.f32.mxu0 0.0
  %430 = vmatmul.mubr.f32.gmra.mrb[0].mxu0 %v167
  %v431 = vpop.f32.mrb[0].mxu0
  %v432 = vadd.f32 %v64, %v431
  %v433 = vpop.f32.mrb[0].mxu0
  %434 = vmatprep.mubr.f32.mxu0 0.0
  %435 = vmatmul.mubr.f32.gmra.mrb[0].mxu0 %v170
  %v436 = vpop.f32.mrb[0].mxu0
  %v437 = vadd.f32 %v64, %v436
  %v438 = vpop.f32.mrb[0].mxu0
  %439 = vmatprep.mubr.f32.mxu0 0.0
  %440 = vmatmul.mubr.f32.gmra.mrb[0].mxu0 %v173
  %v441 = vpop.f32.mrb[0].mxu0
  %v442 = vadd.f32 %v64, %v441
  %v443 = vpop.f32.mrb[0].mxu0
  %444 = vmatprep.mubr.f32.mxu0 0.0
  %445 = vmatmul.mubr.f32.gmra.mrb[0].mxu0 %v176
  %v446 = vpop.f32.mrb[0].mxu0
  %v447 = vadd.f32 %v64, %v446
  %v448 = vpop.f32.mrb[0].mxu0
  %449 = vmatprep.mubr.f32.mxu0 0.0
  %450 = vmatmul.mubr.f32.gmra.mrb[0].mxu0 %v179
  %v451 = vpop.f32.mrb[0].mxu0
  %v452 = vadd.f32 %v64, %v451
  %v453 = vpop.f32.mrb[0].mxu0
  %454 = vmatprep.mubr.f32.mxu0 0.0
  %455 = vmatmul.mubr.f32.gmra.mrb[0].mxu0 %v182
  %v456 = vpop.f32.mrb[0].mxu0
  %v457 = vadd.f32 %v64, %v456
  %v458 = vpop.f32.mrb[0].mxu0
  %459 = vmatprep.mubr.f32.mxu0 0.0
  %460 = vmatmul.mubr.f32.gmra.mrb[0].mxu0 %v185
  %v461 = vpop.f32.mrb[0].mxu0
  %v462 = vadd.f32 %v64, %v461
  %v463 = vpop.f32.mrb[0].mxu0
  %464 = vmatprep.mubr.f32.mxu0 0.0
  %465 = vmatmul.mubr.f32.gmra.mrb[0].mxu0 %v188
  %v466 = vpop.f32.mrb[0].mxu0
  %v467 = vadd.f32 %v64, %v466
  %v468 = vpop.f32.mrb[0].mxu0
  %469 = vmatprep.mubr.f32.mxu0 0.0
  %470 = vmatmul.mubr.f32.gmra.mrb[0].mxu0 %v191
  %v471 = vpop.f32.mrb[0].mxu0
  %v472 = vadd.f32 %v64, %v471
  %v473 = vpop.f32.mrb[0].mxu0
  %474 = vmatprep.mubr.f32.mxu0 0.0
  %475 = vmatmul.mubr.f32.gmra.mrb[0].mxu0 %v194
  %v476 = vpop.f32.mrb[0].mxu0
  %v477 = vadd.f32 %v64, %v476
  %v478 = vpop.f32.mrb[0].mxu0
  %479 = vdwg.mxu0
  %v480 = vmax.f32 %v267, 0.0
  %v481 = vmax.f32 %v272, 0.0
  %v482 = vmax.f32 %v277, 0.0
  %v483 = vmax.f32 %v282, 0.0
  %v484 = vmax.f32 %v287, 0.0
  %v485 = vmax.f32 %v292, 0.0
  %v486 = vmax.f32 %v297, 0.0
  %v487 = vmax.f32 %v302, 0.0
  %v488 = vmax.f32 %v307, 0.0
  %v489 = vmax.f32 %v312, 0.0
  %v490 = vmax.f32 %v317, 0.0
  %v491 = vmax.f32 %v322, 0.0
  %v492 = vmax.f32 %v327, 0.0
  %v493 = vmax.f32 %v332, 0.0
  %v494 = vmax.f32 %v337, 0.0
  %v495 = vmax.f32 %v342, 0.0
  %v496 = vmax.f32 %v347, 0.0
  %v497 = vmax.f32 %v352, 0.0
  %v498 = vmax.f32 %v357, 0.0
  %v499 = vmax.f32 %v362, 0.0
  %v500 = vmax.f32 %v367, 0.0
  %v501 = vmax.f32 %v372, 0.0
  %v502 = vmax.f32 %v377, 0.0
  %v503 = vmax.f32 %v382, 0.0
  %v504 = vmax.f32 %v387, 0.0
  %v505 = vmax.f32 %v392, 0.0
  %v506 = vmax.f32 %v397, 0.0
  %v507 = vmax.f32 %v402, 0.0
  %v508 = vmax.f32 %v407, 0.0
  %v509 = vmax.f32 %v412, 0.0
  %v510 = vmax.f32 %v417, 0.0
  %v511 = vmax.f32 %v422, 0.0
  %v512 = vmax.f32 %v427, 0.0
  %v513 = vmax.f32 %v432, 0.0
  %v514 = vmax.f32 %v437, 0.0
  %v515 = vmax.f32 %v442, 0.0
  %v516 = vmax.f32 %v447, 0.0
  %v517 = vmax.f32 %v452, 0.0
  %v518 = vmax.f32 %v457, 0.0
  %v519 = vmax.f32 %v462, 0.0
  %v520 = vmax.f32 %v467, 0.0
  %v521 = vmax.f32 %v472, 0.0
  %v522 = vmax.f32 %v477, 0.0
  %vm523 = vcmask 261120
  %524 = vst.msk [vmem:[%s3] sm:$0xff] %vm523, %v480
  %525 = vst.msk [vmem:[%s3 + $0x8] sm:$0xff] %vm523, %v481
  %526 = vst.msk [vmem:[%s3 + $0x10] sm:$0xff] %vm523, %v482
  %527 = vst.msk [vmem:[%s3 + $0x18] sm:$0xff] %vm523, %v483
  %528 = vst.msk [vmem:[%s3 + $0x20] sm:$0xff] %vm523, %v484
  %529 = vst.msk [vmem:[%s3 + $0x28] sm:$0xff] %vm523, %v485
  %530 = vst.msk [vmem:[%s3 + $0x30] sm:$0xff] %vm523, %v486
  %531 = vst.msk [vmem:[%s3 + $0x38] sm:$0xff] %vm523, %v487
  %532 = vst.msk [vmem:[%s3 + $0x40] sm:$0xff] %vm523, %v488
  %533 = vst.msk [vmem:[%s3 + $0x48] sm:$0xff] %vm523, %v489
  %534 = vst.msk [vmem:[%s3 + $0x50] sm:$0xff] %vm523, %v490
  %535 = vst.msk [vmem:[%s3 + $0x58] sm:$0xff] %vm523, %v491
  %536 = vst.msk [vmem:[%s3 + $0x60] sm:$0xff] %vm523, %v492
  %537 = vst.msk [vmem:[%s3 + $0x68] sm:$0xff] %vm523, %v493
  %538 = vst.msk [vmem:[%s3 + $0x70] sm:$0xff] %vm523, %v494
  %539 = vst.msk [vmem:[%s3 + $0x78] sm:$0xff] %vm523, %v495
  %540 = vst.msk [vmem:[%s3 + $0x80] sm:$0xff] %vm523, %v496
  %541 = vst.msk [vmem:[%s3 + $0x88] sm:$0xff] %vm523, %v497
  %542 = vst.msk [vmem:[%s3 + $0x90] sm:$0xff] %vm523, %v498
  %543 = vst.msk [vmem:[%s3 + $0x98] sm:$0xff] %vm523, %v499
  %544 = vst.msk [vmem:[%s3 + $0xa0] sm:$0xff] %vm523, %v500
  %545 = vst.msk [vmem:[%s3 + $0xa8] sm:$0xff] %vm523, %v501
  %546 = vst.msk [vmem:[%s3 + $0xb0] sm:$0xff] %vm523, %v502
  %547 = vst.msk [vmem:[%s3 + $0xb8] sm:$0xff] %vm523, %v503
  %548 = vst.msk [vmem:[%s3 + $0xc0] sm:$0xff] %vm523, %v504
  %549 = vst.msk [vmem:[%s3 + $0xc8] sm:$0xff] %vm523, %v505
  %550 = vst.msk [vmem:[%s3 + $0xd0] sm:$0xff] %vm523, %v506
  %551 = vst.msk [vmem:[%s3 + $0xd8] sm:$0xff] %vm523, %v507
  %552 = vst.msk [vmem:[%s3 + $0xe0] sm:$0xff] %vm523, %v508
  %553 = vst.msk [vmem:[%s3 + $0xe8] sm:$0xff] %vm523, %v509
  %554 = vst.msk [vmem:[%s3 + $0xf0] sm:$0xff] %vm523, %v510
  %555 = vst.msk [vmem:[%s3 + $0xf8] sm:$0xff] %vm523, %v511
  %556 = vst.msk [vmem:[%s3 + $0x100] sm:$0xff] %vm523, %v512
  %557 = vst.msk [vmem:[%s3 + $0x108] sm:$0xff] %vm523, %v513
  %558 = vst.msk [vmem:[%s3 + $0x110] sm:$0xff] %vm523, %v514
  %559 = vst.msk [vmem:[%s3 + $0x118] sm:$0xff] %vm523, %v515
  %560 = vst.msk [vmem:[%s3 + $0x120] sm:$0xff] %vm523, %v516
  %561 = vst.msk [vmem:[%s3 + $0x128] sm:$0xff] %vm523, %v517
  %562 = vst.msk [vmem:[%s3 + $0x130] sm:$0xff] %vm523, %v518
  %563 = vst.msk [vmem:[%s3 + $0x138] sm:$0xff] %vm523, %v519
  %564 = vst.msk [vmem:[%s3 + $0x140] sm:$0xff] %vm523, %v520
  %565 = vst.msk [vmem:[%s3 + $0x148] sm:$0xff] %vm523, %v521
  %vm566 = vcmask 254976
  %567 = vst.msk [vmem:[%s3 + $0x150] sm:$0x3] %vm566, %v522
  // Predicated region
  $region14: #{cnn_ae_mnist_forward.8} parent=0 // pred_check
    _
  $region15: #{cnn_ae_mnist_forward.8} parent=0 // pred_check_branch
    %569 = sbr.rel (0) target = $region17
  $region16: #{cnn_ae_mnist_forward.8} parent=0 // pred_region
    _
  $region17: #{cnn_ae_mnist_forward.8} parent=0 // pred_fallthru
    _
  // Predicated region
  $region18: #{cnn_ae_mnist_forward.8} parent=0 // pred_check
    _
  $region19: #{cnn_ae_mnist_forward.8} parent=0 // pred_check_branch
    %571 = sbr.rel (0) target = $region21
  $region20: #{cnn_ae_mnist_forward.8} parent=0 // pred_region
    _
  $region21: #{cnn_ae_mnist_forward.8} parent=0 // pred_fallthru
    _

// kernel: cnn_ae_mnist_forward.9
$region0: #{cnn_ae_mnist_forward.9}
  #allocation0 [shape = 'u32[]', space=smem, size = 0x4, offset = 0x4, fixed_abs, tag = 'smem constant byte address 0x4 - core index']
  #allocation1 [shape = 'u32[144,128]{1,0:T(1,128)}', space=vmem, size = 0x12000, scoped, tag = 'internal scratch']
  #allocation2 [shape = 'f32[1,1]{1,0:T(1,128)S(1)}', space=vmem, size = 0x200, scoped, tag = 'scoped memory for cnn_ae_mnist_forward.9']
  %s0 = inlined_call_operand.vmem [shape: f32[1,512], index: 0, kind: input, shape index: {}]
  %s1 = inlined_call_operand.vmem [shape: f32[512,1568], index: 1, kind: input, shape index: {}]
  %s2 = inlined_call_operand.<no memory space> [shape: f32[1,1], index: 2, kind: input, shape index: {}]
  %s3 = inlined_call_operand.vmem [shape: f32[1,1568], index: 3, kind: output, shape index: {}]
  %s4 = sld [smem:[#allocation0]]
  $region22: #{cnn_ae_mnist_forward.9} parent=0
    _
  %s6 = ssub.s32 1, %s4
  %s7 = scalar_select 0, %s6, %s4
  %v8 = vstv %s2
  %9 = vst [vmem:[#allocation2] sm:$0x1] %v8
  // Predicated region
  $region2: #{cnn_ae_mnist_forward.9} parent=0 // pred_check
    _
  $region3: #{cnn_ae_mnist_forward.9} parent=0 // pred_check_branch
    %11 = sbr.rel (0) target = $region5
  $region4: #{cnn_ae_mnist_forward.9} parent=0 // pred_region
    _
  $region5: #{cnn_ae_mnist_forward.9} parent=0 // pred_fallthru
    _
  // Predicated region
  $region6: #{cnn_ae_mnist_forward.9} parent=0 // pred_check
    _
  $region7: #{cnn_ae_mnist_forward.9} parent=0 // pred_check_branch
    %13 = sbr.rel (0) target = $region9
  $region8: #{cnn_ae_mnist_forward.9} parent=0 // pred_region
    _
  $region9: #{cnn_ae_mnist_forward.9} parent=0 // pred_fallthru
    _
  // Predicated region
  $region10: #{cnn_ae_mnist_forward.9} parent=0 // pred_check
    _
  $region11: #{cnn_ae_mnist_forward.9} parent=0 // pred_check_branch
    %15 = sbr.rel (0) target = $region13
  $region12: #{cnn_ae_mnist_forward.9} parent=0 // pred_region
    _
  $region13: #{cnn_ae_mnist_forward.9} parent=0 // pred_fallthru
    _
  %v16 = vld [vmem:[%s0] sm:$0xf]
  %v17 = vld [vmem:[%s1] sm:$0xff]
  %v18 = vld [vmem:[%s1 + $0x8] sm:$0xff]
  %v19 = vld [vmem:[%s1 + $0x10] sm:$0xff]
  %v20 = vld [vmem:[%s1 + $0x18] sm:$0xff]
  %v21 = vld [vmem:[%s1 + $0x20] sm:$0xff]
  %v22 = vld [vmem:[%s1 + $0x28] sm:$0xff]
  %v23 = vld [vmem:[%s1 + $0x30] sm:$0xff]
  %v24 = vld [vmem:[%s1 + $0x38] sm:$0xff]
  %v25 = vld [vmem:[%s1 + $0x40] sm:$0xff]
  %v26 = vld [vmem:[%s1 + $0x48] sm:$0xff]
  %v27 = vld [vmem:[%s1 + $0x50] sm:$0xff]
  %v28 = vld [vmem:[%s1 + $0x58] sm:$0xff]
  %v29 = vld [vmem:[%s1 + $0x60] sm:$0xff]
  %v30 = vld [vmem:[%s1 + $0x68] sm:$0xff]
  %v31 = vld [vmem:[%s1 + $0x70] sm:$0xff]
  %v32 = vld [vmem:[%s1 + $0x78] sm:$0xff]
  %v33 = vld [vmem:[%s1 + $0x80] sm:$0xff]
  %v34 = vld [vmem:[%s1 + $0x88] sm:$0xff]
  %v35 = vld [vmem:[%s1 + $0x90] sm:$0xff]
  %v36 = vld [vmem:[%s1 + $0x98] sm:$0xff]
  %v37 = vld [vmem:[%s1 + $0xa0] sm:$0xff]
  %v38 = vld [vmem:[%s1 + $0xa8] sm:$0xff]
  %v39 = vld [vmem:[%s1 + $0xb0] sm:$0xff]
  %v40 = vld [vmem:[%s1 + $0xb8] sm:$0xff]
  %v41 = vld [vmem:[%s1 + $0xc0] sm:$0xff]
  %v42 = vld [vmem:[%s1 + $0xc8] sm:$0xff]
  %v43 = vld [vmem:[%s1 + $0xd0] sm:$0xff]
  %v44 = vld [vmem:[%s1 + $0xd8] sm:$0xff]
  %v45 = vld [vmem:[%s1 + $0xe0] sm:$0xff]
  %v46 = vld [vmem:[%s1 + $0xe8] sm:$0xff]
  %v47 = vld [vmem:[%s1 + $0xf0] sm:$0xff]
  %v48 = vld [vmem:[%s1 + $0xf8] sm:$0xff]
  %v49 = vld [vmem:[%s1 + $0x100] sm:$0xff]
  %v50 = vld [vmem:[%s1 + $0x108] sm:$0xff]
  %v51 = vld [vmem:[%s1 + $0x110] sm:$0xff]
  %v52 = vld [vmem:[%s1 + $0x118] sm:$0xff]
  %v53 = vld [vmem:[%s1 + $0x120] sm:$0xff]
  %v54 = vld [vmem:[%s1 + $0x128] sm:$0xff]
  %v55 = vld [vmem:[%s1 + $0x130] sm:$0xff]
  %v56 = vld [vmem:[%s1 + $0x138] sm:$0xff]
  %v57 = vld [vmem:[%s1 + $0x140] sm:$0xff]
  %v58 = vld [vmem:[%s1 + $0x148] sm:$0xff]
  %v59 = vld [vmem:[%s1 + $0x150] sm:$0xff]
  %v60 = vld [vmem:[%s1 + $0x158] sm:$0xff]
  %v61 = vld [vmem:[%s1 + $0x160] sm:$0xff]
  %v62 = vld [vmem:[%s1 + $0x168] sm:$0xff]
  %v63 = vld [vmem:[%s1 + $0x170] sm:$0xff]
  %v64 = vld [vmem:[%s1 + $0x178] sm:$0xff]
  %v65 = vld [vmem:[%s1 + $0x180] sm:$0xff]
  %v66 = vld [vmem:[%s1 + $0x188] sm:$0xff]
  %v67 = vld [vmem:[%s1 + $0x190] sm:$0xff]
  %v68 = vld [vmem:[%s1 + $0x198] sm:$0xff]
  %v69 = vld [vmem:[%s1 + $0x1a0] sm:$0xff]
  %v70 = vld [vmem:[%s1 + $0x1a8] sm:$0xff]
  %v71 = vld [vmem:[%s1 + $0x1b0] sm:$0xff]
  %v72 = vld [vmem:[%s1 + $0x1b8] sm:$0xff]
  %v73 = vld [vmem:[%s1 + $0x1c0] sm:$0xff]
  %v74 = vld [vmem:[%s1 + $0x1c8] sm:$0xff]
  %v75 = vld [vmem:[%s1 + $0x1d0] sm:$0xff]
  %v76 = vld [vmem:[%s1 + $0x1d8] sm:$0xff]
  %v77 = vld [vmem:[%s1 + $0x1e0] sm:$0xff]
  %v78 = vld [vmem:[%s1 + $0x1e8] sm:$0xff]
  %v79 = vld [vmem:[%s1 + $0x1f0] sm:$0xff]
  %v80 = vld [vmem:[%s1 + $0x1f8] sm:$0xff]
  %v81 = vld [vmem:[%s1 + $0x200] sm:$0xff]
  %v82 = vld [vmem:[%s1 + $0x208] sm:$0xff]
  %v83 = vld [vmem:[%s1 + $0x210] sm:$0xff]
  %v84 = vld [vmem:[%s1 + $0x218] sm:$0xff]
  %v85 = vld [vmem:[%s1 + $0x220] sm:$0xff]
  %v86 = vld [vmem:[%s1 + $0x228] sm:$0xff]
  %v87 = vld [vmem:[%s1 + $0x230] sm:$0xff]
  %v88 = vld [vmem:[%s1 + $0x238] sm:$0xff]
  %v89 = vld [vmem:[%s1 + $0x240] sm:$0xff]
  %v90 = vld [vmem:[%s1 + $0x248] sm:$0xff]
  %v91 = vld [vmem:[%s1 + $0x250] sm:$0xff]
  %v92 = vld [vmem:[%s1 + $0x258] sm:$0xff]
  %v93 = vld [vmem:[%s1 + $0x260] sm:$0xff]
  %v94 = vld [vmem:[%s1 + $0x268] sm:$0xff]
  %v95 = vld [vmem:[%s1 + $0x270] sm:$0xff]
  %v96 = vld [vmem:[%s1 + $0x278] sm:$0xff]
  %v97 = vld [vmem:[%s1 + $0x280] sm:$0xff]
  %v98 = vld [vmem:[%s1 + $0x288] sm:$0xff]
  %v99 = vld [vmem:[%s1 + $0x290] sm:$0xff]
  %v100 = vld [vmem:[%s1 + $0x298] sm:$0xff]
  %v101 = vld [vmem:[%s1 + $0x2a0] sm:$0xff]
  %v102 = vld [vmem:[%s1 + $0x2a8] sm:$0xff]
  %v103 = vld [vmem:[%s1 + $0x2b0] sm:$0xff]
  %v104 = vld [vmem:[%s1 + $0x2b8] sm:$0xff]
  %v105 = vld [vmem:[%s1 + $0x2c0] sm:$0xff]
  %v106 = vld [vmem:[%s1 + $0x2c8] sm:$0xff]
  %v107 = vld [vmem:[%s1 + $0x2d0] sm:$0xff]
  %v108 = vld [vmem:[%s1 + $0x2d8] sm:$0xff]
  %v109 = vld [vmem:[%s1 + $0x2e0] sm:$0xff]
  %v110 = vld [vmem:[%s1 + $0x2e8] sm:$0xff]
  %v111 = vld [vmem:[%s1 + $0x2f0] sm:$0xff]
  %v112 = vld [vmem:[%s1 + $0x2f8] sm:$0xff]
  %v113 = vld [vmem:[%s1 + $0x300] sm:$0xff]
  %v114 = vld [vmem:[%s1 + $0x308] sm:$0xff]
  %v115 = vld [vmem:[%s1 + $0x310] sm:$0xff]
  %v116 = vld [vmem:[%s1 + $0x318] sm:$0xff]
  %v117 = vld [vmem:[%s1 + $0x320] sm:$0xff]
  %v118 = vld [vmem:[%s1 + $0x328] sm:$0xff]
  %v119 = vld [vmem:[%s1 + $0x330] sm:$0xff]
  %v120 = vld [vmem:[%s1 + $0x338] sm:$0xff]
  %v121 = vld [vmem:[%s1 + $0x340] sm:$0xff]
  %v122 = vld [vmem:[%s1 + $0x348] sm:$0xff]
  %v123 = vld [vmem:[%s1 + $0x350] sm:$0xff]
  %v124 = vld [vmem:[%s1 + $0x358] sm:$0xff]
  %v125 = vld [vmem:[%s1 + $0x360] sm:$0xff]
  %v126 = vld [vmem:[%s1 + $0x368] sm:$0xff]
  %v127 = vld [vmem:[%s1 + $0x370] sm:$0xff]
  %v128 = vld [vmem:[%s1 + $0x378] sm:$0xff]
  %v129 = vld [vmem:[%s1 + $0x380] sm:$0xff]
  %v130 = vld [vmem:[%s1 + $0x388] sm:$0xff]
  %v131 = vld [vmem:[%s1 + $0x390] sm:$0xff]
  %v132 = vld [vmem:[%s1 + $0x398] sm:$0xff]
  %v133 = vld [vmem:[%s1 + $0x3a0] sm:$0xff]
  %v134 = vld [vmem:[%s1 + $0x3a8] sm:$0xff]
  %v135 = vld [vmem:[%s1 + $0x3b0] sm:$0xff]
  %v136 = vld [vmem:[%s1 + $0x3b8] sm:$0xff]
  %v137 = vld [vmem:[%s1 + $0x3c0] sm:$0xff]
  %v138 = vld [vmem:[%s1 + $0x3c8] sm:$0xff]
  %v139 = vld [vmem:[%s1 + $0x3d0] sm:$0xff]
  %v140 = vld [vmem:[%s1 + $0x3d8] sm:$0xff]
  %v141 = vld [vmem:[%s1 + $0x3e0] sm:$0xff]
  %v142 = vld [vmem:[%s1 + $0x3e8] sm:$0xff]
  %v143 = vld [vmem:[%s1 + $0x3f0] sm:$0xff]
  %v144 = vld [vmem:[%s1 + $0x3f8] sm:$0xff]
  %v145 = vld [vmem:[%s1 + $0x400] sm:$0xff]
  %v146 = vld [vmem:[%s1 + $0x408] sm:$0xff]
  %v147 = vld [vmem:[%s1 + $0x410] sm:$0xff]
  %v148 = vld [vmem:[%s1 + $0x418] sm:$0xff]
  %v149 = vld [vmem:[%s1 + $0x420] sm:$0xff]
  %v150 = vld [vmem:[%s1 + $0x428] sm:$0xff]
  %v151 = vld [vmem:[%s1 + $0x430] sm:$0xff]
  %v152 = vld [vmem:[%s1 + $0x438] sm:$0xff]
  %v153 = vld [vmem:[%s1 + $0x440] sm:$0xff]
  %v154 = vld [vmem:[%s1 + $0x448] sm:$0xff]
  %v155 = vld [vmem:[%s1 + $0x450] sm:$0xff]
  %v156 = vld [vmem:[%s1 + $0x458] sm:$0xff]
  %v157 = vld [vmem:[%s1 + $0x460] sm:$0xff]
  %v158 = vld [vmem:[%s1 + $0x468] sm:$0xff]
  %v159 = vld [vmem:[%s1 + $0x470] sm:$0xff]
  %v160 = vld [vmem:[%s1 + $0x478] sm:$0xff]
  %v161 = vld [vmem:[%s1 + $0x480] sm:$0xff]
  %v162 = vld [vmem:[%s1 + $0x488] sm:$0xff]
  %v163 = vld [vmem:[%s1 + $0x490] sm:$0xff]
  %v164 = vld [vmem:[%s1 + $0x498] sm:$0xff]
  %v165 = vld [vmem:[%s1 + $0x4a0] sm:$0xff]
  %v166 = vld [vmem:[%s1 + $0x4a8] sm:$0xff]
  %v167 = vld [vmem:[%s1 + $0x4b0] sm:$0xff]
  %v168 = vld [vmem:[%s1 + $0x4b8] sm:$0xff]
  %v169 = vld [vmem:[%s1 + $0x4c0] sm:$0xff]
  %v170 = vld [vmem:[%s1 + $0x4c8] sm:$0xff]
  %v171 = vld [vmem:[%s1 + $0x4d0] sm:$0xff]
  %v172 = vld [vmem:[%s1 + $0x4d8] sm:$0xff]
  %v173 = vld [vmem:[%s1 + $0x4e0] sm:$0xff]
  %v174 = vld [vmem:[%s1 + $0x4e8] sm:$0xff]
  %v175 = vld [vmem:[%s1 + $0x4f0] sm:$0xff]
  %v176 = vld [vmem:[%s1 + $0x4f8] sm:$0xff]
  %v177 = vld [vmem:[%s1 + $0x500] sm:$0xff]
  %v178 = vld [vmem:[%s1 + $0x508] sm:$0xff]
  %v179 = vld [vmem:[%s1 + $0x510] sm:$0xff]
  %v180 = vld [vmem:[%s1 + $0x518] sm:$0xff]
  %v181 = vld [vmem:[%s1 + $0x520] sm:$0xff]
  %v182 = vld [vmem:[%s1 + $0x528] sm:$0xff]
  %v183 = vld [vmem:[%s1 + $0x530] sm:$0xff]
  %v184 = vld [vmem:[%s1 + $0x538] sm:$0xff]
  %v185 = vld [vmem:[%s1 + $0x540] sm:$0xff]
  %v186 = vld [vmem:[%s1 + $0x548] sm:$0xff]
  %v187 = vld [vmem:[%s1 + $0x550] sm:$0xff]
  %v188 = vld [vmem:[%s1 + $0x558] sm:$0xff]
  %v189 = vld [vmem:[%s1 + $0x560] sm:$0xff]
  %v190 = vld [vmem:[%s1 + $0x568] sm:$0xff]
  %v191 = vld [vmem:[%s1 + $0x570] sm:$0xff]
  %v192 = vld [vmem:[%s1 + $0x578] sm:$0xff]
  %v193 = vld [vmem:[%s1 + $0x580] sm:$0xff]
  %v194 = vld [vmem:[%s1 + $0x588] sm:$0xff]
  %v195 = vld [vmem:[%s1 + $0x590] sm:$0xff]
  %v196 = vld [vmem:[%s1 + $0x598] sm:$0xff]
  %v197 = vld [vmem:[%s1 + $0x5a0] sm:$0xff]
  %v198 = vld [vmem:[%s1 + $0x5a8] sm:$0xff]
  %v199 = vld [vmem:[%s1 + $0x5b0] sm:$0xff]
  %v200 = vld [vmem:[%s1 + $0x5b8] sm:$0xff]
  %v201 = vld [vmem:[%s1 + $0x5c0] sm:$0xff]
  %v202 = vld [vmem:[%s1 + $0x5c8] sm:$0xff]
  %v203 = vld [vmem:[%s1 + $0x5d0] sm:$0xff]
  %v204 = vld [vmem:[%s1 + $0x5d8] sm:$0xff]
  %v205 = vld [vmem:[%s1 + $0x5e0] sm:$0xff]
  %v206 = vld [vmem:[%s1 + $0x5e8] sm:$0xff]
  %v207 = vld [vmem:[%s1 + $0x5f0] sm:$0xff]
  %v208 = vld [vmem:[%s1 + $0x5f8] sm:$0xff]
  %v209 = vld [vmem:[%s1 + $0x600] sm:$0xff]
  %v210 = vld [vmem:[%s1 + $0x608] sm:$0xff]
  %v211 = vld [vmem:[%s1 + $0x610] sm:$0xff]
  %v212 = vld [vmem:[%s1 + $0x618] sm:$0xff]
  %v213 = vld [vmem:[%s1 + $0x620] sm:$0xff]
  %v214 = vld [vmem:[%s1 + $0x628] sm:$0xff]
  %v215 = vld [vmem:[%s1 + $0x630] sm:$0xff]
  %v216 = vld [vmem:[%s1 + $0x638] sm:$0xff]
  %v217 = vld [vmem:[%s1 + $0x640] sm:$0xff]
  %v218 = vld [vmem:[%s1 + $0x648] sm:$0xff]
  %v219 = vld [vmem:[%s1 + $0x650] sm:$0xff]
  %v220 = vld [vmem:[%s1 + $0x658] sm:$0xff]
  %v221 = vld [vmem:[%s1 + $0x660] sm:$0xff]
  %v222 = vld [vmem:[%s1 + $0x668] sm:$0xff]
  %v223 = vld [vmem:[%s1 + $0x670] sm:$0xff]
  %v224 = vld [vmem:[%s1 + $0x678] sm:$0xff]
  %v225 = vld [vmem:[%s1 + $0x680] sm:$0xff]
  %v226 = vld [vmem:[%s1 + $0x688] sm:$0xff]
  %v227 = vld [vmem:[%s1 + $0x690] sm:$0xff]
  %v228 = vld [vmem:[%s1 + $0x698] sm:$0xff]
  %v229 = vld [vmem:[%s1 + $0x6a0] sm:$0xff]
  %v230 = vld [vmem:[%s1 + $0x6a8] sm:$0xff]
  %v231 = vld [vmem:[%s1 + $0x6b0] sm:$0xff]
  %v232 = vld [vmem:[%s1 + $0x6b8] sm:$0xff]
  %v233 = vld [vmem:[%s1 + $0x6c0] sm:$0xff]
  %v234 = vld [vmem:[%s1 + $0x6c8] sm:$0xff]
  %v235 = vld [vmem:[%s1 + $0x6d0] sm:$0xff]
  %v236 = vld [vmem:[%s1 + $0x6d8] sm:$0xff]
  %v237 = vld [vmem:[%s1 + $0x6e0] sm:$0xff]
  %v238 = vld [vmem:[%s1 + $0x6e8] sm:$0xff]
  %v239 = vld [vmem:[%s1 + $0x6f0] sm:$0xff]
  %v240 = vld [vmem:[%s1 + $0x6f8] sm:$0xff]
  %v241 = vld [vmem:[%s1 + $0x700] sm:$0xff]
  %v242 = vld [vmem:[%s1 + $0x708] sm:$0xff]
  %v243 = vld [vmem:[%s1 + $0x710] sm:$0xff]
  %v244 = vld [vmem:[%s1 + $0x718] sm:$0xff]
  %v245 = vld [vmem:[%s1 + $0x720] sm:$0xff]
  %v246 = vld [vmem:[%s1 + $0x728] sm:$0xff]
  %v247 = vld [vmem:[%s1 + $0x730] sm:$0xff]
  %v248 = vld [vmem:[%s1 + $0x738] sm:$0xff]
  %v249 = vld [vmem:[%s1 + $0x740] sm:$0xff]
  %v250 = vld [vmem:[%s1 + $0x748] sm:$0xff]
  %v251 = vld [vmem:[%s1 + $0x750] sm:$0xff]
  %v252 = vld [vmem:[%s1 + $0x758] sm:$0xff]
  %v253 = vld [vmem:[%s1 + $0x760] sm:$0xff]
  %v254 = vld [vmem:[%s1 + $0x768] sm:$0xff]
  %v255 = vld [vmem:[%s1 + $0x770] sm:$0xff]
  %v256 = vld [vmem:[%s1 + $0x778] sm:$0xff]
  %v257 = vld [vmem:[%s1 + $0x780] sm:$0xff]
  %v258 = vld [vmem:[%s1 + $0x788] sm:$0xff]
  %v259 = vld [vmem:[%s1 + $0x790] sm:$0xff]
  %v260 = vld [vmem:[%s1 + $0x798] sm:$0xff]
  %v261 = vld [vmem:[%s1 + $0x7a0] sm:$0xff]
  %v262 = vld [vmem:[%s1 + $0x7a8] sm:$0xff]
  %v263 = vld [vmem:[%s1 + $0x7b0] sm:$0xff]
  %v264 = vld [vmem:[%s1 + $0x7b8] sm:$0xff]
  %v265 = vld [vmem:[%s1 + $0x7c0] sm:$0xff]
  %v266 = vld [vmem:[%s1 + $0x7c8] sm:$0xff]
  %v267 = vld [vmem:[%s1 + $0x7d0] sm:$0xff]
  %v268 = vld [vmem:[%s1 + $0x7d8] sm:$0xff]
  %v269 = vld [vmem:[%s1 + $0x7e0] sm:$0xff]
  %v270 = vld [vmem:[%s1 + $0x7e8] sm:$0xff]
  %v271 = vld [vmem:[%s1 + $0x7f0] sm:$0xff]
  %v272 = vld [vmem:[%s1 + $0x7f8] sm:$0xff]
  %v273 = vld [vmem:[%s1 + $0x800] sm:$0xff]
  %v274 = vld [vmem:[%s1 + $0x808] sm:$0xff]
  %v275 = vld [vmem:[%s1 + $0x810] sm:$0xff]
  %v276 = vld [vmem:[%s1 + $0x818] sm:$0xff]
  %v277 = vld [vmem:[%s1 + $0x820] sm:$0xff]
  %v278 = vld [vmem:[%s1 + $0x828] sm:$0xff]
  %v279 = vld [vmem:[%s1 + $0x830] sm:$0xff]
  %v280 = vld [vmem:[%s1 + $0x838] sm:$0xff]
  %v281 = vld [vmem:[%s1 + $0x840] sm:$0xff]
  %v282 = vld [vmem:[%s1 + $0x848] sm:$0xff]
  %v283 = vld [vmem:[%s1 + $0x850] sm:$0xff]
  %v284 = vld [vmem:[%s1 + $0x858] sm:$0xff]
  %v285 = vld [vmem:[%s1 + $0x860] sm:$0xff]
  %v286 = vld [vmem:[%s1 + $0x868] sm:$0xff]
  %v287 = vld [vmem:[%s1 + $0x870] sm:$0xff]
  %v288 = vld [vmem:[%s1 + $0x878] sm:$0xff]
  %v289 = vld [vmem:[%s1 + $0x880] sm:$0xff]
  %v290 = vld [vmem:[%s1 + $0x888] sm:$0xff]
  %v291 = vld [vmem:[%s1 + $0x890] sm:$0xff]
  %v292 = vld [vmem:[%s1 + $0x898] sm:$0xff]
  %v293 = vld [vmem:[%s1 + $0x8a0] sm:$0xff]
  %v294 = vld [vmem:[%s1 + $0x8a8] sm:$0xff]
  %v295 = vld [vmem:[%s1 + $0x8b0] sm:$0xff]
  %v296 = vld [vmem:[%s1 + $0x8b8] sm:$0xff]
  %v297 = vld [vmem:[%s1 + $0x8c0] sm:$0xff]
  %v298 = vld [vmem:[%s1 + $0x8c8] sm:$0xff]
  %v299 = vld [vmem:[%s1 + $0x8d0] sm:$0xff]
  %v300 = vld [vmem:[%s1 + $0x8d8] sm:$0xff]
  %v301 = vld [vmem:[%s1 + $0x8e0] sm:$0xff]
  %v302 = vld [vmem:[%s1 + $0x8e8] sm:$0xff]
  %v303 = vld [vmem:[%s1 + $0x8f0] sm:$0xff]
  %v304 = vld [vmem:[%s1 + $0x8f8] sm:$0xff]
  %v305 = vld [vmem:[%s1 + $0x900] sm:$0xff]
  %v306 = vld [vmem:[%s1 + $0x908] sm:$0xff]
  %v307 = vld [vmem:[%s1 + $0x910] sm:$0xff]
  %v308 = vld [vmem:[%s1 + $0x918] sm:$0xff]
  %v309 = vld [vmem:[%s1 + $0x920] sm:$0xff]
  %v310 = vld [vmem:[%s1 + $0x928] sm:$0xff]
  %v311 = vld [vmem:[%s1 + $0x930] sm:$0xff]
  %v312 = vld [vmem:[%s1 + $0x938] sm:$0xff]
  %v313 = vld [vmem:[%s1 + $0x940] sm:$0xff]
  %v314 = vld [vmem:[%s1 + $0x948] sm:$0xff]
  %v315 = vld [vmem:[%s1 + $0x950] sm:$0xff]
  %v316 = vld [vmem:[%s1 + $0x958] sm:$0xff]
  %v317 = vld [vmem:[%s1 + $0x960] sm:$0xff]
  %v318 = vld [vmem:[%s1 + $0x968] sm:$0xff]
  %v319 = vld [vmem:[%s1 + $0x970] sm:$0xff]
  %v320 = vld [vmem:[%s1 + $0x978] sm:$0xff]
  %v321 = vld [vmem:[%s1 + $0x980] sm:$0xff]
  %v322 = vld [vmem:[%s1 + $0x988] sm:$0xff]
  %v323 = vld [vmem:[%s1 + $0x990] sm:$0xff]
  %v324 = vld [vmem:[%s1 + $0x998] sm:$0xff]
  %v325 = vld [vmem:[%s1 + $0x9a0] sm:$0xff]
  %v326 = vld [vmem:[%s1 + $0x9a8] sm:$0xff]
  %v327 = vld [vmem:[%s1 + $0x9b0] sm:$0xff]
  %v328 = vld [vmem:[%s1 + $0x9b8] sm:$0xff]
  %v329 = vld [vmem:[%s1 + $0x9c0] sm:$0xff]
  %v330 = vld [vmem:[%s1 + $0x9c8] sm:$0xff]
  %v331 = vld [vmem:[%s1 + $0x9d0] sm:$0xff]
  %v332 = vld [vmem:[%s1 + $0x9d8] sm:$0xff]
  %v333 = vld [vmem:[%s1 + $0x9e0] sm:$0xff]
  %v334 = vld [vmem:[%s1 + $0x9e8] sm:$0xff]
  %v335 = vld [vmem:[%s1 + $0x9f0] sm:$0xff]
  %v336 = vld [vmem:[%s1 + $0x9f8] sm:$0xff]
  %v337 = vld [vmem:[%s1 + $0xa00] sm:$0xff]
  %v338 = vld [vmem:[%s1 + $0xa08] sm:$0xff]
  %v339 = vld [vmem:[%s1 + $0xa10] sm:$0xff]
  %v340 = vld [vmem:[%s1 + $0xa18] sm:$0xff]
  %v341 = vld [vmem:[%s1 + $0xa20] sm:$0xff]
  %v342 = vld [vmem:[%s1 + $0xa28] sm:$0xff]
  %v343 = vld [vmem:[%s1 + $0xa30] sm:$0xff]
  %v344 = vld [vmem:[%s1 + $0xa38] sm:$0xff]
  %v345 = vld [vmem:[%s1 + $0xa40] sm:$0xff]
  %v346 = vld [vmem:[%s1 + $0xa48] sm:$0xff]
  %v347 = vld [vmem:[%s1 + $0xa50] sm:$0xff]
  %v348 = vld [vmem:[%s1 + $0xa58] sm:$0xff]
  %v349 = vld [vmem:[%s1 + $0xa60] sm:$0xff]
  %v350 = vld [vmem:[%s1 + $0xa68] sm:$0xff]
  %v351 = vld [vmem:[%s1 + $0xa70] sm:$0xff]
  %v352 = vld [vmem:[%s1 + $0xa78] sm:$0xff]
  %v353 = vld [vmem:[%s1 + $0xa80] sm:$0xff]
  %v354 = vld [vmem:[%s1 + $0xa88] sm:$0xff]
  %v355 = vld [vmem:[%s1 + $0xa90] sm:$0xff]
  %v356 = vld [vmem:[%s1 + $0xa98] sm:$0xff]
  %v357 = vld [vmem:[%s1 + $0xaa0] sm:$0xff]
  %v358 = vld [vmem:[%s1 + $0xaa8] sm:$0xff]
  %v359 = vld [vmem:[%s1 + $0xab0] sm:$0xff]
  %v360 = vld [vmem:[%s1 + $0xab8] sm:$0xff]
  %v361 = vld [vmem:[%s1 + $0xac0] sm:$0xff]
  %v362 = vld [vmem:[%s1 + $0xac8] sm:$0xff]
  %v363 = vld [vmem:[%s1 + $0xad0] sm:$0xff]
  %v364 = vld [vmem:[%s1 + $0xad8] sm:$0xff]
  %v365 = vld [vmem:[%s1 + $0xae0] sm:$0xff]
  %v366 = vld [vmem:[%s1 + $0xae8] sm:$0xff]
  %v367 = vld [vmem:[%s1 + $0xaf0] sm:$0xff]
  %v368 = vld [vmem:[%s1 + $0xaf8] sm:$0xff]
  %v369 = vld [vmem:[%s1 + $0xb00] sm:$0xff]
  %v370 = vld [vmem:[%s1 + $0xb08] sm:$0xff]
  %v371 = vld [vmem:[%s1 + $0xb10] sm:$0xff]
  %v372 = vld [vmem:[%s1 + $0xb18] sm:$0xff]
  %v373 = vld [vmem:[%s1 + $0xb20] sm:$0xff]
  %v374 = vld [vmem:[%s1 + $0xb28] sm:$0xff]
  %v375 = vld [vmem:[%s1 + $0xb30] sm:$0xff]
  %v376 = vld [vmem:[%s1 + $0xb38] sm:$0xff]
  %v377 = vld [vmem:[%s1 + $0xb40] sm:$0xff]
  %v378 = vld [vmem:[%s1 + $0xb48] sm:$0xff]
  %v379 = vld [vmem:[%s1 + $0xb50] sm:$0xff]
  %v380 = vld [vmem:[%s1 + $0xb58] sm:$0xff]
  %v381 = vld [vmem:[%s1 + $0xb60] sm:$0xff]
  %v382 = vld [vmem:[%s1 + $0xb68] sm:$0xff]
  %v383 = vld [vmem:[%s1 + $0xb70] sm:$0xff]
  %v384 = vld [vmem:[%s1 + $0xb78] sm:$0xff]
  %v385 = vld [vmem:[%s1 + $0xb80] sm:$0xff]
  %v386 = vld [vmem:[%s1 + $0xb88] sm:$0xff]
  %v387 = vld [vmem:[%s1 + $0xb90] sm:$0xff]
  %v388 = vld [vmem:[%s1 + $0xb98] sm:$0xff]
  %v389 = vld [vmem:[%s1 + $0xba0] sm:$0xff]
  %v390 = vld [vmem:[%s1 + $0xba8] sm:$0xff]
  %v391 = vld [vmem:[%s1 + $0xbb0] sm:$0xff]
  %v392 = vld [vmem:[%s1 + $0xbb8] sm:$0xff]
  %v393 = vld [vmem:[%s1 + $0xbc0] sm:$0xff]
  %v394 = vld [vmem:[%s1 + $0xbc8] sm:$0xff]
  %v395 = vld [vmem:[%s1 + $0xbd0] sm:$0xff]
  %v396 = vld [vmem:[%s1 + $0xbd8] sm:$0xff]
  %v397 = vld [vmem:[%s1 + $0xbe0] sm:$0xff]
  %v398 = vld [vmem:[%s1 + $0xbe8] sm:$0xff]
  %v399 = vld [vmem:[%s1 + $0xbf0] sm:$0xff]
  %v400 = vld [vmem:[%s1 + $0xbf8] sm:$0xff]
  %v401 = vld [vmem:[%s1 + $0xc00] sm:$0xff]
  %v402 = vld [vmem:[%s1 + $0xc08] sm:$0xff]
  %v403 = vld [vmem:[%s1 + $0xc10] sm:$0xff]
  %v404 = vld [vmem:[%s1 + $0xc18] sm:$0xff]
  %v405 = vld [vmem:[%s1 + $0xc20] sm:$0xff]
  %v406 = vld [vmem:[%s1 + $0xc28] sm:$0xff]
  %v407 = vld [vmem:[%s1 + $0xc30] sm:$0xff]
  %v408 = vld [vmem:[%s1 + $0xc38] sm:$0xff]
  %v409 = vld [vmem:[%s1 + $0xc40] sm:$0xff]
  %v410 = vld [vmem:[%s1 + $0xc48] sm:$0xff]
  %v411 = vld [vmem:[%s1 + $0xc50] sm:$0xff]
  %v412 = vld [vmem:[%s1 + $0xc58] sm:$0xff]
  %v413 = vld [vmem:[%s1 + $0xc60] sm:$0xff]
  %v414 = vld [vmem:[%s1 + $0xc68] sm:$0xff]
  %v415 = vld [vmem:[%s1 + $0xc70] sm:$0xff]
  %v416 = vld [vmem:[%s1 + $0xc78] sm:$0xff]
  %v417 = vld [vmem:[%s1 + $0xc80] sm:$0xff]
  %v418 = vld [vmem:[%s1 + $0xc88] sm:$0xff]
  %v419 = vld [vmem:[%s1 + $0xc90] sm:$0xff]
  %v420 = vld [vmem:[%s1 + $0xc98] sm:$0xff]
  %v421 = vld [vmem:[%s1 + $0xca0] sm:$0xff]
  %v422 = vld [vmem:[%s1 + $0xca8] sm:$0xff]
  %v423 = vld [vmem:[%s1 + $0xcb0] sm:$0xff]
  %v424 = vld [vmem:[%s1 + $0xcb8] sm:$0xff]
  %v425 = vld [vmem:[%s1 + $0xcc0] sm:$0xff]
  %v426 = vld [vmem:[%s1 + $0xcc8] sm:$0xff]
  %v427 = vld [vmem:[%s1 + $0xcd0] sm:$0xff]
  %v428 = vld [vmem:[%s1 + $0xcd8] sm:$0xff]
  %v429 = vld [vmem:[%s1 + $0xce0] sm:$0xff]
  %v430 = vld [vmem:[%s1 + $0xce8] sm:$0xff]
  %v431 = vld [vmem:[%s1 + $0xcf0] sm:$0xff]
  %v432 = vld [vmem:[%s1 + $0xcf8] sm:$0xff]
  %v433 = vld [vmem:[%s1 + $0xd00] sm:$0xff]
  %v434 = vld [vmem:[%s1 + $0xd08] sm:$0xff]
  %v435 = vld [vmem:[%s1 + $0xd10] sm:$0xff]
  %v436 = vld [vmem:[%s1 + $0xd18] sm:$0xff]
  %v437 = vld [vmem:[%s1 + $0xd20] sm:$0xff]
  %v438 = vld [vmem:[%s1 + $0xd28] sm:$0xff]
  %v439 = vld [vmem:[%s1 + $0xd30] sm:$0xff]
  %v440 = vld [vmem:[%s1 + $0xd38] sm:$0xff]
  %v441 = vld [vmem:[%s1 + $0xd40] sm:$0xff]
  %v442 = vld [vmem:[%s1 + $0xd48] sm:$0xff]
  %v443 = vld [vmem:[%s1 + $0xd50] sm:$0xff]
  %v444 = vld [vmem:[%s1 + $0xd58] sm:$0xff]
  %v445 = vld [vmem:[%s1 + $0xd60] sm:$0xff]
  %v446 = vld [vmem:[%s1 + $0xd68] sm:$0xff]
  %v447 = vld [vmem:[%s1 + $0xd70] sm:$0xff]
  %v448 = vld [vmem:[%s1 + $0xd78] sm:$0xff]
  %v449 = vld [vmem:[%s1 + $0xd80] sm:$0xff]
  %v450 = vld [vmem:[%s1 + $0xd88] sm:$0xff]
  %v451 = vld [vmem:[%s1 + $0xd90] sm:$0xff]
  %v452 = vld [vmem:[%s1 + $0xd98] sm:$0xff]
  %v453 = vld [vmem:[%s1 + $0xda0] sm:$0xff]
  %v454 = vld [vmem:[%s1 + $0xda8] sm:$0xff]
  %v455 = vld [vmem:[%s1 + $0xdb0] sm:$0xff]
  %v456 = vld [vmem:[%s1 + $0xdb8] sm:$0xff]
  %v457 = vld [vmem:[%s1 + $0xdc0] sm:$0xff]
  %v458 = vld [vmem:[%s1 + $0xdc8] sm:$0xff]
  %v459 = vld [vmem:[%s1 + $0xdd0] sm:$0xff]
  %v460 = vld [vmem:[%s1 + $0xdd8] sm:$0xff]
  %v461 = vld [vmem:[%s1 + $0xde0] sm:$0xff]
  %v462 = vld [vmem:[%s1 + $0xde8] sm:$0xff]
  %v463 = vld [vmem:[%s1 + $0xdf0] sm:$0xff]
  %v464 = vld [vmem:[%s1 + $0xdf8] sm:$0xff]
  %v465 = vld [vmem:[%s1 + $0xe00] sm:$0xff]
  %v466 = vld [vmem:[%s1 + $0xe08] sm:$0xff]
  %v467 = vld [vmem:[%s1 + $0xe10] sm:$0xff]
  %v468 = vld [vmem:[%s1 + $0xe18] sm:$0xff]
  %v469 = vld [vmem:[%s1 + $0xe20] sm:$0xff]
  %v470 = vld [vmem:[%s1 + $0xe28] sm:$0xff]
  %v471 = vld [vmem:[%s1 + $0xe30] sm:$0xff]
  %v472 = vld [vmem:[%s1 + $0xe38] sm:$0xff]
  %v473 = vld [vmem:[%s1 + $0xe40] sm:$0xff]
  %v474 = vld [vmem:[%s1 + $0xe48] sm:$0xff]
  %v475 = vld [vmem:[%s1 + $0xe50] sm:$0xff]
  %v476 = vld [vmem:[%s1 + $0xe58] sm:$0xff]
  %v477 = vld [vmem:[%s1 + $0xe60] sm:$0xff]
  %v478 = vld [vmem:[%s1 + $0xe68] sm:$0xff]
  %v479 = vld [vmem:[%s1 + $0xe70] sm:$0xff]
  %v480 = vld [vmem:[%s1 + $0xe78] sm:$0xff]
  %v481 = vld [vmem:[%s1 + $0xe80] sm:$0xff]
  %v482 = vld [vmem:[%s1 + $0xe88] sm:$0xff]
  %v483 = vld [vmem:[%s1 + $0xe90] sm:$0xff]
  %v484 = vld [vmem:[%s1 + $0xe98] sm:$0xff]
  %v485 = vld [vmem:[%s1 + $0xea0] sm:$0xff]
  %v486 = vld [vmem:[%s1 + $0xea8] sm:$0xff]
  %v487 = vld [vmem:[%s1 + $0xeb0] sm:$0xff]
  %v488 = vld [vmem:[%s1 + $0xeb8] sm:$0xff]
  %v489 = vld [vmem:[%s1 + $0xec0] sm:$0xff]
  %v490 = vld [vmem:[%s1 + $0xec8] sm:$0xff]
  %v491 = vld [vmem:[%s1 + $0xed0] sm:$0xff]
  %v492 = vld [vmem:[%s1 + $0xed8] sm:$0xff]
  %v493 = vld [vmem:[%s1 + $0xee0] sm:$0xff]
  %v494 = vld [vmem:[%s1 + $0xee8] sm:$0xff]
  %v495 = vld [vmem:[%s1 + $0xef0] sm:$0xff]
  %v496 = vld [vmem:[%s1 + $0xef8] sm:$0xff]
  %v497 = vld [vmem:[%s1 + $0xf00] sm:$0xff]
  %v498 = vld [vmem:[%s1 + $0xf08] sm:$0xff]
  %v499 = vld [vmem:[%s1 + $0xf10] sm:$0xff]
  %v500 = vld [vmem:[%s1 + $0xf18] sm:$0xff]
  %v501 = vld [vmem:[%s1 + $0xf20] sm:$0xff]
  %v502 = vld [vmem:[%s1 + $0xf28] sm:$0xff]
  %v503 = vld [vmem:[%s1 + $0xf30] sm:$0xff]
  %v504 = vld [vmem:[%s1 + $0xf38] sm:$0xff]
  %v505 = vld [vmem:[%s1 + $0xf40] sm:$0xff]
  %v506 = vld [vmem:[%s1 + $0xf48] sm:$0xff]
  %v507 = vld [vmem:[%s1 + $0xf50] sm:$0xff]
  %v508 = vld [vmem:[%s1 + $0xf58] sm:$0xff]
  %v509 = vld [vmem:[%s1 + $0xf60] sm:$0xff]
  %v510 = vld [vmem:[%s1 + $0xf68] sm:$0xff]
  %v511 = vld [vmem:[%s1 + $0xf70] sm:$0xff]
  %v512 = vld [vmem:[%s1 + $0xf78] sm:$0xff]
  %v513 = vld [vmem:[%s1 + $0xf80] sm:$0xff]
  %v514 = vld [vmem:[%s1 + $0xf88] sm:$0xff]
  %v515 = vld [vmem:[%s1 + $0xf90] sm:$0xff]
  %v516 = vld [vmem:[%s1 + $0xf98] sm:$0xff]
  %v517 = vld [vmem:[%s1 + $0xfa0] sm:$0xff]
  %v518 = vld [vmem:[%s1 + $0xfa8] sm:$0xff]
  %v519 = vld [vmem:[%s1 + $0xfb0] sm:$0xff]
  %v520 = vld [vmem:[%s1 + $0xfb8] sm:$0xff]
  %v521 = vld [vmem:[%s1 + $0xfc0] sm:$0xff]
  %v522 = vld [vmem:[%s1 + $0xfc8] sm:$0xff]
  %v523 = vld [vmem:[%s1 + $0xfd0] sm:$0xff]
  %v524 = vld [vmem:[%s1 + $0xfd8] sm:$0xff]
  %v525 = vld [vmem:[%s1 + $0xfe0] sm:$0xff]
  %v526 = vld [vmem:[%s1 + $0xfe8] sm:$0xff]
  %v527 = vld [vmem:[%s1 + $0xff0] sm:$0xff]
  %v528 = vld [vmem:[%s1 + $0xff8] sm:$0xff]
  %v529 = vld [vmem:[%s1 + $0x1000] sm:$0xff]
  %v530 = vld [vmem:[%s1 + $0x1008] sm:$0xff]
  %v531 = vld [vmem:[%s1 + $0x1010] sm:$0xff]
  %v532 = vld [vmem:[%s1 + $0x1018] sm:$0xff]
  %v533 = vld [vmem:[%s1 + $0x1020] sm:$0xff]
  %v534 = vld [vmem:[%s1 + $0x1028] sm:$0xff]
  %v535 = vld [vmem:[%s1 + $0x1030] sm:$0xff]
  %v536 = vld [vmem:[%s1 + $0x1038] sm:$0xff]
  %v537 = vld [vmem:[%s1 + $0x1040] sm:$0xff]
  %v538 = vld [vmem:[%s1 + $0x1048] sm:$0xff]
  %v539 = vld [vmem:[%s1 + $0x1050] sm:$0xff]
  %v540 = vld [vmem:[%s1 + $0x1058] sm:$0xff]
  %v541 = vld [vmem:[%s1 + $0x1060] sm:$0xff]
  %v542 = vld [vmem:[%s1 + $0x1068] sm:$0xff]
  %v543 = vld [vmem:[%s1 + $0x1070] sm:$0xff]
  %v544 = vld [vmem:[%s1 + $0x1078] sm:$0xff]
  %v545 = vld [vmem:[%s1 + $0x1080] sm:$0xff]
  %v546 = vld [vmem:[%s1 + $0x1088] sm:$0xff]
  %v547 = vld [vmem:[%s1 + $0x1090] sm:$0xff]
  %v548 = vld [vmem:[%s1 + $0x1098] sm:$0xff]
  %v549 = vld [vmem:[%s1 + $0x10a0] sm:$0xff]
  %v550 = vld [vmem:[%s1 + $0x10a8] sm:$0xff]
  %v551 = vld [vmem:[%s1 + $0x10b0] sm:$0xff]
  %v552 = vld [vmem:[%s1 + $0x10b8] sm:$0xff]
  %v553 = vld [vmem:[%s1 + $0x10c0] sm:$0xff]
  %v554 = vld [vmem:[%s1 + $0x10c8] sm:$0xff]
  %v555 = vld [vmem:[%s1 + $0x10d0] sm:$0xff]
  %v556 = vld [vmem:[%s1 + $0x10d8] sm:$0xff]
  %v557 = vld [vmem:[%s1 + $0x10e0] sm:$0xff]
  %v558 = vld [vmem:[%s1 + $0x10e8] sm:$0xff]
  %v559 = vld [vmem:[%s1 + $0x10f0] sm:$0xff]
  %v560 = vld [vmem:[%s1 + $0x10f8] sm:$0xff]
  %v561 = vld [vmem:[%s1 + $0x1100] sm:$0xff]
  %v562 = vld [vmem:[%s1 + $0x1108] sm:$0xff]
  %v563 = vld [vmem:[%s1 + $0x1110] sm:$0xff]
  %v564 = vld [vmem:[%s1 + $0x1118] sm:$0xff]
  %v565 = vld [vmem:[%s1 + $0x1120] sm:$0xff]
  %v566 = vld [vmem:[%s1 + $0x1128] sm:$0xff]
  %v567 = vld [vmem:[%s1 + $0x1130] sm:$0xff]
  %v568 = vld [vmem:[%s1 + $0x1138] sm:$0xff]
  %v569 = vld [vmem:[%s1 + $0x1140] sm:$0xff]
  %v570 = vld [vmem:[%s1 + $0x1148] sm:$0xff]
  %v571 = vld [vmem:[%s1 + $0x1150] sm:$0xff]
  %v572 = vld [vmem:[%s1 + $0x1158] sm:$0xff]
  %v573 = vld [vmem:[%s1 + $0x1160] sm:$0xff]
  %v574 = vld [vmem:[%s1 + $0x1168] sm:$0xff]
  %v575 = vld [vmem:[%s1 + $0x1170] sm:$0xff]
  %v576 = vld [vmem:[%s1 + $0x1178] sm:$0xff]
  %v577 = vld [vmem:[%s1 + $0x1180] sm:$0xff]
  %v578 = vld [vmem:[%s1 + $0x1188] sm:$0xff]
  %v579 = vld [vmem:[%s1 + $0x1190] sm:$0xff]
  %v580 = vld [vmem:[%s1 + $0x1198] sm:$0xff]
  %v581 = vld [vmem:[%s1 + $0x11a0] sm:$0xff]
  %v582 = vld [vmem:[%s1 + $0x11a8] sm:$0xff]
  %v583 = vld [vmem:[%s1 + $0x11b0] sm:$0xff]
  %v584 = vld [vmem:[%s1 + $0x11b8] sm:$0xff]
  %v585 = vld [vmem:[%s1 + $0x11c0] sm:$0xff]
  %v586 = vld [vmem:[%s1 + $0x11c8] sm:$0xff]
  %v587 = vld [vmem:[%s1 + $0x11d0] sm:$0xff]
  %v588 = vld [vmem:[%s1 + $0x11d8] sm:$0xff]
  %v589 = vld [vmem:[%s1 + $0x11e0] sm:$0xff]
  %v590 = vld [vmem:[%s1 + $0x11e8] sm:$0xff]
  %v591 = vld [vmem:[%s1 + $0x11f0] sm:$0xff]
  %v592 = vld [vmem:[%s1 + $0x11f8] sm:$0xff]
  %v593 = vld [vmem:[%s1 + $0x1200] sm:$0xff]
  %v594 = vld [vmem:[%s1 + $0x1208] sm:$0xff]
  %v595 = vld [vmem:[%s1 + $0x1210] sm:$0xff]
  %v596 = vld [vmem:[%s1 + $0x1218] sm:$0xff]
  %v597 = vld [vmem:[%s1 + $0x1220] sm:$0xff]
  %v598 = vld [vmem:[%s1 + $0x1228] sm:$0xff]
  %v599 = vld [vmem:[%s1 + $0x1230] sm:$0xff]
  %v600 = vld [vmem:[%s1 + $0x1238] sm:$0xff]
  %v601 = vld [vmem:[%s1 + $0x1240] sm:$0xff]
  %v602 = vld [vmem:[%s1 + $0x1248] sm:$0xff]
  %v603 = vld [vmem:[%s1 + $0x1250] sm:$0xff]
  %v604 = vld [vmem:[%s1 + $0x1258] sm:$0xff]
  %v605 = vld [vmem:[%s1 + $0x1260] sm:$0xff]
  %v606 = vld [vmem:[%s1 + $0x1268] sm:$0xff]
  %v607 = vld [vmem:[%s1 + $0x1270] sm:$0xff]
  %v608 = vld [vmem:[%s1 + $0x1278] sm:$0xff]
  %v609 = vld [vmem:[%s1 + $0x1280] sm:$0xff]
  %v610 = vld [vmem:[%s1 + $0x1288] sm:$0xff]
  %v611 = vld [vmem:[%s1 + $0x1290] sm:$0xff]
  %v612 = vld [vmem:[%s1 + $0x1298] sm:$0xff]
  %v613 = vld [vmem:[%s1 + $0x12a0] sm:$0xff]
  %v614 = vld [vmem:[%s1 + $0x12a8] sm:$0xff]
  %v615 = vld [vmem:[%s1 + $0x12b0] sm:$0xff]
  %v616 = vld [vmem:[%s1 + $0x12b8] sm:$0xff]
  %v617 = vld [vmem:[%s1 + $0x12c0] sm:$0xff]
  %v618 = vld [vmem:[%s1 + $0x12c8] sm:$0xff]
  %v619 = vld [vmem:[%s1 + $0x12d0] sm:$0xff]
  %v620 = vld [vmem:[%s1 + $0x12d8] sm:$0xff]
  %v621 = vld [vmem:[%s1 + $0x12e0] sm:$0xff]
  %v622 = vld [vmem:[%s1 + $0x12e8] sm:$0xff]
  %v623 = vld [vmem:[%s1 + $0x12f0] sm:$0xff]
  %v624 = vld [vmem:[%s1 + $0x12f8] sm:$0xff]
  %v625 = vld [vmem:[%s1 + $0x1300] sm:$0xff]
  %v626 = vld [vmem:[%s1 + $0x1308] sm:$0xff]
  %v627 = vld [vmem:[%s1 + $0x1310] sm:$0xff]
  %v628 = vld [vmem:[%s1 + $0x1318] sm:$0xff]
  %v629 = vld [vmem:[%s1 + $0x1320] sm:$0xff]
  %v630 = vld [vmem:[%s1 + $0x1328] sm:$0xff]
  %v631 = vld [vmem:[%s1 + $0x1330] sm:$0xff]
  %v632 = vld [vmem:[%s1 + $0x1338] sm:$0xff]
  %v633 = vld [vmem:[%s1 + $0x1340] sm:$0xff]
  %v634 = vld [vmem:[%s1 + $0x1348] sm:$0xff]
  %v635 = vld [vmem:[%s1 + $0x1350] sm:$0xff]
  %v636 = vld [vmem:[%s1 + $0x1358] sm:$0xff]
  %v637 = vld [vmem:[%s1 + $0x1360] sm:$0xff]
  %v638 = vld [vmem:[%s1 + $0x1368] sm:$0xff]
  %v639 = vld [vmem:[%s1 + $0x1370] sm:$0xff]
  %v640 = vld [vmem:[%s1 + $0x1378] sm:$0xff]
  %v641 = vld [vmem:[%s1 + $0x1380] sm:$0xff]
  %v642 = vld [vmem:[%s1 + $0x1388] sm:$0xff]
  %v643 = vld [vmem:[%s1 + $0x1390] sm:$0xff]
  %v644 = vld [vmem:[%s1 + $0x1398] sm:$0xff]
  %v645 = vld [vmem:[%s1 + $0x13a0] sm:$0xff]
  %v646 = vld [vmem:[%s1 + $0x13a8] sm:$0xff]
  %v647 = vld [vmem:[%s1 + $0x13b0] sm:$0xff]
  %v648 = vld [vmem:[%s1 + $0x13b8] sm:$0xff]
  %v649 = vld [vmem:[%s1 + $0x13c0] sm:$0xff]
  %v650 = vld [vmem:[%s1 + $0x13c8] sm:$0xff]
  %v651 = vld [vmem:[%s1 + $0x13d0] sm:$0xff]
  %v652 = vld [vmem:[%s1 + $0x13d8] sm:$0xff]
  %v653 = vld [vmem:[%s1 + $0x13e0] sm:$0xff]
  %v654 = vld [vmem:[%s1 + $0x13e8] sm:$0xff]
  %v655 = vld [vmem:[%s1 + $0x13f0] sm:$0xff]
  %v656 = vld [vmem:[%s1 + $0x13f8] sm:$0xff]
  %v657 = vld [vmem:[%s1 + $0x1400] sm:$0xff]
  %v658 = vld [vmem:[%s1 + $0x1408] sm:$0xff]
  %v659 = vld [vmem:[%s1 + $0x1410] sm:$0xff]
  %v660 = vld [vmem:[%s1 + $0x1418] sm:$0xff]
  %v661 = vld [vmem:[%s1 + $0x1420] sm:$0xff]
  %v662 = vld [vmem:[%s1 + $0x1428] sm:$0xff]
  %v663 = vld [vmem:[%s1 + $0x1430] sm:$0xff]
  %v664 = vld [vmem:[%s1 + $0x1438] sm:$0xff]
  %v665 = vld [vmem:[%s1 + $0x1440] sm:$0xff]
  %v666 = vld [vmem:[%s1 + $0x1448] sm:$0xff]
  %v667 = vld [vmem:[%s1 + $0x1450] sm:$0xff]
  %v668 = vld [vmem:[%s1 + $0x1458] sm:$0xff]
  %v669 = vld [vmem:[%s1 + $0x1460] sm:$0xff]
  %v670 = vld [vmem:[%s1 + $0x1468] sm:$0xff]
  %v671 = vld [vmem:[%s1 + $0x1470] sm:$0xff]
  %v672 = vld [vmem:[%s1 + $0x1478] sm:$0xff]
  %v673 = vld [vmem:[%s1 + $0x1480] sm:$0xff]
  %v674 = vld [vmem:[%s1 + $0x1488] sm:$0xff]
  %v675 = vld [vmem:[%s1 + $0x1490] sm:$0xff]
  %v676 = vld [vmem:[%s1 + $0x1498] sm:$0xff]
  %v677 = vld [vmem:[%s1 + $0x14a0] sm:$0xff]
  %v678 = vld [vmem:[%s1 + $0x14a8] sm:$0xff]
  %v679 = vld [vmem:[%s1 + $0x14b0] sm:$0xff]
  %v680 = vld [vmem:[%s1 + $0x14b8] sm:$0xff]
  %v681 = vld [vmem:[%s1 + $0x14c0] sm:$0xff]
  %v682 = vld [vmem:[%s1 + $0x14c8] sm:$0xff]
  %v683 = vld [vmem:[%s1 + $0x14d0] sm:$0xff]
  %v684 = vld [vmem:[%s1 + $0x14d8] sm:$0xff]
  %v685 = vld [vmem:[%s1 + $0x14e0] sm:$0xff]
  %v686 = vld [vmem:[%s1 + $0x14e8] sm:$0xff]
  %v687 = vld [vmem:[%s1 + $0x14f0] sm:$0xff]
  %v688 = vld [vmem:[%s1 + $0x14f8] sm:$0xff]
  %v689 = vld [vmem:[%s1 + $0x1500] sm:$0xff]
  %v690 = vld [vmem:[%s1 + $0x1508] sm:$0xff]
  %v691 = vld [vmem:[%s1 + $0x1510] sm:$0xff]
  %v692 = vld [vmem:[%s1 + $0x1518] sm:$0xff]
  %v693 = vld [vmem:[%s1 + $0x1520] sm:$0xff]
  %v694 = vld [vmem:[%s1 + $0x1528] sm:$0xff]
  %v695 = vld [vmem:[%s1 + $0x1530] sm:$0xff]
  %v696 = vld [vmem:[%s1 + $0x1538] sm:$0xff]
  %v697 = vld [vmem:[%s1 + $0x1540] sm:$0xff]
  %v698 = vld [vmem:[%s1 + $0x1548] sm:$0xff]
  %v699 = vld [vmem:[%s1 + $0x1550] sm:$0xff]
  %v700 = vld [vmem:[%s1 + $0x1558] sm:$0xff]
  %v701 = vld [vmem:[%s1 + $0x1560] sm:$0xff]
  %v702 = vld [vmem:[%s1 + $0x1568] sm:$0xff]
  %v703 = vld [vmem:[%s1 + $0x1570] sm:$0xff]
  %v704 = vld [vmem:[%s1 + $0x1578] sm:$0xff]
  %v705 = vld [vmem:[%s1 + $0x1580] sm:$0xff]
  %v706 = vld [vmem:[%s1 + $0x1588] sm:$0xff]
  %v707 = vld [vmem:[%s1 + $0x1590] sm:$0xff]
  %v708 = vld [vmem:[%s1 + $0x1598] sm:$0xff]
  %v709 = vld [vmem:[%s1 + $0x15a0] sm:$0xff]
  %v710 = vld [vmem:[%s1 + $0x15a8] sm:$0xff]
  %v711 = vld [vmem:[%s1 + $0x15b0] sm:$0xff]
  %v712 = vld [vmem:[%s1 + $0x15b8] sm:$0xff]
  %v713 = vld [vmem:[%s1 + $0x15c0] sm:$0xff]
  %v714 = vld [vmem:[%s1 + $0x15c8] sm:$0xff]
  %v715 = vld [vmem:[%s1 + $0x15d0] sm:$0xff]
  %v716 = vld [vmem:[%s1 + $0x15d8] sm:$0xff]
  %v717 = vld [vmem:[%s1 + $0x15e0] sm:$0xff]
  %v718 = vld [vmem:[%s1 + $0x15e8] sm:$0xff]
  %v719 = vld [vmem:[%s1 + $0x15f0] sm:$0xff]
  %v720 = vld [vmem:[%s1 + $0x15f8] sm:$0xff]
  %v721 = vld [vmem:[%s1 + $0x1600] sm:$0xff]
  %v722 = vld [vmem:[%s1 + $0x1608] sm:$0xff]
  %v723 = vld [vmem:[%s1 + $0x1610] sm:$0xff]
  %v724 = vld [vmem:[%s1 + $0x1618] sm:$0xff]
  %v725 = vld [vmem:[%s1 + $0x1620] sm:$0xff]
  %v726 = vld [vmem:[%s1 + $0x1628] sm:$0xff]
  %v727 = vld [vmem:[%s1 + $0x1630] sm:$0xff]
  %v728 = vld [vmem:[%s1 + $0x1638] sm:$0xff]
  %v729 = vld [vmem:[%s1 + $0x1640] sm:$0xff]
  %v730 = vld [vmem:[%s1 + $0x1648] sm:$0xff]
  %v731 = vld [vmem:[%s1 + $0x1650] sm:$0xff]
  %v732 = vld [vmem:[%s1 + $0x1658] sm:$0xff]
  %v733 = vld [vmem:[%s1 + $0x1660] sm:$0xff]
  %v734 = vld [vmem:[%s1 + $0x1668] sm:$0xff]
  %v735 = vld [vmem:[%s1 + $0x1670] sm:$0xff]
  %v736 = vld [vmem:[%s1 + $0x1678] sm:$0xff]
  %v737 = vld [vmem:[%s1 + $0x1680] sm:$0xff]
  %v738 = vld [vmem:[%s1 + $0x1688] sm:$0xff]
  %v739 = vld [vmem:[%s1 + $0x1690] sm:$0xff]
  %v740 = vld [vmem:[%s1 + $0x1698] sm:$0xff]
  %v741 = vld [vmem:[%s1 + $0x16a0] sm:$0xff]
  %v742 = vld [vmem:[%s1 + $0x16a8] sm:$0xff]
  %v743 = vld [vmem:[%s1 + $0x16b0] sm:$0xff]
  %v744 = vld [vmem:[%s1 + $0x16b8] sm:$0xff]
  %v745 = vld [vmem:[%s1 + $0x16c0] sm:$0xff]
  %v746 = vld [vmem:[%s1 + $0x16c8] sm:$0xff]
  %v747 = vld [vmem:[%s1 + $0x16d0] sm:$0xff]
  %v748 = vld [vmem:[%s1 + $0x16d8] sm:$0xff]
  %v749 = vld [vmem:[%s1 + $0x16e0] sm:$0xff]
  %v750 = vld [vmem:[%s1 + $0x16e8] sm:$0xff]
  %v751 = vld [vmem:[%s1 + $0x16f0] sm:$0xff]
  %v752 = vld [vmem:[%s1 + $0x16f8] sm:$0xff]
  %v753 = vld [vmem:[%s1 + $0x1700] sm:$0xff]
  %v754 = vld [vmem:[%s1 + $0x1708] sm:$0xff]
  %v755 = vld [vmem:[%s1 + $0x1710] sm:$0xff]
  %v756 = vld [vmem:[%s1 + $0x1718] sm:$0xff]
  %v757 = vld [vmem:[%s1 + $0x1720] sm:$0xff]
  %v758 = vld [vmem:[%s1 + $0x1728] sm:$0xff]
  %v759 = vld [vmem:[%s1 + $0x1730] sm:$0xff]
  %v760 = vld [vmem:[%s1 + $0x1738] sm:$0xff]
  %v761 = vld [vmem:[%s1 + $0x1740] sm:$0xff]
  %v762 = vld [vmem:[%s1 + $0x1748] sm:$0xff]
  %v763 = vld [vmem:[%s1 + $0x1750] sm:$0xff]
  %v764 = vld [vmem:[%s1 + $0x1758] sm:$0xff]
  %v765 = vld [vmem:[%s1 + $0x1760] sm:$0xff]
  %v766 = vld [vmem:[%s1 + $0x1768] sm:$0xff]
  %v767 = vld [vmem:[%s1 + $0x1770] sm:$0xff]
  %v768 = vld [vmem:[%s1 + $0x1778] sm:$0xff]
  %v769 = vld [vmem:[%s1 + $0x1780] sm:$0xff]
  %v770 = vld [vmem:[%s1 + $0x1788] sm:$0xff]
  %v771 = vld [vmem:[%s1 + $0x1790] sm:$0xff]
  %v772 = vld [vmem:[%s1 + $0x1798] sm:$0xff]
  %v773 = vld [vmem:[%s1 + $0x17a0] sm:$0xff]
  %v774 = vld [vmem:[%s1 + $0x17a8] sm:$0xff]
  %v775 = vld [vmem:[%s1 + $0x17b0] sm:$0xff]
  %v776 = vld [vmem:[%s1 + $0x17b8] sm:$0xff]
  %v777 = vld [vmem:[%s1 + $0x17c0] sm:$0xff]
  %v778 = vld [vmem:[%s1 + $0x17c8] sm:$0xff]
  %v779 = vld [vmem:[%s1 + $0x17d0] sm:$0xff]
  %v780 = vld [vmem:[%s1 + $0x17d8] sm:$0xff]
  %v781 = vld [vmem:[%s1 + $0x17e0] sm:$0xff]
  %v782 = vld [vmem:[%s1 + $0x17e8] sm:$0xff]
  %v783 = vld [vmem:[%s1 + $0x17f0] sm:$0xff]
  %v784 = vld [vmem:[%s1 + $0x17f8] sm:$0xff]
  %v785 = vld [vmem:[%s1 + $0x1800] sm:$0xff]
  %v786 = vld [vmem:[%s1 + $0x1808] sm:$0xff]
  %v787 = vld [vmem:[%s1 + $0x1810] sm:$0xff]
  %v788 = vld [vmem:[%s1 + $0x1818] sm:$0xff]
  %v789 = vld [vmem:[%s1 + $0x1820] sm:$0xff]
  %v790 = vld [vmem:[%s1 + $0x1828] sm:$0xff]
  %v791 = vld [vmem:[%s1 + $0x1830] sm:$0xff]
  %v792 = vld [vmem:[%s1 + $0x1838] sm:$0xff]
  %v793 = vld [vmem:[%s1 + $0x1840] sm:$0xff]
  %v794 = vld [vmem:[%s1 + $0x1848] sm:$0xff]
  %v795 = vld [vmem:[%s1 + $0x1850] sm:$0xff]
  %v796 = vld [vmem:[%s1 + $0x1858] sm:$0xff]
  %v797 = vld [vmem:[%s1 + $0x1860] sm:$0xff]
  %v798 = vld [vmem:[%s1 + $0x1868] sm:$0xff]
  %v799 = vld [vmem:[%s1 + $0x1870] sm:$0xff]
  %v800 = vld [vmem:[%s1 + $0x1878] sm:$0xff]
  %v801 = vld [vmem:[%s1 + $0x1880] sm:$0xff]
  %v802 = vld [vmem:[%s1 + $0x1888] sm:$0xff]
  %v803 = vld [vmem:[%s1 + $0x1890] sm:$0xff]
  %v804 = vld [vmem:[%s1 + $0x1898] sm:$0xff]
  %v805 = vld [vmem:[%s1 + $0x18a0] sm:$0xff]
  %v806 = vld [vmem:[%s1 + $0x18a8] sm:$0xff]
  %v807 = vld [vmem:[%s1 + $0x18b0] sm:$0xff]
  %v808 = vld [vmem:[%s1 + $0x18b8] sm:$0xff]
  %v809 = vld [vmem:[%s1 + $0x18c0] sm:$0xff]
  %v810 = vld [vmem:[%s1 + $0x18c8] sm:$0xff]
  %v811 = vld [vmem:[%s1 + $0x18d0] sm:$0xff]
  %v812 = vld [vmem:[%s1 + $0x18d8] sm:$0xff]
  %v813 = vld [vmem:[%s1 + $0x18e0] sm:$0xff]
  %v814 = vld [vmem:[%s1 + $0x18e8] sm:$0xff]
  %v815 = vld [vmem:[%s1 + $0x18f0] sm:$0xff]
  %v816 = vld [vmem:[%s1 + $0x18f8] sm:$0xff]
  %v817 = vld [vmem:[%s1 + $0x1900] sm:$0xff]
  %v818 = vld [vmem:[%s1 + $0x1908] sm:$0xff]
  %v819 = vld [vmem:[%s1 + $0x1910] sm:$0xff]
  %v820 = vld [vmem:[%s1 + $0x1918] sm:$0xff]
  %v821 = vld [vmem:[%s1 + $0x1920] sm:$0xff]
  %v822 = vld [vmem:[%s1 + $0x1928] sm:$0xff]
  %v823 = vld [vmem:[%s1 + $0x1930] sm:$0xff]
  %v824 = vld [vmem:[%s1 + $0x1938] sm:$0xff]
  %v825 = vld [vmem:[%s1 + $0x1940] sm:$0xff]
  %v826 = vld [vmem:[%s1 + $0x1948] sm:$0xff]
  %v827 = vld [vmem:[%s1 + $0x1950] sm:$0xff]
  %v828 = vld [vmem:[%s1 + $0x1958] sm:$0xff]
  %v829 = vld [vmem:[%s1 + $0x1960] sm:$0xff]
  %v830 = vld [vmem:[%s1 + $0x1968] sm:$0xff]
  %v831 = vld [vmem:[%s1 + $0x1970] sm:$0xff]
  %v832 = vld [vmem:[%s1 + $0x1978] sm:$0xff]
  %v833 = vld [vmem:[%s1 + $0x1980] sm:$0xff]
  %v834 = vld [vmem:[%s1 + $0x1988] sm:$0xff]
  %v835 = vld [vmem:[%s1 + $0x1990] sm:$0xff]
  %v836 = vld [vmem:[%s1 + $0x1998] sm:$0xff]
  %v837 = vld [vmem:[%s1 + $0x19a0] sm:$0xff]
  %v838 = vld [vmem:[%s1 + $0x19a8] sm:$0xff]
  %v839 = vld [vmem:[%s1 + $0x19b0] sm:$0xff]
  %v840 = vld [vmem:[%s1 + $0x19b8] sm:$0xff]
  %v841 = vld [vmem:[%s1 + $0x19c0] sm:$0xff]
  %v842 = vld [vmem:[%s1 + $0x19c8] sm:$0xff]
  %v843 = vld [vmem:[%s1 + $0x19d0] sm:$0xff]
  %v844 = vld [vmem:[%s1 + $0x19d8] sm:$0xff]
  %v845 = vld [vmem:[%s1 + $0x19e0] sm:$0xff]
  %v846 = vld [vmem:[%s1 + $0x19e8] sm:$0xff]
  %v847 = vld [vmem:[%s1 + $0x19f0] sm:$0xff]
  %v848 = vld [vmem:[%s1 + $0x19f8] sm:$0xff]
  %v849 = vld [vmem:[#allocation2] sm:$0x1]
  %851 = vset.pattern.permute.xlu0 0
  %852 = vperm.xlu0 %851, %v849
  %v853 = vpop.permute.xlu0 %852
  %v855 = vlaneseq
  %v856 = vshrl.u32 %v855, 7
  %v857 = vsub.s32 0, %v856
  %v858 = vrot.slane %v853, %v857
  %v860 = vlaneseq
  %v861 = vshrl.u32 %v860, 7
  %v862 = vsub.s32 0, %v861
  %v863 = vrot.slane %v16, %v862
  %v864 = vlaneseq
  %v865 = vshrl.u32 %v864, 7
  %v866 = vsub.s32 1, %v865
  %v867 = vrot.slane %v16, %v866
  %v868 = vlaneseq
  %v869 = vshrl.u32 %v868, 7
  %v870 = vsub.s32 2, %v869
  %v871 = vrot.slane %v16, %v870
  %v872 = vlaneseq
  %v873 = vshrl.u32 %v872, 7
  %v874 = vsub.s32 3, %v873
  %v875 = vrot.slane %v16, %v874
  %880 = vmatprep.subr.mxu0 %v18
  %881 = vmatpush1.msra.mxu0 %v17
  %882 = vmatprep.subr.mxu0 %v31
  %883 = vmatpush1.msra.mxu0 %v30
  %884 = vmatprep.subr.mxu0 %v44
  %885 = vmatpush1.msra.mxu0 %v43
  %886 = vmatprep.subr.mxu0 %v57
  %887 = vmatpush1.msra.mxu0 %v56
  %888 = vmatprep.subr.mxu0 %v70
  %889 = vmatpush1.msra.mxu0 %v69
  %890 = vmatprep.subr.mxu0 %v83
  %891 = vmatpush1.msra.mxu0 %v82
  %892 = vmatprep.subr.mxu0 %v96
  %893 = vmatpush1.msra.mxu0 %v95
  %894 = vmatprep.subr.mxu0 %v109
  %895 = vmatpush1.msra.mxu0 %v108
  %896 = vmatprep.subr.mxu0 %v122
  %897 = vmatpush1.msra.mxu0 %v121
  %898 = vmatprep.subr.mxu0 %v135
  %899 = vmatpush1.msra.mxu0 %v134
  %900 = vmatprep.subr.mxu0 %v148
  %901 = vmatpush1.msra.mxu0 %v147
  %902 = vmatprep.subr.mxu0 %v161
  %903 = vmatpush1.msra.mxu0 %v160
  %904 = vmatprep.subr.mxu0 %v174
  %905 = vmatpush1.msra.mxu0 %v173
  %906 = vmatprep.subr.mxu0 %v187
  %907 = vmatpush1.msra.mxu0 %v186
  %908 = vmatprep.subr.mxu0 %v200
  %909 = vmatpush1.msra.mxu0 %v199
  %910 = vmatprep.subr.mxu0 %v213
  %911 = vmatpush1.msra.mxu0 %v212
  %912 = vmatprep.subr.mxu0 %v226
  %913 = vmatpush1.msra.mxu0 %v225
  %914 = vmatprep.subr.mxu0 %v239
  %915 = vmatpush1.msra.mxu0 %v238
  %916 = vmatprep.subr.mxu0 %v252
  %917 = vmatpush1.msra.mxu0 %v251
  %918 = vmatprep.subr.mxu0 %v265
  %919 = vmatpush1.msra.mxu0 %v264
  %920 = vmatprep.subr.mxu0 %v278
  %921 = vmatpush1.msra.mxu0 %v277
  %922 = vmatprep.subr.mxu0 %v291
  %923 = vmatpush1.msra.mxu0 %v290
  %924 = vmatprep.subr.mxu0 %v304
  %925 = vmatpush1.msra.mxu0 %v303
  %926 = vmatprep.subr.mxu0 %v317
  %927 = vmatpush1.msra.mxu0 %v316
  %928 = vmatprep.subr.mxu0 %v330
  %929 = vmatpush1.msra.mxu0 %v329
  %930 = vmatprep.subr.mxu0 %v343
  %931 = vmatpush1.msra.mxu0 %v342
  %932 = vmatprep.subr.mxu0 %v356
  %933 = vmatpush1.msra.mxu0 %v355
  %934 = vmatprep.subr.mxu0 %v369
  %935 = vmatpush1.msra.mxu0 %v368
  %936 = vmatprep.subr.mxu0 %v382
  %937 = vmatpush1.msra.mxu0 %v381
  %938 = vmatprep.subr.mxu0 %v395
  %939 = vmatpush1.msra.mxu0 %v394
  %940 = vmatprep.subr.mxu0 %v408
  %941 = vmatpush1.msra.mxu0 %v407
  %942 = vmatprep.subr.mxu0 %v421
  %943 = vmatpush1.msra.mxu0 %v420
  %944 = vmatprep.mubr.f32.mxu0 %v867
  %945 = vmatmul.mubr.f32.gmra.mrb[0].mxu0 %v863
  %v946 = vpop.f32.mrb[0].mxu0
  %v947 = vadd.f32 %v858, %v946
  %v948 = vpop.f32.mrb[0].mxu0
  %v949 = vadd.f32 %v858, %v948
  %950 = vdwg.mxu0
  %951 = vmatprep.subr.mxu0 %v434
  %952 = vmatpush1.msra.mxu0 %v433
  %953 = vmatprep.subr.mxu0 %v447
  %954 = vmatpush1.msra.mxu0 %v446
  %955 = vmatprep.subr.mxu0 %v460
  %956 = vmatpush1.msra.mxu0 %v459
  %957 = vmatprep.subr.mxu0 %v473
  %958 = vmatpush1.msra.mxu0 %v472
  %959 = vmatprep.subr.mxu0 %v486
  %960 = vmatpush1.msra.mxu0 %v485
  %961 = vmatprep.subr.mxu0 %v499
  %962 = vmatpush1.msra.mxu0 %v498
  %963 = vmatprep.subr.mxu0 %v512
  %964 = vmatpush1.msra.mxu0 %v511
  %965 = vmatprep.subr.mxu0 %v525
  %966 = vmatpush1.msra.mxu0 %v524
  %967 = vmatprep.subr.mxu0 %v538
  %968 = vmatpush1.msra.mxu0 %v537
  %969 = vmatprep.subr.mxu0 %v551
  %970 = vmatpush1.msra.mxu0 %v550
  %971 = vmatprep.subr.mxu0 %v564
  %972 = vmatpush1.msra.mxu0 %v563
  %973 = vmatprep.subr.mxu0 %v577
  %974 = vmatpush1.msra.mxu0 %v576
  %975 = vmatprep.subr.mxu0 %v590
  %976 = vmatpush1.msra.mxu0 %v589
  %977 = vmatprep.subr.mxu0 %v603
  %978 = vmatpush1.msra.mxu0 %v602
  %979 = vmatprep.subr.mxu0 %v616
  %980 = vmatpush1.msra.mxu0 %v615
  %981 = vmatprep.subr.mxu0 %v629
  %982 = vmatpush1.msra.mxu0 %v628
  %983 = vmatprep.subr.mxu0 %v642
  %984 = vmatpush1.msra.mxu0 %v641
  %985 = vmatprep.subr.mxu0 %v655
  %986 = vmatpush1.msra.mxu0 %v654
  %987 = vmatprep.subr.mxu0 %v668
  %988 = vmatpush1.msra.mxu0 %v667
  %989 = vmatprep.subr.mxu0 %v681
  %990 = vmatpush1.msra.mxu0 %v680
  %991 = vmatprep.subr.mxu0 %v694
  %992 = vmatpush1.msra.mxu0 %v693
  %993 = vmatprep.subr.mxu0 %v707
  %994 = vmatpush1.msra.mxu0 %v706
  %995 = vmatprep.subr.mxu0 %v720
  %996 = vmatpush1.msra.mxu0 %v719
  %997 = vmatprep.subr.mxu0 %v733
  %998 = vmatpush1.msra.mxu0 %v732
  %999 = vmatprep.subr.mxu0 %v746
  %1000 = vmatpush1.msra.mxu0 %v745
  %1001 = vmatprep.subr.mxu0 %v759
  %1002 = vmatpush1.msra.mxu0 %v758
  %1003 = vmatprep.subr.mxu0 %v772
  %1004 = vmatpush1.msra.mxu0 %v771
  %1005 = vmatprep.subr.mxu0 %v785
  %1006 = vmatpush1.msra.mxu0 %v784
  %1007 = vmatprep.subr.mxu0 %v798
  %1008 = vmatpush1.msra.mxu0 %v797
  %1009 = vmatprep.subr.mxu0 %v811
  %1010 = vmatpush1.msra.mxu0 %v810
  %1011 = vmatprep.subr.mxu0 %v824
  %1012 = vmatpush1.msra.mxu0 %v823
  %1013 = vmatprep.subr.mxu0 %v837
  %1014 = vmatpush1.msra.mxu0 %v836
  %1015 = vmatprep.mubr.f32.mxu0 %v875
  %1016 = vmatmul.mubr.f32.gmra.mrb[0].mxu0 %v871
  %v1017 = vpop.f32.mrb[0].mxu0
  %v1018 = vadd.f32 %v947, %v1017
  %v1019 = vpop.f32.mrb[0].mxu0
  %v1020 = vadd.f32 %v949, %v1019
  %1021 = vdwg.mxu0
  %1022 = vmatprep.subr.mxu0 %v20
  %1023 = vmatpush1.msra.mxu0 %v19
  %1024 = vmatprep.subr.mxu0 %v33
  %1025 = vmatpush1.msra.mxu0 %v32
  %1026 = vmatprep.subr.mxu0 %v46
  %1027 = vmatpush1.msra.mxu0 %v45
  %1028 = vmatprep.subr.mxu0 %v59
  %1029 = vmatpush1.msra.mxu0 %v58
  %1030 = vmatprep.subr.mxu0 %v72
  %1031 = vmatpush1.msra.mxu0 %v71
  %1032 = vmatprep.subr.mxu0 %v85
  %1033 = vmatpush1.msra.mxu0 %v84
  %1034 = vmatprep.subr.mxu0 %v98
  %1035 = vmatpush1.msra.mxu0 %v97
  %1036 = vmatprep.subr.mxu0 %v111
  %1037 = vmatpush1.msra.mxu0 %v110
  %1038 = vmatprep.subr.mxu0 %v124
  %1039 = vmatpush1.msra.mxu0 %v123
  %1040 = vmatprep.subr.mxu0 %v137
  %1041 = vmatpush1.msra.mxu0 %v136
  %1042 = vmatprep.subr.mxu0 %v150
  %1043 = vmatpush1.msra.mxu0 %v149
  %1044 = vmatprep.subr.mxu0 %v163
  %1045 = vmatpush1.msra.mxu0 %v162
  %1046 = vmatprep.subr.mxu0 %v176
  %1047 = vmatpush1.msra.mxu0 %v175
  %1048 = vmatprep.subr.mxu0 %v189
  %1049 = vmatpush1.msra.mxu0 %v188
  %1050 = vmatprep.subr.mxu0 %v202
  %1051 = vmatpush1.msra.mxu0 %v201
  %1052 = vmatprep.subr.mxu0 %v215
  %1053 = vmatpush1.msra.mxu0 %v214
  %1054 = vmatprep.subr.mxu0 %v228
  %1055 = vmatpush1.msra.mxu0 %v227
  %1056 = vmatprep.subr.mxu0 %v241
  %1057 = vmatpush1.msra.mxu0 %v240
  %1058 = vmatprep.subr.mxu0 %v254
  %1059 = vmatpush1.msra.mxu0 %v253
  %1060 = vmatprep.subr.mxu0 %v267
  %1061 = vmatpush1.msra.mxu0 %v266
  %1062 = vmatprep.subr.mxu0 %v280
  %1063 = vmatpush1.msra.mxu0 %v279
  %1064 = vmatprep.subr.mxu0 %v293
  %1065 = vmatpush1.msra.mxu0 %v292
  %1066 = vmatprep.subr.mxu0 %v306
  %1067 = vmatpush1.msra.mxu0 %v305
  %1068 = vmatprep.subr.mxu0 %v319
  %1069 = vmatpush1.msra.mxu0 %v318
  %1070 = vmatprep.subr.mxu0 %v332
  %1071 = vmatpush1.msra.mxu0 %v331
  %1072 = vmatprep.subr.mxu0 %v345
  %1073 = vmatpush1.msra.mxu0 %v344
  %1074 = vmatprep.subr.mxu0 %v358
  %1075 = vmatpush1.msra.mxu0 %v357
  %1076 = vmatprep.subr.mxu0 %v371
  %1077 = vmatpush1.msra.mxu0 %v370
  %1078 = vmatprep.subr.mxu0 %v384
  %1079 = vmatpush1.msra.mxu0 %v383
  %1080 = vmatprep.subr.mxu0 %v397
  %1081 = vmatpush1.msra.mxu0 %v396
  %1082 = vmatprep.subr.mxu0 %v410
  %1083 = vmatpush1.msra.mxu0 %v409
  %1084 = vmatprep.subr.mxu0 %v423
  %1085 = vmatpush1.msra.mxu0 %v422
  %1086 = vmatprep.mubr.f32.mxu0 %v867
  %1087 = vmatmul.mubr.f32.gmra.mrb[0].mxu0 %v863
  %v1088 = vpop.f32.mrb[0].mxu0
  %v1089 = vadd.f32 %v858, %v1088
  %v1090 = vpop.f32.mrb[0].mxu0
  %v1091 = vadd.f32 %v858, %v1090
  %1092 = vdwg.mxu0
  %1093 = vmatprep.subr.mxu0 %v436
  %1094 = vmatpush1.msra.mxu0 %v435
  %1095 = vmatprep.subr.mxu0 %v449
  %1096 = vmatpush1.msra.mxu0 %v448
  %1097 = vmatprep.subr.mxu0 %v462
  %1098 = vmatpush1.msra.mxu0 %v461
  %1099 = vmatprep.subr.mxu0 %v475
  %1100 = vmatpush1.msra.mxu0 %v474
  %1101 = vmatprep.subr.mxu0 %v488
  %1102 = vmatpush1.msra.mxu0 %v487
  %1103 = vmatprep.subr.mxu0 %v501
  %1104 = vmatpush1.msra.mxu0 %v500
  %1105 = vmatprep.subr.mxu0 %v514
  %1106 = vmatpush1.msra.mxu0 %v513
  %1107 = vmatprep.subr.mxu0 %v527
  %1108 = vmatpush1.msra.mxu0 %v526
  %1109 = vmatprep.subr.mxu0 %v540
  %1110 = vmatpush1.msra.mxu0 %v539
  %1111 = vmatprep.subr.mxu0 %v553
  %1112 = vmatpush1.msra.mxu0 %v552
  %1113 = vmatprep.subr.mxu0 %v566
  %1114 = vmatpush1.msra.mxu0 %v565
  %1115 = vmatprep.subr.mxu0 %v579
  %1116 = vmatpush1.msra.mxu0 %v578
  %1117 = vmatprep.subr.mxu0 %v592
  %1118 = vmatpush1.msra.mxu0 %v591
  %1119 = vmatprep.subr.mxu0 %v605
  %1120 = vmatpush1.msra.mxu0 %v604
  %1121 = vmatprep.subr.mxu0 %v618
  %1122 = vmatpush1.msra.mxu0 %v617
  %1123 = vmatprep.subr.mxu0 %v631
  %1124 = vmatpush1.msra.mxu0 %v630
  %1125 = vmatprep.subr.mxu0 %v644
  %1126 = vmatpush1.msra.mxu0 %v643
  %1127 = vmatprep.subr.mxu0 %v657
  %1128 = vmatpush1.msra.mxu0 %v656
  %1129 = vmatprep.subr.mxu0 %v670
  %1130 = vmatpush1.msra.mxu0 %v669
  %1131 = vmatprep.subr.mxu0 %v683
  %1132 = vmatpush1.msra.mxu0 %v682
  %1133 = vmatprep.subr.mxu0 %v696
  %1134 = vmatpush1.msra.mxu0 %v695
  %1135 = vmatprep.subr.mxu0 %v709
  %1136 = vmatpush1.msra.mxu0 %v708
  %1137 = vmatprep.subr.mxu0 %v722
  %1138 = vmatpush1.msra.mxu0 %v721
  %1139 = vmatprep.subr.mxu0 %v735
  %1140 = vmatpush1.msra.mxu0 %v734
  %1141 = vmatprep.subr.mxu0 %v748
  %1142 = vmatpush1.msra.mxu0 %v747
  %1143 = vmatprep.subr.mxu0 %v761
  %1144 = vmatpush1.msra.mxu0 %v760
  %1145 = vmatprep.subr.mxu0 %v774
  %1146 = vmatpush1.msra.mxu0 %v773
  %1147 = vmatprep.subr.mxu0 %v787
  %1148 = vmatpush1.msra.mxu0 %v786
  %1149 = vmatprep.subr.mxu0 %v800
  %1150 = vmatpush1.msra.mxu0 %v799
  %1151 = vmatprep.subr.mxu0 %v813
  %1152 = vmatpush1.msra.mxu0 %v812
  %1153 = vmatprep.subr.mxu0 %v826
  %1154 = vmatpush1.msra.mxu0 %v825
  %1155 = vmatprep.subr.mxu0 %v839
  %1156 = vmatpush1.msra.mxu0 %v838
  %1157 = vmatprep.mubr.f32.mxu0 %v875
  %1158 = vmatmul.mubr.f32.gmra.mrb[0].mxu0 %v871
  %v1159 = vpop.f32.mrb[0].mxu0
  %v1160 = vadd.f32 %v1089, %v1159
  %v1161 = vpop.f32.mrb[0].mxu0
  %v1162 = vadd.f32 %v1091, %v1161
  %1163 = vdwg.mxu0
  %1164 = vmatprep.subr.mxu0 %v22
  %1165 = vmatpush1.msra.mxu0 %v21
  %1166 = vmatprep.subr.mxu0 %v35
  %1167 = vmatpush1.msra.mxu0 %v34
  %1168 = vmatprep.subr.mxu0 %v48
  %1169 = vmatpush1.msra.mxu0 %v47
  %1170 = vmatprep.subr.mxu0 %v61
  %1171 = vmatpush1.msra.mxu0 %v60
  %1172 = vmatprep.subr.mxu0 %v74
  %1173 = vmatpush1.msra.mxu0 %v73
  %1174 = vmatprep.subr.mxu0 %v87
  %1175 = vmatpush1.msra.mxu0 %v86
  %1176 = vmatprep.subr.mxu0 %v100
  %1177 = vmatpush1.msra.mxu0 %v99
  %1178 = vmatprep.subr.mxu0 %v113
  %1179 = vmatpush1.msra.mxu0 %v112
  %1180 = vmatprep.subr.mxu0 %v126
  %1181 = vmatpush1.msra.mxu0 %v125
  %1182 = vmatprep.subr.mxu0 %v139
  %1183 = vmatpush1.msra.mxu0 %v138
  %1184 = vmatprep.subr.mxu0 %v152
  %1185 = vmatpush1.msra.mxu0 %v151
  %1186 = vmatprep.subr.mxu0 %v165
  %1187 = vmatpush1.msra.mxu0 %v164
  %1188 = vmatprep.subr.mxu0 %v178
  %1189 = vmatpush1.msra.mxu0 %v177
  %1190 = vmatprep.subr.mxu0 %v191
  %1191 = vmatpush1.msra.mxu0 %v190
  %1192 = vmatprep.subr.mxu0 %v204
  %1193 = vmatpush1.msra.mxu0 %v203
  %1194 = vmatprep.subr.mxu0 %v217
  %1195 = vmatpush1.msra.mxu0 %v216
  %1196 = vmatprep.subr.mxu0 %v230
  %1197 = vmatpush1.msra.mxu0 %v229
  %1198 = vmatprep.subr.mxu0 %v243
  %1199 = vmatpush1.msra.mxu0 %v242
  %1200 = vmatprep.subr.mxu0 %v256
  %1201 = vmatpush1.msra.mxu0 %v255
  %1202 = vmatprep.subr.mxu0 %v269
  %1203 = vmatpush1.msra.mxu0 %v268
  %1204 = vmatprep.subr.mxu0 %v282
  %1205 = vmatpush1.msra.mxu0 %v281
  %1206 = vmatprep.subr.mxu0 %v295
  %1207 = vmatpush1.msra.mxu0 %v294
  %1208 = vmatprep.subr.mxu0 %v308
  %1209 = vmatpush1.msra.mxu0 %v307
  %1210 = vmatprep.subr.mxu0 %v321
  %1211 = vmatpush1.msra.mxu0 %v320
  %1212 = vmatprep.subr.mxu0 %v334
  %1213 = vmatpush1.msra.mxu0 %v333
  %1214 = vmatprep.subr.mxu0 %v347
  %1215 = vmatpush1.msra.mxu0 %v346
  %1216 = vmatprep.subr.mxu0 %v360
  %1217 = vmatpush1.msra.mxu0 %v359
  %1218 = vmatprep.subr.mxu0 %v373
  %1219 = vmatpush1.msra.mxu0 %v372
  %1220 = vmatprep.subr.mxu0 %v386
  %1221 = vmatpush1.msra.mxu0 %v385
  %1222 = vmatprep.subr.mxu0 %v399
  %1223 = vmatpush1.msra.mxu0 %v398
  %1224 = vmatprep.subr.mxu0 %v412
  %1225 = vmatpush1.msra.mxu0 %v411
  %1226 = vmatprep.subr.mxu0 %v425
  %1227 = vmatpush1.msra.mxu0 %v424
  %1228 = vmatprep.mubr.f32.mxu0 %v867
  %1229 = vmatmul.mubr.f32.gmra.mrb[0].mxu0 %v863
  %v1230 = vpop.f32.mrb[0].mxu0
  %v1231 = vadd.f32 %v858, %v1230
  %v1232 = vpop.f32.mrb[0].mxu0
  %v1233 = vadd.f32 %v858, %v1232
  %1234 = vdwg.mxu0
  %1235 = vmatprep.subr.mxu0 %v438
  %1236 = vmatpush1.msra.mxu0 %v437
  %1237 = vmatprep.subr.mxu0 %v451
  %1238 = vmatpush1.msra.mxu0 %v450
  %1239 = vmatprep.subr.mxu0 %v464
  %1240 = vmatpush1.msra.mxu0 %v463
  %1241 = vmatprep.subr.mxu0 %v477
  %1242 = vmatpush1.msra.mxu0 %v476
  %1243 = vmatprep.subr.mxu0 %v490
  %1244 = vmatpush1.msra.mxu0 %v489
  %1245 = vmatprep.subr.mxu0 %v503
  %1246 = vmatpush1.msra.mxu0 %v502
  %1247 = vmatprep.subr.mxu0 %v516
  %1248 = vmatpush1.msra.mxu0 %v515
  %1249 = vmatprep.subr.mxu0 %v529
  %1250 = vmatpush1.msra.mxu0 %v528
  %1251 = vmatprep.subr.mxu0 %v542
  %1252 = vmatpush1.msra.mxu0 %v541
  %1253 = vmatprep.subr.mxu0 %v555
  %1254 = vmatpush1.msra.mxu0 %v554
  %1255 = vmatprep.subr.mxu0 %v568
  %1256 = vmatpush1.msra.mxu0 %v567
  %1257 = vmatprep.subr.mxu0 %v581
  %1258 = vmatpush1.msra.mxu0 %v580
  %1259 = vmatprep.subr.mxu0 %v594
  %1260 = vmatpush1.msra.mxu0 %v593
  %1261 = vmatprep.subr.mxu0 %v607
  %1262 = vmatpush1.msra.mxu0 %v606
  %1263 = vmatprep.subr.mxu0 %v620
  %1264 = vmatpush1.msra.mxu0 %v619
  %1265 = vmatprep.subr.mxu0 %v633
  %1266 = vmatpush1.msra.mxu0 %v632
  %1267 = vmatprep.subr.mxu0 %v646
  %1268 = vmatpush1.msra.mxu0 %v645
  %1269 = vmatprep.subr.mxu0 %v659
  %1270 = vmatpush1.msra.mxu0 %v658
  %1271 = vmatprep.subr.mxu0 %v672
  %1272 = vmatpush1.msra.mxu0 %v671
  %1273 = vmatprep.subr.mxu0 %v685
  %1274 = vmatpush1.msra.mxu0 %v684
  %1275 = vmatprep.subr.mxu0 %v698
  %1276 = vmatpush1.msra.mxu0 %v697
  %1277 = vmatprep.subr.mxu0 %v711
  %1278 = vmatpush1.msra.mxu0 %v710
  %1279 = vmatprep.subr.mxu0 %v724
  %1280 = vmatpush1.msra.mxu0 %v723
  %1281 = vmatprep.subr.mxu0 %v737
  %1282 = vmatpush1.msra.mxu0 %v736
  %1283 = vmatprep.subr.mxu0 %v750
  %1284 = vmatpush1.msra.mxu0 %v749
  %1285 = vmatprep.subr.mxu0 %v763
  %1286 = vmatpush1.msra.mxu0 %v762
  %1287 = vmatprep.subr.mxu0 %v776
  %1288 = vmatpush1.msra.mxu0 %v775
  %1289 = vmatprep.subr.mxu0 %v789
  %1290 = vmatpush1.msra.mxu0 %v788
  %1291 = vmatprep.subr.mxu0 %v802
  %1292 = vmatpush1.msra.mxu0 %v801
  %1293 = vmatprep.subr.mxu0 %v815
  %1294 = vmatpush1.msra.mxu0 %v814
  %1295 = vmatprep.subr.mxu0 %v828
  %1296 = vmatpush1.msra.mxu0 %v827
  %1297 = vmatprep.subr.mxu0 %v841
  %1298 = vmatpush1.msra.mxu0 %v840
  %1299 = vmatprep.mubr.f32.mxu0 %v875
  %1300 = vmatmul.mubr.f32.gmra.mrb[0].mxu0 %v871
  %v1301 = vpop.f32.mrb[0].mxu0
  %v1302 = vadd.f32 %v1231, %v1301
  %v1303 = vpop.f32.mrb[0].mxu0
  %v1304 = vadd.f32 %v1233, %v1303
  %1305 = vdwg.mxu0
  %1306 = vmatprep.subr.mxu0 %v24
  %1307 = vmatpush1.msra.mxu0 %v23
  %1308 = vmatprep.subr.mxu0 %v37
  %1309 = vmatpush1.msra.mxu0 %v36
  %1310 = vmatprep.subr.mxu0 %v50
  %1311 = vmatpush1.msra.mxu0 %v49
  %1312 = vmatprep.subr.mxu0 %v63
  %1313 = vmatpush1.msra.mxu0 %v62
  %1314 = vmatprep.subr.mxu0 %v76
  %1315 = vmatpush1.msra.mxu0 %v75
  %1316 = vmatprep.subr.mxu0 %v89
  %1317 = vmatpush1.msra.mxu0 %v88
  %1318 = vmatprep.subr.mxu0 %v102
  %1319 = vmatpush1.msra.mxu0 %v101
  %1320 = vmatprep.subr.mxu0 %v115
  %1321 = vmatpush1.msra.mxu0 %v114
  %1322 = vmatprep.subr.mxu0 %v128
  %1323 = vmatpush1.msra.mxu0 %v127
  %1324 = vmatprep.subr.mxu0 %v141
  %1325 = vmatpush1.msra.mxu0 %v140
  %1326 = vmatprep.subr.mxu0 %v154
  %1327 = vmatpush1.msra.mxu0 %v153
  %1328 = vmatprep.subr.mxu0 %v167
  %1329 = vmatpush1.msra.mxu0 %v166
  %1330 = vmatprep.subr.mxu0 %v180
  %1331 = vmatpush1.msra.mxu0 %v179
  %1332 = vmatprep.subr.mxu0 %v193
  %1333 = vmatpush1.msra.mxu0 %v192
  %1334 = vmatprep.subr.mxu0 %v206
  %1335 = vmatpush1.msra.mxu0 %v205
  %1336 = vmatprep.subr.mxu0 %v219
  %1337 = vmatpush1.msra.mxu0 %v218
  %1338 = vmatprep.subr.mxu0 %v232
  %1339 = vmatpush1.msra.mxu0 %v231
  %1340 = vmatprep.subr.mxu0 %v245
  %1341 = vmatpush1.msra.mxu0 %v244
  %1342 = vmatprep.subr.mxu0 %v258
  %1343 = vmatpush1.msra.mxu0 %v257
  %1344 = vmatprep.subr.mxu0 %v271
  %1345 = vmatpush1.msra.mxu0 %v270
  %1346 = vmatprep.subr.mxu0 %v284
  %1347 = vmatpush1.msra.mxu0 %v283
  %1348 = vmatprep.subr.mxu0 %v297
  %1349 = vmatpush1.msra.mxu0 %v296
  %1350 = vmatprep.subr.mxu0 %v310
  %1351 = vmatpush1.msra.mxu0 %v309
  %1352 = vmatprep.subr.mxu0 %v323
  %1353 = vmatpush1.msra.mxu0 %v322
  %1354 = vmatprep.subr.mxu0 %v336
  %1355 = vmatpush1.msra.mxu0 %v335
  %1356 = vmatprep.subr.mxu0 %v349
  %1357 = vmatpush1.msra.mxu0 %v348
  %1358 = vmatprep.subr.mxu0 %v362
  %1359 = vmatpush1.msra.mxu0 %v361
  %1360 = vmatprep.subr.mxu0 %v375
  %1361 = vmatpush1.msra.mxu0 %v374
  %1362 = vmatprep.subr.mxu0 %v388
  %1363 = vmatpush1.msra.mxu0 %v387
  %1364 = vmatprep.subr.mxu0 %v401
  %1365 = vmatpush1.msra.mxu0 %v400
  %1366 = vmatprep.subr.mxu0 %v414
  %1367 = vmatpush1.msra.mxu0 %v413
  %1368 = vmatprep.subr.mxu0 %v427
  %1369 = vmatpush1.msra.mxu0 %v426
  %1370 = vmatprep.mubr.f32.mxu0 %v867
  %1371 = vmatmul.mubr.f32.gmra.mrb[0].mxu0 %v863
  %v1372 = vpop.f32.mrb[0].mxu0
  %v1373 = vadd.f32 %v858, %v1372
  %v1374 = vpop.f32.mrb[0].mxu0
  %v1375 = vadd.f32 %v858, %v1374
  %1376 = vdwg.mxu0
  %1377 = vmatprep.subr.mxu0 %v440
  %1378 = vmatpush1.msra.mxu0 %v439
  %1379 = vmatprep.subr.mxu0 %v453
  %1380 = vmatpush1.msra.mxu0 %v452
  %1381 = vmatprep.subr.mxu0 %v466
  %1382 = vmatpush1.msra.mxu0 %v465
  %1383 = vmatprep.subr.mxu0 %v479
  %1384 = vmatpush1.msra.mxu0 %v478
  %1385 = vmatprep.subr.mxu0 %v492
  %1386 = vmatpush1.msra.mxu0 %v491
  %1387 = vmatprep.subr.mxu0 %v505
  %1388 = vmatpush1.msra.mxu0 %v504
  %1389 = vmatprep.subr.mxu0 %v518
  %1390 = vmatpush1.msra.mxu0 %v517
  %1391 = vmatprep.subr.mxu0 %v531
  %1392 = vmatpush1.msra.mxu0 %v530
  %1393 = vmatprep.subr.mxu0 %v544
  %1394 = vmatpush1.msra.mxu0 %v543
  %1395 = vmatprep.subr.mxu0 %v557
  %1396 = vmatpush1.msra.mxu0 %v556
  %1397 = vmatprep.subr.mxu0 %v570
  %1398 = vmatpush1.msra.mxu0 %v569
  %1399 = vmatprep.subr.mxu0 %v583
  %1400 = vmatpush1.msra.mxu0 %v582
  %1401 = vmatprep.subr.mxu0 %v596
  %1402 = vmatpush1.msra.mxu0 %v595
  %1403 = vmatprep.subr.mxu0 %v609
  %1404 = vmatpush1.msra.mxu0 %v608
  %1405 = vmatprep.subr.mxu0 %v622
  %1406 = vmatpush1.msra.mxu0 %v621
  %1407 = vmatprep.subr.mxu0 %v635
  %1408 = vmatpush1.msra.mxu0 %v634
  %1409 = vmatprep.subr.mxu0 %v648
  %1410 = vmatpush1.msra.mxu0 %v647
  %1411 = vmatprep.subr.mxu0 %v661
  %1412 = vmatpush1.msra.mxu0 %v660
  %1413 = vmatprep.subr.mxu0 %v674
  %1414 = vmatpush1.msra.mxu0 %v673
  %1415 = vmatprep.subr.mxu0 %v687
  %1416 = vmatpush1.msra.mxu0 %v686
  %1417 = vmatprep.subr.mxu0 %v700
  %1418 = vmatpush1.msra.mxu0 %v699
  %1419 = vmatprep.subr.mxu0 %v713
  %1420 = vmatpush1.msra.mxu0 %v712
  %1421 = vmatprep.subr.mxu0 %v726
  %1422 = vmatpush1.msra.mxu0 %v725
  %1423 = vmatprep.subr.mxu0 %v739
  %1424 = vmatpush1.msra.mxu0 %v738
  %1425 = vmatprep.subr.mxu0 %v752
  %1426 = vmatpush1.msra.mxu0 %v751
  %1427 = vmatprep.subr.mxu0 %v765
  %1428 = vmatpush1.msra.mxu0 %v764
  %1429 = vmatprep.subr.mxu0 %v778
  %1430 = vmatpush1.msra.mxu0 %v777
  %1431 = vmatprep.subr.mxu0 %v791
  %1432 = vmatpush1.msra.mxu0 %v790
  %1433 = vmatprep.subr.mxu0 %v804
  %1434 = vmatpush1.msra.mxu0 %v803
  %1435 = vmatprep.subr.mxu0 %v817
  %1436 = vmatpush1.msra.mxu0 %v816
  %1437 = vmatprep.subr.mxu0 %v830
  %1438 = vmatpush1.msra.mxu0 %v829
  %1439 = vmatprep.subr.mxu0 %v843
  %1440 = vmatpush1.msra.mxu0 %v842
  %1441 = vmatprep.mubr.f32.mxu0 %v875
  %1442 = vmatmul.mubr.f32.gmra.mrb[0].mxu0 %v871
  %v1443 = vpop.f32.mrb[0].mxu0
  %v1444 = vadd.f32 %v1373, %v1443
  %v1445 = vpop.f32.mrb[0].mxu0
  %v1446 = vadd.f32 %v1375, %v1445
  %1447 = vdwg.mxu0
  %1448 = vmatprep.subr.mxu0 %v26
  %1449 = vmatpush1.msra.mxu0 %v25
  %1450 = vmatprep.subr.mxu0 %v39
  %1451 = vmatpush1.msra.mxu0 %v38
  %1452 = vmatprep.subr.mxu0 %v52
  %1453 = vmatpush1.msra.mxu0 %v51
  %1454 = vmatprep.subr.mxu0 %v65
  %1455 = vmatpush1.msra.mxu0 %v64
  %1456 = vmatprep.subr.mxu0 %v78
  %1457 = vmatpush1.msra.mxu0 %v77
  %1458 = vmatprep.subr.mxu0 %v91
  %1459 = vmatpush1.msra.mxu0 %v90
  %1460 = vmatprep.subr.mxu0 %v104
  %1461 = vmatpush1.msra.mxu0 %v103
  %1462 = vmatprep.subr.mxu0 %v117
  %1463 = vmatpush1.msra.mxu0 %v116
  %1464 = vmatprep.subr.mxu0 %v130
  %1465 = vmatpush1.msra.mxu0 %v129
  %1466 = vmatprep.subr.mxu0 %v143
  %1467 = vmatpush1.msra.mxu0 %v142
  %1468 = vmatprep.subr.mxu0 %v156
  %1469 = vmatpush1.msra.mxu0 %v155
  %1470 = vmatprep.subr.mxu0 %v169
  %1471 = vmatpush1.msra.mxu0 %v168
  %1472 = vmatprep.subr.mxu0 %v182
  %1473 = vmatpush1.msra.mxu0 %v181
  %1474 = vmatprep.subr.mxu0 %v195
  %1475 = vmatpush1.msra.mxu0 %v194
  %1476 = vmatprep.subr.mxu0 %v208
  %1477 = vmatpush1.msra.mxu0 %v207
  %1478 = vmatprep.subr.mxu0 %v221
  %1479 = vmatpush1.msra.mxu0 %v220
  %1480 = vmatprep.subr.mxu0 %v234
  %1481 = vmatpush1.msra.mxu0 %v233
  %1482 = vmatprep.subr.mxu0 %v247
  %1483 = vmatpush1.msra.mxu0 %v246
  %1484 = vmatprep.subr.mxu0 %v260
  %1485 = vmatpush1.msra.mxu0 %v259
  %1486 = vmatprep.subr.mxu0 %v273
  %1487 = vmatpush1.msra.mxu0 %v272
  %1488 = vmatprep.subr.mxu0 %v286
  %1489 = vmatpush1.msra.mxu0 %v285
  %1490 = vmatprep.subr.mxu0 %v299
  %1491 = vmatpush1.msra.mxu0 %v298
  %1492 = vmatprep.subr.mxu0 %v312
  %1493 = vmatpush1.msra.mxu0 %v311
  %1494 = vmatprep.subr.mxu0 %v325
  %1495 = vmatpush1.msra.mxu0 %v324
  %1496 = vmatprep.subr.mxu0 %v338
  %1497 = vmatpush1.msra.mxu0 %v337
  %1498 = vmatprep.subr.mxu0 %v351
  %1499 = vmatpush1.msra.mxu0 %v350
  %1500 = vmatprep.subr.mxu0 %v364
  %1501 = vmatpush1.msra.mxu0 %v363
  %1502 = vmatprep.subr.mxu0 %v377
  %1503 = vmatpush1.msra.mxu0 %v376
  %1504 = vmatprep.subr.mxu0 %v390
  %1505 = vmatpush1.msra.mxu0 %v389
  %1506 = vmatprep.subr.mxu0 %v403
  %1507 = vmatpush1.msra.mxu0 %v402
  %1508 = vmatprep.subr.mxu0 %v416
  %1509 = vmatpush1.msra.mxu0 %v415
  %1510 = vmatprep.subr.mxu0 %v429
  %1511 = vmatpush1.msra.mxu0 %v428
  %1512 = vmatprep.mubr.f32.mxu0 %v867
  %1513 = vmatmul.mubr.f32.gmra.mrb[0].mxu0 %v863
  %v1514 = vpop.f32.mrb[0].mxu0
  %v1515 = vadd.f32 %v858, %v1514
  %v1516 = vpop.f32.mrb[0].mxu0
  %v1517 = vadd.f32 %v858, %v1516
  %1518 = vdwg.mxu0
  %1519 = vmatprep.subr.mxu0 %v442
  %1520 = vmatpush1.msra.mxu0 %v441
  %1521 = vmatprep.subr.mxu0 %v455
  %1522 = vmatpush1.msra.mxu0 %v454
  %1523 = vmatprep.subr.mxu0 %v468
  %1524 = vmatpush1.msra.mxu0 %v467
  %1525 = vmatprep.subr.mxu0 %v481
  %1526 = vmatpush1.msra.mxu0 %v480
  %1527 = vmatprep.subr.mxu0 %v494
  %1528 = vmatpush1.msra.mxu0 %v493
  %1529 = vmatprep.subr.mxu0 %v507
  %1530 = vmatpush1.msra.mxu0 %v506
  %1531 = vmatprep.subr.mxu0 %v520
  %1532 = vmatpush1.msra.mxu0 %v519
  %1533 = vmatprep.subr.mxu0 %v533
  %1534 = vmatpush1.msra.mxu0 %v532
  %1535 = vmatprep.subr.mxu0 %v546
  %1536 = vmatpush1.msra.mxu0 %v545
  %1537 = vmatprep.subr.mxu0 %v559
  %1538 = vmatpush1.msra.mxu0 %v558
  %1539 = vmatprep.subr.mxu0 %v572
  %1540 = vmatpush1.msra.mxu0 %v571
  %1541 = vmatprep.subr.mxu0 %v585
  %1542 = vmatpush1.msra.mxu0 %v584
  %1543 = vmatprep.subr.mxu0 %v598
  %1544 = vmatpush1.msra.mxu0 %v597
  %1545 = vmatprep.subr.mxu0 %v611
  %1546 = vmatpush1.msra.mxu0 %v610
  %1547 = vmatprep.subr.mxu0 %v624
  %1548 = vmatpush1.msra.mxu0 %v623
  %1549 = vmatprep.subr.mxu0 %v637
  %1550 = vmatpush1.msra.mxu0 %v636
  %1551 = vmatprep.subr.mxu0 %v650
  %1552 = vmatpush1.msra.mxu0 %v649
  %1553 = vmatprep.subr.mxu0 %v663
  %1554 = vmatpush1.msra.mxu0 %v662
  %1555 = vmatprep.subr.mxu0 %v676
  %1556 = vmatpush1.msra.mxu0 %v675
  %1557 = vmatprep.subr.mxu0 %v689
  %1558 = vmatpush1.msra.mxu0 %v688
  %1559 = vmatprep.subr.mxu0 %v702
  %1560 = vmatpush1.msra.mxu0 %v701
  %1561 = vmatprep.subr.mxu0 %v715
  %1562 = vmatpush1.msra.mxu0 %v714
  %1563 = vmatprep.subr.mxu0 %v728
  %1564 = vmatpush1.msra.mxu0 %v727
  %1565 = vmatprep.subr.mxu0 %v741
  %1566 = vmatpush1.msra.mxu0 %v740
  %1567 = vmatprep.subr.mxu0 %v754
  %1568 = vmatpush1.msra.mxu0 %v753
  %1569 = vmatprep.subr.mxu0 %v767
  %1570 = vmatpush1.msra.mxu0 %v766
  %1571 = vmatprep.subr.mxu0 %v780
  %1572 = vmatpush1.msra.mxu0 %v779
  %1573 = vmatprep.subr.mxu0 %v793
  %1574 = vmatpush1.msra.mxu0 %v792
  %1575 = vmatprep.subr.mxu0 %v806
  %1576 = vmatpush1.msra.mxu0 %v805
  %1577 = vmatprep.subr.mxu0 %v819
  %1578 = vmatpush1.msra.mxu0 %v818
  %1579 = vmatprep.subr.mxu0 %v832
  %1580 = vmatpush1.msra.mxu0 %v831
  %1581 = vmatprep.subr.mxu0 %v845
  %1582 = vmatpush1.msra.mxu0 %v844
  %1583 = vmatprep.mubr.f32.mxu0 %v875
  %1584 = vmatmul.mubr.f32.gmra.mrb[0].mxu0 %v871
  %v1585 = vpop.f32.mrb[0].mxu0
  %v1586 = vadd.f32 %v1515, %v1585
  %v1587 = vpop.f32.mrb[0].mxu0
  %v1588 = vadd.f32 %v1517, %v1587
  %1589 = vdwg.mxu0
  %1590 = vmatprep.subr.mxu0 %v28
  %1591 = vmatpush1.msra.mxu0 %v27
  %1592 = vmatprep.subr.mxu0 %v41
  %1593 = vmatpush1.msra.mxu0 %v40
  %1594 = vmatprep.subr.mxu0 %v54
  %1595 = vmatpush1.msra.mxu0 %v53
  %1596 = vmatprep.subr.mxu0 %v67
  %1597 = vmatpush1.msra.mxu0 %v66
  %1598 = vmatprep.subr.mxu0 %v80
  %1599 = vmatpush1.msra.mxu0 %v79
  %1600 = vmatprep.subr.mxu0 %v93
  %1601 = vmatpush1.msra.mxu0 %v92
  %1602 = vmatprep.subr.mxu0 %v106
  %1603 = vmatpush1.msra.mxu0 %v105
  %1604 = vmatprep.subr.mxu0 %v119
  %1605 = vmatpush1.msra.mxu0 %v118
  %1606 = vmatprep.subr.mxu0 %v132
  %1607 = vmatpush1.msra.mxu0 %v131
  %1608 = vmatprep.subr.mxu0 %v145
  %1609 = vmatpush1.msra.mxu0 %v144
  %1610 = vmatprep.subr.mxu0 %v158
  %1611 = vmatpush1.msra.mxu0 %v157
  %1612 = vmatprep.subr.mxu0 %v171
  %1613 = vmatpush1.msra.mxu0 %v170
  %1614 = vmatprep.subr.mxu0 %v184
  %1615 = vmatpush1.msra.mxu0 %v183
  %1616 = vmatprep.subr.mxu0 %v197
  %1617 = vmatpush1.msra.mxu0 %v196
  %1618 = vmatprep.subr.mxu0 %v210
  %1619 = vmatpush1.msra.mxu0 %v209
  %1620 = vmatprep.subr.mxu0 %v223
  %1621 = vmatpush1.msra.mxu0 %v222
  %1622 = vmatprep.subr.mxu0 %v236
  %1623 = vmatpush1.msra.mxu0 %v235
  %1624 = vmatprep.subr.mxu0 %v249
  %1625 = vmatpush1.msra.mxu0 %v248
  %1626 = vmatprep.subr.mxu0 %v262
  %1627 = vmatpush1.msra.mxu0 %v261
  %1628 = vmatprep.subr.mxu0 %v275
  %1629 = vmatpush1.msra.mxu0 %v274
  %1630 = vmatprep.subr.mxu0 %v288
  %1631 = vmatpush1.msra.mxu0 %v287
  %1632 = vmatprep.subr.mxu0 %v301
  %1633 = vmatpush1.msra.mxu0 %v300
  %1634 = vmatprep.subr.mxu0 %v314
  %1635 = vmatpush1.msra.mxu0 %v313
  %1636 = vmatprep.subr.mxu0 %v327
  %1637 = vmatpush1.msra.mxu0 %v326
  %1638 = vmatprep.subr.mxu0 %v340
  %1639 = vmatpush1.msra.mxu0 %v339
  %1640 = vmatprep.subr.mxu0 %v353
  %1641 = vmatpush1.msra.mxu0 %v352
  %1642 = vmatprep.subr.mxu0 %v366
  %1643 = vmatpush1.msra.mxu0 %v365
  %1644 = vmatprep.subr.mxu0 %v379
  %1645 = vmatpush1.msra.mxu0 %v378
  %1646 = vmatprep.subr.mxu0 %v392
  %1647 = vmatpush1.msra.mxu0 %v391
  %1648 = vmatprep.subr.mxu0 %v405
  %1649 = vmatpush1.msra.mxu0 %v404
  %1650 = vmatprep.subr.mxu0 %v418
  %1651 = vmatpush1.msra.mxu0 %v417
  %1652 = vmatprep.subr.mxu0 %v431
  %1653 = vmatpush1.msra.mxu0 %v430
  %1654 = vmatprep.mubr.f32.mxu0 %v867
  %1655 = vmatmul.mubr.f32.gmra.mrb[0].mxu0 %v863
  %v1656 = vpop.f32.mrb[0].mxu0
  %v1657 = vadd.f32 %v858, %v1656
  %v1658 = vpop.f32.mrb[0].mxu0
  %v1659 = vadd.f32 %v858, %v1658
  %1660 = vdwg.mxu0
  %1661 = vmatprep.subr.mxu0 %v444
  %1662 = vmatpush1.msra.mxu0 %v443
  %1663 = vmatprep.subr.mxu0 %v457
  %1664 = vmatpush1.msra.mxu0 %v456
  %1665 = vmatprep.subr.mxu0 %v470
  %1666 = vmatpush1.msra.mxu0 %v469
  %1667 = vmatprep.subr.mxu0 %v483
  %1668 = vmatpush1.msra.mxu0 %v482
  %1669 = vmatprep.subr.mxu0 %v496
  %1670 = vmatpush1.msra.mxu0 %v495
  %1671 = vmatprep.subr.mxu0 %v509
  %1672 = vmatpush1.msra.mxu0 %v508
  %1673 = vmatprep.subr.mxu0 %v522
  %1674 = vmatpush1.msra.mxu0 %v521
  %1675 = vmatprep.subr.mxu0 %v535
  %1676 = vmatpush1.msra.mxu0 %v534
  %1677 = vmatprep.subr.mxu0 %v548
  %1678 = vmatpush1.msra.mxu0 %v547
  %1679 = vmatprep.subr.mxu0 %v561
  %1680 = vmatpush1.msra.mxu0 %v560
  %1681 = vmatprep.subr.mxu0 %v574
  %1682 = vmatpush1.msra.mxu0 %v573
  %1683 = vmatprep.subr.mxu0 %v587
  %1684 = vmatpush1.msra.mxu0 %v586
  %1685 = vmatprep.subr.mxu0 %v600
  %1686 = vmatpush1.msra.mxu0 %v599
  %1687 = vmatprep.subr.mxu0 %v613
  %1688 = vmatpush1.msra.mxu0 %v612
  %1689 = vmatprep.subr.mxu0 %v626
  %1690 = vmatpush1.msra.mxu0 %v625
  %1691 = vmatprep.subr.mxu0 %v639
  %1692 = vmatpush1.msra.mxu0 %v638
  %1693 = vmatprep.subr.mxu0 %v652
  %1694 = vmatpush1.msra.mxu0 %v651
  %1695 = vmatprep.subr.mxu0 %v665
  %1696 = vmatpush1.msra.mxu0 %v664
  %1697 = vmatprep.subr.mxu0 %v678
  %1698 = vmatpush1.msra.mxu0 %v677
  %1699 = vmatprep.subr.mxu0 %v691
  %1700 = vmatpush1.msra.mxu0 %v690
  %1701 = vmatprep.subr.mxu0 %v704
  %1702 = vmatpush1.msra.mxu0 %v703
  %1703 = vmatprep.subr.mxu0 %v717
  %1704 = vmatpush1.msra.mxu0 %v716
  %1705 = vmatprep.subr.mxu0 %v730
  %1706 = vmatpush1.msra.mxu0 %v729
  %1707 = vmatprep.subr.mxu0 %v743
  %1708 = vmatpush1.msra.mxu0 %v742
  %1709 = vmatprep.subr.mxu0 %v756
  %1710 = vmatpush1.msra.mxu0 %v755
  %1711 = vmatprep.subr.mxu0 %v769
  %1712 = vmatpush1.msra.mxu0 %v768
  %1713 = vmatprep.subr.mxu0 %v782
  %1714 = vmatpush1.msra.mxu0 %v781
  %1715 = vmatprep.subr.mxu0 %v795
  %1716 = vmatpush1.msra.mxu0 %v794
  %1717 = vmatprep.subr.mxu0 %v808
  %1718 = vmatpush1.msra.mxu0 %v807
  %1719 = vmatprep.subr.mxu0 %v821
  %1720 = vmatpush1.msra.mxu0 %v820
  %1721 = vmatprep.subr.mxu0 %v834
  %1722 = vmatpush1.msra.mxu0 %v833
  %1723 = vmatprep.subr.mxu0 %v847
  %1724 = vmatpush1.msra.mxu0 %v846
  %1725 = vmatprep.mubr.f32.mxu0 %v875
  %1726 = vmatmul.mubr.f32.gmra.mrb[0].mxu0 %v871
  %v1727 = vpop.f32.mrb[0].mxu0
  %v1728 = vadd.f32 %v1657, %v1727
  %v1729 = vpop.f32.mrb[0].mxu0
  %v1730 = vadd.f32 %v1659, %v1729
  %1731 = vdwg.mxu0
  %1732 = vmatprep.subr.mxu0 0.0
  %1733 = vmatpush1.msra.mxu0 %v29
  %1734 = vmatprep.subr.mxu0 0.0
  %1735 = vmatpush1.msra.mxu0 %v42
  %1736 = vmatprep.subr.mxu0 0.0
  %1737 = vmatpush1.msra.mxu0 %v55
  %1738 = vmatprep.subr.mxu0 0.0
  %1739 = vmatpush1.msra.mxu0 %v68
  %1740 = vmatprep.subr.mxu0 0.0
  %1741 = vmatpush1.msra.mxu0 %v81
  %1742 = vmatprep.subr.mxu0 0.0
  %1743 = vmatpush1.msra.mxu0 %v94
  %1744 = vmatprep.subr.mxu0 0.0
  %1745 = vmatpush1.msra.mxu0 %v107
  %1746 = vmatprep.subr.mxu0 0.0
  %1747 = vmatpush1.msra.mxu0 %v120
  %1748 = vmatprep.subr.mxu0 0.0
  %1749 = vmatpush1.msra.mxu0 %v133
  %1750 = vmatprep.subr.mxu0 0.0
  %1751 = vmatpush1.msra.mxu0 %v146
  %1752 = vmatprep.subr.mxu0 0.0
  %1753 = vmatpush1.msra.mxu0 %v159
  %1754 = vmatprep.subr.mxu0 0.0
  %1755 = vmatpush1.msra.mxu0 %v172
  %1756 = vmatprep.subr.mxu0 0.0
  %1757 = vmatpush1.msra.mxu0 %v185
  %1758 = vmatprep.subr.mxu0 0.0
  %1759 = vmatpush1.msra.mxu0 %v198
  %1760 = vmatprep.subr.mxu0 0.0
  %1761 = vmatpush1.msra.mxu0 %v211
  %1762 = vmatprep.subr.mxu0 0.0
  %1763 = vmatpush1.msra.mxu0 %v224
  %1764 = vmatprep.subr.mxu0 0.0
  %1765 = vmatpush1.msra.mxu0 %v237
  %1766 = vmatprep.subr.mxu0 0.0
  %1767 = vmatpush1.msra.mxu0 %v250
  %1768 = vmatprep.subr.mxu0 0.0
  %1769 = vmatpush1.msra.mxu0 %v263
  %1770 = vmatprep.subr.mxu0 0.0
  %1771 = vmatpush1.msra.mxu0 %v276
  %1772 = vmatprep.subr.mxu0 0.0
  %1773 = vmatpush1.msra.mxu0 %v289
  %1774 = vmatprep.subr.mxu0 0.0
  %1775 = vmatpush1.msra.mxu0 %v302
  %1776 = vmatprep.subr.mxu0 0.0
  %1777 = vmatpush1.msra.mxu0 %v315
  %1778 = vmatprep.subr.mxu0 0.0
  %1779 = vmatpush1.msra.mxu0 %v328
  %1780 = vmatprep.subr.mxu0 0.0
  %1781 = vmatpush1.msra.mxu0 %v341
  %1782 = vmatprep.subr.mxu0 0.0
  %1783 = vmatpush1.msra.mxu0 %v354
  %1784 = vmatprep.subr.mxu0 0.0
  %1785 = vmatpush1.msra.mxu0 %v367
  %1786 = vmatprep.subr.mxu0 0.0
  %1787 = vmatpush1.msra.mxu0 %v380
  %1788 = vmatprep.subr.mxu0 0.0
  %1789 = vmatpush1.msra.mxu0 %v393
  %1790 = vmatprep.subr.mxu0 0.0
  %1791 = vmatpush1.msra.mxu0 %v406
  %1792 = vmatprep.subr.mxu0 0.0
  %1793 = vmatpush1.msra.mxu0 %v419
  %1794 = vmatprep.subr.mxu0 0.0
  %1795 = vmatpush1.msra.mxu0 %v432
  %1796 = vmatprep.mubr.f32.mxu0 %v867
  %1797 = vmatmul.mubr.f32.gmra.mrb[0].mxu0 %v863
  %v1798 = vpop.f32.mrb[0].mxu0
  %v1799 = vadd.f32 %v858, %v1798
  %v1800 = vpop.f32.mrb[0].mxu0
  %1801 = vdwg.mxu0
  %1802 = vmatprep.subr.mxu0 0.0
  %1803 = vmatpush1.msra.mxu0 %v445
  %1804 = vmatprep.subr.mxu0 0.0
  %1805 = vmatpush1.msra.mxu0 %v458
  %1806 = vmatprep.subr.mxu0 0.0
  %1807 = vmatpush1.msra.mxu0 %v471
  %1808 = vmatprep.subr.mxu0 0.0
  %1809 = vmatpush1.msra.mxu0 %v484
  %1810 = vmatprep.subr.mxu0 0.0
  %1811 = vmatpush1.msra.mxu0 %v497
  %1812 = vmatprep.subr.mxu0 0.0
  %1813 = vmatpush1.msra.mxu0 %v510
  %1814 = vmatprep.subr.mxu0 0.0
  %1815 = vmatpush1.msra.mxu0 %v523
  %1816 = vmatprep.subr.mxu0 0.0
  %1817 = vmatpush1.msra.mxu0 %v536
  %1818 = vmatprep.subr.mxu0 0.0
  %1819 = vmatpush1.msra.mxu0 %v549
  %1820 = vmatprep.subr.mxu0 0.0
  %1821 = vmatpush1.msra.mxu0 %v562
  %1822 = vmatprep.subr.mxu0 0.0
  %1823 = vmatpush1.msra.mxu0 %v575
  %1824 = vmatprep.subr.mxu0 0.0
  %1825 = vmatpush1.msra.mxu0 %v588
  %1826 = vmatprep.subr.mxu0 0.0
  %1827 = vmatpush1.msra.mxu0 %v601
  %1828 = vmatprep.subr.mxu0 0.0
  %1829 = vmatpush1.msra.mxu0 %v614
  %1830 = vmatprep.subr.mxu0 0.0
  %1831 = vmatpush1.msra.mxu0 %v627
  %1832 = vmatprep.subr.mxu0 0.0
  %1833 = vmatpush1.msra.mxu0 %v640
  %1834 = vmatprep.subr.mxu0 0.0
  %1835 = vmatpush1.msra.mxu0 %v653
  %1836 = vmatprep.subr.mxu0 0.0
  %1837 = vmatpush1.msra.mxu0 %v666
  %1838 = vmatprep.subr.mxu0 0.0
  %1839 = vmatpush1.msra.mxu0 %v679
  %1840 = vmatprep.subr.mxu0 0.0
  %1841 = vmatpush1.msra.mxu0 %v692
  %1842 = vmatprep.subr.mxu0 0.0
  %1843 = vmatpush1.msra.mxu0 %v705
  %1844 = vmatprep.subr.mxu0 0.0
  %1845 = vmatpush1.msra.mxu0 %v718
  %1846 = vmatprep.subr.mxu0 0.0
  %1847 = vmatpush1.msra.mxu0 %v731
  %1848 = vmatprep.subr.mxu0 0.0
  %1849 = vmatpush1.msra.mxu0 %v744
  %1850 = vmatprep.subr.mxu0 0.0
  %1851 = vmatpush1.msra.mxu0 %v757
  %1852 = vmatprep.subr.mxu0 0.0
  %1853 = vmatpush1.msra.mxu0 %v770
  %1854 = vmatprep.subr.mxu0 0.0
  %1855 = vmatpush1.msra.mxu0 %v783
  %1856 = vmatprep.subr.mxu0 0.0
  %1857 = vmatpush1.msra.mxu0 %v796
  %1858 = vmatprep.subr.mxu0 0.0
  %1859 = vmatpush1.msra.mxu0 %v809
  %1860 = vmatprep.subr.mxu0 0.0
  %1861 = vmatpush1.msra.mxu0 %v822
  %1862 = vmatprep.subr.mxu0 0.0
  %1863 = vmatpush1.msra.mxu0 %v835
  %1864 = vmatprep.subr.mxu0 0.0
  %1865 = vmatpush1.msra.mxu0 %v848
  %1866 = vmatprep.mubr.f32.mxu0 %v875
  %1867 = vmatmul.mubr.f32.gmra.mrb[0].mxu0 %v871
  %v1868 = vpop.f32.mrb[0].mxu0
  %v1869 = vadd.f32 %v1799, %v1868
  %v1870 = vpop.f32.mrb[0].mxu0
  %1871 = vdwg.mxu0
  %v1872 = vxor.u32 %v1018, 2147483648
  %v1873 = vxor.u32 %v1020, 2147483648
  %v1874 = vxor.u32 %v1160, 2147483648
  %v1875 = vxor.u32 %v1162, 2147483648
  %v1876 = vxor.u32 %v1302, 2147483648
  %v1877 = vxor.u32 %v1304, 2147483648
  %v1878 = vxor.u32 %v1444, 2147483648
  %v1879 = vxor.u32 %v1446, 2147483648
  %v1880 = vxor.u32 %v1586, 2147483648
  %v1881 = vxor.u32 %v1588, 2147483648
  %v1882 = vxor.u32 %v1728, 2147483648
  %v1883 = vxor.u32 %v1730, 2147483648
  %v1884 = vxor.u32 %v1869, 2147483648
  %v1885 = vmul.f32 %v1872, 1.442695
  %v1886 = vpow.pop %v1885
  %v1887 = vmul.f32 %v1873, 1.442695
  %v1888 = vpow.pop %v1887
  %v1889 = vmul.f32 %v1874, 1.442695
  %v1890 = vpow.pop %v1889
  %v1891 = vmul.f32 %v1875, 1.442695
  %v1892 = vpow.pop %v1891
  %v1893 = vmul.f32 %v1876, 1.442695
  %v1894 = vpow.pop %v1893
  %v1895 = vmul.f32 %v1877, 1.442695
  %v1896 = vpow.pop %v1895
  %v1897 = vmul.f32 %v1878, 1.442695
  %v1898 = vpow.pop %v1897
  %v1899 = vmul.f32 %v1879, 1.442695
  %v1900 = vpow.pop %v1899
  %v1901 = vmul.f32 %v1880, 1.442695
  %v1902 = vpow.pop %v1901
  %v1903 = vmul.f32 %v1881, 1.442695
  %v1904 = vpow.pop %v1903
  %v1905 = vmul.f32 %v1882, 1.442695
  %v1906 = vpow.pop %v1905
  %v1907 = vmul.f32 %v1883, 1.442695
  %v1908 = vpow.pop %v1907
  %v1909 = vmul.f32 %v1884, 1.442695
  %v1910 = vpow.pop %v1909
  %v1911 = vadd.f32 %v1886, 1.0
  %v1912 = vadd.f32 %v1888, 1.0
  %v1913 = vadd.f32 %v1890, 1.0
  %v1914 = vadd.f32 %v1892, 1.0
  %v1915 = vadd.f32 %v1894, 1.0
  %v1916 = vadd.f32 %v1896, 1.0
  %v1917 = vadd.f32 %v1898, 1.0
  %v1918 = vadd.f32 %v1900, 1.0
  %v1919 = vadd.f32 %v1902, 1.0
  %v1920 = vadd.f32 %v1904, 1.0
  %v1921 = vadd.f32 %v1906, 1.0
  %v1922 = vadd.f32 %v1908, 1.0
  %v1923 = vadd.f32 %v1910, 1.0
  %v1924 = vrcp.pop %v1911
  %v1925 = vmul.f32 1.0, %v1924
  %v1926 = vrcp.pop %v1912
  %v1927 = vmul.f32 1.0, %v1926
  %v1928 = vrcp.pop %v1913
  %v1929 = vmul.f32 1.0, %v1928
  %v1930 = vrcp.pop %v1914
  %v1931 = vmul.f32 1.0, %v1930
  %v1932 = vrcp.pop %v1915
  %v1933 = vmul.f32 1.0, %v1932
  %v1934 = vrcp.pop %v1916
  %v1935 = vmul.f32 1.0, %v1934
  %v1936 = vrcp.pop %v1917
  %v1937 = vmul.f32 1.0, %v1936
  %v1938 = vrcp.pop %v1918
  %v1939 = vmul.f32 1.0, %v1938
  %v1940 = vrcp.pop %v1919
  %v1941 = vmul.f32 1.0, %v1940
  %v1942 = vrcp.pop %v1920
  %v1943 = vmul.f32 1.0, %v1942
  %v1944 = vrcp.pop %v1921
  %v1945 = vmul.f32 1.0, %v1944
  %v1946 = vrcp.pop %v1922
  %v1947 = vmul.f32 1.0, %v1946
  %v1948 = vrcp.pop %v1923
  %v1949 = vmul.f32 1.0, %v1948
  %v1963 = vcombine.low %v1925, %v1927
  %v1964 = vcombine.low %v1929, %v1931
  %v1965 = vcombine.low %v1933, %v1935
  %v1966 = vcombine.low %v1937, %v1939
  %v1968 = vunpack.c.l.s4 1966171168
  %v1969 = vunpack.c.0.s8 %v1968
  %v1970 = vlaneseq
  %v1971 = vshrl.u32 %v1970, 7
  %v1972 = vsub.s32 %v1969, %v1971
  %v1973 = vrot.slane %v1963, %v1972
  %v1975 = vunpack.c.l.s4 1966171168
  %v1976 = vunpack.c.0.s8 %v1975
  %v1977 = vlaneseq
  %v1978 = vshrl.u32 %v1977, 7
  %v1979 = vsub.s32 %v1976, %v1978
  %v1980 = vrot.slane %v1964, %v1979
  %v1982 = vunpack.c.l.s4 1966171168
  %v1983 = vunpack.c.0.s8 %v1982
  %v1984 = vlaneseq
  %v1985 = vshrl.u32 %v1984, 7
  %v1986 = vsub.s32 %v1983, %v1985
  %v1987 = vrot.slane %v1965, %v1986
  %v1989 = vunpack.c.l.s4 1966171168
  %v1990 = vunpack.c.0.s8 %v1989
  %v1991 = vlaneseq
  %v1992 = vshrl.u32 %v1991, 7
  %v1993 = vsub.s32 %v1990, %v1992
  %v1994 = vrot.slane %v1966, %v1993
  %v1995 = vcombine.low %v1973, %v1980
  %v1996 = vcombine.low %v1987, %v1994
  %v1998 = vunpack.c.l.s4 1966171168
  %v1999 = vunpack.c.0.s8 %v1998
  %v2000 = vlaneseq
  %v2001 = vshrl.u32 %v2000, 7
  %v2002 = vsub.s32 %v1999, %v2001
  %v2003 = vrot.slane %v1995, %v2002
  %v2005 = vunpack.c.l.s4 1966171168
  %v2006 = vunpack.c.0.s8 %v2005
  %v2007 = vlaneseq
  %v2008 = vshrl.u32 %v2007, 7
  %v2009 = vsub.s32 %v2006, %v2008
  %v2010 = vrot.slane %v1996, %v2009
  %v2011 = vcombine.low %v2003, %v2010
  %v2012 = vcombine.low %v1941, %v1943
  %v2013 = vcombine.low %v1945, %v1947
  %v2015 = vunpack.c.l.s4 1966171168
  %v2016 = vunpack.c.0.s8 %v2015
  %v2017 = vlaneseq
  %v2018 = vshrl.u32 %v2017, 7
  %v2019 = vsub.s32 %v2016, %v2018
  %v2020 = vrot.slane %v2012, %v2019
  %v2022 = vunpack.c.l.s4 1966171168
  %v2023 = vunpack.c.0.s8 %v2022
  %v2024 = vlaneseq
  %v2025 = vshrl.u32 %v2024, 7
  %v2026 = vsub.s32 %v2023, %v2025
  %v2027 = vrot.slane %v2013, %v2026
  %v2029 = vunpack.c.l.s4 1966171168
  %v2030 = vunpack.c.0.s8 %v2029
  %v2031 = vlaneseq
  %v2032 = vshrl.u32 %v2031, 7
  %v2033 = vsub.s32 %v2030, %v2032
  %v2034 = vrot.slane %v1949, %v2033
  %v2035 = vcombine.low %v2020, %v2027
  %v2037 = vunpack.c.l.s4 1966171168
  %v2038 = vunpack.c.0.s8 %v2037
  %v2039 = vlaneseq
  %v2040 = vshrl.u32 %v2039, 7
  %v2041 = vsub.s32 %v2038, %v2040
  %v2042 = vrot.slane %v2035, %v2041
  %v2044 = vunpack.c.l.s4 1966171168
  %v2045 = vunpack.c.0.s8 %v2044
  %v2046 = vlaneseq
  %v2047 = vshrl.u32 %v2046, 7
  %v2048 = vsub.s32 %v2045, %v2047
  %v2049 = vrot.slane %v2034, %v2048
  %v2050 = vcombine.low %v2042, %v2049
  %2053 = vst [vmem:[%s3] sm:$0xff] %v2011
  %v2054 = vlaneseq
  %vm2055 = vcmp.ge.s32.totalorder %v2054, 0
  %vm2056 = vcmp.lt.s32.totalorder %v2054, 544
  %vm2057 = vmand %vm2055, %vm2056
  %2058 = vst.msk [vmem:[%s3 + $0x8] sm:$0x1f] %vm2057, %v2050
  // Predicated region
  $region14: #{cnn_ae_mnist_forward.9} parent=0 // pred_check
    _
  $region15: #{cnn_ae_mnist_forward.9} parent=0 // pred_check_branch
    %2060 = sbr.rel (0) target = $region17
  $region16: #{cnn_ae_mnist_forward.9} parent=0 // pred_region
    _
  $region17: #{cnn_ae_mnist_forward.9} parent=0 // pred_fallthru
    _
  // Predicated region
  $region18: #{cnn_ae_mnist_forward.9} parent=0 // pred_check
    _
  $region19: #{cnn_ae_mnist_forward.9} parent=0 // pred_check_branch
    %2062 = sbr.rel (0) target = $region21
  $region20: #{cnn_ae_mnist_forward.9} parent=0 // pred_region
    _
  $region21: #{cnn_ae_mnist_forward.9} parent=0 // pred_fallthru
    _

</llo_original>
